<compile_context>
chip_gen: v6e
topology: v6e:2x2x1
jax: 0.10.0
libtpu: 0.0.40
codegen_flags: <defaults>
</compile_context>

<pallas_src>
import math

import numpy as np
import jax
import jax.numpy as jnp
from jax.experimental import pallas as pl
from jax.experimental.pallas import tpu as pltpu

# ----------------------------- configuration ------------------------------
B = 2           # batch
SEQ_LEN = 8     # encoder sequence length
ENC_IN = 4      # input channels
D_MODEL = 32
N_HEADS = 8
D_FF = 32
E_LAYERS = 3    # fused 3-stage structure below assumes e_layers == 3
LABEL_LEN = 8   # projection output size
LN_EPS = 1e-5
BN_EPS = 1e-5
DH = D_MODEL // N_HEADS
ATT_SCALE = 1.0 / math.sqrt(DH)
NEG_INF = -1e30


# -------------------------- in-kernel math helpers --------------------------
def _layernorm(x, g, b):
    mu = jnp.mean(x, axis=-1, keepdims=True)
    var = jnp.mean((x - mu) ** 2, axis=-1, keepdims=True)
    return (x - mu) * jax.lax.rsqrt(var + LN_EPS) * g + b


def _erf(x):
    # Abramowitz & Stegun 7.1.26 (max abs error ~1.5e-7): gives exact-GELU
    # accuracy in f32 without relying on an erf lowering inside Mosaic.
    t = 1.0 / (1.0 + 0.3275911 * jnp.abs(x))
    poly = ((((1.061405429 * t - 1.453152027) * t + 1.421413741) * t
             - 0.284496736) * t + 0.254829592) * t
    y = 1.0 - poly * jnp.exp(-x * x)
    return jnp.where(x >= 0, y, -y)


def _gelu(x):
    # F.gelu (erf form)
    return 0.5 * x * (1.0 + _erf(x * (1.0 / math.sqrt(2.0))))


def _attention_all_heads(qkv, amask, L):
    """Full softmax attention for all batches and heads in one shot.

    qkv:   (B*L, 3*D_MODEL), rows ordered batch-major.
    amask: (B*L, B*L) block-diagonal 0/-1e30 mask keeping batches independent.
    Returns context (B*L, D_MODEL) and lane-dense probs (B*L, N_HEADS*L).
    """
    n_rows = qkv.shape[0]
    n_blocks = n_rows // L
    ctxs, probs = [], []
    for hd in range(N_HEADS):
        q = qkv[:, hd * DH:(hd + 1) * DH]
        k = qkv[:, D_MODEL + hd * DH:D_MODEL + (hd + 1) * DH]
        v = qkv[:, 2 * D_MODEL + hd * DH:2 * D_MODEL + (hd + 1) * DH]
        s = jax.lax.dot_general(q, k, (((1,), (1,)), ((), ())),
                                preferred_element_type=jnp.float32)
        s = s * ATT_SCALE + amask
        m = jnp.max(s, axis=-1, keepdims=True)
        e = jnp.exp(s - m)
        p = e * pl.reciprocal(jnp.sum(e, axis=-1, keepdims=True), approx=True)
        ctxs.append(jnp.dot(p, v, preferred_element_type=jnp.float32))
        # masked entries of p are exactly 0 -> summing the batch-column blocks
        # packs each batch's (L, L) attention into a lane-dense (B*L, L) tile.
        comp = p[:, 0:L]
        for bb in range(1, n_blocks):
            comp = comp + p[:, bb * L:(bb + 1) * L]
        probs.append(comp)
    return jnp.concatenate(ctxs, axis=-1), jnp.concatenate(probs, axis=-1)


def _encoder_layer(h, amask, L, wqkv, bqkv, wo, bo, w1, b1, w2, b2,
                   n1g, n1b, n2g, n2b):
    # AttentionLayer (fused QKV) + residual + LayerNorm + FFN(1x1 convs, GELU)
    qkv = jnp.dot(h, wqkv, preferred_element_type=jnp.float32) + bqkv
    ctx, attn = _attention_all_heads(qkv, amask, L)
    h = h + jnp.dot(ctx, wo, preferred_element_type=jnp.float32) + bo
    h = _layernorm(h, n1g, n1b)
    y = _gelu(jnp.dot(h, w1, preferred_element_type=jnp.float32) + b1)
    y = jnp.dot(y, w2, preferred_element_type=jnp.float32) + b2
    return _layernorm(h + y, n2g, n2b), attn


def _circular_conv(x, sm, sp, w0, w1, w2, bias):
    # Conv1d(kernel=3, padding=1, padding_mode='circular') as three matmuls.
    # sm/sp are block-diagonal circular-shift matrices, so the circular pad
    # never crosses a batch boundary.
    y = (jnp.dot(jnp.dot(sm, x, preferred_element_type=jnp.float32), w0,
                 preferred_element_type=jnp.float32)
         + jnp.dot(x, w1, preferred_element_type=jnp.float32)
         + jnp.dot(jnp.dot(sp, x, preferred_element_type=jnp.float32), w2,
                   preferred_element_type=jnp.float32))
    if bias is not None:
        y = y + bias
    return y


def _distil(h, sm, sp, w0, w1, w2, bias, bn_g, bn_b, p0, p1, p2):
    # ConvLayer: circular conv -> BatchNorm1d (training batch stats) -> ELU
    #            -> MaxPool1d(kernel=3, stride=2, padding=1)
    y = _circular_conv(h, sm, sp, w0, w1, w2, bias)
    mu = jnp.mean(y, axis=0, keepdims=True)
    var = jnp.mean((y - mu) ** 2, axis=0, keepdims=True)
    y = (y - mu) * jax.lax.rsqrt(var + BN_EPS) * bn_g + bn_b
    y = jnp.where(y > 0, y, jnp.exp(y) - 1.0)          # ELU(alpha=1)
    # MaxPool: p0/p1/p2 are row-selection matrices with clamped indices
    # (max(a,a,b)==max(a,b)), so the pool is 3 matmuls + elementwise max.
    return jnp.maximum(jnp.maximum(jnp.dot(p0, y), jnp.dot(p1, y)),
                       jnp.dot(p2, y))


# ------------------------------ fused stage kernels ------------------------------
def _stage0_kernel(x_ref, pet_ref, tokw_ref, sm_ref, sp_ref, am_ref,
                   wqkv_ref, bqkv_ref, wo_ref, bo_ref, w1_ref, b1_ref,
                   w2_ref, b2_ref, n1g_ref, n1b_ref, n2g_ref, n2b_ref,
                   dcw_ref, dcb_ref, bng_ref, bnb_ref, pool_ref,
                   h_out_ref, attn_ref):
    sm = sm_ref[...]
    sp = sp_ref[...]
    # DataEmbedding: TokenEmbedding (circular conv, no bias) + pos + temporal
    emb = _circular_conv(x_ref[...], sm, sp, tokw_ref[0], tokw_ref[1],
                         tokw_ref[2], None) + pet_ref[...]
    h, attn = _encoder_layer(emb, am_ref[...], SEQ_LEN,
                             wqkv_ref[...], bqkv_ref[...], wo_ref[...], bo_ref[...],
                             w1_ref[...], b1_ref[...], w2_ref[...], b2_ref[...],
                             n1g_ref[...], n1b_ref[...], n2g_ref[...], n2b_ref[...])
    attn_ref[...] = attn
    h_out_ref[...] = _distil(h, sm, sp, dcw_ref[0], dcw_ref[1], dcw_ref[2],
                             dcb_ref[...], bng_ref[...], bnb_ref[...],
                             pool_ref[0], pool_ref[1], pool_ref[2])


def _stage1_kernel(h_ref, sm_ref, sp_ref, am_ref,
                   wqkv_ref, bqkv_ref, wo_ref, bo_ref, w1_ref, b1_ref,
                   w2_ref, b2_ref, n1g_ref, n1b_ref, n2g_ref, n2b_ref,
                   dcw_ref, dcb_ref, bng_ref, bnb_ref, pool_ref,
                   h_out_ref, attn_ref):
    h, attn = _encoder_layer(h_ref[...], am_ref[...], SEQ_LEN // 2,
                             wqkv_ref[...], bqkv_ref[...], wo_ref[...], bo_ref[...],
                             w1_ref[...], b1_ref[...], w2_ref[...], b2_ref[...],
                             n1g_ref[...], n1b_ref[...], n2g_ref[...], n2b_ref[...])
    attn_ref[...] = attn
    h_out_ref[...] = _distil(h, sm_ref[...], sp_ref[...],
                             dcw_ref[0], dcw_ref[1], dcw_ref[2],
                             dcb_ref[...], bng_ref[...], bnb_ref[...],
                             pool_ref[0], pool_ref[1], pool_ref[2])


def _stage2_kernel(h_ref, am_ref,
                   wqkv_ref, bqkv_ref, wo_ref, bo_ref, w1_ref, b1_ref,
                   w2_ref, b2_ref, n1g_ref, n1b_ref, n2g_ref, n2b_ref,
                   ng_ref, nb_ref, rsel_ref, pw_ref, pb_ref,
                   probs_ref, attn_ref):
    h, attn = _encoder_layer(h_ref[...], am_ref[...], SEQ_LEN // 4,
                             wqkv_ref[...], bqkv_ref[...], wo_ref[...], bo_ref[...],
                             w1_ref[...], b1_ref[...], w2_ref[...], b2_ref[...],
                             n1g_ref[...], n1b_ref[...], n2g_ref[...], n2b_ref[...])
    attn_ref[...] = attn
    # final encoder LayerNorm
    z = _layernorm(h, ng_ref[...], nb_ref[...])
    # projection over the per-batch flattened (L*D) features, expressed without
    # an in-kernel reshape: logits[b] = sum_t z[b*L+t] @ W[t*D:(t+1)*D]
    logits = pb_ref[...]
    for t in range(SEQ_LEN // 4):
        logits = logits + jnp.dot(
            jnp.dot(rsel_ref[t], z, preferred_element_type=jnp.float32),
            pw_ref[t], preferred_element_type=jnp.float32)
    # F.softmax (dim=1 for a 2-D tensor) -- exact divide for the final output
    m = jnp.max(logits, axis=-1, keepdims=True)
    e = jnp.exp(logits - m)
    probs_ref[...] = e / jnp.sum(e, axis=-1, keepdims=True)


# ------------------------------ pallas_call glue ------------------------------
def _full_block_spec(shape):
    nd = len(shape)

    def idx(i):
        return (0,) * nd

    return pl.BlockSpec(shape, idx)


def _fused_call(kernel, args, out_shapes):
    args = tuple(jnp.asarray(a, jnp.float32) for a in args)
    return pl.pallas_call(
        kernel,
        out_shape=tuple(jax.ShapeDtypeStruct(s, jnp.float32) for s in out_shapes),
        grid=(1,),
        in_specs=[_full_block_spec(a.shape) for a in args],
        out_specs=tuple(_full_block_spec(s) for s in out_shapes),
        compiler_params=pltpu.CompilerParams(dimension_semantics=("arbitrary",)),
    )(*args)


# ------------------------- constant index matrices -------------------------
def _shift_mats(bsz, L):
    n = bsz * L
    idx = np.arange(n)
    bb, tt = idx // L, idx % L
    sm = np.zeros((n, n), np.float32)
    sp = np.zeros((n, n), np.float32)
    sm[idx, bb * L + (tt - 1) % L] = 1.0   # picks x[t-1] (circular, per batch)
    sp[idx, bb * L + (tt + 1) % L] = 1.0   # picks x[t+1]
    return jnp.asarray(sm), jnp.asarray(sp)


def _attn_mask(bsz, L):
    blk = np.arange(bsz * L) // L
    m = np.where(blk[:, None] == blk[None, :], 0.0, NEG_INF).astype(np.float32)
    return jnp.asarray(m)


def _pool_select(bsz, L):
    lout = (L - 1) // 2 + 1                # MaxPool1d(kernel=3, stride=2, padding=1)
    sel = np.zeros((3, bsz * lout, bsz * L), np.float32)
    for j in range(3):
        for bb in range(bsz):
            for t in range(lout):
                src = min(max(2 * t - 1 + j, 0), L - 1)   # clamp: max(a,a,b)==max(a,b)
                sel[j, bb * lout + t, bb * L + src] = 1.0
    return jnp.asarray(sel)


def _row_select(bsz, L):
    sel = np.zeros((L, bsz, bsz * L), np.float32)
    for t in range(L):
        for bb in range(bsz):
            sel[t, bb, bb * L + t] = 1.0
    return jnp.asarray(sel)


def sinusoid_table(n_pos, d_model):
    position = jnp.arange(n_pos, dtype=jnp.float32)[:, None]
    div_term = jnp.exp(
        jnp.arange(0, d_model, 2, dtype=jnp.float32) * -(math.log(10000.0) / d_model)
    )
    pe = jnp.zeros((n_pos, d_model), jnp.float32)
    pe = pe.at[:, 0::2].set(jnp.sin(position * div_term))
    pe = pe.at[:, 1::2].set(jnp.cos(position * div_term))
    return pe


# ------------------------------ forward pass ------------------------------
def ec_encoder_forward(params, x_enc, x_mark_enc, x_dec=None, x_mark_dec=None):
    bsz, L, _ = x_enc.shape
    # Positional + temporal ('fixed', freq='h') embeddings: tiny frozen-table
    # gathers, precomputed here and folded into the fused stage-0 kernel.
    # TODO(synk): the [month, day, weekday, hour] column layout of x_mark is an
    # assumption about the data pipeline.
    pos = params["pe"][:L][None]
    xm = x_mark_enc.astype(jnp.int32)
    temporal = (jnp.take(params["hour_emb"], xm[:, :, 3], axis=0)
                + jnp.take(params["weekday_emb"], xm[:, :, 2], axis=0)
                + jnp.take(params["day_emb"], xm[:, :, 1], axis=0)
                + jnp.take(params["month_emb"], xm[:, :, 0], axis=0))
    pet = (pos + temporal).reshape(bsz * L, D_MODEL)
    x2 = x_enc.reshape(bsz * L, -1)

    sm8, sp8 = _shift_mats(bsz, L)
    sm4, sp4 = _shift_mats(bsz, L // 2)
    am8, am4, am2 = _attn_mask(bsz, L), _attn_mask(bsz, L // 2), _attn_mask(bsz, L // 4)
    pool8, pool4 = _pool_select(bsz, L), _pool_select(bsz, L // 2)
    rsel = _row_select(bsz, L // 4)

    def layer_args(lp):
        return (lp["wqkv"], lp["bqkv"], lp["wo"], lp["bo"],
                lp["conv1_w"], lp["conv1_b"], lp["conv2_w"], lp["conv2_b"],
                lp["norm1_g"], lp["norm1_b"], lp["norm2_g"], lp["norm2_b"])

    def conv_args(cp):
        return (cp["w"], cp["b"], cp["bn_g"], cp["bn_b"])

    l0, l1, l2 = params["layers"]
    c0, c1 = params["conv_layers"]

    # stage 0: embedding + encoder layer 0 + distil conv 0   (1 pallas_call)
    h1, a0 = _fused_call(
        _stage0_kernel,
        (x2, pet, params["token_w"], sm8, sp8, am8)
        + layer_args(l0) + conv_args(c0) + (pool8,),
        ((bsz * L // 2, D_MODEL), (bsz * L, N_HEADS * L)))

    # stage 1: encoder layer 1 + distil conv 1                (1 pallas_call)
    h2, a1 = _fused_call(
        _stage1_kernel,
        (h1, sm4, sp4, am4) + layer_args(l1) + conv_args(c1) + (pool4,),
        ((bsz * L // 4, D_MODEL), (bsz * L // 2, N_HEADS * (L // 2))))

    # stage 2: encoder layer 2 + final norm + projection + softmax (1 pallas_call)
    probs, a2 = _fused_call(
        _stage2_kernel,
        (h2, am2) + layer_args(l2)
        + (params["norm_g"], params["norm_b"], rsel, params["proj_w"], params["proj_b"]),
        ((bsz, LABEL_LEN), (bsz * L // 4, N_HEADS * (L // 4))))

    def unpack(a, lk):   # (B*lk, H*lk) lane-dense -> (B, H, lk, lk)
        return a.reshape(bsz, lk, N_HEADS, lk).transpose(0, 2, 1, 3)

    return probs, [unpack(a0, L), unpack(a1, L // 2), unpack(a2, L // 4)]


# ------------------------------ parameter init ------------------------------
def init_params(key):
    keys = jax.random.split(key, 64)
    ki = iter(range(64))

    def u(shape, fan_in):
        bound = 1.0 / math.sqrt(fan_in)
        return jax.random.uniform(keys[next(ki)], shape, jnp.float32, -bound, bound)

    p = {}
    # TokenEmbedding conv weight: (kernel tap, Cin, Cout); no bias
    p["token_w"] = u((3, ENC_IN, D_MODEL), 3 * ENC_IN)
    # Frozen sinusoidal tables
    p["pe"] = sinusoid_table(5000, D_MODEL)
    p["month_emb"] = sinusoid_table(13, D_MODEL)
    p["day_emb"] = sinusoid_table(32, D_MODEL)
    p["weekday_emb"] = sinusoid_table(7, D_MODEL)
    p["hour_emb"] = sinusoid_table(24, D_MODEL)

    layers = []
    for _ in range(E_LAYERS):
        lp = {
            "wqkv": u((D_MODEL, 3 * D_MODEL), D_MODEL),      # [Wq | Wk | Wv]
            "bqkv": u((1, 3 * D_MODEL), D_MODEL),
            "wo": u((D_MODEL, D_MODEL), D_MODEL), "bo": u((1, D_MODEL), D_MODEL),
            "conv1_w": u((D_MODEL, D_FF), D_MODEL), "conv1_b": u((1, D_FF), D_MODEL),
            "conv2_w": u((D_FF, D_MODEL), D_FF), "conv2_b": u((1, D_MODEL), D_FF),
            "norm1_g": jnp.ones((1, D_MODEL), jnp.float32),
            "norm1_b": jnp.zeros((1, D_MODEL), jnp.float32),
            "norm2_g": jnp.ones((1, D_MODEL), jnp.float32),
            "norm2_b": jnp.zeros((1, D_MODEL), jnp.float32),
        }
        layers.append(lp)
    p["layers"] = layers

    conv_layers = []
    for _ in range(E_LAYERS - 1):
        cp = {
            "w": u((3, D_MODEL, D_MODEL), 3 * D_MODEL),      # (tap, Cin, Cout)
            "b": u((1, D_MODEL), 3 * D_MODEL),
            "bn_g": jnp.ones((1, D_MODEL), jnp.float32),
            "bn_b": jnp.zeros((1, D_MODEL), jnp.float32),
        }
        conv_layers.append(cp)
    p["conv_layers"] = conv_layers

    p["norm_g"] = jnp.ones((1, D_MODEL), jnp.float32)
    p["norm_b"] = jnp.zeros((1, D_MODEL), jnp.float32)

    proj_in = D_MODEL * SEQ_LEN // 4
    p["proj_w"] = u((proj_in, LABEL_LEN), proj_in).reshape(SEQ_LEN // 4, D_MODEL, LABEL_LEN)
    p["proj_b"] = u((1, LABEL_LEN), proj_in)
    return p


# ------------------------------ main ------------------------------
if __name__ == "__main__":
    key = jax.random.PRNGKey(0)
    kp, kx, k1, k2, k3, k4 = jax.random.split(key, 6)
    params = init_params(kp)

    x_enc = jax.random.normal(kx, (B, SEQ_LEN, ENC_IN), jnp.float32)
    # time-feature marks: [month, day, weekday, hour] (integer-valued, as floats)
    month = jax.random.randint(k1, (B, SEQ_LEN, 1), 0, 13)
    day = jax.random.randint(k2, (B, SEQ_LEN, 1), 0, 32)
    weekday = jax.random.randint(k3, (B, SEQ_LEN, 1), 0, 7)
    hour = jax.random.randint(k4, (B, SEQ_LEN, 1), 0, 24)
    x_mark_enc = jnp.concatenate([month, day, weekday, hour], axis=-1).astype(jnp.float32)

    # decoder inputs are accepted but unused by EC_Encoder.forward
    x_dec = jnp.zeros((B, SEQ_LEN, ENC_IN), jnp.float32)
    x_mark_dec = jnp.zeros((B, SEQ_LEN, 4), jnp.float32)

    fwd = jax.jit(ec_encoder_forward)
    probs, attns = fwd(params, x_enc, x_mark_enc, x_dec, x_mark_dec)
    probs = jax.block_until_ready(probs)
    attns = [jax.block_until_ready(a) for a in attns]

    assert probs.shape == (B, LABEL_LEN)
    assert attns[0].shape == (B, N_HEADS, SEQ_LEN, SEQ_LEN)
    assert attns[1].shape == (B, N_HEADS, SEQ_LEN // 2, SEQ_LEN // 2)
    assert attns[2].shape == (B, N_HEADS, SEQ_LEN // 4, SEQ_LEN // 4)
    assert bool(jnp.all(jnp.isfinite(probs)))
    assert abs(float(jnp.sum(probs)) - B) < 1e-3  # rows of softmax sum to 1
    print("KERNEL_OK")
</pallas_src>

<mosaic_0001>
module attributes {stable_mosaic.version = 11 : i64} {
  func.func @_stage2_kernel(%arg0: i32, %arg1: memref<4x32xf32, #tpu.memory_space<vmem>>, %arg2: memref<4x4xf32, #tpu.memory_space<vmem>>, %arg3: memref<32x96xf32, #tpu.memory_space<vmem>>, %arg4: memref<1x96xf32, #tpu.memory_space<vmem>>, %arg5: memref<32x32xf32, #tpu.memory_space<vmem>>, %arg6: memref<1x32xf32, #tpu.memory_space<vmem>>, %arg7: memref<32x32xf32, #tpu.memory_space<vmem>>, %arg8: memref<1x32xf32, #tpu.memory_space<vmem>>, %arg9: memref<32x32xf32, #tpu.memory_space<vmem>>, %arg10: memref<1x32xf32, #tpu.memory_space<vmem>>, %arg11: memref<1x32xf32, #tpu.memory_space<vmem>>, %arg12: memref<1x32xf32, #tpu.memory_space<vmem>>, %arg13: memref<1x32xf32, #tpu.memory_space<vmem>>, %arg14: memref<1x32xf32, #tpu.memory_space<vmem>>, %arg15: memref<1x32xf32, #tpu.memory_space<vmem>>, %arg16: memref<1x32xf32, #tpu.memory_space<vmem>>, %arg17: memref<2x2x4xf32, #tpu.memory_space<vmem>>, %arg18: memref<2x32x8xf32, #tpu.memory_space<vmem>>, %arg19: memref<1x8xf32, #tpu.memory_space<vmem>>, %arg20: memref<2x8xf32, #tpu.memory_space<vmem>>, %arg21: memref<4x16xf32, #tpu.memory_space<vmem>>) attributes {dimension_semantics = [#tpu.dimension_semantics<arbitrary>], iteration_bounds = array<i64: 1>, scalar_prefetch = 0 : i64, scratch_operands = 0 : i64, tpu.core_type = #tpu.core_type<tc>, window_params = [{pipeline_mode = #tpu.pipeline_mode<synchronous>, transform_indices = @transform_0, window_bounds = array<i64: 4, 32>}, {pipeline_mode = #tpu.pipeline_mode<synchronous>, transform_indices = @transform_1, window_bounds = array<i64: 4, 4>}, {pipeline_mode = #tpu.pipeline_mode<synchronous>, transform_indices = @transform_2, window_bounds = array<i64: 32, 96>}, {pipeline_mode = #tpu.pipeline_mode<synchronous>, transform_indices = @transform_3, window_bounds = array<i64: 1, 96>}, {pipeline_mode = #tpu.pipeline_mode<synchronous>, transform_indices = @transform_4, window_bounds = array<i64: 32, 32>}, {pipeline_mode = #tpu.pipeline_mode<synchronous>, transform_indices = @transform_5, window_bounds = array<i64: 1, 32>}, {pipeline_mode = #tpu.pipeline_mode<synchronous>, transform_indices = @transform_6, window_bounds = array<i64: 32, 32>}, {pipeline_mode = #tpu.pipeline_mode<synchronous>, transform_indices = @transform_7, window_bounds = array<i64: 1, 32>}, {pipeline_mode = #tpu.pipeline_mode<synchronous>, transform_indices = @transform_8, window_bounds = array<i64: 32, 32>}, {pipeline_mode = #tpu.pipeline_mode<synchronous>, transform_indices = @transform_9, window_bounds = array<i64: 1, 32>}, {pipeline_mode = #tpu.pipeline_mode<synchronous>, transform_indices = @transform_10, window_bounds = array<i64: 1, 32>}, {pipeline_mode = #tpu.pipeline_mode<synchronous>, transform_indices = @transform_11, window_bounds = array<i64: 1, 32>}, {pipeline_mode = #tpu.pipeline_mode<synchronous>, transform_indices = @transform_12, window_bounds = array<i64: 1, 32>}, {pipeline_mode = #tpu.pipeline_mode<synchronous>, transform_indices = @transform_13, window_bounds = array<i64: 1, 32>}, {pipeline_mode = #tpu.pipeline_mode<synchronous>, transform_indices = @transform_14, window_bounds = array<i64: 1, 32>}, {pipeline_mode = #tpu.pipeline_mode<synchronous>, transform_indices = @transform_15, window_bounds = array<i64: 1, 32>}, {pipeline_mode = #tpu.pipeline_mode<synchronous>, transform_indices = @transform_16, window_bounds = array<i64: 2, 2, 4>}, {pipeline_mode = #tpu.pipeline_mode<synchronous>, transform_indices = @transform_17, window_bounds = array<i64: 2, 32, 8>}, {pipeline_mode = #tpu.pipeline_mode<synchronous>, transform_indices = @transform_18, window_bounds = array<i64: 1, 8>}, {pipeline_mode = #tpu.pipeline_mode<synchronous>, transform_indices = @transform_19, window_bounds = array<i64: 2, 8>}, {pipeline_mode = #tpu.pipeline_mode<synchronous>, transform_indices = @transform_20, window_bounds = array<i64: 4, 16>}]} {
    %c0 = arith.constant 0 : index
    %c0_0 = arith.constant 0 : index
    %0 = vector.load %arg1[%c0, %c0_0] : memref<4x32xf32, #tpu.memory_space<vmem>>, vector<4x32xf32>
    %c0_1 = arith.constant 0 : index
    %c0_2 = arith.constant 0 : index
    %1 = vector.load %arg2[%c0_1, %c0_2] : memref<4x4xf32, #tpu.memory_space<vmem>>, vector<4x4xf32>
    %c0_3 = arith.constant 0 : index
    %c0_4 = arith.constant 0 : index
    %2 = vector.load %arg3[%c0_3, %c0_4] : memref<32x96xf32, #tpu.memory_space<vmem>>, vector<32x96xf32>
    %c0_5 = arith.constant 0 : index
    %c0_6 = arith.constant 0 : index
    %3 = vector.load %arg4[%c0_5, %c0_6] : memref<1x96xf32, #tpu.memory_space<vmem>>, vector<1x96xf32>
    %c0_7 = arith.constant 0 : index
    %c0_8 = arith.constant 0 : index
    %4 = vector.load %arg5[%c0_7, %c0_8] : memref<32x32xf32, #tpu.memory_space<vmem>>, vector<32x32xf32>
    %c0_9 = arith.constant 0 : index
    %c0_10 = arith.constant 0 : index
    %5 = vector.load %arg6[%c0_9, %c0_10] : memref<1x32xf32, #tpu.memory_space<vmem>>, vector<1x32xf32>
    %c0_11 = arith.constant 0 : index
    %c0_12 = arith.constant 0 : index
    %6 = vector.load %arg7[%c0_11, %c0_12] : memref<32x32xf32, #tpu.memory_space<vmem>>, vector<32x32xf32>
    %c0_13 = arith.constant 0 : index
    %c0_14 = arith.constant 0 : index
    %7 = vector.load %arg8[%c0_13, %c0_14] : memref<1x32xf32, #tpu.memory_space<vmem>>, vector<1x32xf32>
    %c0_15 = arith.constant 0 : index
    %c0_16 = arith.constant 0 : index
    %8 = vector.load %arg9[%c0_15, %c0_16] : memref<32x32xf32, #tpu.memory_space<vmem>>, vector<32x32xf32>
    %c0_17 = arith.constant 0 : index
    %c0_18 = arith.constant 0 : index
    %9 = vector.load %arg10[%c0_17, %c0_18] : memref<1x32xf32, #tpu.memory_space<vmem>>, vector<1x32xf32>
    %c0_19 = arith.constant 0 : index
    %c0_20 = arith.constant 0 : index
    %10 = vector.load %arg11[%c0_19, %c0_20] : memref<1x32xf32, #tpu.memory_space<vmem>>, vector<1x32xf32>
    %c0_21 = arith.constant 0 : index
    %c0_22 = arith.constant 0 : index
    %11 = vector.load %arg12[%c0_21, %c0_22] : memref<1x32xf32, #tpu.memory_space<vmem>>, vector<1x32xf32>
    %c0_23 = arith.constant 0 : index
    %c0_24 = arith.constant 0 : index
    %12 = vector.load %arg13[%c0_23, %c0_24] : memref<1x32xf32, #tpu.memory_space<vmem>>, vector<1x32xf32>
    %c0_25 = arith.constant 0 : index
    %c0_26 = arith.constant 0 : index
    %13 = vector.load %arg14[%c0_25, %c0_26] : memref<1x32xf32, #tpu.memory_space<vmem>>, vector<1x32xf32>
    %cst = arith.constant dense<0.000000e+00> : vector<4x96xf32>
    %14 = tpu.matmul %0, %2, %cst {dimension_numbers = #tpu.dot_dimension_numbers<[1], [0], [0], [1], [0, 0, 1, 1], [], []>} : vector<4x32xf32>, vector<32x96xf32>, vector<4x96xf32> -> vector<4x96xf32>
    %15 = vector.broadcast %3 : vector<1x96xf32> to vector<4x96xf32>
    %16 = arith.addf %14, %15 : vector<4x96xf32>
    %17 = vector.extract_strided_slice %16 {offsets = [0, 0], sizes = [4, 4], strides = [1, 1]} : vector<4x96xf32> to vector<4x4xf32>
    %18 = vector.extract_strided_slice %16 {offsets = [0, 32], sizes = [4, 4], strides = [1, 1]} : vector<4x96xf32> to vector<4x4xf32>
    %19 = vector.extract_strided_slice %16 {offsets = [0, 64], sizes = [4, 4], strides = [1, 1]} : vector<4x96xf32> to vector<4x4xf32>
    %cst_27 = arith.constant dense<0.000000e+00> : vector<4x4xf32>
    %20 = tpu.matmul %17, %18, %cst_27 {dimension_numbers = #tpu.dot_dimension_numbers<[1], [1], [0], [0], [0, 0, 1, 0], [], []>} : vector<4x4xf32>, vector<4x4xf32>, vector<4x4xf32> -> vector<4x4xf32>
    %cst_28 = arith.constant 5.000000e-01 : f32
    %21 = vector.broadcast %cst_28 : f32 to vector<4x4xf32>
    %22 = arith.mulf %20, %21 : vector<4x4xf32>
    %23 = arith.addf %22, %1 : vector<4x4xf32>
    %cst_29 = arith.constant dense<0xFF800000> : vector<4xf32>
    %24 = vector.multi_reduction <maximumf>, %23, %cst_29 [1] : vector<4x4xf32> to vector<4xf32>
    %25 = vector.shape_cast %24 : vector<4xf32> to vector<4x1xf32>
    %26 = vector.broadcast %25 : vector<4x1xf32> to vector<4x4xf32>
    %27 = arith.subf %23, %26 : vector<4x4xf32>
    %28 = math.exp %27 : vector<4x4xf32>
    %cst_30 = arith.constant dense<0.000000e+00> : vector<4xf32>
    %29 = vector.multi_reduction <add>, %28, %cst_30 [1] : vector<4x4xf32> to vector<4xf32>
    %30 = vector.shape_cast %29 : vector<4xf32> to vector<4x1xf32>
    %31 = tpu.reciprocal %30 {approx = true} : vector<4x1xf32> -> vector<4x1xf32>
    %32 = vector.broadcast %31 : vector<4x1xf32> to vector<4x4xf32>
    %33 = arith.mulf %28, %32 : vector<4x4xf32>
    %cst_31 = arith.constant dense<0.000000e+00> : vector<4x4xf32>
    %34 = tpu.matmul %33, %19, %cst_31 {dimension_numbers = #tpu.dot_dimension_numbers<[1], [0], [0], [1], [0, 0, 1, 1], [], []>} : vector<4x4xf32>, vector<4x4xf32>, vector<4x4xf32> -> vector<4x4xf32>
    %35 = vector.extract_strided_slice %33 {offsets = [0, 0], sizes = [4, 2], strides = [1, 1]} : vector<4x4xf32> to vector<4x2xf32>
    %36 = vector.extract_strided_slice %33 {offsets = [0, 2], sizes = [4, 2], strides = [1, 1]} : vector<4x4xf32> to vector<4x2xf32>
    %37 = arith.addf %35, %36 : vector<4x2xf32>
    %38 = vector.extract_strided_slice %16 {offsets = [0, 4], sizes = [4, 4], strides = [1, 1]} : vector<4x96xf32> to vector<4x4xf32>
    %39 = vector.extract_strided_slice %16 {offsets = [0, 36], sizes = [4, 4], strides = [1, 1]} : vector<4x96xf32> to vector<4x4xf32>
    %40 = vector.extract_strided_slice %16 {offsets = [0, 68], sizes = [4, 4], strides = [1, 1]} : vector<4x96xf32> to vector<4x4xf32>
    %cst_32 = arith.constant dense<0.000000e+00> : vector<4x4xf32>
    %41 = tpu.matmul %38, %39, %cst_32 {dimension_numbers = #tpu.dot_dimension_numbers<[1], [1], [0], [0], [0, 0, 1, 0], [], []>} : vector<4x4xf32>, vector<4x4xf32>, vector<4x4xf32> -> vector<4x4xf32>
    %cst_33 = arith.constant 5.000000e-01 : f32
    %42 = vector.broadcast %cst_33 : f32 to vector<4x4xf32>
    %43 = arith.mulf %41, %42 : vector<4x4xf32>
    %44 = arith.addf %43, %1 : vector<4x4xf32>
    %cst_34 = arith.constant dense<0xFF800000> : vector<4xf32>
    %45 = vector.multi_reduction <maximumf>, %44, %cst_34 [1] : vector<4x4xf32> to vector<4xf32>
    %46 = vector.shape_cast %45 : vector<4xf32> to vector<4x1xf32>
    %47 = vector.broadcast %46 : vector<4x1xf32> to vector<4x4xf32>
    %48 = arith.subf %44, %47 : vector<4x4xf32>
    %49 = math.exp %48 : vector<4x4xf32>
    %cst_35 = arith.constant dense<0.000000e+00> : vector<4xf32>
    %50 = vector.multi_reduction <add>, %49, %cst_35 [1] : vector<4x4xf32> to vector<4xf32>
    %51 = vector.shape_cast %50 : vector<4xf32> to vector<4x1xf32>
    %52 = tpu.reciprocal %51 {approx = true} : vector<4x1xf32> -> vector<4x1xf32>
    %53 = vector.broadcast %52 : vector<4x1xf32> to vector<4x4xf32>
    %54 = arith.mulf %49, %53 : vector<4x4xf32>
    %cst_36 = arith.constant dense<0.000000e+00> : vector<4x4xf32>
    %55 = tpu.matmul %54, %40, %cst_36 {dimension_numbers = #tpu.dot_dimension_numbers<[1], [0], [0], [1], [0, 0, 1, 1], [], []>} : vector<4x4xf32>, vector<4x4xf32>, vector<4x4xf32> -> vector<4x4xf32>
    %56 = vector.extract_strided_slice %54 {offsets = [0, 0], sizes = [4, 2], strides = [1, 1]} : vector<4x4xf32> to vector<4x2xf32>
    %57 = vector.extract_strided_slice %54 {offsets = [0, 2], sizes = [4, 2], strides = [1, 1]} : vector<4x4xf32> to vector<4x2xf32>
    %58 = arith.addf %56, %57 : vector<4x2xf32>
    %59 = vector.extract_strided_slice %16 {offsets = [0, 8], sizes = [4, 4], strides = [1, 1]} : vector<4x96xf32> to vector<4x4xf32>
    %60 = vector.extract_strided_slice %16 {offsets = [0, 40], sizes = [4, 4], strides = [1, 1]} : vector<4x96xf32> to vector<4x4xf32>
    %61 = vector.extract_strided_slice %16 {offsets = [0, 72], sizes = [4, 4], strides = [1, 1]} : vector<4x96xf32> to vector<4x4xf32>
    %cst_37 = arith.constant dense<0.000000e+00> : vector<4x4xf32>
    %62 = tpu.matmul %59, %60, %cst_37 {dimension_numbers = #tpu.dot_dimension_numbers<[1], [1], [0], [0], [0, 0, 1, 0], [], []>} : vector<4x4xf32>, vector<4x4xf32>, vector<4x4xf32> -> vector<4x4xf32>
    %cst_38 = arith.constant 5.000000e-01 : f32
    %63 = vector.broadcast %cst_38 : f32 to vector<4x4xf32>
    %64 = arith.mulf %62, %63 : vector<4x4xf32>
    %65 = arith.addf %64, %1 : vector<4x4xf32>
    %cst_39 = arith.constant dense<0xFF800000> : vector<4xf32>
    %66 = vector.multi_reduction <maximumf>, %65, %cst_39 [1] : vector<4x4xf32> to vector<4xf32>
    %67 = vector.shape_cast %66 : vector<4xf32> to vector<4x1xf32>
    %68 = vector.broadcast %67 : vector<4x1xf32> to vector<4x4xf32>
    %69 = arith.subf %65, %68 : vector<4x4xf32>
    %70 = math.exp %69 : vector<4x4xf32>
    %cst_40 = arith.constant dense<0.000000e+00> : vector<4xf32>
    %71 = vector.multi_reduction <add>, %70, %cst_40 [1] : vector<4x4xf32> to vector<4xf32>
    %72 = vector.shape_cast %71 : vector<4xf32> to vector<4x1xf32>
    %73 = tpu.reciprocal %72 {approx = true} : vector<4x1xf32> -> vector<4x1xf32>
    %74 = vector.broadcast %73 : vector<4x1xf32> to vector<4x4xf32>
    %75 = arith.mulf %70, %74 : vector<4x4xf32>
    %cst_41 = arith.constant dense<0.000000e+00> : vector<4x4xf32>
    %76 = tpu.matmul %75, %61, %cst_41 {dimension_numbers = #tpu.dot_dimension_numbers<[1], [0], [0], [1], [0, 0, 1, 1], [], []>} : vector<4x4xf32>, vector<4x4xf32>, vector<4x4xf32> -> vector<4x4xf32>
    %77 = vector.extract_strided_slice %75 {offsets = [0, 0], sizes = [4, 2], strides = [1, 1]} : vector<4x4xf32> to vector<4x2xf32>
    %78 = vector.extract_strided_slice %75 {offsets = [0, 2], sizes = [4, 2], strides = [1, 1]} : vector<4x4xf32> to vector<4x2xf32>
    %79 = arith.addf %77, %78 : vector<4x2xf32>
    %80 = vector.extract_strided_slice %16 {offsets = [0, 12], sizes = [4, 4], strides = [1, 1]} : vector<4x96xf32> to vector<4x4xf32>
    %81 = vector.extract_strided_slice %16 {offsets = [0, 44], sizes = [4, 4], strides = [1, 1]} : vector<4x96xf32> to vector<4x4xf32>
    %82 = vector.extract_strided_slice %16 {offsets = [0, 76], sizes = [4, 4], strides = [1, 1]} : vector<4x96xf32> to vector<4x4xf32>
    %cst_42 = arith.constant dense<0.000000e+00> : vector<4x4xf32>
    %83 = tpu.matmul %80, %81, %cst_42 {dimension_numbers = #tpu.dot_dimension_numbers<[1], [1], [0], [0], [0, 0, 1, 0], [], []>} : vector<4x4xf32>, vector<4x4xf32>, vector<4x4xf32> -> vector<4x4xf32>
    %cst_43 = arith.constant 5.000000e-01 : f32
    %84 = vector.broadcast %cst_43 : f32 to vector<4x4xf32>
    %85 = arith.mulf %83, %84 : vector<4x4xf32>
    %86 = arith.addf %85, %1 : vector<4x4xf32>
    %cst_44 = arith.constant dense<0xFF800000> : vector<4xf32>
    %87 = vector.multi_reduction <maximumf>, %86, %cst_44 [1] : vector<4x4xf32> to vector<4xf32>
    %88 = vector.shape_cast %87 : vector<4xf32> to vector<4x1xf32>
    %89 = vector.broadcast %88 : vector<4x1xf32> to vector<4x4xf32>
    %90 = arith.subf %86, %89 : vector<4x4xf32>
    %91 = math.exp %90 : vector<4x4xf32>
    %cst_45 = arith.constant dense<0.000000e+00> : vector<4xf32>
    %92 = vector.multi_reduction <add>, %91, %cst_45 [1] : vector<4x4xf32> to vector<4xf32>
    %93 = vector.shape_cast %92 : vector<4xf32> to vector<4x1xf32>
    %94 = tpu.reciprocal %93 {approx = true} : vector<4x1xf32> -> vector<4x1xf32>
    %95 = vector.broadcast %94 : vector<4x1xf32> to vector<4x4xf32>
    %96 = arith.mulf %91, %95 : vector<4x4xf32>
    %cst_46 = arith.constant dense<0.000000e+00> : vector<4x4xf32>
    %97 = tpu.matmul %96, %82, %cst_46 {dimension_numbers = #tpu.dot_dimension_numbers<[1], [0], [0], [1], [0, 0, 1, 1], [], []>} : vector<4x4xf32>, vector<4x4xf32>, vector<4x4xf32> -> vector<4x4xf32>
    %98 = vector.extract_strided_slice %96 {offsets = [0, 0], sizes = [4, 2], strides = [1, 1]} : vector<4x4xf32> to vector<4x2xf32>
    %99 = vector.extract_strided_slice %96 {offsets = [0, 2], sizes = [4, 2], strides = [1, 1]} : vector<4x4xf32> to vector<4x2xf32>
    %100 = arith.addf %98, %99 : vector<4x2xf32>
    %101 = vector.extract_strided_slice %16 {offsets = [0, 16], sizes = [4, 4], strides = [1, 1]} : vector<4x96xf32> to vector<4x4xf32>
    %102 = vector.extract_strided_slice %16 {offsets = [0, 48], sizes = [4, 4], strides = [1, 1]} : vector<4x96xf32> to vector<4x4xf32>
    %103 = vector.extract_strided_slice %16 {offsets = [0, 80], sizes = [4, 4], strides = [1, 1]} : vector<4x96xf32> to vector<4x4xf32>
    %cst_47 = arith.constant dense<0.000000e+00> : vector<4x4xf32>
    %104 = tpu.matmul %101, %102, %cst_47 {dimension_numbers = #tpu.dot_dimension_numbers<[1], [1], [0], [0], [0, 0, 1, 0], [], []>} : vector<4x4xf32>, vector<4x4xf32>, vector<4x4xf32> -> vector<4x4xf32>
    %cst_48 = arith.constant 5.000000e-01 : f32
    %105 = vector.broadcast %cst_48 : f32 to vector<4x4xf32>
    %106 = arith.mulf %104, %105 : vector<4x4xf32>
    %107 = arith.addf %106, %1 : vector<4x4xf32>
    %cst_49 = arith.constant dense<0xFF800000> : vector<4xf32>
    %108 = vector.multi_reduction <maximumf>, %107, %cst_49 [1] : vector<4x4xf32> to vector<4xf32>
    %109 = vector.shape_cast %108 : vector<4xf32> to vector<4x1xf32>
    %110 = vector.broadcast %109 : vector<4x1xf32> to vector<4x4xf32>
    %111 = arith.subf %107, %110 : vector<4x4xf32>
    %112 = math.exp %111 : vector<4x4xf32>
    %cst_50 = arith.constant dense<0.000000e+00> : vector<4xf32>
    %113 = vector.multi_reduction <add>, %112, %cst_50 [1] : vector<4x4xf32> to vector<4xf32>
    %114 = vector.shape_cast %113 : vector<4xf32> to vector<4x1xf32>
    %115 = tpu.reciprocal %114 {approx = true} : vector<4x1xf32> -> vector<4x1xf32>
    %116 = vector.broadcast %115 : vector<4x1xf32> to vector<4x4xf32>
    %117 = arith.mulf %112, %116 : vector<4x4xf32>
    %cst_51 = arith.constant dense<0.000000e+00> : vector<4x4xf32>
    %118 = tpu.matmul %117, %103, %cst_51 {dimension_numbers = #tpu.dot_dimension_numbers<[1], [0], [0], [1], [0, 0, 1, 1], [], []>} : vector<4x4xf32>, vector<4x4xf32>, vector<4x4xf32> -> vector<4x4xf32>
    %119 = vector.extract_strided_slice %117 {offsets = [0, 0], sizes = [4, 2], strides = [1, 1]} : vector<4x4xf32> to vector<4x2xf32>
    %120 = vector.extract_strided_slice %117 {offsets = [0, 2], sizes = [4, 2], strides = [1, 1]} : vector<4x4xf32> to vector<4x2xf32>
    %121 = arith.addf %119, %120 : vector<4x2xf32>
    %122 = vector.extract_strided_slice %16 {offsets = [0, 20], sizes = [4, 4], strides = [1, 1]} : vector<4x96xf32> to vector<4x4xf32>
    %123 = vector.extract_strided_slice %16 {offsets = [0, 52], sizes = [4, 4], strides = [1, 1]} : vector<4x96xf32> to vector<4x4xf32>
    %124 = vector.extract_strided_slice %16 {offsets = [0, 84], sizes = [4, 4], strides = [1, 1]} : vector<4x96xf32> to vector<4x4xf32>
    %cst_52 = arith.constant dense<0.000000e+00> : vector<4x4xf32>
    %125 = tpu.matmul %122, %123, %cst_52 {dimension_numbers = #tpu.dot_dimension_numbers<[1], [1], [0], [0], [0, 0, 1, 0], [], []>} : vector<4x4xf32>, vector<4x4xf32>, vector<4x4xf32> -> vector<4x4xf32>
    %cst_53 = arith.constant 5.000000e-01 : f32
    %126 = vector.broadcast %cst_53 : f32 to vector<4x4xf32>
    %127 = arith.mulf %125, %126 : vector<4x4xf32>
    %128 = arith.addf %127, %1 : vector<4x4xf32>
    %cst_54 = arith.constant dense<0xFF800000> : vector<4xf32>
    %129 = vector.multi_reduction <maximumf>, %128, %cst_54 [1] : vector<4x4xf32> to vector<4xf32>
    %130 = vector.shape_cast %129 : vector<4xf32> to vector<4x1xf32>
    %131 = vector.broadcast %130 : vector<4x1xf32> to vector<4x4xf32>
    %132 = arith.subf %128, %131 : vector<4x4xf32>
    %133 = math.exp %132 : vector<4x4xf32>
    %cst_55 = arith.constant dense<0.000000e+00> : vector<4xf32>
    %134 = vector.multi_reduction <add>, %133, %cst_55 [1] : vector<4x4xf32> to vector<4xf32>
    %135 = vector.shape_cast %134 : vector<4xf32> to vector<4x1xf32>
    %136 = tpu.reciprocal %135 {approx = true} : vector<4x1xf32> -> vector<4x1xf32>
    %137 = vector.broadcast %136 : vector<4x1xf32> to vector<4x4xf32>
    %138 = arith.mulf %133, %137 : vector<4x4xf32>
    %cst_56 = arith.constant dense<0.000000e+00> : vector<4x4xf32>
    %139 = tpu.matmul %138, %124, %cst_56 {dimension_numbers = #tpu.dot_dimension_numbers<[1], [0], [0], [1], [0, 0, 1, 1], [], []>} : vector<4x4xf32>, vector<4x4xf32>, vector<4x4xf32> -> vector<4x4xf32>
    %140 = vector.extract_strided_slice %138 {offsets = [0, 0], sizes = [4, 2], strides = [1, 1]} : vector<4x4xf32> to vector<4x2xf32>
    %141 = vector.extract_strided_slice %138 {offsets = [0, 2], sizes = [4, 2], strides = [1, 1]} : vector<4x4xf32> to vector<4x2xf32>
    %142 = arith.addf %140, %141 : vector<4x2xf32>
    %143 = vector.extract_strided_slice %16 {offsets = [0, 24], sizes = [4, 4], strides = [1, 1]} : vector<4x96xf32> to vector<4x4xf32>
    %144 = vector.extract_strided_slice %16 {offsets = [0, 56], sizes = [4, 4], strides = [1, 1]} : vector<4x96xf32> to vector<4x4xf32>
    %145 = vector.extract_strided_slice %16 {offsets = [0, 88], sizes = [4, 4], strides = [1, 1]} : vector<4x96xf32> to vector<4x4xf32>
    %cst_57 = arith.constant dense<0.000000e+00> : vector<4x4xf32>
    %146 = tpu.matmul %143, %144, %cst_57 {dimension_numbers = #tpu.dot_dimension_numbers<[1], [1], [0], [0], [0, 0, 1, 0], [], []>} : vector<4x4xf32>, vector<4x4xf32>, vector<4x4xf32> -> vector<4x4xf32>
    %cst_58 = arith.constant 5.000000e-01 : f32
    %147 = vector.broadcast %cst_58 : f32 to vector<4x4xf32>
    %148 = arith.mulf %146, %147 : vector<4x4xf32>
    %149 = arith.addf %148, %1 : vector<4x4xf32>
    %cst_59 = arith.constant dense<0xFF800000> : vector<4xf32>
    %150 = vector.multi_reduction <maximumf>, %149, %cst_59 [1] : vector<4x4xf32> to vector<4xf32>
    %151 = vector.shape_cast %150 : vector<4xf32> to vector<4x1xf32>
    %152 = vector.broadcast %151 : vector<4x1xf32> to vector<4x4xf32>
    %153 = arith.subf %149, %152 : vector<4x4xf32>
    %154 = math.exp %153 : vector<4x4xf32>
    %cst_60 = arith.constant dense<0.000000e+00> : vector<4xf32>
    %155 = vector.multi_reduction <add>, %154, %cst_60 [1] : vector<4x4xf32> to vector<4xf32>
    %156 = vector.shape_cast %155 : vector<4xf32> to vector<4x1xf32>
    %157 = tpu.reciprocal %156 {approx = true} : vector<4x1xf32> -> vector<4x1xf32>
    %158 = vector.broadcast %157 : vector<4x1xf32> to vector<4x4xf32>
    %159 = arith.mulf %154, %158 : vector<4x4xf32>
    %cst_61 = arith.constant dense<0.000000e+00> : vector<4x4xf32>
    %160 = tpu.matmul %159, %145, %cst_61 {dimension_numbers = #tpu.dot_dimension_numbers<[1], [0], [0], [1], [0, 0, 1, 1], [], []>} : vector<4x4xf32>, vector<4x4xf32>, vector<4x4xf32> -> vector<4x4xf32>
    %161 = vector.extract_strided_slice %159 {offsets = [0, 0], sizes = [4, 2], strides = [1, 1]} : vector<4x4xf32> to vector<4x2xf32>
    %162 = vector.extract_strided_slice %159 {offsets = [0, 2], sizes = [4, 2], strides = [1, 1]} : vector<4x4xf32> to vector<4x2xf32>
    %163 = arith.addf %161, %162 : vector<4x2xf32>
    %164 = vector.extract_strided_slice %16 {offsets = [0, 28], sizes = [4, 4], strides = [1, 1]} : vector<4x96xf32> to vector<4x4xf32>
    %165 = vector.extract_strided_slice %16 {offsets = [0, 60], sizes = [4, 4], strides = [1, 1]} : vector<4x96xf32> to vector<4x4xf32>
    %166 = vector.extract_strided_slice %16 {offsets = [0, 92], sizes = [4, 4], strides = [1, 1]} : vector<4x96xf32> to vector<4x4xf32>
    %cst_62 = arith.constant dense<0.000000e+00> : vector<4x4xf32>
    %167 = tpu.matmul %164, %165, %cst_62 {dimension_numbers = #tpu.dot_dimension_numbers<[1], [1], [0], [0], [0, 0, 1, 0], [], []>} : vector<4x4xf32>, vector<4x4xf32>, vector<4x4xf32> -> vector<4x4xf32>
    %cst_63 = arith.constant 5.000000e-01 : f32
    %168 = vector.broadcast %cst_63 : f32 to vector<4x4xf32>
    %169 = arith.mulf %167, %168 : vector<4x4xf32>
    %170 = arith.addf %169, %1 : vector<4x4xf32>
    %cst_64 = arith.constant dense<0xFF800000> : vector<4xf32>
    %171 = vector.multi_reduction <maximumf>, %170, %cst_64 [1] : vector<4x4xf32> to vector<4xf32>
    %172 = vector.shape_cast %171 : vector<4xf32> to vector<4x1xf32>
    %173 = vector.broadcast %172 : vector<4x1xf32> to vector<4x4xf32>
    %174 = arith.subf %170, %173 : vector<4x4xf32>
    %175 = math.exp %174 : vector<4x4xf32>
    %cst_65 = arith.constant dense<0.000000e+00> : vector<4xf32>
    %176 = vector.multi_reduction <add>, %175, %cst_65 [1] : vector<4x4xf32> to vector<4xf32>
    %177 = vector.shape_cast %176 : vector<4xf32> to vector<4x1xf32>
    %178 = tpu.reciprocal %177 {approx = true} : vector<4x1xf32> -> vector<4x1xf32>
    %179 = vector.broadcast %178 : vector<4x1xf32> to vector<4x4xf32>
    %180 = arith.mulf %175, %179 : vector<4x4xf32>
    %cst_66 = arith.constant dense<0.000000e+00> : vector<4x4xf32>
    %181 = tpu.matmul %180, %166, %cst_66 {dimension_numbers = #tpu.dot_dimension_numbers<[1], [0], [0], [1], [0, 0, 1, 1], [], []>} : vector<4x4xf32>, vector<4x4xf32>, vector<4x4xf32> -> vector<4x4xf32>
    %182 = vector.extract_strided_slice %180 {offsets = [0, 0], sizes = [4, 2], strides = [1, 1]} : vector<4x4xf32> to vector<4x2xf32>
    %183 = vector.extract_strided_slice %180 {offsets = [0, 2], sizes = [4, 2], strides = [1, 1]} : vector<4x4xf32> to vector<4x2xf32>
    %184 = arith.addf %182, %183 : vector<4x2xf32>
    %185 = tpu.concatenate %34, %55, %76, %97, %118, %139, %160, %181 in 1 : vector<4x4xf32>, vector<4x4xf32>, vector<4x4xf32>, vector<4x4xf32>, vector<4x4xf32>, vector<4x4xf32>, vector<4x4xf32>, vector<4x4xf32> -> vector<4x32xf32>
    %186 = tpu.concatenate %37, %58, %79, %100, %121, %142, %163, %184 in 1 : vector<4x2xf32>, vector<4x2xf32>, vector<4x2xf32>, vector<4x2xf32>, vector<4x2xf32>, vector<4x2xf32>, vector<4x2xf32>, vector<4x2xf32> -> vector<4x16xf32>
    %cst_67 = arith.constant dense<0.000000e+00> : vector<4x32xf32>
    %187 = tpu.matmul %185, %4, %cst_67 {dimension_numbers = #tpu.dot_dimension_numbers<[1], [0], [0], [1], [0, 0, 1, 1], [], []>} : vector<4x32xf32>, vector<32x32xf32>, vector<4x32xf32> -> vector<4x32xf32>
    %188 = arith.addf %0, %187 : vector<4x32xf32>
    %189 = vector.broadcast %5 : vector<1x32xf32> to vector<4x32xf32>
    %190 = arith.addf %188, %189 : vector<4x32xf32>
    %cst_68 = arith.constant dense<0.000000e+00> : vector<4xf32>
    %191 = vector.multi_reduction <add>, %190, %cst_68 [1] : vector<4x32xf32> to vector<4xf32>
    %192 = vector.shape_cast %191 : vector<4xf32> to vector<4x1xf32>
    %cst_69 = arith.constant 3.200000e+01 : f32
    %193 = vector.broadcast %cst_69 : f32 to vector<4x1xf32>
    %194 = arith.divf %192, %193 : vector<4x1xf32>
    %195 = vector.broadcast %194 : vector<4x1xf32> to vector<4x32xf32>
    %196 = arith.subf %190, %195 : vector<4x32xf32>
    %197 = arith.mulf %196, %196 : vector<4x32xf32>
    %cst_70 = arith.constant dense<0.000000e+00> : vector<4xf32>
    %198 = vector.multi_reduction <add>, %197, %cst_70 [1] : vector<4x32xf32> to vector<4xf32>
    %199 = vector.shape_cast %198 : vector<4xf32> to vector<4x1xf32>
    %cst_71 = arith.constant 3.200000e+01 : f32
    %200 = vector.broadcast %cst_71 : f32 to vector<4x1xf32>
    %201 = arith.divf %199, %200 : vector<4x1xf32>
    %202 = vector.broadcast %194 : vector<4x1xf32> to vector<4x32xf32>
    %203 = arith.subf %190, %202 : vector<4x32xf32>
    %cst_72 = arith.constant 9.99999974E-6 : f32
    %204 = vector.broadcast %cst_72 : f32 to vector<4x1xf32>
    %205 = arith.addf %201, %204 : vector<4x1xf32>
    %206 = math.rsqrt %205 : vector<4x1xf32>
    %207 = vector.broadcast %206 : vector<4x1xf32> to vector<4x32xf32>
    %208 = arith.mulf %203, %207 : vector<4x32xf32>
    %209 = vector.broadcast %10 : vector<1x32xf32> to vector<4x32xf32>
    %210 = arith.mulf %208, %209 : vector<4x32xf32>
    %211 = vector.broadcast %11 : vector<1x32xf32> to vector<4x32xf32>
    %212 = arith.addf %210, %211 : vector<4x32xf32>
    %cst_73 = arith.constant dense<0.000000e+00> : vector<4x32xf32>
    %213 = tpu.matmul %212, %6, %cst_73 {dimension_numbers = #tpu.dot_dimension_numbers<[1], [0], [0], [1], [0, 0, 1, 1], [], []>} : vector<4x32xf32>, vector<32x32xf32>, vector<4x32xf32> -> vector<4x32xf32>
    %214 = vector.broadcast %7 : vector<1x32xf32> to vector<4x32xf32>
    %215 = arith.addf %213, %214 : vector<4x32xf32>
    %cst_74 = arith.constant 5.000000e-01 : f32
    %216 = vector.broadcast %cst_74 : f32 to vector<4x32xf32>
    %217 = arith.mulf %216, %215 : vector<4x32xf32>
    %cst_75 = arith.constant 0.707106769 : f32
    %218 = vector.broadcast %cst_75 : f32 to vector<4x32xf32>
    %219 = arith.mulf %215, %218 : vector<4x32xf32>
    %220 = math.absf %219 : vector<4x32xf32>
    %cst_76 = arith.constant 0.327591091 : f32
    %221 = vector.broadcast %cst_76 : f32 to vector<4x32xf32>
    %222 = arith.mulf %221, %220 : vector<4x32xf32>
    %cst_77 = arith.constant 1.000000e+00 : f32
    %223 = vector.broadcast %cst_77 : f32 to vector<4x32xf32>
    %224 = arith.addf %223, %222 : vector<4x32xf32>
    %cst_78 = arith.constant 1.000000e+00 : f32
    %225 = vector.broadcast %cst_78 : f32 to vector<4x32xf32>
    %226 = arith.divf %225, %224 : vector<4x32xf32>
    %cst_79 = arith.constant 1.06140542 : f32
    %227 = vector.broadcast %cst_79 : f32 to vector<4x32xf32>
    %228 = arith.mulf %227, %226 : vector<4x32xf32>
    %cst_80 = arith.constant 1.45315206 : f32
    %229 = vector.broadcast %cst_80 : f32 to vector<4x32xf32>
    %230 = arith.subf %228, %229 : vector<4x32xf32>
    %231 = arith.mulf %230, %226 : vector<4x32xf32>
    %cst_81 = arith.constant 1.42141378 : f32
    %232 = vector.broadcast %cst_81 : f32 to vector<4x32xf32>
    %233 = arith.addf %231, %232 : vector<4x32xf32>
    %234 = arith.mulf %233, %226 : vector<4x32xf32>
    %cst_82 = arith.constant 0.284496725 : f32
    %235 = vector.broadcast %cst_82 : f32 to vector<4x32xf32>
    %236 = arith.subf %234, %235 : vector<4x32xf32>
    %237 = arith.mulf %236, %226 : vector<4x32xf32>
    %cst_83 = arith.constant 0.254829586 : f32
    %238 = vector.broadcast %cst_83 : f32 to vector<4x32xf32>
    %239 = arith.addf %237, %238 : vector<4x32xf32>
    %240 = arith.mulf %239, %226 : vector<4x32xf32>
    %cst_84 = arith.constant 0.000000e+00 : f32
    %241 = vector.broadcast %cst_84 : f32 to vector<4x32xf32>
    %242 = arith.subf %241, %219 : vector<4x32xf32>
    %243 = arith.mulf %242, %219 : vector<4x32xf32>
    %244 = math.exp %243 : vector<4x32xf32>
    %245 = arith.mulf %240, %244 : vector<4x32xf32>
    %cst_85 = arith.constant 1.000000e+00 : f32
    %246 = vector.broadcast %cst_85 : f32 to vector<4x32xf32>
    %247 = arith.subf %246, %245 : vector<4x32xf32>
    %cst_86 = arith.constant 0.000000e+00 : f32
    %248 = vector.broadcast %cst_86 : f32 to vector<4x32xf32>
    %249 = arith.cmpf oge, %219, %248 : vector<4x32xf32>
    %cst_87 = arith.constant 0.000000e+00 : f32
    %250 = vector.broadcast %cst_87 : f32 to vector<4x32xf32>
    %251 = arith.subf %250, %247 : vector<4x32xf32>
    %252 = arith.select %249, %247, %251 : vector<4x32xi1>, vector<4x32xf32>
    %cst_88 = arith.constant 1.000000e+00 : f32
    %253 = vector.broadcast %cst_88 : f32 to vector<4x32xf32>
    %254 = arith.addf %253, %252 : vector<4x32xf32>
    %255 = arith.mulf %217, %254 : vector<4x32xf32>
    %cst_89 = arith.constant dense<0.000000e+00> : vector<4x32xf32>
    %256 = tpu.matmul %255, %8, %cst_89 {dimension_numbers = #tpu.dot_dimension_numbers<[1], [0], [0], [1], [0, 0, 1, 1], [], []>} : vector<4x32xf32>, vector<32x32xf32>, vector<4x32xf32> -> vector<4x32xf32>
    %257 = vector.broadcast %9 : vector<1x32xf32> to vector<4x32xf32>
    %258 = arith.addf %256, %257 : vector<4x32xf32>
    %259 = arith.addf %212, %258 : vector<4x32xf32>
    %cst_90 = arith.constant dense<0.000000e+00> : vector<4xf32>
    %260 = vector.multi_reduction <add>, %259, %cst_90 [1] : vector<4x32xf32> to vector<4xf32>
    %261 = vector.shape_cast %260 : vector<4xf32> to vector<4x1xf32>
    %cst_91 = arith.constant 3.200000e+01 : f32
    %262 = vector.broadcast %cst_91 : f32 to vector<4x1xf32>
    %263 = arith.divf %261, %262 : vector<4x1xf32>
    %264 = vector.broadcast %263 : vector<4x1xf32> to vector<4x32xf32>
    %265 = arith.subf %259, %264 : vector<4x32xf32>
    %266 = arith.mulf %265, %265 : vector<4x32xf32>
    %cst_92 = arith.constant dense<0.000000e+00> : vector<4xf32>
    %267 = vector.multi_reduction <add>, %266, %cst_92 [1] : vector<4x32xf32> to vector<4xf32>
    %268 = vector.shape_cast %267 : vector<4xf32> to vector<4x1xf32>
    %cst_93 = arith.constant 3.200000e+01 : f32
    %269 = vector.broadcast %cst_93 : f32 to vector<4x1xf32>
    %270 = arith.divf %268, %269 : vector<4x1xf32>
    %271 = vector.broadcast %263 : vector<4x1xf32> to vector<4x32xf32>
    %272 = arith.subf %259, %271 : vector<4x32xf32>
    %cst_94 = arith.constant 9.99999974E-6 : f32
    %273 = vector.broadcast %cst_94 : f32 to vector<4x1xf32>
    %274 = arith.addf %270, %273 : vector<4x1xf32>
    %275 = math.rsqrt %274 : vector<4x1xf32>
    %276 = vector.broadcast %275 : vector<4x1xf32> to vector<4x32xf32>
    %277 = arith.mulf %272, %276 : vector<4x32xf32>
    %278 = vector.broadcast %12 : vector<1x32xf32> to vector<4x32xf32>
    %279 = arith.mulf %277, %278 : vector<4x32xf32>
    %280 = vector.broadcast %13 : vector<1x32xf32> to vector<4x32xf32>
    %281 = arith.addf %279, %280 : vector<4x32xf32>
    %c0_95 = arith.constant 0 : index
    %c0_96 = arith.constant 0 : index
    %282 = vector.load %arg21[%c0_95, %c0_96] : memref<4x16xf32, #tpu.memory_space<vmem>>, vector<4x16xf32>
    tpu.vector_store %arg21[%c0_95, %c0_96], %186 {strides = array<i32>} : memref<4x16xf32, #tpu.memory_space<vmem>>, vector<4x16xf32>,
    %c0_97 = arith.constant 0 : index
    %c0_98 = arith.constant 0 : index
    %283 = vector.load %arg15[%c0_97, %c0_98] : memref<1x32xf32, #tpu.memory_space<vmem>>, vector<1x32xf32>
    %c0_99 = arith.constant 0 : index
    %c0_100 = arith.constant 0 : index
    %284 = vector.load %arg16[%c0_99, %c0_100] : memref<1x32xf32, #tpu.memory_space<vmem>>, vector<1x32xf32>
    %cst_101 = arith.constant dense<0.000000e+00> : vector<4xf32>
    %285 = vector.multi_reduction <add>, %281, %cst_101 [1] : vector<4x32xf32> to vector<4xf32>
    %286 = vector.shape_cast %285 : vector<4xf32> to vector<4x1xf32>
    %cst_102 = arith.constant 3.200000e+01 : f32
    %287 = vector.broadcast %cst_102 : f32 to vector<4x1xf32>
    %288 = arith.divf %286, %287 : vector<4x1xf32>
    %289 = vector.broadcast %288 : vector<4x1xf32> to vector<4x32xf32>
    %290 = arith.subf %281, %289 : vector<4x32xf32>
    %291 = arith.mulf %290, %290 : vector<4x32xf32>
    %cst_103 = arith.constant dense<0.000000e+00> : vector<4xf32>
    %292 = vector.multi_reduction <add>, %291, %cst_103 [1] : vector<4x32xf32> to vector<4xf32>
    %293 = vector.shape_cast %292 : vector<4xf32> to vector<4x1xf32>
    %cst_104 = arith.constant 3.200000e+01 : f32
    %294 = vector.broadcast %cst_104 : f32 to vector<4x1xf32>
    %295 = arith.divf %293, %294 : vector<4x1xf32>
    %296 = vector.broadcast %288 : vector<4x1xf32> to vector<4x32xf32>
    %297 = arith.subf %281, %296 : vector<4x32xf32>
    %cst_105 = arith.constant 9.99999974E-6 : f32
    %298 = vector.broadcast %cst_105 : f32 to vector<4x1xf32>
    %299 = arith.addf %295, %298 : vector<4x1xf32>
    %300 = math.rsqrt %299 : vector<4x1xf32>
    %301 = vector.broadcast %300 : vector<4x1xf32> to vector<4x32xf32>
    %302 = arith.mulf %297, %301 : vector<4x32xf32>
    %303 = vector.broadcast %283 : vector<1x32xf32> to vector<4x32xf32>
    %304 = arith.mulf %302, %303 : vector<4x32xf32>
    %305 = vector.broadcast %284 : vector<1x32xf32> to vector<4x32xf32>
    %306 = arith.addf %304, %305 : vector<4x32xf32>
    %c0_106 = arith.constant 0 : index
    %c0_107 = arith.constant 0 : index
    %307 = vector.load %arg19[%c0_106, %c0_107] : memref<1x8xf32, #tpu.memory_space<vmem>>, vector<1x8xf32>
    %c0_108 = arith.constant 0 : index
    %c0_109 = arith.constant 0 : index
    %c0_110 = arith.constant 0 : index
    %308 = vector.load %arg17[%c0_108, %c0_109, %c0_110] : memref<2x2x4xf32, #tpu.memory_space<vmem>>, vector<1x2x4xf32>
    %309 = vector.shape_cast %308 : vector<1x2x4xf32> to vector<2x4xf32>
    %cst_111 = arith.constant dense<0.000000e+00> : vector<2x32xf32>
    %310 = tpu.matmul %309, %306, %cst_111 {dimension_numbers = #tpu.dot_dimension_numbers<[1], [0], [0], [1], [0, 0, 1, 1], [], []>} : vector<2x4xf32>, vector<4x32xf32>, vector<2x32xf32> -> vector<2x32xf32>
    %c0_112 = arith.constant 0 : index
    %c0_113 = arith.constant 0 : index
    %c0_114 = arith.constant 0 : index
    %311 = vector.load %arg18[%c0_112, %c0_113, %c0_114] : memref<2x32x8xf32, #tpu.memory_space<vmem>>, vector<1x32x8xf32>
    %312 = vector.shape_cast %311 : vector<1x32x8xf32> to vector<32x8xf32>
    %cst_115 = arith.constant dense<0.000000e+00> : vector<2x8xf32>
    %313 = tpu.matmul %310, %312, %cst_115 {dimension_numbers = #tpu.dot_dimension_numbers<[1], [0], [0], [1], [0, 0, 1, 1], [], []>} : vector<2x32xf32>, vector<32x8xf32>, vector<2x8xf32> -> vector<2x8xf32>
    %314 = vector.broadcast %307 : vector<1x8xf32> to vector<2x8xf32>
    %315 = arith.addf %314, %313 : vector<2x8xf32>
    %c1 = arith.constant 1 : index
    %c0_116 = arith.constant 0 : index
    %c0_117 = arith.constant 0 : index
    %316 = vector.load %arg17[%c1, %c0_116, %c0_117] : memref<2x2x4xf32, #tpu.memory_space<vmem>>, vector<1x2x4xf32>
    %317 = vector.shape_cast %316 : vector<1x2x4xf32> to vector<2x4xf32>
    %cst_118 = arith.constant dense<0.000000e+00> : vector<2x32xf32>
    %318 = tpu.matmul %317, %306, %cst_118 {dimension_numbers = #tpu.dot_dimension_numbers<[1], [0], [0], [1], [0, 0, 1, 1], [], []>} : vector<2x4xf32>, vector<4x32xf32>, vector<2x32xf32> -> vector<2x32xf32>
    %c1_119 = arith.constant 1 : index
    %c0_120 = arith.constant 0 : index
    %c0_121 = arith.constant 0 : index
    %319 = vector.load %arg18[%c1_119, %c0_120, %c0_121] : memref<2x32x8xf32, #tpu.memory_space<vmem>>, vector<1x32x8xf32>
    %320 = vector.shape_cast %319 : vector<1x32x8xf32> to vector<32x8xf32>
    %cst_122 = arith.constant dense<0.000000e+00> : vector<2x8xf32>
    %321 = tpu.matmul %318, %320, %cst_122 {dimension_numbers = #tpu.dot_dimension_numbers<[1], [0], [0], [1], [0, 0, 1, 1], [], []>} : vector<2x32xf32>, vector<32x8xf32>, vector<2x8xf32> -> vector<2x8xf32>
    %322 = arith.addf %315, %321 : vector<2x8xf32>
    %cst_123 = arith.constant dense<0xFF800000> : vector<2xf32>
    %323 = vector.multi_reduction <maximumf>, %322, %cst_123 [1] : vector<2x8xf32> to vector<2xf32>
    %324 = vector.shape_cast %323 : vector<2xf32> to vector<2x1xf32>
    %325 = vector.broadcast %324 : vector<2x1xf32> to vector<2x8xf32>
    %326 = arith.subf %322, %325 : vector<2x8xf32>
    %327 = math.exp %326 : vector<2x8xf32>
    %cst_124 = arith.constant dense<0.000000e+00> : vector<2xf32>
    %328 = vector.multi_reduction <add>, %327, %cst_124 [1] : vector<2x8xf32> to vector<2xf32>
    %329 = vector.shape_cast %328 : vector<2xf32> to vector<2x1xf32>
    %330 = vector.broadcast %329 : vector<2x1xf32> to vector<2x8xf32>
    %331 = arith.divf %327, %330 : vector<2x8xf32>
    %c0_125 = arith.constant 0 : index
    %c0_126 = arith.constant 0 : index
    %332 = vector.load %arg20[%c0_125, %c0_126] : memref<2x8xf32, #tpu.memory_space<vmem>>, vector<2x8xf32>
    tpu.vector_store %arg20[%c0_125, %c0_126], %331 {strides = array<i32>} : memref<2x8xf32, #tpu.memory_space<vmem>>, vector<2x8xf32>,
    return
  }
  func.func @transform_0(%arg0: i32) -> (i32, i32) {
    %c0_i32 = arith.constant 0 : i32
    %c0_i32_0 = arith.constant 0 : i32
    %c0_i32_1 = arith.constant 0 : i32
    return %c0_i32, %c0_i32_0 : i32, i32
  }
  func.func @transform_1(%arg0: i32) -> (i32, i32) {
    %c0_i32 = arith.constant 0 : i32
    %c0_i32_0 = arith.constant 0 : i32
    %c0_i32_1 = arith.constant 0 : i32
    return %c0_i32, %c0_i32_0 : i32, i32
  }
  func.func @transform_2(%arg0: i32) -> (i32, i32) {
    %c0_i32 = arith.constant 0 : i32
    %c0_i32_0 = arith.constant 0 : i32
    %c0_i32_1 = arith.constant 0 : i32
    return %c0_i32, %c0_i32_0 : i32, i32
  }
  func.func @transform_3(%arg0: i32) -> (i32, i32) {
    %c0_i32 = arith.constant 0 : i32
    %c0_i32_0 = arith.constant 0 : i32
    %c0_i32_1 = arith.constant 0 : i32
    return %c0_i32, %c0_i32_0 : i32, i32
  }
  func.func @transform_4(%arg0: i32) -> (i32, i32) {
    %c0_i32 = arith.constant 0 : i32
    %c0_i32_0 = arith.constant 0 : i32
    %c0_i32_1 = arith.constant 0 : i32
    return %c0_i32, %c0_i32_0 : i32, i32
  }
  func.func @transform_5(%arg0: i32) -> (i32, i32) {
    %c0_i32 = arith.constant 0 : i32
    %c0_i32_0 = arith.constant 0 : i32
    %c0_i32_1 = arith.constant 0 : i32
    return %c0_i32, %c0_i32_0 : i32, i32
  }
  func.func @transform_6(%arg0: i32) -> (i32, i32) {
    %c0_i32 = arith.constant 0 : i32
    %c0_i32_0 = arith.constant 0 : i32
    %c0_i32_1 = arith.constant 0 : i32
    return %c0_i32, %c0_i32_0 : i32, i32
  }
  func.func @transform_7(%arg0: i32) -> (i32, i32) {
    %c0_i32 = arith.constant 0 : i32
    %c0_i32_0 = arith.constant 0 : i32
    %c0_i32_1 = arith.constant 0 : i32
    return %c0_i32, %c0_i32_0 : i32, i32
  }
  func.func @transform_8(%arg0: i32) -> (i32, i32) {
    %c0_i32 = arith.constant 0 : i32
    %c0_i32_0 = arith.constant 0 : i32
    %c0_i32_1 = arith.constant 0 : i32
    return %c0_i32, %c0_i32_0 : i32, i32
  }
  func.func @transform_9(%arg0: i32) -> (i32, i32) {
    %c0_i32 = arith.constant 0 : i32
    %c0_i32_0 = arith.constant 0 : i32
    %c0_i32_1 = arith.constant 0 : i32
    return %c0_i32, %c0_i32_0 : i32, i32
  }
  func.func @transform_10(%arg0: i32) -> (i32, i32) {
    %c0_i32 = arith.constant 0 : i32
    %c0_i32_0 = arith.constant 0 : i32
    %c0_i32_1 = arith.constant 0 : i32
    return %c0_i32, %c0_i32_0 : i32, i32
  }
  func.func @transform_11(%arg0: i32) -> (i32, i32) {
    %c0_i32 = arith.constant 0 : i32
    %c0_i32_0 = arith.constant 0 : i32
    %c0_i32_1 = arith.constant 0 : i32
    return %c0_i32, %c0_i32_0 : i32, i32
  }
  func.func @transform_12(%arg0: i32) -> (i32, i32) {
    %c0_i32 = arith.constant 0 : i32
    %c0_i32_0 = arith.constant 0 : i32
    %c0_i32_1 = arith.constant 0 : i32
    return %c0_i32, %c0_i32_0 : i32, i32
  }
  func.func @transform_13(%arg0: i32) -> (i32, i32) {
    %c0_i32 = arith.constant 0 : i32
    %c0_i32_0 = arith.constant 0 : i32
    %c0_i32_1 = arith.constant 0 : i32
    return %c0_i32, %c0_i32_0 : i32, i32
  }
  func.func @transform_14(%arg0: i32) -> (i32, i32) {
    %c0_i32 = arith.constant 0 : i32
    %c0_i32_0 = arith.constant 0 : i32
    %c0_i32_1 = arith.constant 0 : i32
    return %c0_i32, %c0_i32_0 : i32, i32
  }
  func.func @transform_15(%arg0: i32) -> (i32, i32) {
    %c0_i32 = arith.constant 0 : i32
    %c0_i32_0 = arith.constant 0 : i32
    %c0_i32_1 = arith.constant 0 : i32
    return %c0_i32, %c0_i32_0 : i32, i32
  }
  func.func @transform_16(%arg0: i32) -> (i32, i32, i32) {
    %c0_i32 = arith.constant 0 : i32
    %c0_i32_0 = arith.constant 0 : i32
    %c0_i32_1 = arith.constant 0 : i32
    %c0_i32_2 = arith.constant 0 : i32
    return %c0_i32, %c0_i32_0, %c0_i32_1 : i32, i32, i32
  }
  func.func @transform_17(%arg0: i32) -> (i32, i32, i32) {
    %c0_i32 = arith.constant 0 : i32
    %c0_i32_0 = arith.constant 0 : i32
    %c0_i32_1 = arith.constant 0 : i32
    %c0_i32_2 = arith.constant 0 : i32
    return %c0_i32, %c0_i32_0, %c0_i32_1 : i32, i32, i32
  }
  func.func @transform_18(%arg0: i32) -> (i32, i32) {
    %c0_i32 = arith.constant 0 : i32
    %c0_i32_0 = arith.constant 0 : i32
    %c0_i32_1 = arith.constant 0 : i32
    return %c0_i32, %c0_i32_0 : i32, i32
  }
  func.func @transform_19(%arg0: i32) -> (i32, i32) {
    %c0_i32 = arith.constant 0 : i32
    %c0_i32_0 = arith.constant 0 : i32
    %c0_i32_1 = arith.constant 0 : i32
    return %c0_i32, %c0_i32_0 : i32, i32
  }
  func.func @transform_20(%arg0: i32) -> (i32, i32) {
    %c0_i32 = arith.constant 0 : i32
    %c0_i32_0 = arith.constant 0 : i32
    %c0_i32_1 = arith.constant 0 : i32
    return %c0_i32, %c0_i32_0 : i32, i32
  }
}

module attributes {stable_mosaic.version = 11 : i64} {
  func.func @_stage0_kernel(%arg0: i32, %arg1: memref<16x4xf32, #tpu.memory_space<vmem>>, %arg2: memref<16x32xf32, #tpu.memory_space<vmem>>, %arg3: memref<3x4x32xf32, #tpu.memory_space<vmem>>, %arg4: memref<16x16xf32, #tpu.memory_space<vmem>>, %arg5: memref<16x16xf32, #tpu.memory_space<vmem>>, %arg6: memref<16x16xf32, #tpu.memory_space<vmem>>, %arg7: memref<32x96xf32, #tpu.memory_space<vmem>>, %arg8: memref<1x96xf32, #tpu.memory_space<vmem>>, %arg9: memref<32x32xf32, #tpu.memory_space<vmem>>, %arg10: memref<1x32xf32, #tpu.memory_space<vmem>>, %arg11: memref<32x32xf32, #tpu.memory_space<vmem>>, %arg12: memref<1x32xf32, #tpu.memory_space<vmem>>, %arg13: memref<32x32xf32, #tpu.memory_space<vmem>>, %arg14: memref<1x32xf32, #tpu.memory_space<vmem>>, %arg15: memref<1x32xf32, #tpu.memory_space<vmem>>, %arg16: memref<1x32xf32, #tpu.memory_space<vmem>>, %arg17: memref<1x32xf32, #tpu.memory_space<vmem>>, %arg18: memref<1x32xf32, #tpu.memory_space<vmem>>, %arg19: memref<3x32x32xf32, #tpu.memory_space<vmem>>, %arg20: memref<1x32xf32, #tpu.memory_space<vmem>>, %arg21: memref<1x32xf32, #tpu.memory_space<vmem>>, %arg22: memref<1x32xf32, #tpu.memory_space<vmem>>, %arg23: memref<3x8x16xf32, #tpu.memory_space<vmem>>, %arg24: memref<8x32xf32, #tpu.memory_space<vmem>>, %arg25: memref<16x64xf32, #tpu.memory_space<vmem>>) attributes {dimension_semantics = [#tpu.dimension_semantics<arbitrary>], iteration_bounds = array<i64: 1>, scalar_prefetch = 0 : i64, scratch_operands = 0 : i64, tpu.core_type = #tpu.core_type<tc>, window_params = [{pipeline_mode = #tpu.pipeline_mode<synchronous>, transform_indices = @transform_0, window_bounds = array<i64: 16, 4>}, {pipeline_mode = #tpu.pipeline_mode<synchronous>, transform_indices = @transform_1, window_bounds = array<i64: 16, 32>}, {pipeline_mode = #tpu.pipeline_mode<synchronous>, transform_indices = @transform_2, window_bounds = array<i64: 3, 4, 32>}, {pipeline_mode = #tpu.pipeline_mode<synchronous>, transform_indices = @transform_3, window_bounds = array<i64: 16, 16>}, {pipeline_mode = #tpu.pipeline_mode<synchronous>, transform_indices = @transform_4, window_bounds = array<i64: 16, 16>}, {pipeline_mode = #tpu.pipeline_mode<synchronous>, transform_indices = @transform_5, window_bounds = array<i64: 16, 16>}, {pipeline_mode = #tpu.pipeline_mode<synchronous>, transform_indices = @transform_6, window_bounds = array<i64: 32, 96>}, {pipeline_mode = #tpu.pipeline_mode<synchronous>, transform_indices = @transform_7, window_bounds = array<i64: 1, 96>}, {pipeline_mode = #tpu.pipeline_mode<synchronous>, transform_indices = @transform_8, window_bounds = array<i64: 32, 32>}, {pipeline_mode = #tpu.pipeline_mode<synchronous>, transform_indices = @transform_9, window_bounds = array<i64: 1, 32>}, {pipeline_mode = #tpu.pipeline_mode<synchronous>, transform_indices = @transform_10, window_bounds = array<i64: 32, 32>}, {pipeline_mode = #tpu.pipeline_mode<synchronous>, transform_indices = @transform_11, window_bounds = array<i64: 1, 32>}, {pipeline_mode = #tpu.pipeline_mode<synchronous>, transform_indices = @transform_12, window_bounds = array<i64: 32, 32>}, {pipeline_mode = #tpu.pipeline_mode<synchronous>, transform_indices = @transform_13, window_bounds = array<i64: 1, 32>}, {pipeline_mode = #tpu.pipeline_mode<synchronous>, transform_indices = @transform_14, window_bounds = array<i64: 1, 32>}, {pipeline_mode = #tpu.pipeline_mode<synchronous>, transform_indices = @transform_15, window_bounds = array<i64: 1, 32>}, {pipeline_mode = #tpu.pipeline_mode<synchronous>, transform_indices = @transform_16, window_bounds = array<i64: 1, 32>}, {pipeline_mode = #tpu.pipeline_mode<synchronous>, transform_indices = @transform_17, window_bounds = array<i64: 1, 32>}, {pipeline_mode = #tpu.pipeline_mode<synchronous>, transform_indices = @transform_18, window_bounds = array<i64: 3, 32, 32>}, {pipeline_mode = #tpu.pipeline_mode<synchronous>, transform_indices = @transform_19, window_bounds = array<i64: 1, 32>}, {pipeline_mode = #tpu.pipeline_mode<synchronous>, transform_indices = @transform_20, window_bounds = array<i64: 1, 32>}, {pipeline_mode = #tpu.pipeline_mode<synchronous>, transform_indices = @transform_21, window_bounds = array<i64: 1, 32>}, {pipeline_mode = #tpu.pipeline_mode<synchronous>, transform_indices = @transform_22, window_bounds = array<i64: 3, 8, 16>}, {pipeline_mode = #tpu.pipeline_mode<synchronous>, transform_indices = @transform_23, window_bounds = array<i64: 8, 32>}, {pipeline_mode = #tpu.pipeline_mode<synchronous>, transform_indices = @transform_24, window_bounds = array<i64: 16, 64>}]} {
    %c0 = arith.constant 0 : index
    %c0_0 = arith.constant 0 : index
    %0 = vector.load %arg4[%c0, %c0_0] : memref<16x16xf32, #tpu.memory_space<vmem>>, vector<16x16xf32>
    %c0_1 = arith.constant 0 : index
    %c0_2 = arith.constant 0 : index
    %1 = vector.load %arg5[%c0_1, %c0_2] : memref<16x16xf32, #tpu.memory_space<vmem>>, vector<16x16xf32>
    %c0_3 = arith.constant 0 : index
    %c0_4 = arith.constant 0 : index
    %2 = vector.load %arg1[%c0_3, %c0_4] : memref<16x4xf32, #tpu.memory_space<vmem>>, vector<16x4xf32>
    %c0_5 = arith.constant 0 : index
    %c0_6 = arith.constant 0 : index
    %c0_7 = arith.constant 0 : index
    %3 = vector.load %arg3[%c0_5, %c0_6, %c0_7] : memref<3x4x32xf32, #tpu.memory_space<vmem>>, vector<1x4x32xf32>
    %4 = vector.shape_cast %3 : vector<1x4x32xf32> to vector<4x32xf32>
    %c1 = arith.constant 1 : index
    %c0_8 = arith.constant 0 : index
    %c0_9 = arith.constant 0 : index
    %5 = vector.load %arg3[%c1, %c0_8, %c0_9] : memref<3x4x32xf32, #tpu.memory_space<vmem>>, vector<1x4x32xf32>
    %6 = vector.shape_cast %5 : vector<1x4x32xf32> to vector<4x32xf32>
    %c2 = arith.constant 2 : index
    %c0_10 = arith.constant 0 : index
    %c0_11 = arith.constant 0 : index
    %7 = vector.load %arg3[%c2, %c0_10, %c0_11] : memref<3x4x32xf32, #tpu.memory_space<vmem>>, vector<1x4x32xf32>
    %8 = vector.shape_cast %7 : vector<1x4x32xf32> to vector<4x32xf32>
    %cst = arith.constant dense<0.000000e+00> : vector<16x4xf32>
    %9 = tpu.matmul %0, %2, %cst {dimension_numbers = #tpu.dot_dimension_numbers<[1], [0], [0], [1], [0, 0, 1, 1], [], []>} : vector<16x16xf32>, vector<16x4xf32>, vector<16x4xf32> -> vector<16x4xf32>
    %cst_12 = arith.constant dense<0.000000e+00> : vector<16x32xf32>
    %10 = tpu.matmul %9, %4, %cst_12 {dimension_numbers = #tpu.dot_dimension_numbers<[1], [0], [0], [1], [0, 0, 1, 1], [], []>} : vector<16x4xf32>, vector<4x32xf32>, vector<16x32xf32> -> vector<16x32xf32>
    %cst_13 = arith.constant dense<0.000000e+00> : vector<16x32xf32>
    %11 = tpu.matmul %2, %6, %cst_13 {dimension_numbers = #tpu.dot_dimension_numbers<[1], [0], [0], [1], [0, 0, 1, 1], [], []>} : vector<16x4xf32>, vector<4x32xf32>, vector<16x32xf32> -> vector<16x32xf32>
    %12 = arith.addf %10, %11 : vector<16x32xf32>
    %cst_14 = arith.constant dense<0.000000e+00> : vector<16x4xf32>
    %13 = tpu.matmul %1, %2, %cst_14 {dimension_numbers = #tpu.dot_dimension_numbers<[1], [0], [0], [1], [0, 0, 1, 1], [], []>} : vector<16x16xf32>, vector<16x4xf32>, vector<16x4xf32> -> vector<16x4xf32>
    %cst_15 = arith.constant dense<0.000000e+00> : vector<16x32xf32>
    %14 = tpu.matmul %13, %8, %cst_15 {dimension_numbers = #tpu.dot_dimension_numbers<[1], [0], [0], [1], [0, 0, 1, 1], [], []>} : vector<16x4xf32>, vector<4x32xf32>, vector<16x32xf32> -> vector<16x32xf32>
    %15 = arith.addf %12, %14 : vector<16x32xf32>
    %c0_16 = arith.constant 0 : index
    %c0_17 = arith.constant 0 : index
    %16 = vector.load %arg2[%c0_16, %c0_17] : memref<16x32xf32, #tpu.memory_space<vmem>>, vector<16x32xf32>
    %17 = arith.addf %15, %16 : vector<16x32xf32>
    %c0_18 = arith.constant 0 : index
    %c0_19 = arith.constant 0 : index
    %18 = vector.load %arg6[%c0_18, %c0_19] : memref<16x16xf32, #tpu.memory_space<vmem>>, vector<16x16xf32>
    %c0_20 = arith.constant 0 : index
    %c0_21 = arith.constant 0 : index
    %19 = vector.load %arg7[%c0_20, %c0_21] : memref<32x96xf32, #tpu.memory_space<vmem>>, vector<32x96xf32>
    %c0_22 = arith.constant 0 : index
    %c0_23 = arith.constant 0 : index
    %20 = vector.load %arg8[%c0_22, %c0_23] : memref<1x96xf32, #tpu.memory_space<vmem>>, vector<1x96xf32>
    %c0_24 = arith.constant 0 : index
    %c0_25 = arith.constant 0 : index
    %21 = vector.load %arg9[%c0_24, %c0_25] : memref<32x32xf32, #tpu.memory_space<vmem>>, vector<32x32xf32>
    %c0_26 = arith.constant 0 : index
    %c0_27 = arith.constant 0 : index
    %22 = vector.load %arg10[%c0_26, %c0_27] : memref<1x32xf32, #tpu.memory_space<vmem>>, vector<1x32xf32>
    %c0_28 = arith.constant 0 : index
    %c0_29 = arith.constant 0 : index
    %23 = vector.load %arg11[%c0_28, %c0_29] : memref<32x32xf32, #tpu.memory_space<vmem>>, vector<32x32xf32>
    %c0_30 = arith.constant 0 : index
    %c0_31 = arith.constant 0 : index
    %24 = vector.load %arg12[%c0_30, %c0_31] : memref<1x32xf32, #tpu.memory_space<vmem>>, vector<1x32xf32>
    %c0_32 = arith.constant 0 : index
    %c0_33 = arith.constant 0 : index
    %25 = vector.load %arg13[%c0_32, %c0_33] : memref<32x32xf32, #tpu.memory_space<vmem>>, vector<32x32xf32>
    %c0_34 = arith.constant 0 : index
    %c0_35 = arith.constant 0 : index
    %26 = vector.load %arg14[%c0_34, %c0_35] : memref<1x32xf32, #tpu.memory_space<vmem>>, vector<1x32xf32>
    %c0_36 = arith.constant 0 : index
    %c0_37 = arith.constant 0 : index
    %27 = vector.load %arg15[%c0_36, %c0_37] : memref<1x32xf32, #tpu.memory_space<vmem>>, vector<1x32xf32>
    %c0_38 = arith.constant 0 : index
    %c0_39 = arith.constant 0 : index
    %28 = vector.load %arg16[%c0_38, %c0_39] : memref<1x32xf32, #tpu.memory_space<vmem>>, vector<1x32xf32>
    %c0_40 = arith.constant 0 : index
    %c0_41 = arith.constant 0 : index
    %29 = vector.load %arg17[%c0_40, %c0_41] : memref<1x32xf32, #tpu.memory_space<vmem>>, vector<1x32xf32>
    %c0_42 = arith.constant 0 : index
    %c0_43 = arith.constant 0 : index
    %30 = vector.load %arg18[%c0_42, %c0_43] : memref<1x32xf32, #tpu.memory_space<vmem>>, vector<1x32xf32>
    %cst_44 = arith.constant dense<0.000000e+00> : vector<16x96xf32>
    %31 = tpu.matmul %17, %19, %cst_44 {dimension_numbers = #tpu.dot_dimension_numbers<[1], [0], [0], [1], [0, 0, 1, 1], [], []>} : vector<16x32xf32>, vector<32x96xf32>, vector<16x96xf32> -> vector<16x96xf32>
    %32 = vector.broadcast %20 : vector<1x96xf32> to vector<16x96xf32>
    %33 = arith.addf %31, %32 : vector<16x96xf32>
    %34 = vector.extract_strided_slice %33 {offsets = [0, 0], sizes = [16, 4], strides = [1, 1]} : vector<16x96xf32> to vector<16x4xf32>
    %35 = vector.extract_strided_slice %33 {offsets = [0, 32], sizes = [16, 4], strides = [1, 1]} : vector<16x96xf32> to vector<16x4xf32>
    %36 = vector.extract_strided_slice %33 {offsets = [0, 64], sizes = [16, 4], strides = [1, 1]} : vector<16x96xf32> to vector<16x4xf32>
    %cst_45 = arith.constant dense<0.000000e+00> : vector<16x16xf32>
    %37 = tpu.matmul %34, %35, %cst_45 {dimension_numbers = #tpu.dot_dimension_numbers<[1], [1], [0], [0], [0, 0, 1, 0], [], []>} : vector<16x4xf32>, vector<16x4xf32>, vector<16x16xf32> -> vector<16x16xf32>
    %cst_46 = arith.constant 5.000000e-01 : f32
    %38 = vector.broadcast %cst_46 : f32 to vector<16x16xf32>
    %39 = arith.mulf %37, %38 : vector<16x16xf32>
    %40 = arith.addf %39, %18 : vector<16x16xf32>
    %cst_47 = arith.constant dense<0xFF800000> : vector<16xf32>
    %41 = vector.multi_reduction <maximumf>, %40, %cst_47 [1] : vector<16x16xf32> to vector<16xf32>
    %42 = vector.shape_cast %41 : vector<16xf32> to vector<16x1xf32>
    %43 = vector.broadcast %42 : vector<16x1xf32> to vector<16x16xf32>
    %44 = arith.subf %40, %43 : vector<16x16xf32>
    %45 = math.exp %44 : vector<16x16xf32>
    %cst_48 = arith.constant dense<0.000000e+00> : vector<16xf32>
    %46 = vector.multi_reduction <add>, %45, %cst_48 [1] : vector<16x16xf32> to vector<16xf32>
    %47 = vector.shape_cast %46 : vector<16xf32> to vector<16x1xf32>
    %48 = tpu.reciprocal %47 {approx = true} : vector<16x1xf32> -> vector<16x1xf32>
    %49 = vector.broadcast %48 : vector<16x1xf32> to vector<16x16xf32>
    %50 = arith.mulf %45, %49 : vector<16x16xf32>
    %cst_49 = arith.constant dense<0.000000e+00> : vector<16x4xf32>
    %51 = tpu.matmul %50, %36, %cst_49 {dimension_numbers = #tpu.dot_dimension_numbers<[1], [0], [0], [1], [0, 0, 1, 1], [], []>} : vector<16x16xf32>, vector<16x4xf32>, vector<16x4xf32> -> vector<16x4xf32>
    %52 = vector.extract_strided_slice %50 {offsets = [0, 0], sizes = [16, 8], strides = [1, 1]} : vector<16x16xf32> to vector<16x8xf32>
    %53 = vector.extract_strided_slice %50 {offsets = [0, 8], sizes = [16, 8], strides = [1, 1]} : vector<16x16xf32> to vector<16x8xf32>
    %54 = arith.addf %52, %53 : vector<16x8xf32>
    %55 = vector.extract_strided_slice %33 {offsets = [0, 4], sizes = [16, 4], strides = [1, 1]} : vector<16x96xf32> to vector<16x4xf32>
    %56 = vector.extract_strided_slice %33 {offsets = [0, 36], sizes = [16, 4], strides = [1, 1]} : vector<16x96xf32> to vector<16x4xf32>
    %57 = vector.extract_strided_slice %33 {offsets = [0, 68], sizes = [16, 4], strides = [1, 1]} : vector<16x96xf32> to vector<16x4xf32>
    %cst_50 = arith.constant dense<0.000000e+00> : vector<16x16xf32>
    %58 = tpu.matmul %55, %56, %cst_50 {dimension_numbers = #tpu.dot_dimension_numbers<[1], [1], [0], [0], [0, 0, 1, 0], [], []>} : vector<16x4xf32>, vector<16x4xf32>, vector<16x16xf32> -> vector<16x16xf32>
    %cst_51 = arith.constant 5.000000e-01 : f32
    %59 = vector.broadcast %cst_51 : f32 to vector<16x16xf32>
    %60 = arith.mulf %58, %59 : vector<16x16xf32>
    %61 = arith.addf %60, %18 : vector<16x16xf32>
    %cst_52 = arith.constant dense<0xFF800000> : vector<16xf32>
    %62 = vector.multi_reduction <maximumf>, %61, %cst_52 [1] : vector<16x16xf32> to vector<16xf32>
    %63 = vector.shape_cast %62 : vector<16xf32> to vector<16x1xf32>
    %64 = vector.broadcast %63 : vector<16x1xf32> to vector<16x16xf32>
    %65 = arith.subf %61, %64 : vector<16x16xf32>
    %66 = math.exp %65 : vector<16x16xf32>
    %cst_53 = arith.constant dense<0.000000e+00> : vector<16xf32>
    %67 = vector.multi_reduction <add>, %66, %cst_53 [1] : vector<16x16xf32> to vector<16xf32>
    %68 = vector.shape_cast %67 : vector<16xf32> to vector<16x1xf32>
    %69 = tpu.reciprocal %68 {approx = true} : vector<16x1xf32> -> vector<16x1xf32>
    %70 = vector.broadcast %69 : vector<16x1xf32> to vector<16x16xf32>
    %71 = arith.mulf %66, %70 : vector<16x16xf32>
    %cst_54 = arith.constant dense<0.000000e+00> : vector<16x4xf32>
    %72 = tpu.matmul %71, %57, %cst_54 {dimension_numbers = #tpu.dot_dimension_numbers<[1], [0], [0], [1], [0, 0, 1, 1], [], []>} : vector<16x16xf32>, vector<16x4xf32>, vector<16x4xf32> -> vector<16x4xf32>
    %73 = vector.extract_strided_slice %71 {offsets = [0, 0], sizes = [16, 8], strides = [1, 1]} : vector<16x16xf32> to vector<16x8xf32>
    %74 = vector.extract_strided_slice %71 {offsets = [0, 8], sizes = [16, 8], strides = [1, 1]} : vector<16x16xf32> to vector<16x8xf32>
    %75 = arith.addf %73, %74 : vector<16x8xf32>
    %76 = vector.extract_strided_slice %33 {offsets = [0, 8], sizes = [16, 4], strides = [1, 1]} : vector<16x96xf32> to vector<16x4xf32>
    %77 = vector.extract_strided_slice %33 {offsets = [0, 40], sizes = [16, 4], strides = [1, 1]} : vector<16x96xf32> to vector<16x4xf32>
    %78 = vector.extract_strided_slice %33 {offsets = [0, 72], sizes = [16, 4], strides = [1, 1]} : vector<16x96xf32> to vector<16x4xf32>
    %cst_55 = arith.constant dense<0.000000e+00> : vector<16x16xf32>
    %79 = tpu.matmul %76, %77, %cst_55 {dimension_numbers = #tpu.dot_dimension_numbers<[1], [1], [0], [0], [0, 0, 1, 0], [], []>} : vector<16x4xf32>, vector<16x4xf32>, vector<16x16xf32> -> vector<16x16xf32>
    %cst_56 = arith.constant 5.000000e-01 : f32
    %80 = vector.broadcast %cst_56 : f32 to vector<16x16xf32>
    %81 = arith.mulf %79, %80 : vector<16x16xf32>
    %82 = arith.addf %81, %18 : vector<16x16xf32>
    %cst_57 = arith.constant dense<0xFF800000> : vector<16xf32>
    %83 = vector.multi_reduction <maximumf>, %82, %cst_57 [1] : vector<16x16xf32> to vector<16xf32>
    %84 = vector.shape_cast %83 : vector<16xf32> to vector<16x1xf32>
    %85 = vector.broadcast %84 : vector<16x1xf32> to vector<16x16xf32>
    %86 = arith.subf %82, %85 : vector<16x16xf32>
    %87 = math.exp %86 : vector<16x16xf32>
    %cst_58 = arith.constant dense<0.000000e+00> : vector<16xf32>
    %88 = vector.multi_reduction <add>, %87, %cst_58 [1] : vector<16x16xf32> to vector<16xf32>
    %89 = vector.shape_cast %88 : vector<16xf32> to vector<16x1xf32>
    %90 = tpu.reciprocal %89 {approx = true} : vector<16x1xf32> -> vector<16x1xf32>
    %91 = vector.broadcast %90 : vector<16x1xf32> to vector<16x16xf32>
    %92 = arith.mulf %87, %91 : vector<16x16xf32>
    %cst_59 = arith.constant dense<0.000000e+00> : vector<16x4xf32>
    %93 = tpu.matmul %92, %78, %cst_59 {dimension_numbers = #tpu.dot_dimension_numbers<[1], [0], [0], [1], [0, 0, 1, 1], [], []>} : vector<16x16xf32>, vector<16x4xf32>, vector<16x4xf32> -> vector<16x4xf32>
    %94 = vector.extract_strided_slice %92 {offsets = [0, 0], sizes = [16, 8], strides = [1, 1]} : vector<16x16xf32> to vector<16x8xf32>
    %95 = vector.extract_strided_slice %92 {offsets = [0, 8], sizes = [16, 8], strides = [1, 1]} : vector<16x16xf32> to vector<16x8xf32>
    %96 = arith.addf %94, %95 : vector<16x8xf32>
    %97 = vector.extract_strided_slice %33 {offsets = [0, 12], sizes = [16, 4], strides = [1, 1]} : vector<16x96xf32> to vector<16x4xf32>
    %98 = vector.extract_strided_slice %33 {offsets = [0, 44], sizes = [16, 4], strides = [1, 1]} : vector<16x96xf32> to vector<16x4xf32>
    %99 = vector.extract_strided_slice %33 {offsets = [0, 76], sizes = [16, 4], strides = [1, 1]} : vector<16x96xf32> to vector<16x4xf32>
    %cst_60 = arith.constant dense<0.000000e+00> : vector<16x16xf32>
    %100 = tpu.matmul %97, %98, %cst_60 {dimension_numbers = #tpu.dot_dimension_numbers<[1], [1], [0], [0], [0, 0, 1, 0], [], []>} : vector<16x4xf32>, vector<16x4xf32>, vector<16x16xf32> -> vector<16x16xf32>
    %cst_61 = arith.constant 5.000000e-01 : f32
    %101 = vector.broadcast %cst_61 : f32 to vector<16x16xf32>
    %102 = arith.mulf %100, %101 : vector<16x16xf32>
    %103 = arith.addf %102, %18 : vector<16x16xf32>
    %cst_62 = arith.constant dense<0xFF800000> : vector<16xf32>
    %104 = vector.multi_reduction <maximumf>, %103, %cst_62 [1] : vector<16x16xf32> to vector<16xf32>
    %105 = vector.shape_cast %104 : vector<16xf32> to vector<16x1xf32>
    %106 = vector.broadcast %105 : vector<16x1xf32> to vector<16x16xf32>
    %107 = arith.subf %103, %106 : vector<16x16xf32>
    %108 = math.exp %107 : vector<16x16xf32>
    %cst_63 = arith.constant dense<0.000000e+00> : vector<16xf32>
    %109 = vector.multi_reduction <add>, %108, %cst_63 [1] : vector<16x16xf32> to vector<16xf32>
    %110 = vector.shape_cast %109 : vector<16xf32> to vector<16x1xf32>
    %111 = tpu.reciprocal %110 {approx = true} : vector<16x1xf32> -> vector<16x1xf32>
    %112 = vector.broadcast %111 : vector<16x1xf32> to vector<16x16xf32>
    %113 = arith.mulf %108, %112 : vector<16x16xf32>
    %cst_64 = arith.constant dense<0.000000e+00> : vector<16x4xf32>
    %114 = tpu.matmul %113, %99, %cst_64 {dimension_numbers = #tpu.dot_dimension_numbers<[1], [0], [0], [1], [0, 0, 1, 1], [], []>} : vector<16x16xf32>, vector<16x4xf32>, vector<16x4xf32> -> vector<16x4xf32>
    %115 = vector.extract_strided_slice %113 {offsets = [0, 0], sizes = [16, 8], strides = [1, 1]} : vector<16x16xf32> to vector<16x8xf32>
    %116 = vector.extract_strided_slice %113 {offsets = [0, 8], sizes = [16, 8], strides = [1, 1]} : vector<16x16xf32> to vector<16x8xf32>
    %117 = arith.addf %115, %116 : vector<16x8xf32>
    %118 = vector.extract_strided_slice %33 {offsets = [0, 16], sizes = [16, 4], strides = [1, 1]} : vector<16x96xf32> to vector<16x4xf32>
    %119 = vector.extract_strided_slice %33 {offsets = [0, 48], sizes = [16, 4], strides = [1, 1]} : vector<16x96xf32> to vector<16x4xf32>
    %120 = vector.extract_strided_slice %33 {offsets = [0, 80], sizes = [16, 4], strides = [1, 1]} : vector<16x96xf32> to vector<16x4xf32>
    %cst_65 = arith.constant dense<0.000000e+00> : vector<16x16xf32>
    %121 = tpu.matmul %118, %119, %cst_65 {dimension_numbers = #tpu.dot_dimension_numbers<[1], [1], [0], [0], [0, 0, 1, 0], [], []>} : vector<16x4xf32>, vector<16x4xf32>, vector<16x16xf32> -> vector<16x16xf32>
    %cst_66 = arith.constant 5.000000e-01 : f32
    %122 = vector.broadcast %cst_66 : f32 to vector<16x16xf32>
    %123 = arith.mulf %121, %122 : vector<16x16xf32>
    %124 = arith.addf %123, %18 : vector<16x16xf32>
    %cst_67 = arith.constant dense<0xFF800000> : vector<16xf32>
    %125 = vector.multi_reduction <maximumf>, %124, %cst_67 [1] : vector<16x16xf32> to vector<16xf32>
    %126 = vector.shape_cast %125 : vector<16xf32> to vector<16x1xf32>
    %127 = vector.broadcast %126 : vector<16x1xf32> to vector<16x16xf32>
    %128 = arith.subf %124, %127 : vector<16x16xf32>
    %129 = math.exp %128 : vector<16x16xf32>
    %cst_68 = arith.constant dense<0.000000e+00> : vector<16xf32>
    %130 = vector.multi_reduction <add>, %129, %cst_68 [1] : vector<16x16xf32> to vector<16xf32>
    %131 = vector.shape_cast %130 : vector<16xf32> to vector<16x1xf32>
    %132 = tpu.reciprocal %131 {approx = true} : vector<16x1xf32> -> vector<16x1xf32>
    %133 = vector.broadcast %132 : vector<16x1xf32> to vector<16x16xf32>
    %134 = arith.mulf %129, %133 : vector<16x16xf32>
    %cst_69 = arith.constant dense<0.000000e+00> : vector<16x4xf32>
    %135 = tpu.matmul %134, %120, %cst_69 {dimension_numbers = #tpu.dot_dimension_numbers<[1], [0], [0], [1], [0, 0, 1, 1], [], []>} : vector<16x16xf32>, vector<16x4xf32>, vector<16x4xf32> -> vector<16x4xf32>
    %136 = vector.extract_strided_slice %134 {offsets = [0, 0], sizes = [16, 8], strides = [1, 1]} : vector<16x16xf32> to vector<16x8xf32>
    %137 = vector.extract_strided_slice %134 {offsets = [0, 8], sizes = [16, 8], strides = [1, 1]} : vector<16x16xf32> to vector<16x8xf32>
    %138 = arith.addf %136, %137 : vector<16x8xf32>
    %139 = vector.extract_strided_slice %33 {offsets = [0, 20], sizes = [16, 4], strides = [1, 1]} : vector<16x96xf32> to vector<16x4xf32>
    %140 = vector.extract_strided_slice %33 {offsets = [0, 52], sizes = [16, 4], strides = [1, 1]} : vector<16x96xf32> to vector<16x4xf32>
    %141 = vector.extract_strided_slice %33 {offsets = [0, 84], sizes = [16, 4], strides = [1, 1]} : vector<16x96xf32> to vector<16x4xf32>
    %cst_70 = arith.constant dense<0.000000e+00> : vector<16x16xf32>
    %142 = tpu.matmul %139, %140, %cst_70 {dimension_numbers = #tpu.dot_dimension_numbers<[1], [1], [0], [0], [0, 0, 1, 0], [], []>} : vector<16x4xf32>, vector<16x4xf32>, vector<16x16xf32> -> vector<16x16xf32>
    %cst_71 = arith.constant 5.000000e-01 : f32
    %143 = vector.broadcast %cst_71 : f32 to vector<16x16xf32>
    %144 = arith.mulf %142, %143 : vector<16x16xf32>
    %145 = arith.addf %144, %18 : vector<16x16xf32>
    %cst_72 = arith.constant dense<0xFF800000> : vector<16xf32>
    %146 = vector.multi_reduction <maximumf>, %145, %cst_72 [1] : vector<16x16xf32> to vector<16xf32>
    %147 = vector.shape_cast %146 : vector<16xf32> to vector<16x1xf32>
    %148 = vector.broadcast %147 : vector<16x1xf32> to vector<16x16xf32>
    %149 = arith.subf %145, %148 : vector<16x16xf32>
    %150 = math.exp %149 : vector<16x16xf32>
    %cst_73 = arith.constant dense<0.000000e+00> : vector<16xf32>
    %151 = vector.multi_reduction <add>, %150, %cst_73 [1] : vector<16x16xf32> to vector<16xf32>
    %152 = vector.shape_cast %151 : vector<16xf32> to vector<16x1xf32>
    %153 = tpu.reciprocal %152 {approx = true} : vector<16x1xf32> -> vector<16x1xf32>
    %154 = vector.broadcast %153 : vector<16x1xf32> to vector<16x16xf32>
    %155 = arith.mulf %150, %154 : vector<16x16xf32>
    %cst_74 = arith.constant dense<0.000000e+00> : vector<16x4xf32>
    %156 = tpu.matmul %155, %141, %cst_74 {dimension_numbers = #tpu.dot_dimension_numbers<[1], [0], [0], [1], [0, 0, 1, 1], [], []>} : vector<16x16xf32>, vector<16x4xf32>, vector<16x4xf32> -> vector<16x4xf32>
    %157 = vector.extract_strided_slice %155 {offsets = [0, 0], sizes = [16, 8], strides = [1, 1]} : vector<16x16xf32> to vector<16x8xf32>
    %158 = vector.extract_strided_slice %155 {offsets = [0, 8], sizes = [16, 8], strides = [1, 1]} : vector<16x16xf32> to vector<16x8xf32>
    %159 = arith.addf %157, %158 : vector<16x8xf32>
    %160 = vector.extract_strided_slice %33 {offsets = [0, 24], sizes = [16, 4], strides = [1, 1]} : vector<16x96xf32> to vector<16x4xf32>
    %161 = vector.extract_strided_slice %33 {offsets = [0, 56], sizes = [16, 4], strides = [1, 1]} : vector<16x96xf32> to vector<16x4xf32>
    %162 = vector.extract_strided_slice %33 {offsets = [0, 88], sizes = [16, 4], strides = [1, 1]} : vector<16x96xf32> to vector<16x4xf32>
    %cst_75 = arith.constant dense<0.000000e+00> : vector<16x16xf32>
    %163 = tpu.matmul %160, %161, %cst_75 {dimension_numbers = #tpu.dot_dimension_numbers<[1], [1], [0], [0], [0, 0, 1, 0], [], []>} : vector<16x4xf32>, vector<16x4xf32>, vector<16x16xf32> -> vector<16x16xf32>
    %cst_76 = arith.constant 5.000000e-01 : f32
    %164 = vector.broadcast %cst_76 : f32 to vector<16x16xf32>
    %165 = arith.mulf %163, %164 : vector<16x16xf32>
    %166 = arith.addf %165, %18 : vector<16x16xf32>
    %cst_77 = arith.constant dense<0xFF800000> : vector<16xf32>
    %167 = vector.multi_reduction <maximumf>, %166, %cst_77 [1] : vector<16x16xf32> to vector<16xf32>
    %168 = vector.shape_cast %167 : vector<16xf32> to vector<16x1xf32>
    %169 = vector.broadcast %168 : vector<16x1xf32> to vector<16x16xf32>
    %170 = arith.subf %166, %169 : vector<16x16xf32>
    %171 = math.exp %170 : vector<16x16xf32>
    %cst_78 = arith.constant dense<0.000000e+00> : vector<16xf32>
    %172 = vector.multi_reduction <add>, %171, %cst_78 [1] : vector<16x16xf32> to vector<16xf32>
    %173 = vector.shape_cast %172 : vector<16xf32> to vector<16x1xf32>
    %174 = tpu.reciprocal %173 {approx = true} : vector<16x1xf32> -> vector<16x1xf32>
    %175 = vector.broadcast %174 : vector<16x1xf32> to vector<16x16xf32>
    %176 = arith.mulf %171, %175 : vector<16x16xf32>
    %cst_79 = arith.constant dense<0.000000e+00> : vector<16x4xf32>
    %177 = tpu.matmul %176, %162, %cst_79 {dimension_numbers = #tpu.dot_dimension_numbers<[1], [0], [0], [1], [0, 0, 1, 1], [], []>} : vector<16x16xf32>, vector<16x4xf32>, vector<16x4xf32> -> vector<16x4xf32>
    %178 = vector.extract_strided_slice %176 {offsets = [0, 0], sizes = [16, 8], strides = [1, 1]} : vector<16x16xf32> to vector<16x8xf32>
    %179 = vector.extract_strided_slice %176 {offsets = [0, 8], sizes = [16, 8], strides = [1, 1]} : vector<16x16xf32> to vector<16x8xf32>
    %180 = arith.addf %178, %179 : vector<16x8xf32>
    %181 = vector.extract_strided_slice %33 {offsets = [0, 28], sizes = [16, 4], strides = [1, 1]} : vector<16x96xf32> to vector<16x4xf32>
    %182 = vector.extract_strided_slice %33 {offsets = [0, 60], sizes = [16, 4], strides = [1, 1]} : vector<16x96xf32> to vector<16x4xf32>
    %183 = vector.extract_strided_slice %33 {offsets = [0, 92], sizes = [16, 4], strides = [1, 1]} : vector<16x96xf32> to vector<16x4xf32>
    %cst_80 = arith.constant dense<0.000000e+00> : vector<16x16xf32>
    %184 = tpu.matmul %181, %182, %cst_80 {dimension_numbers = #tpu.dot_dimension_numbers<[1], [1], [0], [0], [0, 0, 1, 0], [], []>} : vector<16x4xf32>, vector<16x4xf32>, vector<16x16xf32> -> vector<16x16xf32>
    %cst_81 = arith.constant 5.000000e-01 : f32
    %185 = vector.broadcast %cst_81 : f32 to vector<16x16xf32>
    %186 = arith.mulf %184, %185 : vector<16x16xf32>
    %187 = arith.addf %186, %18 : vector<16x16xf32>
    %cst_82 = arith.constant dense<0xFF800000> : vector<16xf32>
    %188 = vector.multi_reduction <maximumf>, %187, %cst_82 [1] : vector<16x16xf32> to vector<16xf32>
    %189 = vector.shape_cast %188 : vector<16xf32> to vector<16x1xf32>
    %190 = vector.broadcast %189 : vector<16x1xf32> to vector<16x16xf32>
    %191 = arith.subf %187, %190 : vector<16x16xf32>
    %192 = math.exp %191 : vector<16x16xf32>
    %cst_83 = arith.constant dense<0.000000e+00> : vector<16xf32>
    %193 = vector.multi_reduction <add>, %192, %cst_83 [1] : vector<16x16xf32> to vector<16xf32>
    %194 = vector.shape_cast %193 : vector<16xf32> to vector<16x1xf32>
    %195 = tpu.reciprocal %194 {approx = true} : vector<16x1xf32> -> vector<16x1xf32>
    %196 = vector.broadcast %195 : vector<16x1xf32> to vector<16x16xf32>
    %197 = arith.mulf %192, %196 : vector<16x16xf32>
    %cst_84 = arith.constant dense<0.000000e+00> : vector<16x4xf32>
    %198 = tpu.matmul %197, %183, %cst_84 {dimension_numbers = #tpu.dot_dimension_numbers<[1], [0], [0], [1], [0, 0, 1, 1], [], []>} : vector<16x16xf32>, vector<16x4xf32>, vector<16x4xf32> -> vector<16x4xf32>
    %199 = vector.extract_strided_slice %197 {offsets = [0, 0], sizes = [16, 8], strides = [1, 1]} : vector<16x16xf32> to vector<16x8xf32>
    %200 = vector.extract_strided_slice %197 {offsets = [0, 8], sizes = [16, 8], strides = [1, 1]} : vector<16x16xf32> to vector<16x8xf32>
    %201 = arith.addf %199, %200 : vector<16x8xf32>
    %202 = tpu.concatenate %51, %72, %93, %114, %135, %156, %177, %198 in 1 : vector<16x4xf32>, vector<16x4xf32>, vector<16x4xf32>, vector<16x4xf32>, vector<16x4xf32>, vector<16x4xf32>, vector<16x4xf32>, vector<16x4xf32> -> vector<16x32xf32>
    %203 = tpu.concatenate %54, %75, %96, %117, %138, %159, %180, %201 in 1 : vector<16x8xf32>, vector<16x8xf32>, vector<16x8xf32>, vector<16x8xf32>, vector<16x8xf32>, vector<16x8xf32>, vector<16x8xf32>, vector<16x8xf32> -> vector<16x64xf32>
    %cst_85 = arith.constant dense<0.000000e+00> : vector<16x32xf32>
    %204 = tpu.matmul %202, %21, %cst_85 {dimension_numbers = #tpu.dot_dimension_numbers<[1], [0], [0], [1], [0, 0, 1, 1], [], []>} : vector<16x32xf32>, vector<32x32xf32>, vector<16x32xf32> -> vector<16x32xf32>
    %205 = arith.addf %17, %204 : vector<16x32xf32>
    %206 = vector.broadcast %22 : vector<1x32xf32> to vector<16x32xf32>
    %207 = arith.addf %205, %206 : vector<16x32xf32>
    %cst_86 = arith.constant dense<0.000000e+00> : vector<16xf32>
    %208 = vector.multi_reduction <add>, %207, %cst_86 [1] : vector<16x32xf32> to vector<16xf32>
    %209 = vector.shape_cast %208 : vector<16xf32> to vector<16x1xf32>
    %cst_87 = arith.constant 3.200000e+01 : f32
    %210 = vector.broadcast %cst_87 : f32 to vector<16x1xf32>
    %211 = arith.divf %209, %210 : vector<16x1xf32>
    %212 = vector.broadcast %211 : vector<16x1xf32> to vector<16x32xf32>
    %213 = arith.subf %207, %212 : vector<16x32xf32>
    %214 = arith.mulf %213, %213 : vector<16x32xf32>
    %cst_88 = arith.constant dense<0.000000e+00> : vector<16xf32>
    %215 = vector.multi_reduction <add>, %214, %cst_88 [1] : vector<16x32xf32> to vector<16xf32>
    %216 = vector.shape_cast %215 : vector<16xf32> to vector<16x1xf32>
    %cst_89 = arith.constant 3.200000e+01 : f32
    %217 = vector.broadcast %cst_89 : f32 to vector<16x1xf32>
    %218 = arith.divf %216, %217 : vector<16x1xf32>
    %219 = vector.broadcast %211 : vector<16x1xf32> to vector<16x32xf32>
    %220 = arith.subf %207, %219 : vector<16x32xf32>
    %cst_90 = arith.constant 9.99999974E-6 : f32
    %221 = vector.broadcast %cst_90 : f32 to vector<16x1xf32>
    %222 = arith.addf %218, %221 : vector<16x1xf32>
    %223 = math.rsqrt %222 : vector<16x1xf32>
    %224 = vector.broadcast %223 : vector<16x1xf32> to vector<16x32xf32>
    %225 = arith.mulf %220, %224 : vector<16x32xf32>
    %226 = vector.broadcast %27 : vector<1x32xf32> to vector<16x32xf32>
    %227 = arith.mulf %225, %226 : vector<16x32xf32>
    %228 = vector.broadcast %28 : vector<1x32xf32> to vector<16x32xf32>
    %229 = arith.addf %227, %228 : vector<16x32xf32>
    %cst_91 = arith.constant dense<0.000000e+00> : vector<16x32xf32>
    %230 = tpu.matmul %229, %23, %cst_91 {dimension_numbers = #tpu.dot_dimension_numbers<[1], [0], [0], [1], [0, 0, 1, 1], [], []>} : vector<16x32xf32>, vector<32x32xf32>, vector<16x32xf32> -> vector<16x32xf32>
    %231 = vector.broadcast %24 : vector<1x32xf32> to vector<16x32xf32>
    %232 = arith.addf %230, %231 : vector<16x32xf32>
    %cst_92 = arith.constant 5.000000e-01 : f32
    %233 = vector.broadcast %cst_92 : f32 to vector<16x32xf32>
    %234 = arith.mulf %233, %232 : vector<16x32xf32>
    %cst_93 = arith.constant 0.707106769 : f32
    %235 = vector.broadcast %cst_93 : f32 to vector<16x32xf32>
    %236 = arith.mulf %232, %235 : vector<16x32xf32>
    %237 = math.absf %236 : vector<16x32xf32>
    %cst_94 = arith.constant 0.327591091 : f32
    %238 = vector.broadcast %cst_94 : f32 to vector<16x32xf32>
    %239 = arith.mulf %238, %237 : vector<16x32xf32>
    %cst_95 = arith.constant 1.000000e+00 : f32
    %240 = vector.broadcast %cst_95 : f32 to vector<16x32xf32>
    %241 = arith.addf %240, %239 : vector<16x32xf32>
    %cst_96 = arith.constant 1.000000e+00 : f32
    %242 = vector.broadcast %cst_96 : f32 to vector<16x32xf32>
    %243 = arith.divf %242, %241 : vector<16x32xf32>
    %cst_97 = arith.constant 1.06140542 : f32
    %244 = vector.broadcast %cst_97 : f32 to vector<16x32xf32>
    %245 = arith.mulf %244, %243 : vector<16x32xf32>
    %cst_98 = arith.constant 1.45315206 : f32
    %246 = vector.broadcast %cst_98 : f32 to vector<16x32xf32>
    %247 = arith.subf %245, %246 : vector<16x32xf32>
    %248 = arith.mulf %247, %243 : vector<16x32xf32>
    %cst_99 = arith.constant 1.42141378 : f32
    %249 = vector.broadcast %cst_99 : f32 to vector<16x32xf32>
    %250 = arith.addf %248, %249 : vector<16x32xf32>
    %251 = arith.mulf %250, %243 : vector<16x32xf32>
    %cst_100 = arith.constant 0.284496725 : f32
    %252 = vector.broadcast %cst_100 : f32 to vector<16x32xf32>
    %253 = arith.subf %251, %252 : vector<16x32xf32>
    %254 = arith.mulf %253, %243 : vector<16x32xf32>
    %cst_101 = arith.constant 0.254829586 : f32
    %255 = vector.broadcast %cst_101 : f32 to vector<16x32xf32>
    %256 = arith.addf %254, %255 : vector<16x32xf32>
    %257 = arith.mulf %256, %243 : vector<16x32xf32>
    %cst_102 = arith.constant 0.000000e+00 : f32
    %258 = vector.broadcast %cst_102 : f32 to vector<16x32xf32>
    %259 = arith.subf %258, %236 : vector<16x32xf32>
    %260 = arith.mulf %259, %236 : vector<16x32xf32>
    %261 = math.exp %260 : vector<16x32xf32>
    %262 = arith.mulf %257, %261 : vector<16x32xf32>
    %cst_103 = arith.constant 1.000000e+00 : f32
    %263 = vector.broadcast %cst_103 : f32 to vector<16x32xf32>
    %264 = arith.subf %263, %262 : vector<16x32xf32>
    %cst_104 = arith.constant 0.000000e+00 : f32
    %265 = vector.broadcast %cst_104 : f32 to vector<16x32xf32>
    %266 = arith.cmpf oge, %236, %265 : vector<16x32xf32>
    %cst_105 = arith.constant 0.000000e+00 : f32
    %267 = vector.broadcast %cst_105 : f32 to vector<16x32xf32>
    %268 = arith.subf %267, %264 : vector<16x32xf32>
    %269 = arith.select %266, %264, %268 : vector<16x32xi1>, vector<16x32xf32>
    %cst_106 = arith.constant 1.000000e+00 : f32
    %270 = vector.broadcast %cst_106 : f32 to vector<16x32xf32>
    %271 = arith.addf %270, %269 : vector<16x32xf32>
    %272 = arith.mulf %234, %271 : vector<16x32xf32>
    %cst_107 = arith.constant dense<0.000000e+00> : vector<16x32xf32>
    %273 = tpu.matmul %272, %25, %cst_107 {dimension_numbers = #tpu.dot_dimension_numbers<[1], [0], [0], [1], [0, 0, 1, 1], [], []>} : vector<16x32xf32>, vector<32x32xf32>, vector<16x32xf32> -> vector<16x32xf32>
    %274 = vector.broadcast %26 : vector<1x32xf32> to vector<16x32xf32>
    %275 = arith.addf %273, %274 : vector<16x32xf32>
    %276 = arith.addf %229, %275 : vector<16x32xf32>
    %cst_108 = arith.constant dense<0.000000e+00> : vector<16xf32>
    %277 = vector.multi_reduction <add>, %276, %cst_108 [1] : vector<16x32xf32> to vector<16xf32>
    %278 = vector.shape_cast %277 : vector<16xf32> to vector<16x1xf32>
    %cst_109 = arith.constant 3.200000e+01 : f32
    %279 = vector.broadcast %cst_109 : f32 to vector<16x1xf32>
    %280 = arith.divf %278, %279 : vector<16x1xf32>
    %281 = vector.broadcast %280 : vector<16x1xf32> to vector<16x32xf32>
    %282 = arith.subf %276, %281 : vector<16x32xf32>
    %283 = arith.mulf %282, %282 : vector<16x32xf32>
    %cst_110 = arith.constant dense<0.000000e+00> : vector<16xf32>
    %284 = vector.multi_reduction <add>, %283, %cst_110 [1] : vector<16x32xf32> to vector<16xf32>
    %285 = vector.shape_cast %284 : vector<16xf32> to vector<16x1xf32>
    %cst_111 = arith.constant 3.200000e+01 : f32
    %286 = vector.broadcast %cst_111 : f32 to vector<16x1xf32>
    %287 = arith.divf %285, %286 : vector<16x1xf32>
    %288 = vector.broadcast %280 : vector<16x1xf32> to vector<16x32xf32>
    %289 = arith.subf %276, %288 : vector<16x32xf32>
    %cst_112 = arith.constant 9.99999974E-6 : f32
    %290 = vector.broadcast %cst_112 : f32 to vector<16x1xf32>
    %291 = arith.addf %287, %290 : vector<16x1xf32>
    %292 = math.rsqrt %291 : vector<16x1xf32>
    %293 = vector.broadcast %292 : vector<16x1xf32> to vector<16x32xf32>
    %294 = arith.mulf %289, %293 : vector<16x32xf32>
    %295 = vector.broadcast %29 : vector<1x32xf32> to vector<16x32xf32>
    %296 = arith.mulf %294, %295 : vector<16x32xf32>
    %297 = vector.broadcast %30 : vector<1x32xf32> to vector<16x32xf32>
    %298 = arith.addf %296, %297 : vector<16x32xf32>
    %c0_113 = arith.constant 0 : index
    %c0_114 = arith.constant 0 : index
    %299 = vector.load %arg25[%c0_113, %c0_114] : memref<16x64xf32, #tpu.memory_space<vmem>>, vector<16x64xf32>
    tpu.vector_store %arg25[%c0_113, %c0_114], %203 {strides = array<i32>} : memref<16x64xf32, #tpu.memory_space<vmem>>, vector<16x64xf32>,
    %c0_115 = arith.constant 0 : index
    %c0_116 = arith.constant 0 : index
    %c0_117 = arith.constant 0 : index
    %300 = vector.load %arg19[%c0_115, %c0_116, %c0_117] : memref<3x32x32xf32, #tpu.memory_space<vmem>>, vector<1x32x32xf32>
    %301 = vector.shape_cast %300 : vector<1x32x32xf32> to vector<32x32xf32>
    %c1_118 = arith.constant 1 : index
    %c0_119 = arith.constant 0 : index
    %c0_120 = arith.constant 0 : index
    %302 = vector.load %arg19[%c1_118, %c0_119, %c0_120] : memref<3x32x32xf32, #tpu.memory_space<vmem>>, vector<1x32x32xf32>
    %303 = vector.shape_cast %302 : vector<1x32x32xf32> to vector<32x32xf32>
    %c2_121 = arith.constant 2 : index
    %c0_122 = arith.constant 0 : index
    %c0_123 = arith.constant 0 : index
    %304 = vector.load %arg19[%c2_121, %c0_122, %c0_123] : memref<3x32x32xf32, #tpu.memory_space<vmem>>, vector<1x32x32xf32>
    %305 = vector.shape_cast %304 : vector<1x32x32xf32> to vector<32x32xf32>
    %c0_124 = arith.constant 0 : index
    %c0_125 = arith.constant 0 : index
    %306 = vector.load %arg20[%c0_124, %c0_125] : memref<1x32xf32, #tpu.memory_space<vmem>>, vector<1x32xf32>
    %c0_126 = arith.constant 0 : index
    %c0_127 = arith.constant 0 : index
    %307 = vector.load %arg21[%c0_126, %c0_127] : memref<1x32xf32, #tpu.memory_space<vmem>>, vector<1x32xf32>
    %c0_128 = arith.constant 0 : index
    %c0_129 = arith.constant 0 : index
    %308 = vector.load %arg22[%c0_128, %c0_129] : memref<1x32xf32, #tpu.memory_space<vmem>>, vector<1x32xf32>
    %c0_130 = arith.constant 0 : index
    %c0_131 = arith.constant 0 : index
    %c0_132 = arith.constant 0 : index
    %309 = vector.load %arg23[%c0_130, %c0_131, %c0_132] : memref<3x8x16xf32, #tpu.memory_space<vmem>>, vector<1x8x16xf32>
    %310 = vector.shape_cast %309 : vector<1x8x16xf32> to vector<8x16xf32>
    %c1_133 = arith.constant 1 : index
    %c0_134 = arith.constant 0 : index
    %c0_135 = arith.constant 0 : index
    %311 = vector.load %arg23[%c1_133, %c0_134, %c0_135] : memref<3x8x16xf32, #tpu.memory_space<vmem>>, vector<1x8x16xf32>
    %312 = vector.shape_cast %311 : vector<1x8x16xf32> to vector<8x16xf32>
    %c2_136 = arith.constant 2 : index
    %c0_137 = arith.constant 0 : index
    %c0_138 = arith.constant 0 : index
    %313 = vector.load %arg23[%c2_136, %c0_137, %c0_138] : memref<3x8x16xf32, #tpu.memory_space<vmem>>, vector<1x8x16xf32>
    %314 = vector.shape_cast %313 : vector<1x8x16xf32> to vector<8x16xf32>
    %cst_139 = arith.constant dense<0.000000e+00> : vector<16x32xf32>
    %315 = tpu.matmul %0, %298, %cst_139 {dimension_numbers = #tpu.dot_dimension_numbers<[1], [0], [0], [1], [0, 0, 1, 1], [], []>} : vector<16x16xf32>, vector<16x32xf32>, vector<16x32xf32> -> vector<16x32xf32>
    %cst_140 = arith.constant dense<0.000000e+00> : vector<16x32xf32>
    %316 = tpu.matmul %315, %301, %cst_140 {dimension_numbers = #tpu.dot_dimension_numbers<[1], [0], [0], [1], [0, 0, 1, 1], [], []>} : vector<16x32xf32>, vector<32x32xf32>, vector<16x32xf32> -> vector<16x32xf32>
    %cst_141 = arith.constant dense<0.000000e+00> : vector<16x32xf32>
    %317 = tpu.matmul %298, %303, %cst_141 {dimension_numbers = #tpu.dot_dimension_numbers<[1], [0], [0], [1], [0, 0, 1, 1], [], []>} : vector<16x32xf32>, vector<32x32xf32>, vector<16x32xf32> -> vector<16x32xf32>
    %318 = arith.addf %316, %317 : vector<16x32xf32>
    %cst_142 = arith.constant dense<0.000000e+00> : vector<16x32xf32>
    %319 = tpu.matmul %1, %298, %cst_142 {dimension_numbers = #tpu.dot_dimension_numbers<[1], [0], [0], [1], [0, 0, 1, 1], [], []>} : vector<16x16xf32>, vector<16x32xf32>, vector<16x32xf32> -> vector<16x32xf32>
    %cst_143 = arith.constant dense<0.000000e+00> : vector<16x32xf32>
    %320 = tpu.matmul %319, %305, %cst_143 {dimension_numbers = #tpu.dot_dimension_numbers<[1], [0], [0], [1], [0, 0, 1, 1], [], []>} : vector<16x32xf32>, vector<32x32xf32>, vector<16x32xf32> -> vector<16x32xf32>
    %321 = arith.addf %318, %320 : vector<16x32xf32>
    %322 = vector.broadcast %306 : vector<1x32xf32> to vector<16x32xf32>
    %323 = arith.addf %321, %322 : vector<16x32xf32>
    %cst_144 = arith.constant dense<0.000000e+00> : vector<32xf32>
    %324 = vector.multi_reduction <add>, %323, %cst_144 [0] : vector<16x32xf32> to vector<32xf32>
    %325 = vector.shape_cast %324 : vector<32xf32> to vector<1x32xf32>
    %cst_145 = arith.constant 1.600000e+01 : f32
    %326 = vector.broadcast %cst_145 : f32 to vector<1x32xf32>
    %327 = arith.divf %325, %326 : vector<1x32xf32>
    %328 = vector.broadcast %327 : vector<1x32xf32> to vector<16x32xf32>
    %329 = arith.subf %323, %328 : vector<16x32xf32>
    %330 = arith.mulf %329, %329 : vector<16x32xf32>
    %cst_146 = arith.constant dense<0.000000e+00> : vector<32xf32>
    %331 = vector.multi_reduction <add>, %330, %cst_146 [0] : vector<16x32xf32> to vector<32xf32>
    %332 = vector.shape_cast %331 : vector<32xf32> to vector<1x32xf32>
    %cst_147 = arith.constant 1.600000e+01 : f32
    %333 = vector.broadcast %cst_147 : f32 to vector<1x32xf32>
    %334 = arith.divf %332, %333 : vector<1x32xf32>
    %335 = vector.broadcast %327 : vector<1x32xf32> to vector<16x32xf32>
    %336 = arith.subf %323, %335 : vector<16x32xf32>
    %cst_148 = arith.constant 9.99999974E-6 : f32
    %337 = vector.broadcast %cst_148 : f32 to vector<1x32xf32>
    %338 = arith.addf %334, %337 : vector<1x32xf32>
    %339 = math.rsqrt %338 : vector<1x32xf32>
    %340 = vector.broadcast %339 : vector<1x32xf32> to vector<16x32xf32>
    %341 = arith.mulf %336, %340 : vector<16x32xf32>
    %342 = vector.broadcast %307 : vector<1x32xf32> to vector<16x32xf32>
    %343 = arith.mulf %341, %342 : vector<16x32xf32>
    %344 = vector.broadcast %308 : vector<1x32xf32> to vector<16x32xf32>
    %345 = arith.addf %343, %344 : vector<16x32xf32>
    %cst_149 = arith.constant 0.000000e+00 : f32
    %346 = vector.broadcast %cst_149 : f32 to vector<16x32xf32>
    %347 = arith.cmpf ogt, %345, %346 : vector<16x32xf32>
    %348 = math.exp %345 : vector<16x32xf32>
    %cst_150 = arith.constant 1.000000e+00 : f32
    %349 = vector.broadcast %cst_150 : f32 to vector<16x32xf32>
    %350 = arith.subf %348, %349 : vector<16x32xf32>
    %351 = arith.select %347, %345, %350 : vector<16x32xi1>, vector<16x32xf32>
    %cst_151 = arith.constant dense<0.000000e+00> : vector<8x32xf32>
    %352 = tpu.matmul %310, %351, %cst_151 {dimension_numbers = #tpu.dot_dimension_numbers<[1], [0], [0], [1], [0, 0, 1, 1], [], []>} : vector<8x16xf32>, vector<16x32xf32>, vector<8x32xf32> -> vector<8x32xf32>
    %cst_152 = arith.constant dense<0.000000e+00> : vector<8x32xf32>
    %353 = tpu.matmul %312, %351, %cst_152 {dimension_numbers = #tpu.dot_dimension_numbers<[1], [0], [0], [1], [0, 0, 1, 1], [], []>} : vector<8x16xf32>, vector<16x32xf32>, vector<8x32xf32> -> vector<8x32xf32>
    %354 = arith.maximumf %352, %353 : vector<8x32xf32>
    %cst_153 = arith.constant dense<0.000000e+00> : vector<8x32xf32>
    %355 = tpu.matmul %314, %351, %cst_153 {dimension_numbers = #tpu.dot_dimension_numbers<[1], [0], [0], [1], [0, 0, 1, 1], [], []>} : vector<8x16xf32>, vector<16x32xf32>, vector<8x32xf32> -> vector<8x32xf32>
    %356 = arith.maximumf %354, %355 : vector<8x32xf32>
    %c0_154 = arith.constant 0 : index
    %c0_155 = arith.constant 0 : index
    %357 = vector.load %arg24[%c0_154, %c0_155] : memref<8x32xf32, #tpu.memory_space<vmem>>, vector<8x32xf32>
    tpu.vector_store %arg24[%c0_154, %c0_155], %356 {strides = array<i32>} : memref<8x32xf32, #tpu.memory_space<vmem>>, vector<8x32xf32>,
    return
  }
  func.func @transform_0(%arg0: i32) -> (i32, i32) {
    %c0_i32 = arith.constant 0 : i32
    %c0_i32_0 = arith.constant 0 : i32
    %c0_i32_1 = arith.constant 0 : i32
    return %c0_i32, %c0_i32_0 : i32, i32
  }
  func.func @transform_1(%arg0: i32) -> (i32, i32) {
    %c0_i32 = arith.constant 0 : i32
    %c0_i32_0 = arith.constant 0 : i32
    %c0_i32_1 = arith.constant 0 : i32
    return %c0_i32, %c0_i32_0 : i32, i32
  }
  func.func @transform_2(%arg0: i32) -> (i32, i32, i32) {
    %c0_i32 = arith.constant 0 : i32
    %c0_i32_0 = arith.constant 0 : i32
    %c0_i32_1 = arith.constant 0 : i32
    %c0_i32_2 = arith.constant 0 : i32
    return %c0_i32, %c0_i32_0, %c0_i32_1 : i32, i32, i32
  }
  func.func @transform_3(%arg0: i32) -> (i32, i32) {
    %c0_i32 = arith.constant 0 : i32
    %c0_i32_0 = arith.constant 0 : i32
    %c0_i32_1 = arith.constant 0 : i32
    return %c0_i32, %c0_i32_0 : i32, i32
  }
  func.func @transform_4(%arg0: i32) -> (i32, i32) {
    %c0_i32 = arith.constant 0 : i32
    %c0_i32_0 = arith.constant 0 : i32
    %c0_i32_1 = arith.constant 0 : i32
    return %c0_i32, %c0_i32_0 : i32, i32
  }
  func.func @transform_5(%arg0: i32) -> (i32, i32) {
    %c0_i32 = arith.constant 0 : i32
    %c0_i32_0 = arith.constant 0 : i32
    %c0_i32_1 = arith.constant 0 : i32
    return %c0_i32, %c0_i32_0 : i32, i32
  }
  func.func @transform_6(%arg0: i32) -> (i32, i32) {
    %c0_i32 = arith.constant 0 : i32
    %c0_i32_0 = arith.constant 0 : i32
    %c0_i32_1 = arith.constant 0 : i32
    return %c0_i32, %c0_i32_0 : i32, i32
  }
  func.func @transform_7(%arg0: i32) -> (i32, i32) {
    %c0_i32 = arith.constant 0 : i32
    %c0_i32_0 = arith.constant 0 : i32
    %c0_i32_1 = arith.constant 0 : i32
    return %c0_i32, %c0_i32_0 : i32, i32
  }
  func.func @transform_8(%arg0: i32) -> (i32, i32) {
    %c0_i32 = arith.constant 0 : i32
    %c0_i32_0 = arith.constant 0 : i32
    %c0_i32_1 = arith.constant 0 : i32
    return %c0_i32, %c0_i32_0 : i32, i32
  }
  func.func @transform_9(%arg0: i32) -> (i32, i32) {
    %c0_i32 = arith.constant 0 : i32
    %c0_i32_0 = arith.constant 0 : i32
    %c0_i32_1 = arith.constant 0 : i32
    return %c0_i32, %c0_i32_0 : i32, i32
  }
  func.func @transform_10(%arg0: i32) -> (i32, i32) {
    %c0_i32 = arith.constant 0 : i32
    %c0_i32_0 = arith.constant 0 : i32
    %c0_i32_1 = arith.constant 0 : i32
    return %c0_i32, %c0_i32_0 : i32, i32
  }
  func.func @transform_11(%arg0: i32) -> (i32, i32) {
    %c0_i32 = arith.constant 0 : i32
    %c0_i32_0 = arith.constant 0 : i32
    %c0_i32_1 = arith.constant 0 : i32
    return %c0_i32, %c0_i32_0 : i32, i32
  }
  func.func @transform_12(%arg0: i32) -> (i32, i32) {
    %c0_i32 = arith.constant 0 : i32
    %c0_i32_0 = arith.constant 0 : i32
    %c0_i32_1 = arith.constant 0 : i32
    return %c0_i32, %c0_i32_0 : i32, i32
  }
  func.func @transform_13(%arg0: i32) -> (i32, i32) {
    %c0_i32 = arith.constant 0 : i32
    %c0_i32_0 = arith.constant 0 : i32
    %c0_i32_1 = arith.constant 0 : i32
    return %c0_i32, %c0_i32_0 : i32, i32
  }
  func.func @transform_14(%arg0: i32) -> (i32, i32) {
    %c0_i32 = arith.constant 0 : i32
    %c0_i32_0 = arith.constant 0 : i32
    %c0_i32_1 = arith.constant 0 : i32
    return %c0_i32, %c0_i32_0 : i32, i32
  }
  func.func @transform_15(%arg0: i32) -> (i32, i32) {
    %c0_i32 = arith.constant 0 : i32
    %c0_i32_0 = arith.constant 0 : i32
    %c0_i32_1 = arith.constant 0 : i32
    return %c0_i32, %c0_i32_0 : i32, i32
  }
  func.func @transform_16(%arg0: i32) -> (i32, i32) {
    %c0_i32 = arith.constant 0 : i32
    %c0_i32_0 = arith.constant 0 : i32
    %c0_i32_1 = arith.constant 0 : i32
    return %c0_i32, %c0_i32_0 : i32, i32
  }
  func.func @transform_17(%arg0: i32) -> (i32, i32) {
    %c0_i32 = arith.constant 0 : i32
    %c0_i32_0 = arith.constant 0 : i32
    %c0_i32_1 = arith.constant 0 : i32
    return %c0_i32, %c0_i32_0 : i32, i32
  }
  func.func @transform_18(%arg0: i32) -> (i32, i32, i32) {
    %c0_i32 = arith.constant 0 : i32
    %c0_i32_0 = arith.constant 0 : i32
    %c0_i32_1 = arith.constant 0 : i32
    %c0_i32_2 = arith.constant 0 : i32
    return %c0_i32, %c0_i32_0, %c0_i32_1 : i32, i32, i32
  }
  func.func @transform_19(%arg0: i32) -> (i32, i32) {
    %c0_i32 = arith.constant 0 : i32
    %c0_i32_0 = arith.constant 0 : i32
    %c0_i32_1 = arith.constant 0 : i32
    return %c0_i32, %c0_i32_0 : i32, i32
  }
  func.func @transform_20(%arg0: i32) -> (i32, i32) {
    %c0_i32 = arith.constant 0 : i32
    %c0_i32_0 = arith.constant 0 : i32
    %c0_i32_1 = arith.constant 0 : i32
    return %c0_i32, %c0_i32_0 : i32, i32
  }
  func.func @transform_21(%arg0: i32) -> (i32, i32) {
    %c0_i32 = arith.constant 0 : i32
    %c0_i32_0 = arith.constant 0 : i32
    %c0_i32_1 = arith.constant 0 : i32
    return %c0_i32, %c0_i32_0 : i32, i32
  }
  func.func @transform_22(%arg0: i32) -> (i32, i32, i32) {
    %c0_i32 = arith.constant 0 : i32
    %c0_i32_0 = arith.constant 0 : i32
    %c0_i32_1 = arith.constant 0 : i32
    %c0_i32_2 = arith.constant 0 : i32
    return %c0_i32, %c0_i32_0, %c0_i32_1 : i32, i32, i32
  }
  func.func @transform_23(%arg0: i32) -> (i32, i32) {
    %c0_i32 = arith.constant 0 : i32
    %c0_i32_0 = arith.constant 0 : i32
    %c0_i32_1 = arith.constant 0 : i32
    return %c0_i32, %c0_i32_0 : i32, i32
  }
  func.func @transform_24(%arg0: i32) -> (i32, i32) {
    %c0_i32 = arith.constant 0 : i32
    %c0_i32_0 = arith.constant 0 : i32
    %c0_i32_1 = arith.constant 0 : i32
    return %c0_i32, %c0_i32_0 : i32, i32
  }
}

module attributes {stable_mosaic.version = 11 : i64} {
  func.func @_stage1_kernel(%arg0: i32, %arg1: memref<8x32xf32, #tpu.memory_space<vmem>>, %arg2: memref<8x8xf32, #tpu.memory_space<vmem>>, %arg3: memref<8x8xf32, #tpu.memory_space<vmem>>, %arg4: memref<8x8xf32, #tpu.memory_space<vmem>>, %arg5: memref<32x96xf32, #tpu.memory_space<vmem>>, %arg6: memref<1x96xf32, #tpu.memory_space<vmem>>, %arg7: memref<32x32xf32, #tpu.memory_space<vmem>>, %arg8: memref<1x32xf32, #tpu.memory_space<vmem>>, %arg9: memref<32x32xf32, #tpu.memory_space<vmem>>, %arg10: memref<1x32xf32, #tpu.memory_space<vmem>>, %arg11: memref<32x32xf32, #tpu.memory_space<vmem>>, %arg12: memref<1x32xf32, #tpu.memory_space<vmem>>, %arg13: memref<1x32xf32, #tpu.memory_space<vmem>>, %arg14: memref<1x32xf32, #tpu.memory_space<vmem>>, %arg15: memref<1x32xf32, #tpu.memory_space<vmem>>, %arg16: memref<1x32xf32, #tpu.memory_space<vmem>>, %arg17: memref<3x32x32xf32, #tpu.memory_space<vmem>>, %arg18: memref<1x32xf32, #tpu.memory_space<vmem>>, %arg19: memref<1x32xf32, #tpu.memory_space<vmem>>, %arg20: memref<1x32xf32, #tpu.memory_space<vmem>>, %arg21: memref<3x4x8xf32, #tpu.memory_space<vmem>>, %arg22: memref<4x32xf32, #tpu.memory_space<vmem>>, %arg23: memref<8x32xf32, #tpu.memory_space<vmem>>) attributes {dimension_semantics = [#tpu.dimension_semantics<arbitrary>], iteration_bounds = array<i64: 1>, scalar_prefetch = 0 : i64, scratch_operands = 0 : i64, tpu.core_type = #tpu.core_type<tc>, window_params = [{pipeline_mode = #tpu.pipeline_mode<synchronous>, transform_indices = @transform_0, window_bounds = array<i64: 8, 32>}, {pipeline_mode = #tpu.pipeline_mode<synchronous>, transform_indices = @transform_1, window_bounds = array<i64: 8, 8>}, {pipeline_mode = #tpu.pipeline_mode<synchronous>, transform_indices = @transform_2, window_bounds = array<i64: 8, 8>}, {pipeline_mode = #tpu.pipeline_mode<synchronous>, transform_indices = @transform_3, window_bounds = array<i64: 8, 8>}, {pipeline_mode = #tpu.pipeline_mode<synchronous>, transform_indices = @transform_4, window_bounds = array<i64: 32, 96>}, {pipeline_mode = #tpu.pipeline_mode<synchronous>, transform_indices = @transform_5, window_bounds = array<i64: 1, 96>}, {pipeline_mode = #tpu.pipeline_mode<synchronous>, transform_indices = @transform_6, window_bounds = array<i64: 32, 32>}, {pipeline_mode = #tpu.pipeline_mode<synchronous>, transform_indices = @transform_7, window_bounds = array<i64: 1, 32>}, {pipeline_mode = #tpu.pipeline_mode<synchronous>, transform_indices = @transform_8, window_bounds = array<i64: 32, 32>}, {pipeline_mode = #tpu.pipeline_mode<synchronous>, transform_indices = @transform_9, window_bounds = array<i64: 1, 32>}, {pipeline_mode = #tpu.pipeline_mode<synchronous>, transform_indices = @transform_10, window_bounds = array<i64: 32, 32>}, {pipeline_mode = #tpu.pipeline_mode<synchronous>, transform_indices = @transform_11, window_bounds = array<i64: 1, 32>}, {pipeline_mode = #tpu.pipeline_mode<synchronous>, transform_indices = @transform_12, window_bounds = array<i64: 1, 32>}, {pipeline_mode = #tpu.pipeline_mode<synchronous>, transform_indices = @transform_13, window_bounds = array<i64: 1, 32>}, {pipeline_mode = #tpu.pipeline_mode<synchronous>, transform_indices = @transform_14, window_bounds = array<i64: 1, 32>}, {pipeline_mode = #tpu.pipeline_mode<synchronous>, transform_indices = @transform_15, window_bounds = array<i64: 1, 32>}, {pipeline_mode = #tpu.pipeline_mode<synchronous>, transform_indices = @transform_16, window_bounds = array<i64: 3, 32, 32>}, {pipeline_mode = #tpu.pipeline_mode<synchronous>, transform_indices = @transform_17, window_bounds = array<i64: 1, 32>}, {pipeline_mode = #tpu.pipeline_mode<synchronous>, transform_indices = @transform_18, window_bounds = array<i64: 1, 32>}, {pipeline_mode = #tpu.pipeline_mode<synchronous>, transform_indices = @transform_19, window_bounds = array<i64: 1, 32>}, {pipeline_mode = #tpu.pipeline_mode<synchronous>, transform_indices = @transform_20, window_bounds = array<i64: 3, 4, 8>}, {pipeline_mode = #tpu.pipeline_mode<synchronous>, transform_indices = @transform_21, window_bounds = array<i64: 4, 32>}, {pipeline_mode = #tpu.pipeline_mode<synchronous>, transform_indices = @transform_22, window_bounds = array<i64: 8, 32>}]} {
    %c0 = arith.constant 0 : index
    %c0_0 = arith.constant 0 : index
    %0 = vector.load %arg1[%c0, %c0_0] : memref<8x32xf32, #tpu.memory_space<vmem>>, vector<8x32xf32>
    %c0_1 = arith.constant 0 : index
    %c0_2 = arith.constant 0 : index
    %1 = vector.load %arg4[%c0_1, %c0_2] : memref<8x8xf32, #tpu.memory_space<vmem>>, vector<8x8xf32>
    %c0_3 = arith.constant 0 : index
    %c0_4 = arith.constant 0 : index
    %2 = vector.load %arg5[%c0_3, %c0_4] : memref<32x96xf32, #tpu.memory_space<vmem>>, vector<32x96xf32>
    %c0_5 = arith.constant 0 : index
    %c0_6 = arith.constant 0 : index
    %3 = vector.load %arg6[%c0_5, %c0_6] : memref<1x96xf32, #tpu.memory_space<vmem>>, vector<1x96xf32>
    %c0_7 = arith.constant 0 : index
    %c0_8 = arith.constant 0 : index
    %4 = vector.load %arg7[%c0_7, %c0_8] : memref<32x32xf32, #tpu.memory_space<vmem>>, vector<32x32xf32>
    %c0_9 = arith.constant 0 : index
    %c0_10 = arith.constant 0 : index
    %5 = vector.load %arg8[%c0_9, %c0_10] : memref<1x32xf32, #tpu.memory_space<vmem>>, vector<1x32xf32>
    %c0_11 = arith.constant 0 : index
    %c0_12 = arith.constant 0 : index
    %6 = vector.load %arg9[%c0_11, %c0_12] : memref<32x32xf32, #tpu.memory_space<vmem>>, vector<32x32xf32>
    %c0_13 = arith.constant 0 : index
    %c0_14 = arith.constant 0 : index
    %7 = vector.load %arg10[%c0_13, %c0_14] : memref<1x32xf32, #tpu.memory_space<vmem>>, vector<1x32xf32>
    %c0_15 = arith.constant 0 : index
    %c0_16 = arith.constant 0 : index
    %8 = vector.load %arg11[%c0_15, %c0_16] : memref<32x32xf32, #tpu.memory_space<vmem>>, vector<32x32xf32>
    %c0_17 = arith.constant 0 : index
    %c0_18 = arith.constant 0 : index
    %9 = vector.load %arg12[%c0_17, %c0_18] : memref<1x32xf32, #tpu.memory_space<vmem>>, vector<1x32xf32>
    %c0_19 = arith.constant 0 : index
    %c0_20 = arith.constant 0 : index
    %10 = vector.load %arg13[%c0_19, %c0_20] : memref<1x32xf32, #tpu.memory_space<vmem>>, vector<1x32xf32>
    %c0_21 = arith.constant 0 : index
    %c0_22 = arith.constant 0 : index
    %11 = vector.load %arg14[%c0_21, %c0_22] : memref<1x32xf32, #tpu.memory_space<vmem>>, vector<1x32xf32>
    %c0_23 = arith.constant 0 : index
    %c0_24 = arith.constant 0 : index
    %12 = vector.load %arg15[%c0_23, %c0_24] : memref<1x32xf32, #tpu.memory_space<vmem>>, vector<1x32xf32>
    %c0_25 = arith.constant 0 : index
    %c0_26 = arith.constant 0 : index
    %13 = vector.load %arg16[%c0_25, %c0_26] : memref<1x32xf32, #tpu.memory_space<vmem>>, vector<1x32xf32>
    %cst = arith.constant dense<0.000000e+00> : vector<8x96xf32>
    %14 = tpu.matmul %0, %2, %cst {dimension_numbers = #tpu.dot_dimension_numbers<[1], [0], [0], [1], [0, 0, 1, 1], [], []>} : vector<8x32xf32>, vector<32x96xf32>, vector<8x96xf32> -> vector<8x96xf32>
    %15 = vector.broadcast %3 : vector<1x96xf32> to vector<8x96xf32>
    %16 = arith.addf %14, %15 : vector<8x96xf32>
    %17 = vector.extract_strided_slice %16 {offsets = [0, 0], sizes = [8, 4], strides = [1, 1]} : vector<8x96xf32> to vector<8x4xf32>
    %18 = vector.extract_strided_slice %16 {offsets = [0, 32], sizes = [8, 4], strides = [1, 1]} : vector<8x96xf32> to vector<8x4xf32>
    %19 = vector.extract_strided_slice %16 {offsets = [0, 64], sizes = [8, 4], strides = [1, 1]} : vector<8x96xf32> to vector<8x4xf32>
    %cst_27 = arith.constant dense<0.000000e+00> : vector<8x8xf32>
    %20 = tpu.matmul %17, %18, %cst_27 {dimension_numbers = #tpu.dot_dimension_numbers<[1], [1], [0], [0], [0, 0, 1, 0], [], []>} : vector<8x4xf32>, vector<8x4xf32>, vector<8x8xf32> -> vector<8x8xf32>
    %cst_28 = arith.constant 5.000000e-01 : f32
    %21 = vector.broadcast %cst_28 : f32 to vector<8x8xf32>
    %22 = arith.mulf %20, %21 : vector<8x8xf32>
    %23 = arith.addf %22, %1 : vector<8x8xf32>
    %cst_29 = arith.constant dense<0xFF800000> : vector<8xf32>
    %24 = vector.multi_reduction <maximumf>, %23, %cst_29 [1] : vector<8x8xf32> to vector<8xf32>
    %25 = vector.shape_cast %24 : vector<8xf32> to vector<8x1xf32>
    %26 = vector.broadcast %25 : vector<8x1xf32> to vector<8x8xf32>
    %27 = arith.subf %23, %26 : vector<8x8xf32>
    %28 = math.exp %27 : vector<8x8xf32>
    %cst_30 = arith.constant dense<0.000000e+00> : vector<8xf32>
    %29 = vector.multi_reduction <add>, %28, %cst_30 [1] : vector<8x8xf32> to vector<8xf32>
    %30 = vector.shape_cast %29 : vector<8xf32> to vector<8x1xf32>
    %31 = tpu.reciprocal %30 {approx = true} : vector<8x1xf32> -> vector<8x1xf32>
    %32 = vector.broadcast %31 : vector<8x1xf32> to vector<8x8xf32>
    %33 = arith.mulf %28, %32 : vector<8x8xf32>
    %cst_31 = arith.constant dense<0.000000e+00> : vector<8x4xf32>
    %34 = tpu.matmul %33, %19, %cst_31 {dimension_numbers = #tpu.dot_dimension_numbers<[1], [0], [0], [1], [0, 0, 1, 1], [], []>} : vector<8x8xf32>, vector<8x4xf32>, vector<8x4xf32> -> vector<8x4xf32>
    %35 = vector.extract_strided_slice %33 {offsets = [0, 0], sizes = [8, 4], strides = [1, 1]} : vector<8x8xf32> to vector<8x4xf32>
    %36 = vector.extract_strided_slice %33 {offsets = [0, 4], sizes = [8, 4], strides = [1, 1]} : vector<8x8xf32> to vector<8x4xf32>
    %37 = arith.addf %35, %36 : vector<8x4xf32>
    %38 = vector.extract_strided_slice %16 {offsets = [0, 4], sizes = [8, 4], strides = [1, 1]} : vector<8x96xf32> to vector<8x4xf32>
    %39 = vector.extract_strided_slice %16 {offsets = [0, 36], sizes = [8, 4], strides = [1, 1]} : vector<8x96xf32> to vector<8x4xf32>
    %40 = vector.extract_strided_slice %16 {offsets = [0, 68], sizes = [8, 4], strides = [1, 1]} : vector<8x96xf32> to vector<8x4xf32>
    %cst_32 = arith.constant dense<0.000000e+00> : vector<8x8xf32>
    %41 = tpu.matmul %38, %39, %cst_32 {dimension_numbers = #tpu.dot_dimension_numbers<[1], [1], [0], [0], [0, 0, 1, 0], [], []>} : vector<8x4xf32>, vector<8x4xf32>, vector<8x8xf32> -> vector<8x8xf32>
    %cst_33 = arith.constant 5.000000e-01 : f32
    %42 = vector.broadcast %cst_33 : f32 to vector<8x8xf32>
    %43 = arith.mulf %41, %42 : vector<8x8xf32>
    %44 = arith.addf %43, %1 : vector<8x8xf32>
    %cst_34 = arith.constant dense<0xFF800000> : vector<8xf32>
    %45 = vector.multi_reduction <maximumf>, %44, %cst_34 [1] : vector<8x8xf32> to vector<8xf32>
    %46 = vector.shape_cast %45 : vector<8xf32> to vector<8x1xf32>
    %47 = vector.broadcast %46 : vector<8x1xf32> to vector<8x8xf32>
    %48 = arith.subf %44, %47 : vector<8x8xf32>
    %49 = math.exp %48 : vector<8x8xf32>
    %cst_35 = arith.constant dense<0.000000e+00> : vector<8xf32>
    %50 = vector.multi_reduction <add>, %49, %cst_35 [1] : vector<8x8xf32> to vector<8xf32>
    %51 = vector.shape_cast %50 : vector<8xf32> to vector<8x1xf32>
    %52 = tpu.reciprocal %51 {approx = true} : vector<8x1xf32> -> vector<8x1xf32>
    %53 = vector.broadcast %52 : vector<8x1xf32> to vector<8x8xf32>
    %54 = arith.mulf %49, %53 : vector<8x8xf32>
    %cst_36 = arith.constant dense<0.000000e+00> : vector<8x4xf32>
    %55 = tpu.matmul %54, %40, %cst_36 {dimension_numbers = #tpu.dot_dimension_numbers<[1], [0], [0], [1], [0, 0, 1, 1], [], []>} : vector<8x8xf32>, vector<8x4xf32>, vector<8x4xf32> -> vector<8x4xf32>
    %56 = vector.extract_strided_slice %54 {offsets = [0, 0], sizes = [8, 4], strides = [1, 1]} : vector<8x8xf32> to vector<8x4xf32>
    %57 = vector.extract_strided_slice %54 {offsets = [0, 4], sizes = [8, 4], strides = [1, 1]} : vector<8x8xf32> to vector<8x4xf32>
    %58 = arith.addf %56, %57 : vector<8x4xf32>
    %59 = vector.extract_strided_slice %16 {offsets = [0, 8], sizes = [8, 4], strides = [1, 1]} : vector<8x96xf32> to vector<8x4xf32>
    %60 = vector.extract_strided_slice %16 {offsets = [0, 40], sizes = [8, 4], strides = [1, 1]} : vector<8x96xf32> to vector<8x4xf32>
    %61 = vector.extract_strided_slice %16 {offsets = [0, 72], sizes = [8, 4], strides = [1, 1]} : vector<8x96xf32> to vector<8x4xf32>
    %cst_37 = arith.constant dense<0.000000e+00> : vector<8x8xf32>
    %62 = tpu.matmul %59, %60, %cst_37 {dimension_numbers = #tpu.dot_dimension_numbers<[1], [1], [0], [0], [0, 0, 1, 0], [], []>} : vector<8x4xf32>, vector<8x4xf32>, vector<8x8xf32> -> vector<8x8xf32>
    %cst_38 = arith.constant 5.000000e-01 : f32
    %63 = vector.broadcast %cst_38 : f32 to vector<8x8xf32>
    %64 = arith.mulf %62, %63 : vector<8x8xf32>
    %65 = arith.addf %64, %1 : vector<8x8xf32>
    %cst_39 = arith.constant dense<0xFF800000> : vector<8xf32>
    %66 = vector.multi_reduction <maximumf>, %65, %cst_39 [1] : vector<8x8xf32> to vector<8xf32>
    %67 = vector.shape_cast %66 : vector<8xf32> to vector<8x1xf32>
    %68 = vector.broadcast %67 : vector<8x1xf32> to vector<8x8xf32>
    %69 = arith.subf %65, %68 : vector<8x8xf32>
    %70 = math.exp %69 : vector<8x8xf32>
    %cst_40 = arith.constant dense<0.000000e+00> : vector<8xf32>
    %71 = vector.multi_reduction <add>, %70, %cst_40 [1] : vector<8x8xf32> to vector<8xf32>
    %72 = vector.shape_cast %71 : vector<8xf32> to vector<8x1xf32>
    %73 = tpu.reciprocal %72 {approx = true} : vector<8x1xf32> -> vector<8x1xf32>
    %74 = vector.broadcast %73 : vector<8x1xf32> to vector<8x8xf32>
    %75 = arith.mulf %70, %74 : vector<8x8xf32>
    %cst_41 = arith.constant dense<0.000000e+00> : vector<8x4xf32>
    %76 = tpu.matmul %75, %61, %cst_41 {dimension_numbers = #tpu.dot_dimension_numbers<[1], [0], [0], [1], [0, 0, 1, 1], [], []>} : vector<8x8xf32>, vector<8x4xf32>, vector<8x4xf32> -> vector<8x4xf32>
    %77 = vector.extract_strided_slice %75 {offsets = [0, 0], sizes = [8, 4], strides = [1, 1]} : vector<8x8xf32> to vector<8x4xf32>
    %78 = vector.extract_strided_slice %75 {offsets = [0, 4], sizes = [8, 4], strides = [1, 1]} : vector<8x8xf32> to vector<8x4xf32>
    %79 = arith.addf %77, %78 : vector<8x4xf32>
    %80 = vector.extract_strided_slice %16 {offsets = [0, 12], sizes = [8, 4], strides = [1, 1]} : vector<8x96xf32> to vector<8x4xf32>
    %81 = vector.extract_strided_slice %16 {offsets = [0, 44], sizes = [8, 4], strides = [1, 1]} : vector<8x96xf32> to vector<8x4xf32>
    %82 = vector.extract_strided_slice %16 {offsets = [0, 76], sizes = [8, 4], strides = [1, 1]} : vector<8x96xf32> to vector<8x4xf32>
    %cst_42 = arith.constant dense<0.000000e+00> : vector<8x8xf32>
    %83 = tpu.matmul %80, %81, %cst_42 {dimension_numbers = #tpu.dot_dimension_numbers<[1], [1], [0], [0], [0, 0, 1, 0], [], []>} : vector<8x4xf32>, vector<8x4xf32>, vector<8x8xf32> -> vector<8x8xf32>
    %cst_43 = arith.constant 5.000000e-01 : f32
    %84 = vector.broadcast %cst_43 : f32 to vector<8x8xf32>
    %85 = arith.mulf %83, %84 : vector<8x8xf32>
    %86 = arith.addf %85, %1 : vector<8x8xf32>
    %cst_44 = arith.constant dense<0xFF800000> : vector<8xf32>
    %87 = vector.multi_reduction <maximumf>, %86, %cst_44 [1] : vector<8x8xf32> to vector<8xf32>
    %88 = vector.shape_cast %87 : vector<8xf32> to vector<8x1xf32>
    %89 = vector.broadcast %88 : vector<8x1xf32> to vector<8x8xf32>
    %90 = arith.subf %86, %89 : vector<8x8xf32>
    %91 = math.exp %90 : vector<8x8xf32>
    %cst_45 = arith.constant dense<0.000000e+00> : vector<8xf32>
    %92 = vector.multi_reduction <add>, %91, %cst_45 [1] : vector<8x8xf32> to vector<8xf32>
    %93 = vector.shape_cast %92 : vector<8xf32> to vector<8x1xf32>
    %94 = tpu.reciprocal %93 {approx = true} : vector<8x1xf32> -> vector<8x1xf32>
    %95 = vector.broadcast %94 : vector<8x1xf32> to vector<8x8xf32>
    %96 = arith.mulf %91, %95 : vector<8x8xf32>
    %cst_46 = arith.constant dense<0.000000e+00> : vector<8x4xf32>
    %97 = tpu.matmul %96, %82, %cst_46 {dimension_numbers = #tpu.dot_dimension_numbers<[1], [0], [0], [1], [0, 0, 1, 1], [], []>} : vector<8x8xf32>, vector<8x4xf32>, vector<8x4xf32> -> vector<8x4xf32>
    %98 = vector.extract_strided_slice %96 {offsets = [0, 0], sizes = [8, 4], strides = [1, 1]} : vector<8x8xf32> to vector<8x4xf32>
    %99 = vector.extract_strided_slice %96 {offsets = [0, 4], sizes = [8, 4], strides = [1, 1]} : vector<8x8xf32> to vector<8x4xf32>
    %100 = arith.addf %98, %99 : vector<8x4xf32>
    %101 = vector.extract_strided_slice %16 {offsets = [0, 16], sizes = [8, 4], strides = [1, 1]} : vector<8x96xf32> to vector<8x4xf32>
    %102 = vector.extract_strided_slice %16 {offsets = [0, 48], sizes = [8, 4], strides = [1, 1]} : vector<8x96xf32> to vector<8x4xf32>
    %103 = vector.extract_strided_slice %16 {offsets = [0, 80], sizes = [8, 4], strides = [1, 1]} : vector<8x96xf32> to vector<8x4xf32>
    %cst_47 = arith.constant dense<0.000000e+00> : vector<8x8xf32>
    %104 = tpu.matmul %101, %102, %cst_47 {dimension_numbers = #tpu.dot_dimension_numbers<[1], [1], [0], [0], [0, 0, 1, 0], [], []>} : vector<8x4xf32>, vector<8x4xf32>, vector<8x8xf32> -> vector<8x8xf32>
    %cst_48 = arith.constant 5.000000e-01 : f32
    %105 = vector.broadcast %cst_48 : f32 to vector<8x8xf32>
    %106 = arith.mulf %104, %105 : vector<8x8xf32>
    %107 = arith.addf %106, %1 : vector<8x8xf32>
    %cst_49 = arith.constant dense<0xFF800000> : vector<8xf32>
    %108 = vector.multi_reduction <maximumf>, %107, %cst_49 [1] : vector<8x8xf32> to vector<8xf32>
    %109 = vector.shape_cast %108 : vector<8xf32> to vector<8x1xf32>
    %110 = vector.broadcast %109 : vector<8x1xf32> to vector<8x8xf32>
    %111 = arith.subf %107, %110 : vector<8x8xf32>
    %112 = math.exp %111 : vector<8x8xf32>
    %cst_50 = arith.constant dense<0.000000e+00> : vector<8xf32>
    %113 = vector.multi_reduction <add>, %112, %cst_50 [1] : vector<8x8xf32> to vector<8xf32>
    %114 = vector.shape_cast %113 : vector<8xf32> to vector<8x1xf32>
    %115 = tpu.reciprocal %114 {approx = true} : vector<8x1xf32> -> vector<8x1xf32>
    %116 = vector.broadcast %115 : vector<8x1xf32> to vector<8x8xf32>
    %117 = arith.mulf %112, %116 : vector<8x8xf32>
    %cst_51 = arith.constant dense<0.000000e+00> : vector<8x4xf32>
    %118 = tpu.matmul %117, %103, %cst_51 {dimension_numbers = #tpu.dot_dimension_numbers<[1], [0], [0], [1], [0, 0, 1, 1], [], []>} : vector<8x8xf32>, vector<8x4xf32>, vector<8x4xf32> -> vector<8x4xf32>
    %119 = vector.extract_strided_slice %117 {offsets = [0, 0], sizes = [8, 4], strides = [1, 1]} : vector<8x8xf32> to vector<8x4xf32>
    %120 = vector.extract_strided_slice %117 {offsets = [0, 4], sizes = [8, 4], strides = [1, 1]} : vector<8x8xf32> to vector<8x4xf32>
    %121 = arith.addf %119, %120 : vector<8x4xf32>
    %122 = vector.extract_strided_slice %16 {offsets = [0, 20], sizes = [8, 4], strides = [1, 1]} : vector<8x96xf32> to vector<8x4xf32>
    %123 = vector.extract_strided_slice %16 {offsets = [0, 52], sizes = [8, 4], strides = [1, 1]} : vector<8x96xf32> to vector<8x4xf32>
    %124 = vector.extract_strided_slice %16 {offsets = [0, 84], sizes = [8, 4], strides = [1, 1]} : vector<8x96xf32> to vector<8x4xf32>
    %cst_52 = arith.constant dense<0.000000e+00> : vector<8x8xf32>
    %125 = tpu.matmul %122, %123, %cst_52 {dimension_numbers = #tpu.dot_dimension_numbers<[1], [1], [0], [0], [0, 0, 1, 0], [], []>} : vector<8x4xf32>, vector<8x4xf32>, vector<8x8xf32> -> vector<8x8xf32>
    %cst_53 = arith.constant 5.000000e-01 : f32
    %126 = vector.broadcast %cst_53 : f32 to vector<8x8xf32>
    %127 = arith.mulf %125, %126 : vector<8x8xf32>
    %128 = arith.addf %127, %1 : vector<8x8xf32>
    %cst_54 = arith.constant dense<0xFF800000> : vector<8xf32>
    %129 = vector.multi_reduction <maximumf>, %128, %cst_54 [1] : vector<8x8xf32> to vector<8xf32>
    %130 = vector.shape_cast %129 : vector<8xf32> to vector<8x1xf32>
    %131 = vector.broadcast %130 : vector<8x1xf32> to vector<8x8xf32>
    %132 = arith.subf %128, %131 : vector<8x8xf32>
    %133 = math.exp %132 : vector<8x8xf32>
    %cst_55 = arith.constant dense<0.000000e+00> : vector<8xf32>
    %134 = vector.multi_reduction <add>, %133, %cst_55 [1] : vector<8x8xf32> to vector<8xf32>
    %135 = vector.shape_cast %134 : vector<8xf32> to vector<8x1xf32>
    %136 = tpu.reciprocal %135 {approx = true} : vector<8x1xf32> -> vector<8x1xf32>
    %137 = vector.broadcast %136 : vector<8x1xf32> to vector<8x8xf32>
    %138 = arith.mulf %133, %137 : vector<8x8xf32>
    %cst_56 = arith.constant dense<0.000000e+00> : vector<8x4xf32>
    %139 = tpu.matmul %138, %124, %cst_56 {dimension_numbers = #tpu.dot_dimension_numbers<[1], [0], [0], [1], [0, 0, 1, 1], [], []>} : vector<8x8xf32>, vector<8x4xf32>, vector<8x4xf32> -> vector<8x4xf32>
    %140 = vector.extract_strided_slice %138 {offsets = [0, 0], sizes = [8, 4], strides = [1, 1]} : vector<8x8xf32> to vector<8x4xf32>
    %141 = vector.extract_strided_slice %138 {offsets = [0, 4], sizes = [8, 4], strides = [1, 1]} : vector<8x8xf32> to vector<8x4xf32>
    %142 = arith.addf %140, %141 : vector<8x4xf32>
    %143 = vector.extract_strided_slice %16 {offsets = [0, 24], sizes = [8, 4], strides = [1, 1]} : vector<8x96xf32> to vector<8x4xf32>
    %144 = vector.extract_strided_slice %16 {offsets = [0, 56], sizes = [8, 4], strides = [1, 1]} : vector<8x96xf32> to vector<8x4xf32>
    %145 = vector.extract_strided_slice %16 {offsets = [0, 88], sizes = [8, 4], strides = [1, 1]} : vector<8x96xf32> to vector<8x4xf32>
    %cst_57 = arith.constant dense<0.000000e+00> : vector<8x8xf32>
    %146 = tpu.matmul %143, %144, %cst_57 {dimension_numbers = #tpu.dot_dimension_numbers<[1], [1], [0], [0], [0, 0, 1, 0], [], []>} : vector<8x4xf32>, vector<8x4xf32>, vector<8x8xf32> -> vector<8x8xf32>
    %cst_58 = arith.constant 5.000000e-01 : f32
    %147 = vector.broadcast %cst_58 : f32 to vector<8x8xf32>
    %148 = arith.mulf %146, %147 : vector<8x8xf32>
    %149 = arith.addf %148, %1 : vector<8x8xf32>
    %cst_59 = arith.constant dense<0xFF800000> : vector<8xf32>
    %150 = vector.multi_reduction <maximumf>, %149, %cst_59 [1] : vector<8x8xf32> to vector<8xf32>
    %151 = vector.shape_cast %150 : vector<8xf32> to vector<8x1xf32>
    %152 = vector.broadcast %151 : vector<8x1xf32> to vector<8x8xf32>
    %153 = arith.subf %149, %152 : vector<8x8xf32>
    %154 = math.exp %153 : vector<8x8xf32>
    %cst_60 = arith.constant dense<0.000000e+00> : vector<8xf32>
    %155 = vector.multi_reduction <add>, %154, %cst_60 [1] : vector<8x8xf32> to vector<8xf32>
    %156 = vector.shape_cast %155 : vector<8xf32> to vector<8x1xf32>
    %157 = tpu.reciprocal %156 {approx = true} : vector<8x1xf32> -> vector<8x1xf32>
    %158 = vector.broadcast %157 : vector<8x1xf32> to vector<8x8xf32>
    %159 = arith.mulf %154, %158 : vector<8x8xf32>
    %cst_61 = arith.constant dense<0.000000e+00> : vector<8x4xf32>
    %160 = tpu.matmul %159, %145, %cst_61 {dimension_numbers = #tpu.dot_dimension_numbers<[1], [0], [0], [1], [0, 0, 1, 1], [], []>} : vector<8x8xf32>, vector<8x4xf32>, vector<8x4xf32> -> vector<8x4xf32>
    %161 = vector.extract_strided_slice %159 {offsets = [0, 0], sizes = [8, 4], strides = [1, 1]} : vector<8x8xf32> to vector<8x4xf32>
    %162 = vector.extract_strided_slice %159 {offsets = [0, 4], sizes = [8, 4], strides = [1, 1]} : vector<8x8xf32> to vector<8x4xf32>
    %163 = arith.addf %161, %162 : vector<8x4xf32>
    %164 = vector.extract_strided_slice %16 {offsets = [0, 28], sizes = [8, 4], strides = [1, 1]} : vector<8x96xf32> to vector<8x4xf32>
    %165 = vector.extract_strided_slice %16 {offsets = [0, 60], sizes = [8, 4], strides = [1, 1]} : vector<8x96xf32> to vector<8x4xf32>
    %166 = vector.extract_strided_slice %16 {offsets = [0, 92], sizes = [8, 4], strides = [1, 1]} : vector<8x96xf32> to vector<8x4xf32>
    %cst_62 = arith.constant dense<0.000000e+00> : vector<8x8xf32>
    %167 = tpu.matmul %164, %165, %cst_62 {dimension_numbers = #tpu.dot_dimension_numbers<[1], [1], [0], [0], [0, 0, 1, 0], [], []>} : vector<8x4xf32>, vector<8x4xf32>, vector<8x8xf32> -> vector<8x8xf32>
    %cst_63 = arith.constant 5.000000e-01 : f32
    %168 = vector.broadcast %cst_63 : f32 to vector<8x8xf32>
    %169 = arith.mulf %167, %168 : vector<8x8xf32>
    %170 = arith.addf %169, %1 : vector<8x8xf32>
    %cst_64 = arith.constant dense<0xFF800000> : vector<8xf32>
    %171 = vector.multi_reduction <maximumf>, %170, %cst_64 [1] : vector<8x8xf32> to vector<8xf32>
    %172 = vector.shape_cast %171 : vector<8xf32> to vector<8x1xf32>
    %173 = vector.broadcast %172 : vector<8x1xf32> to vector<8x8xf32>
    %174 = arith.subf %170, %173 : vector<8x8xf32>
    %175 = math.exp %174 : vector<8x8xf32>
    %cst_65 = arith.constant dense<0.000000e+00> : vector<8xf32>
    %176 = vector.multi_reduction <add>, %175, %cst_65 [1] : vector<8x8xf32> to vector<8xf32>
    %177 = vector.shape_cast %176 : vector<8xf32> to vector<8x1xf32>
    %178 = tpu.reciprocal %177 {approx = true} : vector<8x1xf32> -> vector<8x1xf32>
    %179 = vector.broadcast %178 : vector<8x1xf32> to vector<8x8xf32>
    %180 = arith.mulf %175, %179 : vector<8x8xf32>
    %cst_66 = arith.constant dense<0.000000e+00> : vector<8x4xf32>
    %181 = tpu.matmul %180, %166, %cst_66 {dimension_numbers = #tpu.dot_dimension_numbers<[1], [0], [0], [1], [0, 0, 1, 1], [], []>} : vector<8x8xf32>, vector<8x4xf32>, vector<8x4xf32> -> vector<8x4xf32>
    %182 = vector.extract_strided_slice %180 {offsets = [0, 0], sizes = [8, 4], strides = [1, 1]} : vector<8x8xf32> to vector<8x4xf32>
    %183 = vector.extract_strided_slice %180 {offsets = [0, 4], sizes = [8, 4], strides = [1, 1]} : vector<8x8xf32> to vector<8x4xf32>
    %184 = arith.addf %182, %183 : vector<8x4xf32>
    %185 = tpu.concatenate %34, %55, %76, %97, %118, %139, %160, %181 in 1 : vector<8x4xf32>, vector<8x4xf32>, vector<8x4xf32>, vector<8x4xf32>, vector<8x4xf32>, vector<8x4xf32>, vector<8x4xf32>, vector<8x4xf32> -> vector<8x32xf32>
    %186 = tpu.concatenate %37, %58, %79, %100, %121, %142, %163, %184 in 1 : vector<8x4xf32>, vector<8x4xf32>, vector<8x4xf32>, vector<8x4xf32>, vector<8x4xf32>, vector<8x4xf32>, vector<8x4xf32>, vector<8x4xf32> -> vector<8x32xf32>
    %cst_67 = arith.constant dense<0.000000e+00> : vector<8x32xf32>
    %187 = tpu.matmul %185, %4, %cst_67 {dimension_numbers = #tpu.dot_dimension_numbers<[1], [0], [0], [1], [0, 0, 1, 1], [], []>} : vector<8x32xf32>, vector<32x32xf32>, vector<8x32xf32> -> vector<8x32xf32>
    %188 = arith.addf %0, %187 : vector<8x32xf32>
    %189 = vector.broadcast %5 : vector<1x32xf32> to vector<8x32xf32>
    %190 = arith.addf %188, %189 : vector<8x32xf32>
    %cst_68 = arith.constant dense<0.000000e+00> : vector<8xf32>
    %191 = vector.multi_reduction <add>, %190, %cst_68 [1] : vector<8x32xf32> to vector<8xf32>
    %192 = vector.shape_cast %191 : vector<8xf32> to vector<8x1xf32>
    %cst_69 = arith.constant 3.200000e+01 : f32
    %193 = vector.broadcast %cst_69 : f32 to vector<8x1xf32>
    %194 = arith.divf %192, %193 : vector<8x1xf32>
    %195 = vector.broadcast %194 : vector<8x1xf32> to vector<8x32xf32>
    %196 = arith.subf %190, %195 : vector<8x32xf32>
    %197 = arith.mulf %196, %196 : vector<8x32xf32>
    %cst_70 = arith.constant dense<0.000000e+00> : vector<8xf32>
    %198 = vector.multi_reduction <add>, %197, %cst_70 [1] : vector<8x32xf32> to vector<8xf32>
    %199 = vector.shape_cast %198 : vector<8xf32> to vector<8x1xf32>
    %cst_71 = arith.constant 3.200000e+01 : f32
    %200 = vector.broadcast %cst_71 : f32 to vector<8x1xf32>
    %201 = arith.divf %199, %200 : vector<8x1xf32>
    %202 = vector.broadcast %194 : vector<8x1xf32> to vector<8x32xf32>
    %203 = arith.subf %190, %202 : vector<8x32xf32>
    %cst_72 = arith.constant 9.99999974E-6 : f32
    %204 = vector.broadcast %cst_72 : f32 to vector<8x1xf32>
    %205 = arith.addf %201, %204 : vector<8x1xf32>
    %206 = math.rsqrt %205 : vector<8x1xf32>
    %207 = vector.broadcast %206 : vector<8x1xf32> to vector<8x32xf32>
    %208 = arith.mulf %203, %207 : vector<8x32xf32>
    %209 = vector.broadcast %10 : vector<1x32xf32> to vector<8x32xf32>
    %210 = arith.mulf %208, %209 : vector<8x32xf32>
    %211 = vector.broadcast %11 : vector<1x32xf32> to vector<8x32xf32>
    %212 = arith.addf %210, %211 : vector<8x32xf32>
    %cst_73 = arith.constant dense<0.000000e+00> : vector<8x32xf32>
    %213 = tpu.matmul %212, %6, %cst_73 {dimension_numbers = #tpu.dot_dimension_numbers<[1], [0], [0], [1], [0, 0, 1, 1], [], []>} : vector<8x32xf32>, vector<32x32xf32>, vector<8x32xf32> -> vector<8x32xf32>
    %214 = vector.broadcast %7 : vector<1x32xf32> to vector<8x32xf32>
    %215 = arith.addf %213, %214 : vector<8x32xf32>
    %cst_74 = arith.constant 5.000000e-01 : f32
    %216 = vector.broadcast %cst_74 : f32 to vector<8x32xf32>
    %217 = arith.mulf %216, %215 : vector<8x32xf32>
    %cst_75 = arith.constant 0.707106769 : f32
    %218 = vector.broadcast %cst_75 : f32 to vector<8x32xf32>
    %219 = arith.mulf %215, %218 : vector<8x32xf32>
    %220 = math.absf %219 : vector<8x32xf32>
    %cst_76 = arith.constant 0.327591091 : f32
    %221 = vector.broadcast %cst_76 : f32 to vector<8x32xf32>
    %222 = arith.mulf %221, %220 : vector<8x32xf32>
    %cst_77 = arith.constant 1.000000e+00 : f32
    %223 = vector.broadcast %cst_77 : f32 to vector<8x32xf32>
    %224 = arith.addf %223, %222 : vector<8x32xf32>
    %cst_78 = arith.constant 1.000000e+00 : f32
    %225 = vector.broadcast %cst_78 : f32 to vector<8x32xf32>
    %226 = arith.divf %225, %224 : vector<8x32xf32>
    %cst_79 = arith.constant 1.06140542 : f32
    %227 = vector.broadcast %cst_79 : f32 to vector<8x32xf32>
    %228 = arith.mulf %227, %226 : vector<8x32xf32>
    %cst_80 = arith.constant 1.45315206 : f32
    %229 = vector.broadcast %cst_80 : f32 to vector<8x32xf32>
    %230 = arith.subf %228, %229 : vector<8x32xf32>
    %231 = arith.mulf %230, %226 : vector<8x32xf32>
    %cst_81 = arith.constant 1.42141378 : f32
    %232 = vector.broadcast %cst_81 : f32 to vector<8x32xf32>
    %233 = arith.addf %231, %232 : vector<8x32xf32>
    %234 = arith.mulf %233, %226 : vector<8x32xf32>
    %cst_82 = arith.constant 0.284496725 : f32
    %235 = vector.broadcast %cst_82 : f32 to vector<8x32xf32>
    %236 = arith.subf %234, %235 : vector<8x32xf32>
    %237 = arith.mulf %236, %226 : vector<8x32xf32>
    %cst_83 = arith.constant 0.254829586 : f32
    %238 = vector.broadcast %cst_83 : f32 to vector<8x32xf32>
    %239 = arith.addf %237, %238 : vector<8x32xf32>
    %240 = arith.mulf %239, %226 : vector<8x32xf32>
    %cst_84 = arith.constant 0.000000e+00 : f32
    %241 = vector.broadcast %cst_84 : f32 to vector<8x32xf32>
    %242 = arith.subf %241, %219 : vector<8x32xf32>
    %243 = arith.mulf %242, %219 : vector<8x32xf32>
    %244 = math.exp %243 : vector<8x32xf32>
    %245 = arith.mulf %240, %244 : vector<8x32xf32>
    %cst_85 = arith.constant 1.000000e+00 : f32
    %246 = vector.broadcast %cst_85 : f32 to vector<8x32xf32>
    %247 = arith.subf %246, %245 : vector<8x32xf32>
    %cst_86 = arith.constant 0.000000e+00 : f32
    %248 = vector.broadcast %cst_86 : f32 to vector<8x32xf32>
    %249 = arith.cmpf oge, %219, %248 : vector<8x32xf32>
    %cst_87 = arith.constant 0.000000e+00 : f32
    %250 = vector.broadcast %cst_87 : f32 to vector<8x32xf32>
    %251 = arith.subf %250, %247 : vector<8x32xf32>
    %252 = arith.select %249, %247, %251 : vector<8x32xi1>, vector<8x32xf32>
    %cst_88 = arith.constant 1.000000e+00 : f32
    %253 = vector.broadcast %cst_88 : f32 to vector<8x32xf32>
    %254 = arith.addf %253, %252 : vector<8x32xf32>
    %255 = arith.mulf %217, %254 : vector<8x32xf32>
    %cst_89 = arith.constant dense<0.000000e+00> : vector<8x32xf32>
    %256 = tpu.matmul %255, %8, %cst_89 {dimension_numbers = #tpu.dot_dimension_numbers<[1], [0], [0], [1], [0, 0, 1, 1], [], []>} : vector<8x32xf32>, vector<32x32xf32>, vector<8x32xf32> -> vector<8x32xf32>
    %257 = vector.broadcast %9 : vector<1x32xf32> to vector<8x32xf32>
    %258 = arith.addf %256, %257 : vector<8x32xf32>
    %259 = arith.addf %212, %258 : vector<8x32xf32>
    %cst_90 = arith.constant dense<0.000000e+00> : vector<8xf32>
    %260 = vector.multi_reduction <add>, %259, %cst_90 [1] : vector<8x32xf32> to vector<8xf32>
    %261 = vector.shape_cast %260 : vector<8xf32> to vector<8x1xf32>
    %cst_91 = arith.constant 3.200000e+01 : f32
    %262 = vector.broadcast %cst_91 : f32 to vector<8x1xf32>
    %263 = arith.divf %261, %262 : vector<8x1xf32>
    %264 = vector.broadcast %263 : vector<8x1xf32> to vector<8x32xf32>
    %265 = arith.subf %259, %264 : vector<8x32xf32>
    %266 = arith.mulf %265, %265 : vector<8x32xf32>
    %cst_92 = arith.constant dense<0.000000e+00> : vector<8xf32>
    %267 = vector.multi_reduction <add>, %266, %cst_92 [1] : vector<8x32xf32> to vector<8xf32>
    %268 = vector.shape_cast %267 : vector<8xf32> to vector<8x1xf32>
    %cst_93 = arith.constant 3.200000e+01 : f32
    %269 = vector.broadcast %cst_93 : f32 to vector<8x1xf32>
    %270 = arith.divf %268, %269 : vector<8x1xf32>
    %271 = vector.broadcast %263 : vector<8x1xf32> to vector<8x32xf32>
    %272 = arith.subf %259, %271 : vector<8x32xf32>
    %cst_94 = arith.constant 9.99999974E-6 : f32
    %273 = vector.broadcast %cst_94 : f32 to vector<8x1xf32>
    %274 = arith.addf %270, %273 : vector<8x1xf32>
    %275 = math.rsqrt %274 : vector<8x1xf32>
    %276 = vector.broadcast %275 : vector<8x1xf32> to vector<8x32xf32>
    %277 = arith.mulf %272, %276 : vector<8x32xf32>
    %278 = vector.broadcast %12 : vector<1x32xf32> to vector<8x32xf32>
    %279 = arith.mulf %277, %278 : vector<8x32xf32>
    %280 = vector.broadcast %13 : vector<1x32xf32> to vector<8x32xf32>
    %281 = arith.addf %279, %280 : vector<8x32xf32>
    %c0_95 = arith.constant 0 : index
    %c0_96 = arith.constant 0 : index
    %282 = vector.load %arg23[%c0_95, %c0_96] : memref<8x32xf32, #tpu.memory_space<vmem>>, vector<8x32xf32>
    tpu.vector_store %arg23[%c0_95, %c0_96], %186 {strides = array<i32>} : memref<8x32xf32, #tpu.memory_space<vmem>>, vector<8x32xf32>,
    %c0_97 = arith.constant 0 : index
    %c0_98 = arith.constant 0 : index
    %283 = vector.load %arg2[%c0_97, %c0_98] : memref<8x8xf32, #tpu.memory_space<vmem>>, vector<8x8xf32>
    %c0_99 = arith.constant 0 : index
    %c0_100 = arith.constant 0 : index
    %284 = vector.load %arg3[%c0_99, %c0_100] : memref<8x8xf32, #tpu.memory_space<vmem>>, vector<8x8xf32>
    %c0_101 = arith.constant 0 : index
    %c0_102 = arith.constant 0 : index
    %c0_103 = arith.constant 0 : index
    %285 = vector.load %arg17[%c0_101, %c0_102, %c0_103] : memref<3x32x32xf32, #tpu.memory_space<vmem>>, vector<1x32x32xf32>
    %286 = vector.shape_cast %285 : vector<1x32x32xf32> to vector<32x32xf32>
    %c1 = arith.constant 1 : index
    %c0_104 = arith.constant 0 : index
    %c0_105 = arith.constant 0 : index
    %287 = vector.load %arg17[%c1, %c0_104, %c0_105] : memref<3x32x32xf32, #tpu.memory_space<vmem>>, vector<1x32x32xf32>
    %288 = vector.shape_cast %287 : vector<1x32x32xf32> to vector<32x32xf32>
    %c2 = arith.constant 2 : index
    %c0_106 = arith.constant 0 : index
    %c0_107 = arith.constant 0 : index
    %289 = vector.load %arg17[%c2, %c0_106, %c0_107] : memref<3x32x32xf32, #tpu.memory_space<vmem>>, vector<1x32x32xf32>
    %290 = vector.shape_cast %289 : vector<1x32x32xf32> to vector<32x32xf32>
    %c0_108 = arith.constant 0 : index
    %c0_109 = arith.constant 0 : index
    %291 = vector.load %arg18[%c0_108, %c0_109] : memref<1x32xf32, #tpu.memory_space<vmem>>, vector<1x32xf32>
    %c0_110 = arith.constant 0 : index
    %c0_111 = arith.constant 0 : index
    %292 = vector.load %arg19[%c0_110, %c0_111] : memref<1x32xf32, #tpu.memory_space<vmem>>, vector<1x32xf32>
    %c0_112 = arith.constant 0 : index
    %c0_113 = arith.constant 0 : index
    %293 = vector.load %arg20[%c0_112, %c0_113] : memref<1x32xf32, #tpu.memory_space<vmem>>, vector<1x32xf32>
    %c0_114 = arith.constant 0 : index
    %c0_115 = arith.constant 0 : index
    %c0_116 = arith.constant 0 : index
    %294 = vector.load %arg21[%c0_114, %c0_115, %c0_116] : memref<3x4x8xf32, #tpu.memory_space<vmem>>, vector<1x4x8xf32>
    %295 = vector.shape_cast %294 : vector<1x4x8xf32> to vector<4x8xf32>
    %c1_117 = arith.constant 1 : index
    %c0_118 = arith.constant 0 : index
    %c0_119 = arith.constant 0 : index
    %296 = vector.load %arg21[%c1_117, %c0_118, %c0_119] : memref<3x4x8xf32, #tpu.memory_space<vmem>>, vector<1x4x8xf32>
    %297 = vector.shape_cast %296 : vector<1x4x8xf32> to vector<4x8xf32>
    %c2_120 = arith.constant 2 : index
    %c0_121 = arith.constant 0 : index
    %c0_122 = arith.constant 0 : index
    %298 = vector.load %arg21[%c2_120, %c0_121, %c0_122] : memref<3x4x8xf32, #tpu.memory_space<vmem>>, vector<1x4x8xf32>
    %299 = vector.shape_cast %298 : vector<1x4x8xf32> to vector<4x8xf32>
    %cst_123 = arith.constant dense<0.000000e+00> : vector<8x32xf32>
    %300 = tpu.matmul %283, %281, %cst_123 {dimension_numbers = #tpu.dot_dimension_numbers<[1], [0], [0], [1], [0, 0, 1, 1], [], []>} : vector<8x8xf32>, vector<8x32xf32>, vector<8x32xf32> -> vector<8x32xf32>
    %cst_124 = arith.constant dense<0.000000e+00> : vector<8x32xf32>
    %301 = tpu.matmul %300, %286, %cst_124 {dimension_numbers = #tpu.dot_dimension_numbers<[1], [0], [0], [1], [0, 0, 1, 1], [], []>} : vector<8x32xf32>, vector<32x32xf32>, vector<8x32xf32> -> vector<8x32xf32>
    %cst_125 = arith.constant dense<0.000000e+00> : vector<8x32xf32>
    %302 = tpu.matmul %281, %288, %cst_125 {dimension_numbers = #tpu.dot_dimension_numbers<[1], [0], [0], [1], [0, 0, 1, 1], [], []>} : vector<8x32xf32>, vector<32x32xf32>, vector<8x32xf32> -> vector<8x32xf32>
    %303 = arith.addf %301, %302 : vector<8x32xf32>
    %cst_126 = arith.constant dense<0.000000e+00> : vector<8x32xf32>
    %304 = tpu.matmul %284, %281, %cst_126 {dimension_numbers = #tpu.dot_dimension_numbers<[1], [0], [0], [1], [0, 0, 1, 1], [], []>} : vector<8x8xf32>, vector<8x32xf32>, vector<8x32xf32> -> vector<8x32xf32>
    %cst_127 = arith.constant dense<0.000000e+00> : vector<8x32xf32>
    %305 = tpu.matmul %304, %290, %cst_127 {dimension_numbers = #tpu.dot_dimension_numbers<[1], [0], [0], [1], [0, 0, 1, 1], [], []>} : vector<8x32xf32>, vector<32x32xf32>, vector<8x32xf32> -> vector<8x32xf32>
    %306 = arith.addf %303, %305 : vector<8x32xf32>
    %307 = vector.broadcast %291 : vector<1x32xf32> to vector<8x32xf32>
    %308 = arith.addf %306, %307 : vector<8x32xf32>
    %cst_128 = arith.constant dense<0.000000e+00> : vector<32xf32>
    %309 = vector.multi_reduction <add>, %308, %cst_128 [0] : vector<8x32xf32> to vector<32xf32>
    %310 = vector.shape_cast %309 : vector<32xf32> to vector<1x32xf32>
    %cst_129 = arith.constant 8.000000e+00 : f32
    %311 = vector.broadcast %cst_129 : f32 to vector<1x32xf32>
    %312 = arith.divf %310, %311 : vector<1x32xf32>
    %313 = vector.broadcast %312 : vector<1x32xf32> to vector<8x32xf32>
    %314 = arith.subf %308, %313 : vector<8x32xf32>
    %315 = arith.mulf %314, %314 : vector<8x32xf32>
    %cst_130 = arith.constant dense<0.000000e+00> : vector<32xf32>
    %316 = vector.multi_reduction <add>, %315, %cst_130 [0] : vector<8x32xf32> to vector<32xf32>
    %317 = vector.shape_cast %316 : vector<32xf32> to vector<1x32xf32>
    %cst_131 = arith.constant 8.000000e+00 : f32
    %318 = vector.broadcast %cst_131 : f32 to vector<1x32xf32>
    %319 = arith.divf %317, %318 : vector<1x32xf32>
    %320 = vector.broadcast %312 : vector<1x32xf32> to vector<8x32xf32>
    %321 = arith.subf %308, %320 : vector<8x32xf32>
    %cst_132 = arith.constant 9.99999974E-6 : f32
    %322 = vector.broadcast %cst_132 : f32 to vector<1x32xf32>
    %323 = arith.addf %319, %322 : vector<1x32xf32>
    %324 = math.rsqrt %323 : vector<1x32xf32>
    %325 = vector.broadcast %324 : vector<1x32xf32> to vector<8x32xf32>
    %326 = arith.mulf %321, %325 : vector<8x32xf32>
    %327 = vector.broadcast %292 : vector<1x32xf32> to vector<8x32xf32>
    %328 = arith.mulf %326, %327 : vector<8x32xf32>
    %329 = vector.broadcast %293 : vector<1x32xf32> to vector<8x32xf32>
    %330 = arith.addf %328, %329 : vector<8x32xf32>
    %cst_133 = arith.constant 0.000000e+00 : f32
    %331 = vector.broadcast %cst_133 : f32 to vector<8x32xf32>
    %332 = arith.cmpf ogt, %330, %331 : vector<8x32xf32>
    %333 = math.exp %330 : vector<8x32xf32>
    %cst_134 = arith.constant 1.000000e+00 : f32
    %334 = vector.broadcast %cst_134 : f32 to vector<8x32xf32>
    %335 = arith.subf %333, %334 : vector<8x32xf32>
    %336 = arith.select %332, %330, %335 : vector<8x32xi1>, vector<8x32xf32>
    %cst_135 = arith.constant dense<0.000000e+00> : vector<4x32xf32>
    %337 = tpu.matmul %295, %336, %cst_135 {dimension_numbers = #tpu.dot_dimension_numbers<[1], [0], [0], [1], [0, 0, 1, 1], [], []>} : vector<4x8xf32>, vector<8x32xf32>, vector<4x32xf32> -> vector<4x32xf32>
    %cst_136 = arith.constant dense<0.000000e+00> : vector<4x32xf32>
    %338 = tpu.matmul %297, %336, %cst_136 {dimension_numbers = #tpu.dot_dimension_numbers<[1], [0], [0], [1], [0, 0, 1, 1], [], []>} : vector<4x8xf32>, vector<8x32xf32>, vector<4x32xf32> -> vector<4x32xf32>
    %339 = arith.maximumf %337, %338 : vector<4x32xf32>
    %cst_137 = arith.constant dense<0.000000e+00> : vector<4x32xf32>
    %340 = tpu.matmul %299, %336, %cst_137 {dimension_numbers = #tpu.dot_dimension_numbers<[1], [0], [0], [1], [0, 0, 1, 1], [], []>} : vector<4x8xf32>, vector<8x32xf32>, vector<4x32xf32> -> vector<4x32xf32>
    %341 = arith.maximumf %339, %340 : vector<4x32xf32>
    %c0_138 = arith.constant 0 : index
    %c0_139 = arith.constant 0 : index
    %342 = vector.load %arg22[%c0_138, %c0_139] : memref<4x32xf32, #tpu.memory_space<vmem>>, vector<4x32xf32>
    tpu.vector_store %arg22[%c0_138, %c0_139], %341 {strides = array<i32>} : memref<4x32xf32, #tpu.memory_space<vmem>>, vector<4x32xf32>,
    return
  }
  func.func @transform_0(%arg0: i32) -> (i32, i32) {
    %c0_i32 = arith.constant 0 : i32
    %c0_i32_0 = arith.constant 0 : i32
    %c0_i32_1 = arith.constant 0 : i32
    return %c0_i32, %c0_i32_0 : i32, i32
  }
  func.func @transform_1(%arg0: i32) -> (i32, i32) {
    %c0_i32 = arith.constant 0 : i32
    %c0_i32_0 = arith.constant 0 : i32
    %c0_i32_1 = arith.constant 0 : i32
    return %c0_i32, %c0_i32_0 : i32, i32
  }
  func.func @transform_2(%arg0: i32) -> (i32, i32) {
    %c0_i32 = arith.constant 0 : i32
    %c0_i32_0 = arith.constant 0 : i32
    %c0_i32_1 = arith.constant 0 : i32
    return %c0_i32, %c0_i32_0 : i32, i32
  }
  func.func @transform_3(%arg0: i32) -> (i32, i32) {
    %c0_i32 = arith.constant 0 : i32
    %c0_i32_0 = arith.constant 0 : i32
    %c0_i32_1 = arith.constant 0 : i32
    return %c0_i32, %c0_i32_0 : i32, i32
  }
  func.func @transform_4(%arg0: i32) -> (i32, i32) {
    %c0_i32 = arith.constant 0 : i32
    %c0_i32_0 = arith.constant 0 : i32
    %c0_i32_1 = arith.constant 0 : i32
    return %c0_i32, %c0_i32_0 : i32, i32
  }
  func.func @transform_5(%arg0: i32) -> (i32, i32) {
    %c0_i32 = arith.constant 0 : i32
    %c0_i32_0 = arith.constant 0 : i32
    %c0_i32_1 = arith.constant 0 : i32
    return %c0_i32, %c0_i32_0 : i32, i32
  }
  func.func @transform_6(%arg0: i32) -> (i32, i32) {
    %c0_i32 = arith.constant 0 : i32
    %c0_i32_0 = arith.constant 0 : i32
    %c0_i32_1 = arith.constant 0 : i32
    return %c0_i32, %c0_i32_0 : i32, i32
  }
  func.func @transform_7(%arg0: i32) -> (i32, i32) {
    %c0_i32 = arith.constant 0 : i32
    %c0_i32_0 = arith.constant 0 : i32
    %c0_i32_1 = arith.constant 0 : i32
    return %c0_i32, %c0_i32_0 : i32, i32
  }
  func.func @transform_8(%arg0: i32) -> (i32, i32) {
    %c0_i32 = arith.constant 0 : i32
    %c0_i32_0 = arith.constant 0 : i32
    %c0_i32_1 = arith.constant 0 : i32
    return %c0_i32, %c0_i32_0 : i32, i32
  }
  func.func @transform_9(%arg0: i32) -> (i32, i32) {
    %c0_i32 = arith.constant 0 : i32
    %c0_i32_0 = arith.constant 0 : i32
    %c0_i32_1 = arith.constant 0 : i32
    return %c0_i32, %c0_i32_0 : i32, i32
  }
  func.func @transform_10(%arg0: i32) -> (i32, i32) {
    %c0_i32 = arith.constant 0 : i32
    %c0_i32_0 = arith.constant 0 : i32
    %c0_i32_1 = arith.constant 0 : i32
    return %c0_i32, %c0_i32_0 : i32, i32
  }
  func.func @transform_11(%arg0: i32) -> (i32, i32) {
    %c0_i32 = arith.constant 0 : i32
    %c0_i32_0 = arith.constant 0 : i32
    %c0_i32_1 = arith.constant 0 : i32
    return %c0_i32, %c0_i32_0 : i32, i32
  }
  func.func @transform_12(%arg0: i32) -> (i32, i32) {
    %c0_i32 = arith.constant 0 : i32
    %c0_i32_0 = arith.constant 0 : i32
    %c0_i32_1 = arith.constant 0 : i32
    return %c0_i32, %c0_i32_0 : i32, i32
  }
  func.func @transform_13(%arg0: i32) -> (i32, i32) {
    %c0_i32 = arith.constant 0 : i32
    %c0_i32_0 = arith.constant 0 : i32
    %c0_i32_1 = arith.constant 0 : i32
    return %c0_i32, %c0_i32_0 : i32, i32
  }
  func.func @transform_14(%arg0: i32) -> (i32, i32) {
    %c0_i32 = arith.constant 0 : i32
    %c0_i32_0 = arith.constant 0 : i32
    %c0_i32_1 = arith.constant 0 : i32
    return %c0_i32, %c0_i32_0 : i32, i32
  }
  func.func @transform_15(%arg0: i32) -> (i32, i32) {
    %c0_i32 = arith.constant 0 : i32
    %c0_i32_0 = arith.constant 0 : i32
    %c0_i32_1 = arith.constant 0 : i32
    return %c0_i32, %c0_i32_0 : i32, i32
  }
  func.func @transform_16(%arg0: i32) -> (i32, i32, i32) {
    %c0_i32 = arith.constant 0 : i32
    %c0_i32_0 = arith.constant 0 : i32
    %c0_i32_1 = arith.constant 0 : i32
    %c0_i32_2 = arith.constant 0 : i32
    return %c0_i32, %c0_i32_0, %c0_i32_1 : i32, i32, i32
  }
  func.func @transform_17(%arg0: i32) -> (i32, i32) {
    %c0_i32 = arith.constant 0 : i32
    %c0_i32_0 = arith.constant 0 : i32
    %c0_i32_1 = arith.constant 0 : i32
    return %c0_i32, %c0_i32_0 : i32, i32
  }
  func.func @transform_18(%arg0: i32) -> (i32, i32) {
    %c0_i32 = arith.constant 0 : i32
    %c0_i32_0 = arith.constant 0 : i32
    %c0_i32_1 = arith.constant 0 : i32
    return %c0_i32, %c0_i32_0 : i32, i32
  }
  func.func @transform_19(%arg0: i32) -> (i32, i32) {
    %c0_i32 = arith.constant 0 : i32
    %c0_i32_0 = arith.constant 0 : i32
    %c0_i32_1 = arith.constant 0 : i32
    return %c0_i32, %c0_i32_0 : i32, i32
  }
  func.func @transform_20(%arg0: i32) -> (i32, i32, i32) {
    %c0_i32 = arith.constant 0 : i32
    %c0_i32_0 = arith.constant 0 : i32
    %c0_i32_1 = arith.constant 0 : i32
    %c0_i32_2 = arith.constant 0 : i32
    return %c0_i32, %c0_i32_0, %c0_i32_1 : i32, i32, i32
  }
  func.func @transform_21(%arg0: i32) -> (i32, i32) {
    %c0_i32 = arith.constant 0 : i32
    %c0_i32_0 = arith.constant 0 : i32
    %c0_i32_1 = arith.constant 0 : i32
    return %c0_i32, %c0_i32_0 : i32, i32
  }
  func.func @transform_22(%arg0: i32) -> (i32, i32) {
    %c0_i32 = arith.constant 0 : i32
    %c0_i32_0 = arith.constant 0 : i32
    %c0_i32_1 = arith.constant 0 : i32
    return %c0_i32, %c0_i32_0 : i32, i32
  }
}

</mosaic_0001>

<llo_original>
// kernel: ec_encoder_forward.5
$region0: #{ec_encoder_forward.5}
  #allocation0 [shape = 'u32[]', space=smem, size = 0x4, offset = 0x4, fixed_abs, tag = 'smem constant byte address 0x4 - core index']
  #allocation1 [shape = 'u32[144,128]{1,0:T(1,128)}', space=vmem, size = 0x12000, scoped, tag = 'internal scratch']
  %s0 = inlined_call_operand.vmem [shape: f32[4,32], index: 0, kind: input, shape index: {}]
  %s1 = inlined_call_operand.vmem [shape: f32[4,4], index: 1, kind: input, shape index: {}]
  %s2 = inlined_call_operand.vmem [shape: f32[32,96], index: 2, kind: input, shape index: {}]
  %s3 = inlined_call_operand.vmem [shape: f32[1,96], index: 3, kind: input, shape index: {}]
  %s4 = inlined_call_operand.vmem [shape: f32[32,32], index: 4, kind: input, shape index: {}]
  %s5 = inlined_call_operand.vmem [shape: f32[1,32], index: 5, kind: input, shape index: {}]
  %s6 = inlined_call_operand.vmem [shape: f32[32,32], index: 6, kind: input, shape index: {}]
  %s7 = inlined_call_operand.vmem [shape: f32[1,32], index: 7, kind: input, shape index: {}]
  %s8 = inlined_call_operand.vmem [shape: f32[32,32], index: 8, kind: input, shape index: {}]
  %s9 = inlined_call_operand.vmem [shape: f32[1,32], index: 9, kind: input, shape index: {}]
  %s10 = inlined_call_operand.vmem [shape: f32[1,32], index: 10, kind: input, shape index: {}]
  %s11 = inlined_call_operand.vmem [shape: f32[1,32], index: 11, kind: input, shape index: {}]
  %s12 = inlined_call_operand.vmem [shape: f32[1,32], index: 12, kind: input, shape index: {}]
  %s13 = inlined_call_operand.vmem [shape: f32[1,32], index: 13, kind: input, shape index: {}]
  %s14 = inlined_call_operand.vmem [shape: f32[1,32], index: 14, kind: input, shape index: {}]
  %s15 = inlined_call_operand.vmem [shape: f32[1,32], index: 15, kind: input, shape index: {}]
  %s16 = inlined_call_operand.vmem [shape: f32[2,2,4], index: 16, kind: input, shape index: {}]
  %s17 = inlined_call_operand.vmem [shape: f32[2,32,8], index: 17, kind: input, shape index: {}]
  %s18 = inlined_call_operand.vmem [shape: f32[1,8], index: 18, kind: input, shape index: {}]
  %s19 = inlined_call_operand.hbm [shape: f32[2,8], index: 19, kind: output, shape index: {0}]
  %s20 = inlined_call_operand.vmem [shape: f32[4,16], index: 20, kind: output, shape index: {1}]
  %21 = xla_tuple %s19, %s20
  %s22 = sld [smem:[#allocation0]]
  $region94: #{ec_encoder_forward.5} parent=0
    _
  %s24 = ssub.s32 1, %s22
  %s25 = scalar_select 0, %s24, %s22
  $region1: #{ec_encoder_forward.5} parent=0
    #allocation2 [shape = 'u8[1024]{0}', space=vmem, size = 0x400, scoped, tag = 'output window, operand 0, single buffered']
    #allocation3 [shape = 's32[1]{0}', space=sflag, size = 0x4, scoped, tag = 'scoped memory for ec_encoder_forward.5']
    %26 = vsyncpa [#allocation3], 0
    // Predicated region
    $region2: #{ec_encoder_forward.5} parent=1 // pred_check
      _
    $region3: #{ec_encoder_forward.5} parent=1 // pred_check_branch
      %28 = sbr.rel (0) target = $region5
    $region4: #{ec_encoder_forward.5} parent=1 // pred_region
      _
    $region5: #{ec_encoder_forward.5} parent=1 // pred_fallthru
      _
    // Predicated region
    $region6: #{ec_encoder_forward.5} parent=1 // pred_check
      _
    $region7: #{ec_encoder_forward.5} parent=1 // pred_check_branch
      %30 = sbr.rel (0) target = $region9
    $region8: #{ec_encoder_forward.5} parent=1 // pred_region
      _
    $region9: #{ec_encoder_forward.5} parent=1 // pred_fallthru
      _
    // Predicated region
    $region10: #{ec_encoder_forward.5} parent=1 // pred_check
      _
    $region11: #{ec_encoder_forward.5} parent=1 // pred_check_branch
      %32 = sbr.rel (0) target = $region13
    $region12: #{ec_encoder_forward.5} parent=1 // pred_region
      _
    $region13: #{ec_encoder_forward.5} parent=1 // pred_fallthru
      _
    // Predicated region
    $region14: #{ec_encoder_forward.5} parent=1 // pred_check
      _
    $region15: #{ec_encoder_forward.5} parent=1 // pred_check_branch
      %34 = sbr.rel (0) target = $region17
    $region16: #{ec_encoder_forward.5} parent=1 // pred_region
      _
    $region17: #{ec_encoder_forward.5} parent=1 // pred_fallthru
      _
    // Predicated region
    $region18: #{ec_encoder_forward.5} parent=1 // pred_check
      _
    $region19: #{ec_encoder_forward.5} parent=1 // pred_check_branch
      %36 = sbr.rel (0) target = $region21
    $region20: #{ec_encoder_forward.5} parent=1 // pred_region
      _
    $region21: #{ec_encoder_forward.5} parent=1 // pred_fallthru
      _
    // Predicated region
    $region22: #{ec_encoder_forward.5} parent=1 // pred_check
      _
    $region23: #{ec_encoder_forward.5} parent=1 // pred_check_branch
      %38 = sbr.rel (0) target = $region25
    $region24: #{ec_encoder_forward.5} parent=1 // pred_region
      _
    $region25: #{ec_encoder_forward.5} parent=1 // pred_fallthru
      _
    // Predicated region
    $region26: #{ec_encoder_forward.5} parent=1 // pred_check
      _
    $region27: #{ec_encoder_forward.5} parent=1 // pred_check_branch
      %40 = sbr.rel (0) target = $region29
    $region28: #{ec_encoder_forward.5} parent=1 // pred_region
      _
    $region29: #{ec_encoder_forward.5} parent=1 // pred_fallthru
      _
    // Predicated region
    $region30: #{ec_encoder_forward.5} parent=1 // pred_check
      _
    $region31: #{ec_encoder_forward.5} parent=1 // pred_check_branch
      %42 = sbr.rel (0) target = $region33
    $region32: #{ec_encoder_forward.5} parent=1 // pred_region
      _
    $region33: #{ec_encoder_forward.5} parent=1 // pred_fallthru
      _
    // Predicated region
    $region34: #{ec_encoder_forward.5} parent=1 // pred_check
      _
    $region35: #{ec_encoder_forward.5} parent=1 // pred_check_branch
      %44 = sbr.rel (0) target = $region37
    $region36: #{ec_encoder_forward.5} parent=1 // pred_region
      _
    $region37: #{ec_encoder_forward.5} parent=1 // pred_fallthru
      _
    // Predicated region
    $region38: #{ec_encoder_forward.5} parent=1 // pred_check
      _
    $region39: #{ec_encoder_forward.5} parent=1 // pred_check_branch
      %46 = sbr.rel (0) target = $region41
    $region40: #{ec_encoder_forward.5} parent=1 // pred_region
      _
    $region41: #{ec_encoder_forward.5} parent=1 // pred_fallthru
      _
    // Predicated region
    $region42: #{ec_encoder_forward.5} parent=1 // pred_check
      _
    $region43: #{ec_encoder_forward.5} parent=1 // pred_check_branch
      %48 = sbr.rel (0) target = $region45
    $region44: #{ec_encoder_forward.5} parent=1 // pred_region
      _
    $region45: #{ec_encoder_forward.5} parent=1 // pred_fallthru
      _
    // Predicated region
    $region46: #{ec_encoder_forward.5} parent=1 // pred_check
      _
    $region47: #{ec_encoder_forward.5} parent=1 // pred_check_branch
      %50 = sbr.rel (0) target = $region49
    $region48: #{ec_encoder_forward.5} parent=1 // pred_region
      _
    $region49: #{ec_encoder_forward.5} parent=1 // pred_fallthru
      _
    // Predicated region
    $region50: #{ec_encoder_forward.5} parent=1 // pred_check
      _
    $region51: #{ec_encoder_forward.5} parent=1 // pred_check_branch
      %52 = sbr.rel (0) target = $region53
    $region52: #{ec_encoder_forward.5} parent=1 // pred_region
      _
    $region53: #{ec_encoder_forward.5} parent=1 // pred_fallthru
      _
    // Predicated region
    $region54: #{ec_encoder_forward.5} parent=1 // pred_check
      _
    $region55: #{ec_encoder_forward.5} parent=1 // pred_check_branch
      %54 = sbr.rel (0) target = $region57
    $region56: #{ec_encoder_forward.5} parent=1 // pred_region
      _
    $region57: #{ec_encoder_forward.5} parent=1 // pred_fallthru
      _
    // Predicated region
    $region58: #{ec_encoder_forward.5} parent=1 // pred_check
      _
    $region59: #{ec_encoder_forward.5} parent=1 // pred_check_branch
      %56 = sbr.rel (0) target = $region61
    $region60: #{ec_encoder_forward.5} parent=1 // pred_region
      _
    $region61: #{ec_encoder_forward.5} parent=1 // pred_fallthru
      _
    // Predicated region
    $region62: #{ec_encoder_forward.5} parent=1 // pred_check
      _
    $region63: #{ec_encoder_forward.5} parent=1 // pred_check_branch
      %58 = sbr.rel (0) target = $region65
    $region64: #{ec_encoder_forward.5} parent=1 // pred_region
      _
    $region65: #{ec_encoder_forward.5} parent=1 // pred_fallthru
      _
    // Predicated region
    $region66: #{ec_encoder_forward.5} parent=1 // pred_check
      _
    $region67: #{ec_encoder_forward.5} parent=1 // pred_check_branch
      %60 = sbr.rel (0) target = $region69
    $region68: #{ec_encoder_forward.5} parent=1 // pred_region
      _
    $region69: #{ec_encoder_forward.5} parent=1 // pred_fallthru
      _
    // Predicated region
    $region70: #{ec_encoder_forward.5} parent=1 // pred_check
      _
    $region71: #{ec_encoder_forward.5} parent=1 // pred_check_branch
      %62 = sbr.rel (0) target = $region73
    $region72: #{ec_encoder_forward.5} parent=1 // pred_region
      _
    $region73: #{ec_encoder_forward.5} parent=1 // pred_fallthru
      _
    // Predicated region
    $region74: #{ec_encoder_forward.5} parent=1 // pred_check
      _
    $region75: #{ec_encoder_forward.5} parent=1 // pred_check_branch
      %64 = sbr.rel (0) target = $region77
    $region76: #{ec_encoder_forward.5} parent=1 // pred_region
      _
    $region77: #{ec_encoder_forward.5} parent=1 // pred_fallthru
      _
    %v65 = vld [vmem:[%s0] sm:$0xf]
    %v66 = vld [vmem:[%s1] sm:$0xf]
    %v67 = vld [vmem:[%s2] sm:$0xff]
    %v68 = vld [vmem:[%s2 + $0x8] sm:$0xff]
    %v69 = vld [vmem:[%s2 + $0x10] sm:$0xff]
    %v70 = vld [vmem:[%s2 + $0x18] sm:$0xff]
    %v71 = vld [vmem:[%s3] sm:$0x1]
    %v72 = vld [vmem:[%s4] sm:$0xff]
    %v73 = vld [vmem:[%s4 + $0x8] sm:$0xff]
    %v74 = vld [vmem:[%s4 + $0x10] sm:$0xff]
    %v75 = vld [vmem:[%s4 + $0x18] sm:$0xff]
    %v76 = vld [vmem:[%s5] sm:$0x1]
    %v77 = vld [vmem:[%s6] sm:$0xff]
    %v78 = vld [vmem:[%s6 + $0x8] sm:$0xff]
    %v79 = vld [vmem:[%s6 + $0x10] sm:$0xff]
    %v80 = vld [vmem:[%s6 + $0x18] sm:$0xff]
    %v81 = vld [vmem:[%s7] sm:$0x1]
    %v82 = vld [vmem:[%s8] sm:$0xff]
    %v83 = vld [vmem:[%s8 + $0x8] sm:$0xff]
    %v84 = vld [vmem:[%s8 + $0x10] sm:$0xff]
    %v85 = vld [vmem:[%s8 + $0x18] sm:$0xff]
    %v86 = vld [vmem:[%s9] sm:$0x1]
    %v87 = vld [vmem:[%s10] sm:$0x1]
    %v88 = vld [vmem:[%s11] sm:$0x1]
    %v89 = vld [vmem:[%s12] sm:$0x1]
    %v90 = vld [vmem:[%s13] sm:$0x1]
    %v92 = vlaneseq
    %v93 = vshrl.u32 %v92, 7
    %v94 = vsub.s32 0, %v93
    %v95 = vrot.slane %v71, %v94
    %vm97 = vcmask 261120
    %v99 = vsel %vm97, %v65, 0
    %101 = vmatprep.subr.mxu0 0.0
    %102 = vmatpush1.msra.mxu0 0.0
    %103 = vmatprep.subr.mxu0 0.0
    %104 = vmatpush1.msra.mxu0 0.0
    %105 = vmatprep.subr.mxu0 0.0
    %106 = vmatpush1.msra.mxu0 0.0
    %107 = vmatprep.subr.mxu0 0.0
    %108 = vmatpush1.msra.mxu0 0.0
    %109 = vmatprep.subr.mxu0 0.0
    %110 = vmatpush1.msra.mxu0 0.0
    %111 = vmatprep.subr.mxu0 0.0
    %112 = vmatpush1.msra.mxu0 0.0
    %113 = vmatprep.subr.mxu0 0.0
    %114 = vmatpush1.msra.mxu0 0.0
    %115 = vmatprep.subr.mxu0 0.0
    %116 = vmatpush1.msra.mxu0 0.0
    %117 = vmatprep.subr.mxu0 0.0
    %118 = vmatpush1.msra.mxu0 0.0
    %119 = vmatprep.subr.mxu0 0.0
    %120 = vmatpush1.msra.mxu0 0.0
    %121 = vmatprep.subr.mxu0 0.0
    %122 = vmatpush1.msra.mxu0 0.0
    %123 = vmatprep.subr.mxu0 0.0
    %124 = vmatpush1.msra.mxu0 0.0
    %125 = vmatprep.subr.mxu0 0.0
    %126 = vmatpush1.msra.mxu0 %v70
    %127 = vmatprep.subr.mxu0 0.0
    %128 = vmatpush1.msra.mxu0 %v69
    %129 = vmatprep.subr.mxu0 0.0
    %130 = vmatpush1.msra.mxu0 %v68
    %131 = vmatprep.subr.mxu0 0.0
    %132 = vmatpush1.msra.mxu0 %v67
    %133 = vmatprep.subr.mxu0 0.0
    %134 = vmatpush2.msra.mxu0 0.0
    %135 = vmatprep.subr.mxu0 0.0
    %136 = vmatpush2.msra.mxu0 0.0
    %137 = vmatprep.subr.mxu0 0.0
    %138 = vmatpush2.msra.mxu0 0.0
    %139 = vmatprep.subr.mxu0 0.0
    %140 = vmatpush2.msra.mxu0 0.0
    %141 = vmatprep.subr.mxu0 0.0
    %142 = vmatpush2.msra.mxu0 0.0
    %143 = vmatprep.subr.mxu0 0.0
    %144 = vmatpush2.msra.mxu0 0.0
    %145 = vmatprep.subr.mxu0 0.0
    %146 = vmatpush2.msra.mxu0 0.0
    %147 = vmatprep.subr.mxu0 0.0
    %148 = vmatpush2.msra.mxu0 0.0
    %149 = vmatprep.subr.mxu0 0.0
    %150 = vmatpush2.msra.mxu0 0.0
    %151 = vmatprep.subr.mxu0 0.0
    %152 = vmatpush2.msra.mxu0 0.0
    %153 = vmatprep.subr.mxu0 0.0
    %154 = vmatpush2.msra.mxu0 0.0
    %155 = vmatprep.subr.mxu0 0.0
    %156 = vmatpush2.msra.mxu0 0.0
    %157 = vmatprep.subr.mxu0 0.0
    %158 = vmatpush2.msra.mxu0 0.0
    %159 = vmatprep.subr.mxu0 0.0
    %160 = vmatpush2.msra.mxu0 0.0
    %161 = vmatprep.subr.mxu0 0.0
    %162 = vmatpush2.msra.mxu0 0.0
    %163 = vmatprep.subr.mxu0 0.0
    %164 = vmatpush2.msra.mxu0 0.0
    %165 = vmatprep.mubr.f32.mxu0 0.0
    %166 = vmatmul.mubr.f32.gmra.mxu0 %v99
    %v167 = vpop.f32.mrf.mxu0
    %v168 = vadd.f32 %v95, %v167
    %v169 = vpop.f32.mrf.mxu0
    %170 = vdwg.mxu0
    %172 = vrot.lane.b32.xlu0 %v168, 96
    %v173 = vpop.permute.xlu0 %172
    %vm174 = vcmask 31744
    %v175 = vsel %vm174, %v168, 0
    %v177 = vsel %vm174, %v173, 0
    %179 = vmatprep.subr.mxu0 0.0
    %180 = vmatpush1.xpose.msra.mxu0 0.0
    %181 = vmatprep.subr.mxu0 0.0
    %182 = vmatpush1.xpose.msra.mxu0 0.0
    %183 = vmatprep.subr.mxu0 0.0
    %184 = vmatpush1.xpose.msra.mxu0 0.0
    %185 = vmatprep.subr.mxu0 0.0
    %186 = vmatpush1.xpose.msra.mxu0 0.0
    %187 = vmatprep.subr.mxu0 0.0
    %188 = vmatpush1.xpose.msra.mxu0 0.0
    %189 = vmatprep.subr.mxu0 0.0
    %190 = vmatpush1.xpose.msra.mxu0 0.0
    %191 = vmatprep.subr.mxu0 0.0
    %192 = vmatpush1.xpose.msra.mxu0 0.0
    %193 = vmatprep.subr.mxu0 0.0
    %194 = vmatpush1.xpose.msra.mxu0 0.0
    %195 = vmatprep.subr.mxu0 0.0
    %196 = vmatpush1.xpose.msra.mxu0 0.0
    %197 = vmatprep.subr.mxu0 0.0
    %198 = vmatpush1.xpose.msra.mxu0 0.0
    %199 = vmatprep.subr.mxu0 0.0
    %200 = vmatpush1.xpose.msra.mxu0 0.0
    %201 = vmatprep.subr.mxu0 0.0
    %202 = vmatpush1.xpose.msra.mxu0 0.0
    %203 = vmatprep.subr.mxu0 0.0
    %204 = vmatpush1.xpose.msra.mxu0 0.0
    %205 = vmatprep.subr.mxu0 0.0
    %206 = vmatpush1.xpose.msra.mxu0 0.0
    %207 = vmatprep.subr.mxu0 0.0
    %208 = vmatpush1.xpose.msra.mxu0 0.0
    %209 = vmatprep.subr.mxu0 0.0
    %210 = vmatpush1.xpose.msra.mxu0 %v177
    %211 = vmatprep.subr.mxu0 0.0
    %212 = vmatpush2.xpose.msra.mxu0 0.0
    %213 = vmatprep.subr.mxu0 0.0
    %214 = vmatpush2.xpose.msra.mxu0 0.0
    %215 = vmatprep.subr.mxu0 0.0
    %216 = vmatpush2.xpose.msra.mxu0 0.0
    %217 = vmatprep.subr.mxu0 0.0
    %218 = vmatpush2.xpose.msra.mxu0 0.0
    %219 = vmatprep.subr.mxu0 0.0
    %220 = vmatpush2.xpose.msra.mxu0 0.0
    %221 = vmatprep.subr.mxu0 0.0
    %222 = vmatpush2.xpose.msra.mxu0 0.0
    %223 = vmatprep.subr.mxu0 0.0
    %224 = vmatpush2.xpose.msra.mxu0 0.0
    %225 = vmatprep.subr.mxu0 0.0
    %226 = vmatpush2.xpose.msra.mxu0 0.0
    %227 = vmatprep.subr.mxu0 0.0
    %228 = vmatpush2.xpose.msra.mxu0 0.0
    %229 = vmatprep.subr.mxu0 0.0
    %230 = vmatpush2.xpose.msra.mxu0 0.0
    %231 = vmatprep.subr.mxu0 0.0
    %232 = vmatpush2.xpose.msra.mxu0 0.0
    %233 = vmatprep.subr.mxu0 0.0
    %234 = vmatpush2.xpose.msra.mxu0 0.0
    %235 = vmatprep.subr.mxu0 0.0
    %236 = vmatpush2.xpose.msra.mxu0 0.0
    %237 = vmatprep.subr.mxu0 0.0
    %238 = vmatpush2.xpose.msra.mxu0 0.0
    %239 = vmatprep.subr.mxu0 0.0
    %240 = vmatpush2.xpose.msra.mxu0 0.0
    %241 = vmatprep.subr.mxu0 0.0
    %242 = vmatpush2.xpose.msra.mxu0 0.0
    %243 = vmatprep.mubr.f32.mxu0 0.0
    %244 = vmatmul.mubr.f32.gmra.mxu0 %v175
    %v245 = vpop.f32.mrf.mxu0
    %v246 = vadd.f32 0.0, %v245
    %v247 = vpop.f32.mrf.mxu0
    %248 = vdwg.mxu0
    %v249 = vmul.f32 %v246, 0.5
    %v250 = vadd.f32 %v249, %v66
    %vm251 = vcmask 27648
    %v252 = vsel %vm251, %v250, -inf
    %253 = vmax.xlane.f32.xlu0 %v252
    %v254 = vpop.xlane.xlu0 %253
    %v255 = vsub.f32 %v250, %v254
    %v256 = vmul.f32 %v255, 1.442695
    %v257 = vpow.pop %v256
    %v258 = vsel %vm251, %v257, 0.0
    %259 = vadd.xlane.f32.xlu0 %v258
    %v260 = vpop.xlane.xlu0 %259
    %v261 = vrcp.pop %v260
    %v262 = vmul.f32 %v257, %v261
    %263 = vrot.lane.b32.xlu0 %v168, 64
    %v264 = vpop.permute.xlu0 %263
    %v266 = vsel %vm174, %v262, 0
    %vm268 = vcmask 1043456
    %v269 = vsel %vm268, %v264, 0
    %271 = vmatprep.subr.mxu0 0.0
    %272 = vmatpush1.msra.mxu0 0.0
    %273 = vmatprep.subr.mxu0 0.0
    %274 = vmatpush1.msra.mxu0 0.0
    %275 = vmatprep.subr.mxu0 0.0
    %276 = vmatpush1.msra.mxu0 0.0
    %277 = vmatprep.subr.mxu0 0.0
    %278 = vmatpush1.msra.mxu0 0.0
    %279 = vmatprep.subr.mxu0 0.0
    %280 = vmatpush1.msra.mxu0 0.0
    %281 = vmatprep.subr.mxu0 0.0
    %282 = vmatpush1.msra.mxu0 0.0
    %283 = vmatprep.subr.mxu0 0.0
    %284 = vmatpush1.msra.mxu0 0.0
    %285 = vmatprep.subr.mxu0 0.0
    %286 = vmatpush1.msra.mxu0 0.0
    %287 = vmatprep.subr.mxu0 0.0
    %288 = vmatpush1.msra.mxu0 0.0
    %289 = vmatprep.subr.mxu0 0.0
    %290 = vmatpush1.msra.mxu0 0.0
    %291 = vmatprep.subr.mxu0 0.0
    %292 = vmatpush1.msra.mxu0 0.0
    %293 = vmatprep.subr.mxu0 0.0
    %294 = vmatpush1.msra.mxu0 0.0
    %295 = vmatprep.subr.mxu0 0.0
    %296 = vmatpush1.msra.mxu0 0.0
    %297 = vmatprep.subr.mxu0 0.0
    %298 = vmatpush1.msra.mxu0 0.0
    %299 = vmatprep.subr.mxu0 0.0
    %300 = vmatpush1.msra.mxu0 0.0
    %301 = vmatprep.subr.mxu0 0.0
    %302 = vmatpush1.msra.mxu0 %v269
    %303 = vmatprep.subr.mxu0 0.0
    %304 = vmatpush2.msra.mxu0 0.0
    %305 = vmatprep.subr.mxu0 0.0
    %306 = vmatpush2.msra.mxu0 0.0
    %307 = vmatprep.subr.mxu0 0.0
    %308 = vmatpush2.msra.mxu0 0.0
    %309 = vmatprep.subr.mxu0 0.0
    %310 = vmatpush2.msra.mxu0 0.0
    %311 = vmatprep.subr.mxu0 0.0
    %312 = vmatpush2.msra.mxu0 0.0
    %313 = vmatprep.subr.mxu0 0.0
    %314 = vmatpush2.msra.mxu0 0.0
    %315 = vmatprep.subr.mxu0 0.0
    %316 = vmatpush2.msra.mxu0 0.0
    %317 = vmatprep.subr.mxu0 0.0
    %318 = vmatpush2.msra.mxu0 0.0
    %319 = vmatprep.subr.mxu0 0.0
    %320 = vmatpush2.msra.mxu0 0.0
    %321 = vmatprep.subr.mxu0 0.0
    %322 = vmatpush2.msra.mxu0 0.0
    %323 = vmatprep.subr.mxu0 0.0
    %324 = vmatpush2.msra.mxu0 0.0
    %325 = vmatprep.subr.mxu0 0.0
    %326 = vmatpush2.msra.mxu0 0.0
    %327 = vmatprep.subr.mxu0 0.0
    %328 = vmatpush2.msra.mxu0 0.0
    %329 = vmatprep.subr.mxu0 0.0
    %330 = vmatpush2.msra.mxu0 0.0
    %331 = vmatprep.subr.mxu0 0.0
    %332 = vmatpush2.msra.mxu0 0.0
    %333 = vmatprep.subr.mxu0 0.0
    %334 = vmatpush2.msra.mxu0 0.0
    %335 = vmatprep.mubr.f32.mxu0 0.0
    %336 = vmatmul.mubr.f32.gmra.mxu0 %v266
    %v337 = vpop.f32.mrf.mxu0
    %v338 = vadd.f32 0.0, %v337
    %v339 = vpop.f32.mrf.mxu0
    %340 = vdwg.mxu0
    %341 = vrot.lane.b32.xlu0 %v262, 126
    %v342 = vpop.permute.xlu0 %341
    %v344 = vadd.f32 %v262, %v342
    %345 = vrot.lane.b32.xlu0 %v168, 124
    %v346 = vpop.permute.xlu0 %345
    %347 = vrot.lane.b32.xlu0 %v168, 92
    %v348 = vpop.permute.xlu0 %347
    %v349 = vsel %vm174, %v346, 0
    %v351 = vsel %vm174, %v348, 0
    %353 = vmatprep.subr.mxu0 0.0
    %354 = vmatpush1.xpose.msra.mxu0 0.0
    %355 = vmatprep.subr.mxu0 0.0
    %356 = vmatpush1.xpose.msra.mxu0 0.0
    %357 = vmatprep.subr.mxu0 0.0
    %358 = vmatpush1.xpose.msra.mxu0 0.0
    %359 = vmatprep.subr.mxu0 0.0
    %360 = vmatpush1.xpose.msra.mxu0 0.0
    %361 = vmatprep.subr.mxu0 0.0
    %362 = vmatpush1.xpose.msra.mxu0 0.0
    %363 = vmatprep.subr.mxu0 0.0
    %364 = vmatpush1.xpose.msra.mxu0 0.0
    %365 = vmatprep.subr.mxu0 0.0
    %366 = vmatpush1.xpose.msra.mxu0 0.0
    %367 = vmatprep.subr.mxu0 0.0
    %368 = vmatpush1.xpose.msra.mxu0 0.0
    %369 = vmatprep.subr.mxu0 0.0
    %370 = vmatpush1.xpose.msra.mxu0 0.0
    %371 = vmatprep.subr.mxu0 0.0
    %372 = vmatpush1.xpose.msra.mxu0 0.0
    %373 = vmatprep.subr.mxu0 0.0
    %374 = vmatpush1.xpose.msra.mxu0 0.0
    %375 = vmatprep.subr.mxu0 0.0
    %376 = vmatpush1.xpose.msra.mxu0 0.0
    %377 = vmatprep.subr.mxu0 0.0
    %378 = vmatpush1.xpose.msra.mxu0 0.0
    %379 = vmatprep.subr.mxu0 0.0
    %380 = vmatpush1.xpose.msra.mxu0 0.0
    %381 = vmatprep.subr.mxu0 0.0
    %382 = vmatpush1.xpose.msra.mxu0 0.0
    %383 = vmatprep.subr.mxu0 0.0
    %384 = vmatpush1.xpose.msra.mxu0 %v351
    %385 = vmatprep.subr.mxu0 0.0
    %386 = vmatpush2.xpose.msra.mxu0 0.0
    %387 = vmatprep.subr.mxu0 0.0
    %388 = vmatpush2.xpose.msra.mxu0 0.0
    %389 = vmatprep.subr.mxu0 0.0
    %390 = vmatpush2.xpose.msra.mxu0 0.0
    %391 = vmatprep.subr.mxu0 0.0
    %392 = vmatpush2.xpose.msra.mxu0 0.0
    %393 = vmatprep.subr.mxu0 0.0
    %394 = vmatpush2.xpose.msra.mxu0 0.0
    %395 = vmatprep.subr.mxu0 0.0
    %396 = vmatpush2.xpose.msra.mxu0 0.0
    %397 = vmatprep.subr.mxu0 0.0
    %398 = vmatpush2.xpose.msra.mxu0 0.0
    %399 = vmatprep.subr.mxu0 0.0
    %400 = vmatpush2.xpose.msra.mxu0 0.0
    %401 = vmatprep.subr.mxu0 0.0
    %402 = vmatpush2.xpose.msra.mxu0 0.0
    %403 = vmatprep.subr.mxu0 0.0
    %404 = vmatpush2.xpose.msra.mxu0 0.0
    %405 = vmatprep.subr.mxu0 0.0
    %406 = vmatpush2.xpose.msra.mxu0 0.0
    %407 = vmatprep.subr.mxu0 0.0
    %408 = vmatpush2.xpose.msra.mxu0 0.0
    %409 = vmatprep.subr.mxu0 0.0
    %410 = vmatpush2.xpose.msra.mxu0 0.0
    %411 = vmatprep.subr.mxu0 0.0
    %412 = vmatpush2.xpose.msra.mxu0 0.0
    %413 = vmatprep.subr.mxu0 0.0
    %414 = vmatpush2.xpose.msra.mxu0 0.0
    %415 = vmatprep.subr.mxu0 0.0
    %416 = vmatpush2.xpose.msra.mxu0 0.0
    %417 = vmatprep.mubr.f32.mxu0 0.0
    %418 = vmatmul.mubr.f32.gmra.mxu0 %v349
    %v419 = vpop.f32.mrf.mxu0
    %v420 = vadd.f32 0.0, %v419
    %v421 = vpop.f32.mrf.mxu0
    %422 = vdwg.mxu0
    %v423 = vmul.f32 %v420, 0.5
    %v424 = vadd.f32 %v423, %v66
    %v425 = vsel %vm251, %v424, -inf
    %426 = vmax.xlane.f32.xlu0 %v425
    %v427 = vpop.xlane.xlu0 %426
    %v428 = vsub.f32 %v424, %v427
    %v429 = vmul.f32 %v428, 1.442695
    %v430 = vpow.pop %v429
    %v431 = vsel %vm251, %v430, 0.0
    %432 = vadd.xlane.f32.xlu0 %v431
    %v433 = vpop.xlane.xlu0 %432
    %v434 = vrcp.pop %v433
    %v435 = vmul.f32 %v430, %v434
    %436 = vrot.lane.b32.xlu0 %v168, 60
    %v437 = vpop.permute.xlu0 %436
    %v439 = vsel %vm174, %v435, 0
    %v441 = vsel %vm268, %v437, 0
    %443 = vmatprep.subr.mxu0 0.0
    %444 = vmatpush1.msra.mxu0 0.0
    %445 = vmatprep.subr.mxu0 0.0
    %446 = vmatpush1.msra.mxu0 0.0
    %447 = vmatprep.subr.mxu0 0.0
    %448 = vmatpush1.msra.mxu0 0.0
    %449 = vmatprep.subr.mxu0 0.0
    %450 = vmatpush1.msra.mxu0 0.0
    %451 = vmatprep.subr.mxu0 0.0
    %452 = vmatpush1.msra.mxu0 0.0
    %453 = vmatprep.subr.mxu0 0.0
    %454 = vmatpush1.msra.mxu0 0.0
    %455 = vmatprep.subr.mxu0 0.0
    %456 = vmatpush1.msra.mxu0 0.0
    %457 = vmatprep.subr.mxu0 0.0
    %458 = vmatpush1.msra.mxu0 0.0
    %459 = vmatprep.subr.mxu0 0.0
    %460 = vmatpush1.msra.mxu0 0.0
    %461 = vmatprep.subr.mxu0 0.0
    %462 = vmatpush1.msra.mxu0 0.0
    %463 = vmatprep.subr.mxu0 0.0
    %464 = vmatpush1.msra.mxu0 0.0
    %465 = vmatprep.subr.mxu0 0.0
    %466 = vmatpush1.msra.mxu0 0.0
    %467 = vmatprep.subr.mxu0 0.0
    %468 = vmatpush1.msra.mxu0 0.0
    %469 = vmatprep.subr.mxu0 0.0
    %470 = vmatpush1.msra.mxu0 0.0
    %471 = vmatprep.subr.mxu0 0.0
    %472 = vmatpush1.msra.mxu0 0.0
    %473 = vmatprep.subr.mxu0 0.0
    %474 = vmatpush1.msra.mxu0 %v441
    %475 = vmatprep.subr.mxu0 0.0
    %476 = vmatpush2.msra.mxu0 0.0
    %477 = vmatprep.subr.mxu0 0.0
    %478 = vmatpush2.msra.mxu0 0.0
    %479 = vmatprep.subr.mxu0 0.0
    %480 = vmatpush2.msra.mxu0 0.0
    %481 = vmatprep.subr.mxu0 0.0
    %482 = vmatpush2.msra.mxu0 0.0
    %483 = vmatprep.subr.mxu0 0.0
    %484 = vmatpush2.msra.mxu0 0.0
    %485 = vmatprep.subr.mxu0 0.0
    %486 = vmatpush2.msra.mxu0 0.0
    %487 = vmatprep.subr.mxu0 0.0
    %488 = vmatpush2.msra.mxu0 0.0
    %489 = vmatprep.subr.mxu0 0.0
    %490 = vmatpush2.msra.mxu0 0.0
    %491 = vmatprep.subr.mxu0 0.0
    %492 = vmatpush2.msra.mxu0 0.0
    %493 = vmatprep.subr.mxu0 0.0
    %494 = vmatpush2.msra.mxu0 0.0
    %495 = vmatprep.subr.mxu0 0.0
    %496 = vmatpush2.msra.mxu0 0.0
    %497 = vmatprep.subr.mxu0 0.0
    %498 = vmatpush2.msra.mxu0 0.0
    %499 = vmatprep.subr.mxu0 0.0
    %500 = vmatpush2.msra.mxu0 0.0
    %501 = vmatprep.subr.mxu0 0.0
    %502 = vmatpush2.msra.mxu0 0.0
    %503 = vmatprep.subr.mxu0 0.0
    %504 = vmatpush2.msra.mxu0 0.0
    %505 = vmatprep.subr.mxu0 0.0
    %506 = vmatpush2.msra.mxu0 0.0
    %507 = vmatprep.mubr.f32.mxu0 0.0
    %508 = vmatmul.mubr.f32.gmra.mxu0 %v439
    %v509 = vpop.f32.mrf.mxu0
    %v510 = vadd.f32 0.0, %v509
    %v511 = vpop.f32.mrf.mxu0
    %512 = vdwg.mxu0
    %513 = vrot.lane.b32.xlu0 %v435, 126
    %v514 = vpop.permute.xlu0 %513
    %v516 = vadd.f32 %v435, %v514
    %517 = vrot.lane.b32.xlu0 %v168, 120
    %v518 = vpop.permute.xlu0 %517
    %519 = vrot.lane.b32.xlu0 %v168, 88
    %v520 = vpop.permute.xlu0 %519
    %v521 = vsel %vm174, %v518, 0
    %v523 = vsel %vm174, %v520, 0
    %525 = vmatprep.subr.mxu0 0.0
    %526 = vmatpush1.xpose.msra.mxu0 0.0
    %527 = vmatprep.subr.mxu0 0.0
    %528 = vmatpush1.xpose.msra.mxu0 0.0
    %529 = vmatprep.subr.mxu0 0.0
    %530 = vmatpush1.xpose.msra.mxu0 0.0
    %531 = vmatprep.subr.mxu0 0.0
    %532 = vmatpush1.xpose.msra.mxu0 0.0
    %533 = vmatprep.subr.mxu0 0.0
    %534 = vmatpush1.xpose.msra.mxu0 0.0
    %535 = vmatprep.subr.mxu0 0.0
    %536 = vmatpush1.xpose.msra.mxu0 0.0
    %537 = vmatprep.subr.mxu0 0.0
    %538 = vmatpush1.xpose.msra.mxu0 0.0
    %539 = vmatprep.subr.mxu0 0.0
    %540 = vmatpush1.xpose.msra.mxu0 0.0
    %541 = vmatprep.subr.mxu0 0.0
    %542 = vmatpush1.xpose.msra.mxu0 0.0
    %543 = vmatprep.subr.mxu0 0.0
    %544 = vmatpush1.xpose.msra.mxu0 0.0
    %545 = vmatprep.subr.mxu0 0.0
    %546 = vmatpush1.xpose.msra.mxu0 0.0
    %547 = vmatprep.subr.mxu0 0.0
    %548 = vmatpush1.xpose.msra.mxu0 0.0
    %549 = vmatprep.subr.mxu0 0.0
    %550 = vmatpush1.xpose.msra.mxu0 0.0
    %551 = vmatprep.subr.mxu0 0.0
    %552 = vmatpush1.xpose.msra.mxu0 0.0
    %553 = vmatprep.subr.mxu0 0.0
    %554 = vmatpush1.xpose.msra.mxu0 0.0
    %555 = vmatprep.subr.mxu0 0.0
    %556 = vmatpush1.xpose.msra.mxu0 %v523
    %557 = vmatprep.subr.mxu0 0.0
    %558 = vmatpush2.xpose.msra.mxu0 0.0
    %559 = vmatprep.subr.mxu0 0.0
    %560 = vmatpush2.xpose.msra.mxu0 0.0
    %561 = vmatprep.subr.mxu0 0.0
    %562 = vmatpush2.xpose.msra.mxu0 0.0
    %563 = vmatprep.subr.mxu0 0.0
    %564 = vmatpush2.xpose.msra.mxu0 0.0
    %565 = vmatprep.subr.mxu0 0.0
    %566 = vmatpush2.xpose.msra.mxu0 0.0
    %567 = vmatprep.subr.mxu0 0.0
    %568 = vmatpush2.xpose.msra.mxu0 0.0
    %569 = vmatprep.subr.mxu0 0.0
    %570 = vmatpush2.xpose.msra.mxu0 0.0
    %571 = vmatprep.subr.mxu0 0.0
    %572 = vmatpush2.xpose.msra.mxu0 0.0
    %573 = vmatprep.subr.mxu0 0.0
    %574 = vmatpush2.xpose.msra.mxu0 0.0
    %575 = vmatprep.subr.mxu0 0.0
    %576 = vmatpush2.xpose.msra.mxu0 0.0
    %577 = vmatprep.subr.mxu0 0.0
    %578 = vmatpush2.xpose.msra.mxu0 0.0
    %579 = vmatprep.subr.mxu0 0.0
    %580 = vmatpush2.xpose.msra.mxu0 0.0
    %581 = vmatprep.subr.mxu0 0.0
    %582 = vmatpush2.xpose.msra.mxu0 0.0
    %583 = vmatprep.subr.mxu0 0.0
    %584 = vmatpush2.xpose.msra.mxu0 0.0
    %585 = vmatprep.subr.mxu0 0.0
    %586 = vmatpush2.xpose.msra.mxu0 0.0
    %587 = vmatprep.subr.mxu0 0.0
    %588 = vmatpush2.xpose.msra.mxu0 0.0
    %589 = vmatprep.mubr.f32.mxu0 0.0
    %590 = vmatmul.mubr.f32.gmra.mxu0 %v521
    %v591 = vpop.f32.mrf.mxu0
    %v592 = vadd.f32 0.0, %v591
    %v593 = vpop.f32.mrf.mxu0
    %594 = vdwg.mxu0
    %v595 = vmul.f32 %v592, 0.5
    %v596 = vadd.f32 %v595, %v66
    %v597 = vsel %vm251, %v596, -inf
    %598 = vmax.xlane.f32.xlu0 %v597
    %v599 = vpop.xlane.xlu0 %598
    %v600 = vsub.f32 %v596, %v599
    %v601 = vmul.f32 %v600, 1.442695
    %v602 = vpow.pop %v601
    %v603 = vsel %vm251, %v602, 0.0
    %604 = vadd.xlane.f32.xlu0 %v603
    %v605 = vpop.xlane.xlu0 %604
    %v606 = vrcp.pop %v605
    %v607 = vmul.f32 %v602, %v606
    %608 = vrot.lane.b32.xlu0 %v168, 56
    %v609 = vpop.permute.xlu0 %608
    %v611 = vsel %vm174, %v607, 0
    %v613 = vsel %vm268, %v609, 0
    %615 = vmatprep.subr.mxu0 0.0
    %616 = vmatpush1.msra.mxu0 0.0
    %617 = vmatprep.subr.mxu0 0.0
    %618 = vmatpush1.msra.mxu0 0.0
    %619 = vmatprep.subr.mxu0 0.0
    %620 = vmatpush1.msra.mxu0 0.0
    %621 = vmatprep.subr.mxu0 0.0
    %622 = vmatpush1.msra.mxu0 0.0
    %623 = vmatprep.subr.mxu0 0.0
    %624 = vmatpush1.msra.mxu0 0.0
    %625 = vmatprep.subr.mxu0 0.0
    %626 = vmatpush1.msra.mxu0 0.0
    %627 = vmatprep.subr.mxu0 0.0
    %628 = vmatpush1.msra.mxu0 0.0
    %629 = vmatprep.subr.mxu0 0.0
    %630 = vmatpush1.msra.mxu0 0.0
    %631 = vmatprep.subr.mxu0 0.0
    %632 = vmatpush1.msra.mxu0 0.0
    %633 = vmatprep.subr.mxu0 0.0
    %634 = vmatpush1.msra.mxu0 0.0
    %635 = vmatprep.subr.mxu0 0.0
    %636 = vmatpush1.msra.mxu0 0.0
    %637 = vmatprep.subr.mxu0 0.0
    %638 = vmatpush1.msra.mxu0 0.0
    %639 = vmatprep.subr.mxu0 0.0
    %640 = vmatpush1.msra.mxu0 0.0
    %641 = vmatprep.subr.mxu0 0.0
    %642 = vmatpush1.msra.mxu0 0.0
    %643 = vmatprep.subr.mxu0 0.0
    %644 = vmatpush1.msra.mxu0 0.0
    %645 = vmatprep.subr.mxu0 0.0
    %646 = vmatpush1.msra.mxu0 %v613
    %647 = vmatprep.subr.mxu0 0.0
    %648 = vmatpush2.msra.mxu0 0.0
    %649 = vmatprep.subr.mxu0 0.0
    %650 = vmatpush2.msra.mxu0 0.0
    %651 = vmatprep.subr.mxu0 0.0
    %652 = vmatpush2.msra.mxu0 0.0
    %653 = vmatprep.subr.mxu0 0.0
    %654 = vmatpush2.msra.mxu0 0.0
    %655 = vmatprep.subr.mxu0 0.0
    %656 = vmatpush2.msra.mxu0 0.0
    %657 = vmatprep.subr.mxu0 0.0
    %658 = vmatpush2.msra.mxu0 0.0
    %659 = vmatprep.subr.mxu0 0.0
    %660 = vmatpush2.msra.mxu0 0.0
    %661 = vmatprep.subr.mxu0 0.0
    %662 = vmatpush2.msra.mxu0 0.0
    %663 = vmatprep.subr.mxu0 0.0
    %664 = vmatpush2.msra.mxu0 0.0
    %665 = vmatprep.subr.mxu0 0.0
    %666 = vmatpush2.msra.mxu0 0.0
    %667 = vmatprep.subr.mxu0 0.0
    %668 = vmatpush2.msra.mxu0 0.0
    %669 = vmatprep.subr.mxu0 0.0
    %670 = vmatpush2.msra.mxu0 0.0
    %671 = vmatprep.subr.mxu0 0.0
    %672 = vmatpush2.msra.mxu0 0.0
    %673 = vmatprep.subr.mxu0 0.0
    %674 = vmatpush2.msra.mxu0 0.0
    %675 = vmatprep.subr.mxu0 0.0
    %676 = vmatpush2.msra.mxu0 0.0
    %677 = vmatprep.subr.mxu0 0.0
    %678 = vmatpush2.msra.mxu0 0.0
    %679 = vmatprep.mubr.f32.mxu0 0.0
    %680 = vmatmul.mubr.f32.gmra.mxu0 %v611
    %v681 = vpop.f32.mrf.mxu0
    %v682 = vadd.f32 0.0, %v681
    %v683 = vpop.f32.mrf.mxu0
    %684 = vdwg.mxu0
    %685 = vrot.lane.b32.xlu0 %v607, 126
    %v686 = vpop.permute.xlu0 %685
    %v688 = vadd.f32 %v607, %v686
    %689 = vrot.lane.b32.xlu0 %v168, 116
    %v690 = vpop.permute.xlu0 %689
    %691 = vrot.lane.b32.xlu0 %v168, 84
    %v692 = vpop.permute.xlu0 %691
    %v693 = vsel %vm174, %v690, 0
    %v695 = vsel %vm174, %v692, 0
    %697 = vmatprep.subr.mxu0 0.0
    %698 = vmatpush1.xpose.msra.mxu0 0.0
    %699 = vmatprep.subr.mxu0 0.0
    %700 = vmatpush1.xpose.msra.mxu0 0.0
    %701 = vmatprep.subr.mxu0 0.0
    %702 = vmatpush1.xpose.msra.mxu0 0.0
    %703 = vmatprep.subr.mxu0 0.0
    %704 = vmatpush1.xpose.msra.mxu0 0.0
    %705 = vmatprep.subr.mxu0 0.0
    %706 = vmatpush1.xpose.msra.mxu0 0.0
    %707 = vmatprep.subr.mxu0 0.0
    %708 = vmatpush1.xpose.msra.mxu0 0.0
    %709 = vmatprep.subr.mxu0 0.0
    %710 = vmatpush1.xpose.msra.mxu0 0.0
    %711 = vmatprep.subr.mxu0 0.0
    %712 = vmatpush1.xpose.msra.mxu0 0.0
    %713 = vmatprep.subr.mxu0 0.0
    %714 = vmatpush1.xpose.msra.mxu0 0.0
    %715 = vmatprep.subr.mxu0 0.0
    %716 = vmatpush1.xpose.msra.mxu0 0.0
    %717 = vmatprep.subr.mxu0 0.0
    %718 = vmatpush1.xpose.msra.mxu0 0.0
    %719 = vmatprep.subr.mxu0 0.0
    %720 = vmatpush1.xpose.msra.mxu0 0.0
    %721 = vmatprep.subr.mxu0 0.0
    %722 = vmatpush1.xpose.msra.mxu0 0.0
    %723 = vmatprep.subr.mxu0 0.0
    %724 = vmatpush1.xpose.msra.mxu0 0.0
    %725 = vmatprep.subr.mxu0 0.0
    %726 = vmatpush1.xpose.msra.mxu0 0.0
    %727 = vmatprep.subr.mxu0 0.0
    %728 = vmatpush1.xpose.msra.mxu0 %v695
    %729 = vmatprep.subr.mxu0 0.0
    %730 = vmatpush2.xpose.msra.mxu0 0.0
    %731 = vmatprep.subr.mxu0 0.0
    %732 = vmatpush2.xpose.msra.mxu0 0.0
    %733 = vmatprep.subr.mxu0 0.0
    %734 = vmatpush2.xpose.msra.mxu0 0.0
    %735 = vmatprep.subr.mxu0 0.0
    %736 = vmatpush2.xpose.msra.mxu0 0.0
    %737 = vmatprep.subr.mxu0 0.0
    %738 = vmatpush2.xpose.msra.mxu0 0.0
    %739 = vmatprep.subr.mxu0 0.0
    %740 = vmatpush2.xpose.msra.mxu0 0.0
    %741 = vmatprep.subr.mxu0 0.0
    %742 = vmatpush2.xpose.msra.mxu0 0.0
    %743 = vmatprep.subr.mxu0 0.0
    %744 = vmatpush2.xpose.msra.mxu0 0.0
    %745 = vmatprep.subr.mxu0 0.0
    %746 = vmatpush2.xpose.msra.mxu0 0.0
    %747 = vmatprep.subr.mxu0 0.0
    %748 = vmatpush2.xpose.msra.mxu0 0.0
    %749 = vmatprep.subr.mxu0 0.0
    %750 = vmatpush2.xpose.msra.mxu0 0.0
    %751 = vmatprep.subr.mxu0 0.0
    %752 = vmatpush2.xpose.msra.mxu0 0.0
    %753 = vmatprep.subr.mxu0 0.0
    %754 = vmatpush2.xpose.msra.mxu0 0.0
    %755 = vmatprep.subr.mxu0 0.0
    %756 = vmatpush2.xpose.msra.mxu0 0.0
    %757 = vmatprep.subr.mxu0 0.0
    %758 = vmatpush2.xpose.msra.mxu0 0.0
    %759 = vmatprep.subr.mxu0 0.0
    %760 = vmatpush2.xpose.msra.mxu0 0.0
    %761 = vmatprep.mubr.f32.mxu0 0.0
    %762 = vmatmul.mubr.f32.gmra.mxu0 %v693
    %v763 = vpop.f32.mrf.mxu0
    %v764 = vadd.f32 0.0, %v763
    %v765 = vpop.f32.mrf.mxu0
    %766 = vdwg.mxu0
    %v767 = vmul.f32 %v764, 0.5
    %v768 = vadd.f32 %v767, %v66
    %v769 = vsel %vm251, %v768, -inf
    %770 = vmax.xlane.f32.xlu0 %v769
    %v771 = vpop.xlane.xlu0 %770
    %v772 = vsub.f32 %v768, %v771
    %v773 = vmul.f32 %v772, 1.442695
    %v774 = vpow.pop %v773
    %v775 = vsel %vm251, %v774, 0.0
    %776 = vadd.xlane.f32.xlu0 %v775
    %v777 = vpop.xlane.xlu0 %776
    %v778 = vrcp.pop %v777
    %v779 = vmul.f32 %v774, %v778
    %780 = vrot.lane.b32.xlu0 %v168, 52
    %v781 = vpop.permute.xlu0 %780
    %v783 = vsel %vm174, %v779, 0
    %v785 = vsel %vm268, %v781, 0
    %787 = vmatprep.subr.mxu0 0.0
    %788 = vmatpush1.msra.mxu0 0.0
    %789 = vmatprep.subr.mxu0 0.0
    %790 = vmatpush1.msra.mxu0 0.0
    %791 = vmatprep.subr.mxu0 0.0
    %792 = vmatpush1.msra.mxu0 0.0
    %793 = vmatprep.subr.mxu0 0.0
    %794 = vmatpush1.msra.mxu0 0.0
    %795 = vmatprep.subr.mxu0 0.0
    %796 = vmatpush1.msra.mxu0 0.0
    %797 = vmatprep.subr.mxu0 0.0
    %798 = vmatpush1.msra.mxu0 0.0
    %799 = vmatprep.subr.mxu0 0.0
    %800 = vmatpush1.msra.mxu0 0.0
    %801 = vmatprep.subr.mxu0 0.0
    %802 = vmatpush1.msra.mxu0 0.0
    %803 = vmatprep.subr.mxu0 0.0
    %804 = vmatpush1.msra.mxu0 0.0
    %805 = vmatprep.subr.mxu0 0.0
    %806 = vmatpush1.msra.mxu0 0.0
    %807 = vmatprep.subr.mxu0 0.0
    %808 = vmatpush1.msra.mxu0 0.0
    %809 = vmatprep.subr.mxu0 0.0
    %810 = vmatpush1.msra.mxu0 0.0
    %811 = vmatprep.subr.mxu0 0.0
    %812 = vmatpush1.msra.mxu0 0.0
    %813 = vmatprep.subr.mxu0 0.0
    %814 = vmatpush1.msra.mxu0 0.0
    %815 = vmatprep.subr.mxu0 0.0
    %816 = vmatpush1.msra.mxu0 0.0
    %817 = vmatprep.subr.mxu0 0.0
    %818 = vmatpush1.msra.mxu0 %v785
    %819 = vmatprep.subr.mxu0 0.0
    %820 = vmatpush2.msra.mxu0 0.0
    %821 = vmatprep.subr.mxu0 0.0
    %822 = vmatpush2.msra.mxu0 0.0
    %823 = vmatprep.subr.mxu0 0.0
    %824 = vmatpush2.msra.mxu0 0.0
    %825 = vmatprep.subr.mxu0 0.0
    %826 = vmatpush2.msra.mxu0 0.0
    %827 = vmatprep.subr.mxu0 0.0
    %828 = vmatpush2.msra.mxu0 0.0
    %829 = vmatprep.subr.mxu0 0.0
    %830 = vmatpush2.msra.mxu0 0.0
    %831 = vmatprep.subr.mxu0 0.0
    %832 = vmatpush2.msra.mxu0 0.0
    %833 = vmatprep.subr.mxu0 0.0
    %834 = vmatpush2.msra.mxu0 0.0
    %835 = vmatprep.subr.mxu0 0.0
    %836 = vmatpush2.msra.mxu0 0.0
    %837 = vmatprep.subr.mxu0 0.0
    %838 = vmatpush2.msra.mxu0 0.0
    %839 = vmatprep.subr.mxu0 0.0
    %840 = vmatpush2.msra.mxu0 0.0
    %841 = vmatprep.subr.mxu0 0.0
    %842 = vmatpush2.msra.mxu0 0.0
    %843 = vmatprep.subr.mxu0 0.0
    %844 = vmatpush2.msra.mxu0 0.0
    %845 = vmatprep.subr.mxu0 0.0
    %846 = vmatpush2.msra.mxu0 0.0
    %847 = vmatprep.subr.mxu0 0.0
    %848 = vmatpush2.msra.mxu0 0.0
    %849 = vmatprep.subr.mxu0 0.0
    %850 = vmatpush2.msra.mxu0 0.0
    %851 = vmatprep.mubr.f32.mxu0 0.0
    %852 = vmatmul.mubr.f32.gmra.mxu0 %v783
    %v853 = vpop.f32.mrf.mxu0
    %v854 = vadd.f32 0.0, %v853
    %v855 = vpop.f32.mrf.mxu0
    %856 = vdwg.mxu0
    %857 = vrot.lane.b32.xlu0 %v779, 126
    %v858 = vpop.permute.xlu0 %857
    %v860 = vadd.f32 %v779, %v858
    %861 = vrot.lane.b32.xlu0 %v168, 112
    %v862 = vpop.permute.xlu0 %861
    %863 = vrot.lane.b32.xlu0 %v168, 80
    %v864 = vpop.permute.xlu0 %863
    %v865 = vsel %vm174, %v862, 0
    %v867 = vsel %vm174, %v864, 0
    %869 = vmatprep.subr.mxu0 0.0
    %870 = vmatpush1.xpose.msra.mxu0 0.0
    %871 = vmatprep.subr.mxu0 0.0
    %872 = vmatpush1.xpose.msra.mxu0 0.0
    %873 = vmatprep.subr.mxu0 0.0
    %874 = vmatpush1.xpose.msra.mxu0 0.0
    %875 = vmatprep.subr.mxu0 0.0
    %876 = vmatpush1.xpose.msra.mxu0 0.0
    %877 = vmatprep.subr.mxu0 0.0
    %878 = vmatpush1.xpose.msra.mxu0 0.0
    %879 = vmatprep.subr.mxu0 0.0
    %880 = vmatpush1.xpose.msra.mxu0 0.0
    %881 = vmatprep.subr.mxu0 0.0
    %882 = vmatpush1.xpose.msra.mxu0 0.0
    %883 = vmatprep.subr.mxu0 0.0
    %884 = vmatpush1.xpose.msra.mxu0 0.0
    %885 = vmatprep.subr.mxu0 0.0
    %886 = vmatpush1.xpose.msra.mxu0 0.0
    %887 = vmatprep.subr.mxu0 0.0
    %888 = vmatpush1.xpose.msra.mxu0 0.0
    %889 = vmatprep.subr.mxu0 0.0
    %890 = vmatpush1.xpose.msra.mxu0 0.0
    %891 = vmatprep.subr.mxu0 0.0
    %892 = vmatpush1.xpose.msra.mxu0 0.0
    %893 = vmatprep.subr.mxu0 0.0
    %894 = vmatpush1.xpose.msra.mxu0 0.0
    %895 = vmatprep.subr.mxu0 0.0
    %896 = vmatpush1.xpose.msra.mxu0 0.0
    %897 = vmatprep.subr.mxu0 0.0
    %898 = vmatpush1.xpose.msra.mxu0 0.0
    %899 = vmatprep.subr.mxu0 0.0
    %900 = vmatpush1.xpose.msra.mxu0 %v867
    %901 = vmatprep.subr.mxu0 0.0
    %902 = vmatpush2.xpose.msra.mxu0 0.0
    %903 = vmatprep.subr.mxu0 0.0
    %904 = vmatpush2.xpose.msra.mxu0 0.0
    %905 = vmatprep.subr.mxu0 0.0
    %906 = vmatpush2.xpose.msra.mxu0 0.0
    %907 = vmatprep.subr.mxu0 0.0
    %908 = vmatpush2.xpose.msra.mxu0 0.0
    %909 = vmatprep.subr.mxu0 0.0
    %910 = vmatpush2.xpose.msra.mxu0 0.0
    %911 = vmatprep.subr.mxu0 0.0
    %912 = vmatpush2.xpose.msra.mxu0 0.0
    %913 = vmatprep.subr.mxu0 0.0
    %914 = vmatpush2.xpose.msra.mxu0 0.0
    %915 = vmatprep.subr.mxu0 0.0
    %916 = vmatpush2.xpose.msra.mxu0 0.0
    %917 = vmatprep.subr.mxu0 0.0
    %918 = vmatpush2.xpose.msra.mxu0 0.0
    %919 = vmatprep.subr.mxu0 0.0
    %920 = vmatpush2.xpose.msra.mxu0 0.0
    %921 = vmatprep.subr.mxu0 0.0
    %922 = vmatpush2.xpose.msra.mxu0 0.0
    %923 = vmatprep.subr.mxu0 0.0
    %924 = vmatpush2.xpose.msra.mxu0 0.0
    %925 = vmatprep.subr.mxu0 0.0
    %926 = vmatpush2.xpose.msra.mxu0 0.0
    %927 = vmatprep.subr.mxu0 0.0
    %928 = vmatpush2.xpose.msra.mxu0 0.0
    %929 = vmatprep.subr.mxu0 0.0
    %930 = vmatpush2.xpose.msra.mxu0 0.0
    %931 = vmatprep.subr.mxu0 0.0
    %932 = vmatpush2.xpose.msra.mxu0 0.0
    %933 = vmatprep.mubr.f32.mxu0 0.0
    %934 = vmatmul.mubr.f32.gmra.mxu0 %v865
    %v935 = vpop.f32.mrf.mxu0
    %v936 = vadd.f32 0.0, %v935
    %v937 = vpop.f32.mrf.mxu0
    %938 = vdwg.mxu0
    %v939 = vmul.f32 %v936, 0.5
    %v940 = vadd.f32 %v939, %v66
    %v941 = vsel %vm251, %v940, -inf
    %942 = vmax.xlane.f32.xlu0 %v941
    %v943 = vpop.xlane.xlu0 %942
    %v944 = vsub.f32 %v940, %v943
    %v945 = vmul.f32 %v944, 1.442695
    %v946 = vpow.pop %v945
    %v947 = vsel %vm251, %v946, 0.0
    %948 = vadd.xlane.f32.xlu0 %v947
    %v949 = vpop.xlane.xlu0 %948
    %v950 = vrcp.pop %v949
    %v951 = vmul.f32 %v946, %v950
    %952 = vrot.lane.b32.xlu0 %v168, 48
    %v953 = vpop.permute.xlu0 %952
    %v955 = vsel %vm174, %v951, 0
    %v957 = vsel %vm268, %v953, 0
    %959 = vmatprep.subr.mxu0 0.0
    %960 = vmatpush1.msra.mxu0 0.0
    %961 = vmatprep.subr.mxu0 0.0
    %962 = vmatpush1.msra.mxu0 0.0
    %963 = vmatprep.subr.mxu0 0.0
    %964 = vmatpush1.msra.mxu0 0.0
    %965 = vmatprep.subr.mxu0 0.0
    %966 = vmatpush1.msra.mxu0 0.0
    %967 = vmatprep.subr.mxu0 0.0
    %968 = vmatpush1.msra.mxu0 0.0
    %969 = vmatprep.subr.mxu0 0.0
    %970 = vmatpush1.msra.mxu0 0.0
    %971 = vmatprep.subr.mxu0 0.0
    %972 = vmatpush1.msra.mxu0 0.0
    %973 = vmatprep.subr.mxu0 0.0
    %974 = vmatpush1.msra.mxu0 0.0
    %975 = vmatprep.subr.mxu0 0.0
    %976 = vmatpush1.msra.mxu0 0.0
    %977 = vmatprep.subr.mxu0 0.0
    %978 = vmatpush1.msra.mxu0 0.0
    %979 = vmatprep.subr.mxu0 0.0
    %980 = vmatpush1.msra.mxu0 0.0
    %981 = vmatprep.subr.mxu0 0.0
    %982 = vmatpush1.msra.mxu0 0.0
    %983 = vmatprep.subr.mxu0 0.0
    %984 = vmatpush1.msra.mxu0 0.0
    %985 = vmatprep.subr.mxu0 0.0
    %986 = vmatpush1.msra.mxu0 0.0
    %987 = vmatprep.subr.mxu0 0.0
    %988 = vmatpush1.msra.mxu0 0.0
    %989 = vmatprep.subr.mxu0 0.0
    %990 = vmatpush1.msra.mxu0 %v957
    %991 = vmatprep.subr.mxu0 0.0
    %992 = vmatpush2.msra.mxu0 0.0
    %993 = vmatprep.subr.mxu0 0.0
    %994 = vmatpush2.msra.mxu0 0.0
    %995 = vmatprep.subr.mxu0 0.0
    %996 = vmatpush2.msra.mxu0 0.0
    %997 = vmatprep.subr.mxu0 0.0
    %998 = vmatpush2.msra.mxu0 0.0
    %999 = vmatprep.subr.mxu0 0.0
    %1000 = vmatpush2.msra.mxu0 0.0
    %1001 = vmatprep.subr.mxu0 0.0
    %1002 = vmatpush2.msra.mxu0 0.0
    %1003 = vmatprep.subr.mxu0 0.0
    %1004 = vmatpush2.msra.mxu0 0.0
    %1005 = vmatprep.subr.mxu0 0.0
    %1006 = vmatpush2.msra.mxu0 0.0
    %1007 = vmatprep.subr.mxu0 0.0
    %1008 = vmatpush2.msra.mxu0 0.0
    %1009 = vmatprep.subr.mxu0 0.0
    %1010 = vmatpush2.msra.mxu0 0.0
    %1011 = vmatprep.subr.mxu0 0.0
    %1012 = vmatpush2.msra.mxu0 0.0
    %1013 = vmatprep.subr.mxu0 0.0
    %1014 = vmatpush2.msra.mxu0 0.0
    %1015 = vmatprep.subr.mxu0 0.0
    %1016 = vmatpush2.msra.mxu0 0.0
    %1017 = vmatprep.subr.mxu0 0.0
    %1018 = vmatpush2.msra.mxu0 0.0
    %1019 = vmatprep.subr.mxu0 0.0
    %1020 = vmatpush2.msra.mxu0 0.0
    %1021 = vmatprep.subr.mxu0 0.0
    %1022 = vmatpush2.msra.mxu0 0.0
    %1023 = vmatprep.mubr.f32.mxu0 0.0
    %1024 = vmatmul.mubr.f32.gmra.mxu0 %v955
    %v1025 = vpop.f32.mrf.mxu0
    %v1026 = vadd.f32 0.0, %v1025
    %v1027 = vpop.f32.mrf.mxu0
    %1028 = vdwg.mxu0
    %1029 = vrot.lane.b32.xlu0 %v951, 126
    %v1030 = vpop.permute.xlu0 %1029
    %v1032 = vadd.f32 %v951, %v1030
    %1033 = vrot.lane.b32.xlu0 %v168, 108
    %v1034 = vpop.permute.xlu0 %1033
    %1035 = vrot.lane.b32.xlu0 %v168, 76
    %v1036 = vpop.permute.xlu0 %1035
    %v1037 = vsel %vm174, %v1034, 0
    %v1039 = vsel %vm174, %v1036, 0
    %1041 = vmatprep.subr.mxu0 0.0
    %1042 = vmatpush1.xpose.msra.mxu0 0.0
    %1043 = vmatprep.subr.mxu0 0.0
    %1044 = vmatpush1.xpose.msra.mxu0 0.0
    %1045 = vmatprep.subr.mxu0 0.0
    %1046 = vmatpush1.xpose.msra.mxu0 0.0
    %1047 = vmatprep.subr.mxu0 0.0
    %1048 = vmatpush1.xpose.msra.mxu0 0.0
    %1049 = vmatprep.subr.mxu0 0.0
    %1050 = vmatpush1.xpose.msra.mxu0 0.0
    %1051 = vmatprep.subr.mxu0 0.0
    %1052 = vmatpush1.xpose.msra.mxu0 0.0
    %1053 = vmatprep.subr.mxu0 0.0
    %1054 = vmatpush1.xpose.msra.mxu0 0.0
    %1055 = vmatprep.subr.mxu0 0.0
    %1056 = vmatpush1.xpose.msra.mxu0 0.0
    %1057 = vmatprep.subr.mxu0 0.0
    %1058 = vmatpush1.xpose.msra.mxu0 0.0
    %1059 = vmatprep.subr.mxu0 0.0
    %1060 = vmatpush1.xpose.msra.mxu0 0.0
    %1061 = vmatprep.subr.mxu0 0.0
    %1062 = vmatpush1.xpose.msra.mxu0 0.0
    %1063 = vmatprep.subr.mxu0 0.0
    %1064 = vmatpush1.xpose.msra.mxu0 0.0
    %1065 = vmatprep.subr.mxu0 0.0
    %1066 = vmatpush1.xpose.msra.mxu0 0.0
    %1067 = vmatprep.subr.mxu0 0.0
    %1068 = vmatpush1.xpose.msra.mxu0 0.0
    %1069 = vmatprep.subr.mxu0 0.0
    %1070 = vmatpush1.xpose.msra.mxu0 0.0
    %1071 = vmatprep.subr.mxu0 0.0
    %1072 = vmatpush1.xpose.msra.mxu0 %v1039
    %1073 = vmatprep.subr.mxu0 0.0
    %1074 = vmatpush2.xpose.msra.mxu0 0.0
    %1075 = vmatprep.subr.mxu0 0.0
    %1076 = vmatpush2.xpose.msra.mxu0 0.0
    %1077 = vmatprep.subr.mxu0 0.0
    %1078 = vmatpush2.xpose.msra.mxu0 0.0
    %1079 = vmatprep.subr.mxu0 0.0
    %1080 = vmatpush2.xpose.msra.mxu0 0.0
    %1081 = vmatprep.subr.mxu0 0.0
    %1082 = vmatpush2.xpose.msra.mxu0 0.0
    %1083 = vmatprep.subr.mxu0 0.0
    %1084 = vmatpush2.xpose.msra.mxu0 0.0
    %1085 = vmatprep.subr.mxu0 0.0
    %1086 = vmatpush2.xpose.msra.mxu0 0.0
    %1087 = vmatprep.subr.mxu0 0.0
    %1088 = vmatpush2.xpose.msra.mxu0 0.0
    %1089 = vmatprep.subr.mxu0 0.0
    %1090 = vmatpush2.xpose.msra.mxu0 0.0
    %1091 = vmatprep.subr.mxu0 0.0
    %1092 = vmatpush2.xpose.msra.mxu0 0.0
    %1093 = vmatprep.subr.mxu0 0.0
    %1094 = vmatpush2.xpose.msra.mxu0 0.0
    %1095 = vmatprep.subr.mxu0 0.0
    %1096 = vmatpush2.xpose.msra.mxu0 0.0
    %1097 = vmatprep.subr.mxu0 0.0
    %1098 = vmatpush2.xpose.msra.mxu0 0.0
    %1099 = vmatprep.subr.mxu0 0.0
    %1100 = vmatpush2.xpose.msra.mxu0 0.0
    %1101 = vmatprep.subr.mxu0 0.0
    %1102 = vmatpush2.xpose.msra.mxu0 0.0
    %1103 = vmatprep.subr.mxu0 0.0
    %1104 = vmatpush2.xpose.msra.mxu0 0.0
    %1105 = vmatprep.mubr.f32.mxu0 0.0
    %1106 = vmatmul.mubr.f32.gmra.mxu0 %v1037
    %v1107 = vpop.f32.mrf.mxu0
    %v1108 = vadd.f32 0.0, %v1107
    %v1109 = vpop.f32.mrf.mxu0
    %1110 = vdwg.mxu0
    %v1111 = vmul.f32 %v1108, 0.5
    %v1112 = vadd.f32 %v1111, %v66
    %v1113 = vsel %vm251, %v1112, -inf
    %1114 = vmax.xlane.f32.xlu0 %v1113
    %v1115 = vpop.xlane.xlu0 %1114
    %v1116 = vsub.f32 %v1112, %v1115
    %v1117 = vmul.f32 %v1116, 1.442695
    %v1118 = vpow.pop %v1117
    %v1119 = vsel %vm251, %v1118, 0.0
    %1120 = vadd.xlane.f32.xlu0 %v1119
    %v1121 = vpop.xlane.xlu0 %1120
    %v1122 = vrcp.pop %v1121
    %v1123 = vmul.f32 %v1118, %v1122
    %1124 = vrot.lane.b32.xlu0 %v168, 44
    %v1125 = vpop.permute.xlu0 %1124
    %v1127 = vsel %vm174, %v1123, 0
    %v1129 = vsel %vm268, %v1125, 0
    %1131 = vmatprep.subr.mxu0 0.0
    %1132 = vmatpush1.msra.mxu0 0.0
    %1133 = vmatprep.subr.mxu0 0.0
    %1134 = vmatpush1.msra.mxu0 0.0
    %1135 = vmatprep.subr.mxu0 0.0
    %1136 = vmatpush1.msra.mxu0 0.0
    %1137 = vmatprep.subr.mxu0 0.0
    %1138 = vmatpush1.msra.mxu0 0.0
    %1139 = vmatprep.subr.mxu0 0.0
    %1140 = vmatpush1.msra.mxu0 0.0
    %1141 = vmatprep.subr.mxu0 0.0
    %1142 = vmatpush1.msra.mxu0 0.0
    %1143 = vmatprep.subr.mxu0 0.0
    %1144 = vmatpush1.msra.mxu0 0.0
    %1145 = vmatprep.subr.mxu0 0.0
    %1146 = vmatpush1.msra.mxu0 0.0
    %1147 = vmatprep.subr.mxu0 0.0
    %1148 = vmatpush1.msra.mxu0 0.0
    %1149 = vmatprep.subr.mxu0 0.0
    %1150 = vmatpush1.msra.mxu0 0.0
    %1151 = vmatprep.subr.mxu0 0.0
    %1152 = vmatpush1.msra.mxu0 0.0
    %1153 = vmatprep.subr.mxu0 0.0
    %1154 = vmatpush1.msra.mxu0 0.0
    %1155 = vmatprep.subr.mxu0 0.0
    %1156 = vmatpush1.msra.mxu0 0.0
    %1157 = vmatprep.subr.mxu0 0.0
    %1158 = vmatpush1.msra.mxu0 0.0
    %1159 = vmatprep.subr.mxu0 0.0
    %1160 = vmatpush1.msra.mxu0 0.0
    %1161 = vmatprep.subr.mxu0 0.0
    %1162 = vmatpush1.msra.mxu0 %v1129
    %1163 = vmatprep.subr.mxu0 0.0
    %1164 = vmatpush2.msra.mxu0 0.0
    %1165 = vmatprep.subr.mxu0 0.0
    %1166 = vmatpush2.msra.mxu0 0.0
    %1167 = vmatprep.subr.mxu0 0.0
    %1168 = vmatpush2.msra.mxu0 0.0
    %1169 = vmatprep.subr.mxu0 0.0
    %1170 = vmatpush2.msra.mxu0 0.0
    %1171 = vmatprep.subr.mxu0 0.0
    %1172 = vmatpush2.msra.mxu0 0.0
    %1173 = vmatprep.subr.mxu0 0.0
    %1174 = vmatpush2.msra.mxu0 0.0
    %1175 = vmatprep.subr.mxu0 0.0
    %1176 = vmatpush2.msra.mxu0 0.0
    %1177 = vmatprep.subr.mxu0 0.0
    %1178 = vmatpush2.msra.mxu0 0.0
    %1179 = vmatprep.subr.mxu0 0.0
    %1180 = vmatpush2.msra.mxu0 0.0
    %1181 = vmatprep.subr.mxu0 0.0
    %1182 = vmatpush2.msra.mxu0 0.0
    %1183 = vmatprep.subr.mxu0 0.0
    %1184 = vmatpush2.msra.mxu0 0.0
    %1185 = vmatprep.subr.mxu0 0.0
    %1186 = vmatpush2.msra.mxu0 0.0
    %1187 = vmatprep.subr.mxu0 0.0
    %1188 = vmatpush2.msra.mxu0 0.0
    %1189 = vmatprep.subr.mxu0 0.0
    %1190 = vmatpush2.msra.mxu0 0.0
    %1191 = vmatprep.subr.mxu0 0.0
    %1192 = vmatpush2.msra.mxu0 0.0
    %1193 = vmatprep.subr.mxu0 0.0
    %1194 = vmatpush2.msra.mxu0 0.0
    %1195 = vmatprep.mubr.f32.mxu0 0.0
    %1196 = vmatmul.mubr.f32.gmra.mxu0 %v1127
    %v1197 = vpop.f32.mrf.mxu0
    %v1198 = vadd.f32 0.0, %v1197
    %v1199 = vpop.f32.mrf.mxu0
    %1200 = vdwg.mxu0
    %1201 = vrot.lane.b32.xlu0 %v1123, 126
    %v1202 = vpop.permute.xlu0 %1201
    %v1204 = vadd.f32 %v1123, %v1202
    %1205 = vrot.lane.b32.xlu0 %v168, 104
    %v1206 = vpop.permute.xlu0 %1205
    %1207 = vrot.lane.b32.xlu0 %v168, 72
    %v1208 = vpop.permute.xlu0 %1207
    %v1209 = vsel %vm174, %v1206, 0
    %v1211 = vsel %vm174, %v1208, 0
    %1213 = vmatprep.subr.mxu0 0.0
    %1214 = vmatpush1.xpose.msra.mxu0 0.0
    %1215 = vmatprep.subr.mxu0 0.0
    %1216 = vmatpush1.xpose.msra.mxu0 0.0
    %1217 = vmatprep.subr.mxu0 0.0
    %1218 = vmatpush1.xpose.msra.mxu0 0.0
    %1219 = vmatprep.subr.mxu0 0.0
    %1220 = vmatpush1.xpose.msra.mxu0 0.0
    %1221 = vmatprep.subr.mxu0 0.0
    %1222 = vmatpush1.xpose.msra.mxu0 0.0
    %1223 = vmatprep.subr.mxu0 0.0
    %1224 = vmatpush1.xpose.msra.mxu0 0.0
    %1225 = vmatprep.subr.mxu0 0.0
    %1226 = vmatpush1.xpose.msra.mxu0 0.0
    %1227 = vmatprep.subr.mxu0 0.0
    %1228 = vmatpush1.xpose.msra.mxu0 0.0
    %1229 = vmatprep.subr.mxu0 0.0
    %1230 = vmatpush1.xpose.msra.mxu0 0.0
    %1231 = vmatprep.subr.mxu0 0.0
    %1232 = vmatpush1.xpose.msra.mxu0 0.0
    %1233 = vmatprep.subr.mxu0 0.0
    %1234 = vmatpush1.xpose.msra.mxu0 0.0
    %1235 = vmatprep.subr.mxu0 0.0
    %1236 = vmatpush1.xpose.msra.mxu0 0.0
    %1237 = vmatprep.subr.mxu0 0.0
    %1238 = vmatpush1.xpose.msra.mxu0 0.0
    %1239 = vmatprep.subr.mxu0 0.0
    %1240 = vmatpush1.xpose.msra.mxu0 0.0
    %1241 = vmatprep.subr.mxu0 0.0
    %1242 = vmatpush1.xpose.msra.mxu0 0.0
    %1243 = vmatprep.subr.mxu0 0.0
    %1244 = vmatpush1.xpose.msra.mxu0 %v1211
    %1245 = vmatprep.subr.mxu0 0.0
    %1246 = vmatpush2.xpose.msra.mxu0 0.0
    %1247 = vmatprep.subr.mxu0 0.0
    %1248 = vmatpush2.xpose.msra.mxu0 0.0
    %1249 = vmatprep.subr.mxu0 0.0
    %1250 = vmatpush2.xpose.msra.mxu0 0.0
    %1251 = vmatprep.subr.mxu0 0.0
    %1252 = vmatpush2.xpose.msra.mxu0 0.0
    %1253 = vmatprep.subr.mxu0 0.0
    %1254 = vmatpush2.xpose.msra.mxu0 0.0
    %1255 = vmatprep.subr.mxu0 0.0
    %1256 = vmatpush2.xpose.msra.mxu0 0.0
    %1257 = vmatprep.subr.mxu0 0.0
    %1258 = vmatpush2.xpose.msra.mxu0 0.0
    %1259 = vmatprep.subr.mxu0 0.0
    %1260 = vmatpush2.xpose.msra.mxu0 0.0
    %1261 = vmatprep.subr.mxu0 0.0
    %1262 = vmatpush2.xpose.msra.mxu0 0.0
    %1263 = vmatprep.subr.mxu0 0.0
    %1264 = vmatpush2.xpose.msra.mxu0 0.0
    %1265 = vmatprep.subr.mxu0 0.0
    %1266 = vmatpush2.xpose.msra.mxu0 0.0
    %1267 = vmatprep.subr.mxu0 0.0
    %1268 = vmatpush2.xpose.msra.mxu0 0.0
    %1269 = vmatprep.subr.mxu0 0.0
    %1270 = vmatpush2.xpose.msra.mxu0 0.0
    %1271 = vmatprep.subr.mxu0 0.0
    %1272 = vmatpush2.xpose.msra.mxu0 0.0
    %1273 = vmatprep.subr.mxu0 0.0
    %1274 = vmatpush2.xpose.msra.mxu0 0.0
    %1275 = vmatprep.subr.mxu0 0.0
    %1276 = vmatpush2.xpose.msra.mxu0 0.0
    %1277 = vmatprep.mubr.f32.mxu0 0.0
    %1278 = vmatmul.mubr.f32.gmra.mxu0 %v1209
    %v1279 = vpop.f32.mrf.mxu0
    %v1280 = vadd.f32 0.0, %v1279
    %v1281 = vpop.f32.mrf.mxu0
    %1282 = vdwg.mxu0
    %v1283 = vmul.f32 %v1280, 0.5
    %v1284 = vadd.f32 %v1283, %v66
    %v1285 = vsel %vm251, %v1284, -inf
    %1286 = vmax.xlane.f32.xlu0 %v1285
    %v1287 = vpop.xlane.xlu0 %1286
    %v1288 = vsub.f32 %v1284, %v1287
    %v1289 = vmul.f32 %v1288, 1.442695
    %v1290 = vpow.pop %v1289
    %v1291 = vsel %vm251, %v1290, 0.0
    %1292 = vadd.xlane.f32.xlu0 %v1291
    %v1293 = vpop.xlane.xlu0 %1292
    %v1294 = vrcp.pop %v1293
    %v1295 = vmul.f32 %v1290, %v1294
    %1296 = vrot.lane.b32.xlu0 %v168, 40
    %v1297 = vpop.permute.xlu0 %1296
    %v1299 = vsel %vm174, %v1295, 0
    %v1301 = vsel %vm268, %v1297, 0
    %1303 = vmatprep.subr.mxu0 0.0
    %1304 = vmatpush1.msra.mxu0 0.0
    %1305 = vmatprep.subr.mxu0 0.0
    %1306 = vmatpush1.msra.mxu0 0.0
    %1307 = vmatprep.subr.mxu0 0.0
    %1308 = vmatpush1.msra.mxu0 0.0
    %1309 = vmatprep.subr.mxu0 0.0
    %1310 = vmatpush1.msra.mxu0 0.0
    %1311 = vmatprep.subr.mxu0 0.0
    %1312 = vmatpush1.msra.mxu0 0.0
    %1313 = vmatprep.subr.mxu0 0.0
    %1314 = vmatpush1.msra.mxu0 0.0
    %1315 = vmatprep.subr.mxu0 0.0
    %1316 = vmatpush1.msra.mxu0 0.0
    %1317 = vmatprep.subr.mxu0 0.0
    %1318 = vmatpush1.msra.mxu0 0.0
    %1319 = vmatprep.subr.mxu0 0.0
    %1320 = vmatpush1.msra.mxu0 0.0
    %1321 = vmatprep.subr.mxu0 0.0
    %1322 = vmatpush1.msra.mxu0 0.0
    %1323 = vmatprep.subr.mxu0 0.0
    %1324 = vmatpush1.msra.mxu0 0.0
    %1325 = vmatprep.subr.mxu0 0.0
    %1326 = vmatpush1.msra.mxu0 0.0
    %1327 = vmatprep.subr.mxu0 0.0
    %1328 = vmatpush1.msra.mxu0 0.0
    %1329 = vmatprep.subr.mxu0 0.0
    %1330 = vmatpush1.msra.mxu0 0.0
    %1331 = vmatprep.subr.mxu0 0.0
    %1332 = vmatpush1.msra.mxu0 0.0
    %1333 = vmatprep.subr.mxu0 0.0
    %1334 = vmatpush1.msra.mxu0 %v1301
    %1335 = vmatprep.subr.mxu0 0.0
    %1336 = vmatpush2.msra.mxu0 0.0
    %1337 = vmatprep.subr.mxu0 0.0
    %1338 = vmatpush2.msra.mxu0 0.0
    %1339 = vmatprep.subr.mxu0 0.0
    %1340 = vmatpush2.msra.mxu0 0.0
    %1341 = vmatprep.subr.mxu0 0.0
    %1342 = vmatpush2.msra.mxu0 0.0
    %1343 = vmatprep.subr.mxu0 0.0
    %1344 = vmatpush2.msra.mxu0 0.0
    %1345 = vmatprep.subr.mxu0 0.0
    %1346 = vmatpush2.msra.mxu0 0.0
    %1347 = vmatprep.subr.mxu0 0.0
    %1348 = vmatpush2.msra.mxu0 0.0
    %1349 = vmatprep.subr.mxu0 0.0
    %1350 = vmatpush2.msra.mxu0 0.0
    %1351 = vmatprep.subr.mxu0 0.0
    %1352 = vmatpush2.msra.mxu0 0.0
    %1353 = vmatprep.subr.mxu0 0.0
    %1354 = vmatpush2.msra.mxu0 0.0
    %1355 = vmatprep.subr.mxu0 0.0
    %1356 = vmatpush2.msra.mxu0 0.0
    %1357 = vmatprep.subr.mxu0 0.0
    %1358 = vmatpush2.msra.mxu0 0.0
    %1359 = vmatprep.subr.mxu0 0.0
    %1360 = vmatpush2.msra.mxu0 0.0
    %1361 = vmatprep.subr.mxu0 0.0
    %1362 = vmatpush2.msra.mxu0 0.0
    %1363 = vmatprep.subr.mxu0 0.0
    %1364 = vmatpush2.msra.mxu0 0.0
    %1365 = vmatprep.subr.mxu0 0.0
    %1366 = vmatpush2.msra.mxu0 0.0
    %1367 = vmatprep.mubr.f32.mxu0 0.0
    %1368 = vmatmul.mubr.f32.gmra.mxu0 %v1299
    %v1369 = vpop.f32.mrf.mxu0
    %v1370 = vadd.f32 0.0, %v1369
    %v1371 = vpop.f32.mrf.mxu0
    %1372 = vdwg.mxu0
    %1373 = vrot.lane.b32.xlu0 %v1295, 126
    %v1374 = vpop.permute.xlu0 %1373
    %v1376 = vadd.f32 %v1295, %v1374
    %1377 = vrot.lane.b32.xlu0 %v168, 100
    %v1378 = vpop.permute.xlu0 %1377
    %1379 = vrot.lane.b32.xlu0 %v168, 68
    %v1380 = vpop.permute.xlu0 %1379
    %v1381 = vsel %vm174, %v1378, 0
    %v1383 = vsel %vm174, %v1380, 0
    %1385 = vmatprep.subr.mxu0 0.0
    %1386 = vmatpush1.xpose.msra.mxu0 0.0
    %1387 = vmatprep.subr.mxu0 0.0
    %1388 = vmatpush1.xpose.msra.mxu0 0.0
    %1389 = vmatprep.subr.mxu0 0.0
    %1390 = vmatpush1.xpose.msra.mxu0 0.0
    %1391 = vmatprep.subr.mxu0 0.0
    %1392 = vmatpush1.xpose.msra.mxu0 0.0
    %1393 = vmatprep.subr.mxu0 0.0
    %1394 = vmatpush1.xpose.msra.mxu0 0.0
    %1395 = vmatprep.subr.mxu0 0.0
    %1396 = vmatpush1.xpose.msra.mxu0 0.0
    %1397 = vmatprep.subr.mxu0 0.0
    %1398 = vmatpush1.xpose.msra.mxu0 0.0
    %1399 = vmatprep.subr.mxu0 0.0
    %1400 = vmatpush1.xpose.msra.mxu0 0.0
    %1401 = vmatprep.subr.mxu0 0.0
    %1402 = vmatpush1.xpose.msra.mxu0 0.0
    %1403 = vmatprep.subr.mxu0 0.0
    %1404 = vmatpush1.xpose.msra.mxu0 0.0
    %1405 = vmatprep.subr.mxu0 0.0
    %1406 = vmatpush1.xpose.msra.mxu0 0.0
    %1407 = vmatprep.subr.mxu0 0.0
    %1408 = vmatpush1.xpose.msra.mxu0 0.0
    %1409 = vmatprep.subr.mxu0 0.0
    %1410 = vmatpush1.xpose.msra.mxu0 0.0
    %1411 = vmatprep.subr.mxu0 0.0
    %1412 = vmatpush1.xpose.msra.mxu0 0.0
    %1413 = vmatprep.subr.mxu0 0.0
    %1414 = vmatpush1.xpose.msra.mxu0 0.0
    %1415 = vmatprep.subr.mxu0 0.0
    %1416 = vmatpush1.xpose.msra.mxu0 %v1383
    %1417 = vmatprep.subr.mxu0 0.0
    %1418 = vmatpush2.xpose.msra.mxu0 0.0
    %1419 = vmatprep.subr.mxu0 0.0
    %1420 = vmatpush2.xpose.msra.mxu0 0.0
    %1421 = vmatprep.subr.mxu0 0.0
    %1422 = vmatpush2.xpose.msra.mxu0 0.0
    %1423 = vmatprep.subr.mxu0 0.0
    %1424 = vmatpush2.xpose.msra.mxu0 0.0
    %1425 = vmatprep.subr.mxu0 0.0
    %1426 = vmatpush2.xpose.msra.mxu0 0.0
    %1427 = vmatprep.subr.mxu0 0.0
    %1428 = vmatpush2.xpose.msra.mxu0 0.0
    %1429 = vmatprep.subr.mxu0 0.0
    %1430 = vmatpush2.xpose.msra.mxu0 0.0
    %1431 = vmatprep.subr.mxu0 0.0
    %1432 = vmatpush2.xpose.msra.mxu0 0.0
    %1433 = vmatprep.subr.mxu0 0.0
    %1434 = vmatpush2.xpose.msra.mxu0 0.0
    %1435 = vmatprep.subr.mxu0 0.0
    %1436 = vmatpush2.xpose.msra.mxu0 0.0
    %1437 = vmatprep.subr.mxu0 0.0
    %1438 = vmatpush2.xpose.msra.mxu0 0.0
    %1439 = vmatprep.subr.mxu0 0.0
    %1440 = vmatpush2.xpose.msra.mxu0 0.0
    %1441 = vmatprep.subr.mxu0 0.0
    %1442 = vmatpush2.xpose.msra.mxu0 0.0
    %1443 = vmatprep.subr.mxu0 0.0
    %1444 = vmatpush2.xpose.msra.mxu0 0.0
    %1445 = vmatprep.subr.mxu0 0.0
    %1446 = vmatpush2.xpose.msra.mxu0 0.0
    %1447 = vmatprep.subr.mxu0 0.0
    %1448 = vmatpush2.xpose.msra.mxu0 0.0
    %1449 = vmatprep.mubr.f32.mxu0 0.0
    %1450 = vmatmul.mubr.f32.gmra.mxu0 %v1381
    %v1451 = vpop.f32.mrf.mxu0
    %v1452 = vadd.f32 0.0, %v1451
    %v1453 = vpop.f32.mrf.mxu0
    %1454 = vdwg.mxu0
    %v1455 = vmul.f32 %v1452, 0.5
    %v1456 = vadd.f32 %v1455, %v66
    %v1457 = vsel %vm251, %v1456, -inf
    %1458 = vmax.xlane.f32.xlu0 %v1457
    %v1459 = vpop.xlane.xlu0 %1458
    %v1460 = vsub.f32 %v1456, %v1459
    %v1461 = vmul.f32 %v1460, 1.442695
    %v1462 = vpow.pop %v1461
    %v1463 = vsel %vm251, %v1462, 0.0
    %1464 = vadd.xlane.f32.xlu0 %v1463
    %v1465 = vpop.xlane.xlu0 %1464
    %v1466 = vrcp.pop %v1465
    %v1467 = vmul.f32 %v1462, %v1466
    %1468 = vrot.lane.b32.xlu0 %v168, 36
    %v1469 = vpop.permute.xlu0 %1468
    %v1471 = vsel %vm174, %v1467, 0
    %v1473 = vsel %vm268, %v1469, 0
    %1475 = vmatprep.subr.mxu0 0.0
    %1476 = vmatpush1.msra.mxu0 0.0
    %1477 = vmatprep.subr.mxu0 0.0
    %1478 = vmatpush1.msra.mxu0 0.0
    %1479 = vmatprep.subr.mxu0 0.0
    %1480 = vmatpush1.msra.mxu0 0.0
    %1481 = vmatprep.subr.mxu0 0.0
    %1482 = vmatpush1.msra.mxu0 0.0
    %1483 = vmatprep.subr.mxu0 0.0
    %1484 = vmatpush1.msra.mxu0 0.0
    %1485 = vmatprep.subr.mxu0 0.0
    %1486 = vmatpush1.msra.mxu0 0.0
    %1487 = vmatprep.subr.mxu0 0.0
    %1488 = vmatpush1.msra.mxu0 0.0
    %1489 = vmatprep.subr.mxu0 0.0
    %1490 = vmatpush1.msra.mxu0 0.0
    %1491 = vmatprep.subr.mxu0 0.0
    %1492 = vmatpush1.msra.mxu0 0.0
    %1493 = vmatprep.subr.mxu0 0.0
    %1494 = vmatpush1.msra.mxu0 0.0
    %1495 = vmatprep.subr.mxu0 0.0
    %1496 = vmatpush1.msra.mxu0 0.0
    %1497 = vmatprep.subr.mxu0 0.0
    %1498 = vmatpush1.msra.mxu0 0.0
    %1499 = vmatprep.subr.mxu0 0.0
    %1500 = vmatpush1.msra.mxu0 0.0
    %1501 = vmatprep.subr.mxu0 0.0
    %1502 = vmatpush1.msra.mxu0 0.0
    %1503 = vmatprep.subr.mxu0 0.0
    %1504 = vmatpush1.msra.mxu0 0.0
    %1505 = vmatprep.subr.mxu0 0.0
    %1506 = vmatpush1.msra.mxu0 %v1473
    %1507 = vmatprep.subr.mxu0 0.0
    %1508 = vmatpush2.msra.mxu0 0.0
    %1509 = vmatprep.subr.mxu0 0.0
    %1510 = vmatpush2.msra.mxu0 0.0
    %1511 = vmatprep.subr.mxu0 0.0
    %1512 = vmatpush2.msra.mxu0 0.0
    %1513 = vmatprep.subr.mxu0 0.0
    %1514 = vmatpush2.msra.mxu0 0.0
    %1515 = vmatprep.subr.mxu0 0.0
    %1516 = vmatpush2.msra.mxu0 0.0
    %1517 = vmatprep.subr.mxu0 0.0
    %1518 = vmatpush2.msra.mxu0 0.0
    %1519 = vmatprep.subr.mxu0 0.0
    %1520 = vmatpush2.msra.mxu0 0.0
    %1521 = vmatprep.subr.mxu0 0.0
    %1522 = vmatpush2.msra.mxu0 0.0
    %1523 = vmatprep.subr.mxu0 0.0
    %1524 = vmatpush2.msra.mxu0 0.0
    %1525 = vmatprep.subr.mxu0 0.0
    %1526 = vmatpush2.msra.mxu0 0.0
    %1527 = vmatprep.subr.mxu0 0.0
    %1528 = vmatpush2.msra.mxu0 0.0
    %1529 = vmatprep.subr.mxu0 0.0
    %1530 = vmatpush2.msra.mxu0 0.0
    %1531 = vmatprep.subr.mxu0 0.0
    %1532 = vmatpush2.msra.mxu0 0.0
    %1533 = vmatprep.subr.mxu0 0.0
    %1534 = vmatpush2.msra.mxu0 0.0
    %1535 = vmatprep.subr.mxu0 0.0
    %1536 = vmatpush2.msra.mxu0 0.0
    %1537 = vmatprep.subr.mxu0 0.0
    %1538 = vmatpush2.msra.mxu0 0.0
    %1539 = vmatprep.mubr.f32.mxu0 0.0
    %1540 = vmatmul.mubr.f32.gmra.mxu0 %v1471
    %v1541 = vpop.f32.mrf.mxu0
    %v1542 = vadd.f32 0.0, %v1541
    %v1543 = vpop.f32.mrf.mxu0
    %1544 = vdwg.mxu0
    %1545 = vrot.lane.b32.xlu0 %v1467, 126
    %v1546 = vpop.permute.xlu0 %1545
    %v1548 = vadd.f32 %v1467, %v1546
    %1550 = vrot.lane.b32.xlu0 %v510, 4
    %v1551 = vpop.permute.xlu0 %1550
    %1554 = vrot.lane.b32.xlu0 %v682, 8
    %v1555 = vpop.permute.xlu0 %1554
    %1558 = vrot.lane.b32.xlu0 %v854, 12
    %v1559 = vpop.permute.xlu0 %1558
    %1562 = vrot.lane.b32.xlu0 %v1026, 16
    %v1563 = vpop.permute.xlu0 %1562
    %1566 = vrot.lane.b32.xlu0 %v1198, 20
    %v1567 = vpop.permute.xlu0 %1566
    %1570 = vrot.lane.b32.xlu0 %v1370, 24
    %v1571 = vpop.permute.xlu0 %1570
    %1574 = vrot.lane.b32.xlu0 %v1542, 28
    %v1575 = vpop.permute.xlu0 %1574
    %v1577 = vsel %vm174, %v338, %v1551
    %vm1578 = vcmask 64512
    %v1579 = vsel %vm1578, %v1577, %v1555
    %vm1580 = vcmask 97280
    %v1581 = vsel %vm1580, %v1579, %v1559
    %vm1582 = vcmask 130048
    %v1583 = vsel %vm1582, %v1581, %v1563
    %vm1584 = vcmask 162816
    %v1585 = vsel %vm1584, %v1583, %v1567
    %vm1586 = vcmask 195584
    %v1587 = vsel %vm1586, %v1585, %v1571
    %vm1588 = vcmask 228352
    %v1589 = vsel %vm1588, %v1587, %v1575
    %1591 = vrot.lane.b32.xlu0 %v516, 2
    %v1592 = vpop.permute.xlu0 %1591
    %1595 = vrot.lane.b32.xlu0 %v688, 4
    %v1596 = vpop.permute.xlu0 %1595
    %1599 = vrot.lane.b32.xlu0 %v860, 6
    %v1600 = vpop.permute.xlu0 %1599
    %1603 = vrot.lane.b32.xlu0 %v1032, 8
    %v1604 = vpop.permute.xlu0 %1603
    %1607 = vrot.lane.b32.xlu0 %v1204, 10
    %v1608 = vpop.permute.xlu0 %1607
    %1611 = vrot.lane.b32.xlu0 %v1376, 12
    %v1612 = vpop.permute.xlu0 %1611
    %1615 = vrot.lane.b32.xlu0 %v1548, 14
    %v1616 = vpop.permute.xlu0 %1615
    %vm1618 = vcmask 15360
    %v1619 = vsel %vm1618, %v344, %v1592
    %v1620 = vsel %vm174, %v1619, %v1596
    %vm1621 = vcmask 48128
    %v1622 = vsel %vm1621, %v1620, %v1600
    %v1623 = vsel %vm1578, %v1622, %v1604
    %vm1624 = vcmask 80896
    %v1625 = vsel %vm1624, %v1623, %v1608
    %v1626 = vsel %vm1580, %v1625, %v1612
    %vm1627 = vcmask 113664
    %v1628 = vsel %vm1627, %v1626, %v1616
    %v1630 = vsel %vm97, %v1589, 0
    %1632 = vmatprep.subr.mxu0 0.0
    %1633 = vmatpush1.msra.mxu0 0.0
    %1634 = vmatprep.subr.mxu0 0.0
    %1635 = vmatpush1.msra.mxu0 0.0
    %1636 = vmatprep.subr.mxu0 0.0
    %1637 = vmatpush1.msra.mxu0 0.0
    %1638 = vmatprep.subr.mxu0 0.0
    %1639 = vmatpush1.msra.mxu0 0.0
    %1640 = vmatprep.subr.mxu0 0.0
    %1641 = vmatpush1.msra.mxu0 0.0
    %1642 = vmatprep.subr.mxu0 0.0
    %1643 = vmatpush1.msra.mxu0 0.0
    %1644 = vmatprep.subr.mxu0 0.0
    %1645 = vmatpush1.msra.mxu0 0.0
    %1646 = vmatprep.subr.mxu0 0.0
    %1647 = vmatpush1.msra.mxu0 0.0
    %1648 = vmatprep.subr.mxu0 0.0
    %1649 = vmatpush1.msra.mxu0 0.0
    %1650 = vmatprep.subr.mxu0 0.0
    %1651 = vmatpush1.msra.mxu0 0.0
    %1652 = vmatprep.subr.mxu0 0.0
    %1653 = vmatpush1.msra.mxu0 0.0
    %1654 = vmatprep.subr.mxu0 0.0
    %1655 = vmatpush1.msra.mxu0 0.0
    %1656 = vmatprep.subr.mxu0 0.0
    %1657 = vmatpush1.msra.mxu0 %v75
    %1658 = vmatprep.subr.mxu0 0.0
    %1659 = vmatpush1.msra.mxu0 %v74
    %1660 = vmatprep.subr.mxu0 0.0
    %1661 = vmatpush1.msra.mxu0 %v73
    %1662 = vmatprep.subr.mxu0 0.0
    %1663 = vmatpush1.msra.mxu0 %v72
    %1664 = vmatprep.subr.mxu0 0.0
    %1665 = vmatpush2.msra.mxu0 0.0
    %1666 = vmatprep.subr.mxu0 0.0
    %1667 = vmatpush2.msra.mxu0 0.0
    %1668 = vmatprep.subr.mxu0 0.0
    %1669 = vmatpush2.msra.mxu0 0.0
    %1670 = vmatprep.subr.mxu0 0.0
    %1671 = vmatpush2.msra.mxu0 0.0
    %1672 = vmatprep.subr.mxu0 0.0
    %1673 = vmatpush2.msra.mxu0 0.0
    %1674 = vmatprep.subr.mxu0 0.0
    %1675 = vmatpush2.msra.mxu0 0.0
    %1676 = vmatprep.subr.mxu0 0.0
    %1677 = vmatpush2.msra.mxu0 0.0
    %1678 = vmatprep.subr.mxu0 0.0
    %1679 = vmatpush2.msra.mxu0 0.0
    %1680 = vmatprep.subr.mxu0 0.0
    %1681 = vmatpush2.msra.mxu0 0.0
    %1682 = vmatprep.subr.mxu0 0.0
    %1683 = vmatpush2.msra.mxu0 0.0
    %1684 = vmatprep.subr.mxu0 0.0
    %1685 = vmatpush2.msra.mxu0 0.0
    %1686 = vmatprep.subr.mxu0 0.0
    %1687 = vmatpush2.msra.mxu0 0.0
    %1688 = vmatprep.subr.mxu0 0.0
    %1689 = vmatpush2.msra.mxu0 0.0
    %1690 = vmatprep.subr.mxu0 0.0
    %1691 = vmatpush2.msra.mxu0 0.0
    %1692 = vmatprep.subr.mxu0 0.0
    %1693 = vmatpush2.msra.mxu0 0.0
    %1694 = vmatprep.subr.mxu0 0.0
    %1695 = vmatpush2.msra.mxu0 0.0
    %1696 = vmatprep.mubr.f32.mxu0 0.0
    %1697 = vmatmul.mubr.f32.gmra.mxu0 %v1630
    %v1698 = vpop.f32.mrf.mxu0
    %v1699 = vadd.f32 0.0, %v1698
    %v1700 = vpop.f32.mrf.mxu0
    %1701 = vdwg.mxu0
    %v1702 = vadd.f32 %v65, %v1699
    %v1704 = vlaneseq
    %v1705 = vshrl.u32 %v1704, 7
    %v1706 = vsub.s32 0, %v1705
    %v1707 = vrot.slane %v76, %v1706
    %v1709 = vadd.f32 %v1702, %v1707
    %vm1710 = vcmask 257024
    %v1711 = vsel %vm1710, %v1709, 0.0
    %1712 = vadd.xlane.f32.xlu0 %v1711
    %v1713 = vpop.xlane.xlu0 %1712
    %v1714 = vrcp.pop 32.0
    %v1715 = vmul.f32 %v1713, %v1714
    %v1716 = vsub.f32 %v1709, %v1715
    %v1717 = vmul.f32 %v1716, %v1716
    %v1718 = vsel %vm1710, %v1717, 0.0
    %1719 = vadd.xlane.f32.xlu0 %v1718
    %v1720 = vpop.xlane.xlu0 %1719
    %v1721 = vmul.f32 %v1720, %v1714
    %v1722 = vadd.f32 %v1721, 1e-05
    %v1723 = vrsqrt.pop %v1722
    %v1724 = vmul.f32 %v1716, %v1723
    %v1726 = vlaneseq
    %v1727 = vshrl.u32 %v1726, 7
    %v1728 = vsub.s32 0, %v1727
    %v1729 = vrot.slane %v87, %v1728
    %v1731 = vmul.f32 %v1724, %v1729
    %v1733 = vlaneseq
    %v1734 = vshrl.u32 %v1733, 7
    %v1735 = vsub.s32 0, %v1734
    %v1736 = vrot.slane %v88, %v1735
    %v1738 = vadd.f32 %v1731, %v1736
    %v1740 = vlaneseq
    %v1741 = vshrl.u32 %v1740, 7
    %v1742 = vsub.s32 0, %v1741
    %v1743 = vrot.slane %v81, %v1742
    %v1746 = vsel %vm97, %v1738, 0
    %1748 = vmatprep.subr.mxu0 0.0
    %1749 = vmatpush1.msra.mxu0 0.0
    %1750 = vmatprep.subr.mxu0 0.0
    %1751 = vmatpush1.msra.mxu0 0.0
    %1752 = vmatprep.subr.mxu0 0.0
    %1753 = vmatpush1.msra.mxu0 0.0
    %1754 = vmatprep.subr.mxu0 0.0
    %1755 = vmatpush1.msra.mxu0 0.0
    %1756 = vmatprep.subr.mxu0 0.0
    %1757 = vmatpush1.msra.mxu0 0.0
    %1758 = vmatprep.subr.mxu0 0.0
    %1759 = vmatpush1.msra.mxu0 0.0
    %1760 = vmatprep.subr.mxu0 0.0
    %1761 = vmatpush1.msra.mxu0 0.0
    %1762 = vmatprep.subr.mxu0 0.0
    %1763 = vmatpush1.msra.mxu0 0.0
    %1764 = vmatprep.subr.mxu0 0.0
    %1765 = vmatpush1.msra.mxu0 0.0
    %1766 = vmatprep.subr.mxu0 0.0
    %1767 = vmatpush1.msra.mxu0 0.0
    %1768 = vmatprep.subr.mxu0 0.0
    %1769 = vmatpush1.msra.mxu0 0.0
    %1770 = vmatprep.subr.mxu0 0.0
    %1771 = vmatpush1.msra.mxu0 0.0
    %1772 = vmatprep.subr.mxu0 0.0
    %1773 = vmatpush1.msra.mxu0 %v80
    %1774 = vmatprep.subr.mxu0 0.0
    %1775 = vmatpush1.msra.mxu0 %v79
    %1776 = vmatprep.subr.mxu0 0.0
    %1777 = vmatpush1.msra.mxu0 %v78
    %1778 = vmatprep.subr.mxu0 0.0
    %1779 = vmatpush1.msra.mxu0 %v77
    %1780 = vmatprep.subr.mxu0 0.0
    %1781 = vmatpush2.msra.mxu0 0.0
    %1782 = vmatprep.subr.mxu0 0.0
    %1783 = vmatpush2.msra.mxu0 0.0
    %1784 = vmatprep.subr.mxu0 0.0
    %1785 = vmatpush2.msra.mxu0 0.0
    %1786 = vmatprep.subr.mxu0 0.0
    %1787 = vmatpush2.msra.mxu0 0.0
    %1788 = vmatprep.subr.mxu0 0.0
    %1789 = vmatpush2.msra.mxu0 0.0
    %1790 = vmatprep.subr.mxu0 0.0
    %1791 = vmatpush2.msra.mxu0 0.0
    %1792 = vmatprep.subr.mxu0 0.0
    %1793 = vmatpush2.msra.mxu0 0.0
    %1794 = vmatprep.subr.mxu0 0.0
    %1795 = vmatpush2.msra.mxu0 0.0
    %1796 = vmatprep.subr.mxu0 0.0
    %1797 = vmatpush2.msra.mxu0 0.0
    %1798 = vmatprep.subr.mxu0 0.0
    %1799 = vmatpush2.msra.mxu0 0.0
    %1800 = vmatprep.subr.mxu0 0.0
    %1801 = vmatpush2.msra.mxu0 0.0
    %1802 = vmatprep.subr.mxu0 0.0
    %1803 = vmatpush2.msra.mxu0 0.0
    %1804 = vmatprep.subr.mxu0 0.0
    %1805 = vmatpush2.msra.mxu0 0.0
    %1806 = vmatprep.subr.mxu0 0.0
    %1807 = vmatpush2.msra.mxu0 0.0
    %1808 = vmatprep.subr.mxu0 0.0
    %1809 = vmatpush2.msra.mxu0 0.0
    %1810 = vmatprep.subr.mxu0 0.0
    %1811 = vmatpush2.msra.mxu0 0.0
    %1812 = vmatprep.mubr.f32.mxu0 0.0
    %1813 = vmatmul.mubr.f32.gmra.mxu0 %v1746
    %v1814 = vpop.f32.mrf.mxu0
    %v1815 = vadd.f32 %v1743, %v1814
    %v1816 = vpop.f32.mrf.mxu0
    %1817 = vdwg.mxu0
    %v1818 = vmul.f32 %v1815, 0.5
    %v1819 = vmul.f32 %v1815, 0.70710677
    %v1820 = vand.u32 2147483647, %v1819
    %v1821 = vmul.f32 %v1820, 0.3275911
    %v1822 = vadd.f32 %v1821, 1.0
    %v1823 = vrcp.pop %v1822
    %v1824 = vmul.f32 1.0, %v1823
    %v1825 = vmul.f32 %v1824, 1.0614054
    %v1826 = vsub.f32 %v1825, 1.4531521
    %v1827 = vmul.f32 %v1826, %v1824
    %v1828 = vadd.f32 %v1827, 1.4214138
    %v1829 = vmul.f32 %v1828, %v1824
    %v1830 = vsub.f32 %v1829, 0.28449672
    %v1831 = vmul.f32 %v1830, %v1824
    %v1832 = vadd.f32 %v1831, 0.2548296
    %v1833 = vmul.f32 %v1832, %v1824
    %v1834 = vsub.f32 0.0, %v1819
    %v1835 = vmul.f32 %v1834, %v1819
    %v1836 = vmul.f32 %v1835, 1.442695
    %v1837 = vpow.pop %v1836
    %v1838 = vmul.f32 %v1833, %v1837
    %v1839 = vsub.f32 1.0, %v1838
    %vm1840 = vcmp.ge.f32.partialorder %v1819, 0.0
    %v1841 = vsub.f32 0.0, %v1839
    %v1842 = vsel %vm1840, %v1839, %v1841
    %v1843 = vadd.f32 %v1842, 1.0
    %v1844 = vmul.f32 %v1818, %v1843
    %v1846 = vlaneseq
    %v1847 = vshrl.u32 %v1846, 7
    %v1848 = vsub.s32 0, %v1847
    %v1849 = vrot.slane %v86, %v1848
    %v1852 = vsel %vm97, %v1844, 0
    %1854 = vmatprep.subr.mxu0 0.0
    %1855 = vmatpush1.msra.mxu0 0.0
    %1856 = vmatprep.subr.mxu0 0.0
    %1857 = vmatpush1.msra.mxu0 0.0
    %1858 = vmatprep.subr.mxu0 0.0
    %1859 = vmatpush1.msra.mxu0 0.0
    %1860 = vmatprep.subr.mxu0 0.0
    %1861 = vmatpush1.msra.mxu0 0.0
    %1862 = vmatprep.subr.mxu0 0.0
    %1863 = vmatpush1.msra.mxu0 0.0
    %1864 = vmatprep.subr.mxu0 0.0
    %1865 = vmatpush1.msra.mxu0 0.0
    %1866 = vmatprep.subr.mxu0 0.0
    %1867 = vmatpush1.msra.mxu0 0.0
    %1868 = vmatprep.subr.mxu0 0.0
    %1869 = vmatpush1.msra.mxu0 0.0
    %1870 = vmatprep.subr.mxu0 0.0
    %1871 = vmatpush1.msra.mxu0 0.0
    %1872 = vmatprep.subr.mxu0 0.0
    %1873 = vmatpush1.msra.mxu0 0.0
    %1874 = vmatprep.subr.mxu0 0.0
    %1875 = vmatpush1.msra.mxu0 0.0
    %1876 = vmatprep.subr.mxu0 0.0
    %1877 = vmatpush1.msra.mxu0 0.0
    %1878 = vmatprep.subr.mxu0 0.0
    %1879 = vmatpush1.msra.mxu0 %v85
    %1880 = vmatprep.subr.mxu0 0.0
    %1881 = vmatpush1.msra.mxu0 %v84
    %1882 = vmatprep.subr.mxu0 0.0
    %1883 = vmatpush1.msra.mxu0 %v83
    %1884 = vmatprep.subr.mxu0 0.0
    %1885 = vmatpush1.msra.mxu0 %v82
    %1886 = vmatprep.subr.mxu0 0.0
    %1887 = vmatpush2.msra.mxu0 0.0
    %1888 = vmatprep.subr.mxu0 0.0
    %1889 = vmatpush2.msra.mxu0 0.0
    %1890 = vmatprep.subr.mxu0 0.0
    %1891 = vmatpush2.msra.mxu0 0.0
    %1892 = vmatprep.subr.mxu0 0.0
    %1893 = vmatpush2.msra.mxu0 0.0
    %1894 = vmatprep.subr.mxu0 0.0
    %1895 = vmatpush2.msra.mxu0 0.0
    %1896 = vmatprep.subr.mxu0 0.0
    %1897 = vmatpush2.msra.mxu0 0.0
    %1898 = vmatprep.subr.mxu0 0.0
    %1899 = vmatpush2.msra.mxu0 0.0
    %1900 = vmatprep.subr.mxu0 0.0
    %1901 = vmatpush2.msra.mxu0 0.0
    %1902 = vmatprep.subr.mxu0 0.0
    %1903 = vmatpush2.msra.mxu0 0.0
    %1904 = vmatprep.subr.mxu0 0.0
    %1905 = vmatpush2.msra.mxu0 0.0
    %1906 = vmatprep.subr.mxu0 0.0
    %1907 = vmatpush2.msra.mxu0 0.0
    %1908 = vmatprep.subr.mxu0 0.0
    %1909 = vmatpush2.msra.mxu0 0.0
    %1910 = vmatprep.subr.mxu0 0.0
    %1911 = vmatpush2.msra.mxu0 0.0
    %1912 = vmatprep.subr.mxu0 0.0
    %1913 = vmatpush2.msra.mxu0 0.0
    %1914 = vmatprep.subr.mxu0 0.0
    %1915 = vmatpush2.msra.mxu0 0.0
    %1916 = vmatprep.subr.mxu0 0.0
    %1917 = vmatpush2.msra.mxu0 0.0
    %1918 = vmatprep.mubr.f32.mxu0 0.0
    %1919 = vmatmul.mubr.f32.gmra.mxu0 %v1852
    %v1920 = vpop.f32.mrf.mxu0
    %v1921 = vadd.f32 %v1849, %v1920
    %v1922 = vpop.f32.mrf.mxu0
    %1923 = vdwg.mxu0
    %v1924 = vadd.f32 %v1738, %v1921
    %v1925 = vsel %vm1710, %v1924, 0.0
    %1926 = vadd.xlane.f32.xlu0 %v1925
    %v1927 = vpop.xlane.xlu0 %1926
    %v1928 = vmul.f32 %v1927, %v1714
    %v1929 = vsub.f32 %v1924, %v1928
    %v1930 = vmul.f32 %v1929, %v1929
    %v1931 = vsel %vm1710, %v1930, 0.0
    %1932 = vadd.xlane.f32.xlu0 %v1931
    %v1933 = vpop.xlane.xlu0 %1932
    %v1934 = vmul.f32 %v1933, %v1714
    %v1935 = vadd.f32 %v1934, 1e-05
    %v1936 = vrsqrt.pop %v1935
    %v1937 = vmul.f32 %v1929, %v1936
    %v1939 = vlaneseq
    %v1940 = vshrl.u32 %v1939, 7
    %v1941 = vsub.s32 0, %v1940
    %v1942 = vrot.slane %v89, %v1941
    %v1944 = vmul.f32 %v1937, %v1942
    %v1946 = vlaneseq
    %v1947 = vshrl.u32 %v1946, 7
    %v1948 = vsub.s32 0, %v1947
    %v1949 = vrot.slane %v90, %v1948
    %v1951 = vadd.f32 %v1944, %v1949
    %vm1952 = vcmask 125952
    %1953 = vst.msk [vmem:[%s20] sm:$0xf] %vm1952, %v1628
    %v1954 = vld [vmem:[%s14] sm:$0x1]
    %v1955 = vld [vmem:[%s15] sm:$0x1]
    %v1956 = vsel %vm1710, %v1951, 0.0
    %1957 = vadd.xlane.f32.xlu0 %v1956
    %v1958 = vpop.xlane.xlu0 %1957
    %v1959 = vmul.f32 %v1958, %v1714
    %v1960 = vsub.f32 %v1951, %v1959
    %v1961 = vmul.f32 %v1960, %v1960
    %v1962 = vsel %vm1710, %v1961, 0.0
    %1963 = vadd.xlane.f32.xlu0 %v1962
    %v1964 = vpop.xlane.xlu0 %1963
    %v1965 = vmul.f32 %v1964, %v1714
    %v1966 = vadd.f32 %v1965, 1e-05
    %v1967 = vrsqrt.pop %v1966
    %v1968 = vmul.f32 %v1960, %v1967
    %v1970 = vlaneseq
    %v1971 = vshrl.u32 %v1970, 7
    %v1972 = vsub.s32 0, %v1971
    %v1973 = vrot.slane %v1954, %v1972
    %v1975 = vmul.f32 %v1968, %v1973
    %v1977 = vlaneseq
    %v1978 = vshrl.u32 %v1977, 7
    %v1979 = vsub.s32 0, %v1978
    %v1980 = vrot.slane %v1955, %v1979
    %v1982 = vadd.f32 %v1975, %v1980
    %v1983 = vld [vmem:[%s18] sm:$0x1]
    %v1984 = vld [vmem:[%s16] sm:$0x3]
    %v1986 = vsel %vm174, %v1984, 0
    %v1989 = vsel %vm268, %v1982, 0
    %1991 = vmatprep.subr.mxu0 0.0
    %1992 = vmatpush1.msra.mxu0 0.0
    %1993 = vmatprep.subr.mxu0 0.0
    %1994 = vmatpush1.msra.mxu0 0.0
    %1995 = vmatprep.subr.mxu0 0.0
    %1996 = vmatpush1.msra.mxu0 0.0
    %1997 = vmatprep.subr.mxu0 0.0
    %1998 = vmatpush1.msra.mxu0 0.0
    %1999 = vmatprep.subr.mxu0 0.0
    %2000 = vmatpush1.msra.mxu0 0.0
    %2001 = vmatprep.subr.mxu0 0.0
    %2002 = vmatpush1.msra.mxu0 0.0
    %2003 = vmatprep.subr.mxu0 0.0
    %2004 = vmatpush1.msra.mxu0 0.0
    %2005 = vmatprep.subr.mxu0 0.0
    %2006 = vmatpush1.msra.mxu0 0.0
    %2007 = vmatprep.subr.mxu0 0.0
    %2008 = vmatpush1.msra.mxu0 0.0
    %2009 = vmatprep.subr.mxu0 0.0
    %2010 = vmatpush1.msra.mxu0 0.0
    %2011 = vmatprep.subr.mxu0 0.0
    %2012 = vmatpush1.msra.mxu0 0.0
    %2013 = vmatprep.subr.mxu0 0.0
    %2014 = vmatpush1.msra.mxu0 0.0
    %2015 = vmatprep.subr.mxu0 0.0
    %2016 = vmatpush1.msra.mxu0 0.0
    %2017 = vmatprep.subr.mxu0 0.0
    %2018 = vmatpush1.msra.mxu0 0.0
    %2019 = vmatprep.subr.mxu0 0.0
    %2020 = vmatpush1.msra.mxu0 0.0
    %2021 = vmatprep.subr.mxu0 0.0
    %2022 = vmatpush1.msra.mxu0 %v1989
    %2023 = vmatprep.subr.mxu0 0.0
    %2024 = vmatpush2.msra.mxu0 0.0
    %2025 = vmatprep.subr.mxu0 0.0
    %2026 = vmatpush2.msra.mxu0 0.0
    %2027 = vmatprep.subr.mxu0 0.0
    %2028 = vmatpush2.msra.mxu0 0.0
    %2029 = vmatprep.subr.mxu0 0.0
    %2030 = vmatpush2.msra.mxu0 0.0
    %2031 = vmatprep.subr.mxu0 0.0
    %2032 = vmatpush2.msra.mxu0 0.0
    %2033 = vmatprep.subr.mxu0 0.0
    %2034 = vmatpush2.msra.mxu0 0.0
    %2035 = vmatprep.subr.mxu0 0.0
    %2036 = vmatpush2.msra.mxu0 0.0
    %2037 = vmatprep.subr.mxu0 0.0
    %2038 = vmatpush2.msra.mxu0 0.0
    %2039 = vmatprep.subr.mxu0 0.0
    %2040 = vmatpush2.msra.mxu0 0.0
    %2041 = vmatprep.subr.mxu0 0.0
    %2042 = vmatpush2.msra.mxu0 0.0
    %2043 = vmatprep.subr.mxu0 0.0
    %2044 = vmatpush2.msra.mxu0 0.0
    %2045 = vmatprep.subr.mxu0 0.0
    %2046 = vmatpush2.msra.mxu0 0.0
    %2047 = vmatprep.subr.mxu0 0.0
    %2048 = vmatpush2.msra.mxu0 0.0
    %2049 = vmatprep.subr.mxu0 0.0
    %2050 = vmatpush2.msra.mxu0 0.0
    %2051 = vmatprep.subr.mxu0 0.0
    %2052 = vmatpush2.msra.mxu0 0.0
    %2053 = vmatprep.subr.mxu0 0.0
    %2054 = vmatpush2.msra.mxu0 0.0
    %2055 = vmatprep.mubr.f32.mxu0 0.0
    %2056 = vmatmul.mubr.f32.gmra.mxu0 %v1986
    %v2057 = vpop.f32.mrf.mxu0
    %v2058 = vadd.f32 0.0, %v2057
    %v2059 = vpop.f32.mrf.mxu0
    %2060 = vdwg.mxu0
    %v2061 = vld [vmem:[%s17] sm:$0xff]
    %v2062 = vld [vmem:[%s17 + $0x8] sm:$0xff]
    %v2063 = vld [vmem:[%s17 + $0x10] sm:$0xff]
    %v2064 = vld [vmem:[%s17 + $0x18] sm:$0xff]
    %v2066 = vsel %vm97, %v2058, 0
    %2068 = vmatprep.subr.mxu0 0.0
    %2069 = vmatpush1.msra.mxu0 0.0
    %2070 = vmatprep.subr.mxu0 0.0
    %2071 = vmatpush1.msra.mxu0 0.0
    %2072 = vmatprep.subr.mxu0 0.0
    %2073 = vmatpush1.msra.mxu0 0.0
    %2074 = vmatprep.subr.mxu0 0.0
    %2075 = vmatpush1.msra.mxu0 0.0
    %2076 = vmatprep.subr.mxu0 0.0
    %2077 = vmatpush1.msra.mxu0 0.0
    %2078 = vmatprep.subr.mxu0 0.0
    %2079 = vmatpush1.msra.mxu0 0.0
    %2080 = vmatprep.subr.mxu0 0.0
    %2081 = vmatpush1.msra.mxu0 0.0
    %2082 = vmatprep.subr.mxu0 0.0
    %2083 = vmatpush1.msra.mxu0 0.0
    %2084 = vmatprep.subr.mxu0 0.0
    %2085 = vmatpush1.msra.mxu0 0.0
    %2086 = vmatprep.subr.mxu0 0.0
    %2087 = vmatpush1.msra.mxu0 0.0
    %2088 = vmatprep.subr.mxu0 0.0
    %2089 = vmatpush1.msra.mxu0 0.0
    %2090 = vmatprep.subr.mxu0 0.0
    %2091 = vmatpush1.msra.mxu0 0.0
    %2092 = vmatprep.subr.mxu0 0.0
    %2093 = vmatpush1.msra.mxu0 %v2064
    %2094 = vmatprep.subr.mxu0 0.0
    %2095 = vmatpush1.msra.mxu0 %v2063
    %2096 = vmatprep.subr.mxu0 0.0
    %2097 = vmatpush1.msra.mxu0 %v2062
    %2098 = vmatprep.subr.mxu0 0.0
    %2099 = vmatpush1.msra.mxu0 %v2061
    %2100 = vmatprep.subr.mxu0 0.0
    %2101 = vmatpush2.msra.mxu0 0.0
    %2102 = vmatprep.subr.mxu0 0.0
    %2103 = vmatpush2.msra.mxu0 0.0
    %2104 = vmatprep.subr.mxu0 0.0
    %2105 = vmatpush2.msra.mxu0 0.0
    %2106 = vmatprep.subr.mxu0 0.0
    %2107 = vmatpush2.msra.mxu0 0.0
    %2108 = vmatprep.subr.mxu0 0.0
    %2109 = vmatpush2.msra.mxu0 0.0
    %2110 = vmatprep.subr.mxu0 0.0
    %2111 = vmatpush2.msra.mxu0 0.0
    %2112 = vmatprep.subr.mxu0 0.0
    %2113 = vmatpush2.msra.mxu0 0.0
    %2114 = vmatprep.subr.mxu0 0.0
    %2115 = vmatpush2.msra.mxu0 0.0
    %2116 = vmatprep.subr.mxu0 0.0
    %2117 = vmatpush2.msra.mxu0 0.0
    %2118 = vmatprep.subr.mxu0 0.0
    %2119 = vmatpush2.msra.mxu0 0.0
    %2120 = vmatprep.subr.mxu0 0.0
    %2121 = vmatpush2.msra.mxu0 0.0
    %2122 = vmatprep.subr.mxu0 0.0
    %2123 = vmatpush2.msra.mxu0 0.0
    %2124 = vmatprep.subr.mxu0 0.0
    %2125 = vmatpush2.msra.mxu0 0.0
    %2126 = vmatprep.subr.mxu0 0.0
    %2127 = vmatpush2.msra.mxu0 0.0
    %2128 = vmatprep.subr.mxu0 0.0
    %2129 = vmatpush2.msra.mxu0 0.0
    %2130 = vmatprep.subr.mxu0 0.0
    %2131 = vmatpush2.msra.mxu0 0.0
    %2132 = vmatprep.mubr.f32.mxu0 0.0
    %2133 = vmatmul.mubr.f32.gmra.mxu0 %v2066
    %v2134 = vpop.f32.mrf.mxu0
    %v2135 = vadd.f32 0.0, %v2134
    %v2136 = vpop.f32.mrf.mxu0
    %2137 = vdwg.mxu0
    %v2139 = vlaneseq
    %v2140 = vshrl.u32 %v2139, 7
    %v2141 = vsub.s32 0, %v2140
    %v2142 = vrot.slane %v1983, %v2141
    %v2144 = vadd.f32 %v2142, %v2135
    %s2145 = scalar_lea.vmem %s16, 2
    %v2146 = vld [vmem:[%s2145] sm:$0x3]
    %v2148 = vsel %vm174, %v2146, 0
    %2150 = vmatprep.subr.mxu0 0.0
    %2151 = vmatpush1.msra.mxu0 0.0
    %2152 = vmatprep.subr.mxu0 0.0
    %2153 = vmatpush1.msra.mxu0 0.0
    %2154 = vmatprep.subr.mxu0 0.0
    %2155 = vmatpush1.msra.mxu0 0.0
    %2156 = vmatprep.subr.mxu0 0.0
    %2157 = vmatpush1.msra.mxu0 0.0
    %2158 = vmatprep.subr.mxu0 0.0
    %2159 = vmatpush1.msra.mxu0 0.0
    %2160 = vmatprep.subr.mxu0 0.0
    %2161 = vmatpush1.msra.mxu0 0.0
    %2162 = vmatprep.subr.mxu0 0.0
    %2163 = vmatpush1.msra.mxu0 0.0
    %2164 = vmatprep.subr.mxu0 0.0
    %2165 = vmatpush1.msra.mxu0 0.0
    %2166 = vmatprep.subr.mxu0 0.0
    %2167 = vmatpush1.msra.mxu0 0.0
    %2168 = vmatprep.subr.mxu0 0.0
    %2169 = vmatpush1.msra.mxu0 0.0
    %2170 = vmatprep.subr.mxu0 0.0
    %2171 = vmatpush1.msra.mxu0 0.0
    %2172 = vmatprep.subr.mxu0 0.0
    %2173 = vmatpush1.msra.mxu0 0.0
    %2174 = vmatprep.subr.mxu0 0.0
    %2175 = vmatpush1.msra.mxu0 0.0
    %2176 = vmatprep.subr.mxu0 0.0
    %2177 = vmatpush1.msra.mxu0 0.0
    %2178 = vmatprep.subr.mxu0 0.0
    %2179 = vmatpush1.msra.mxu0 0.0
    %2180 = vmatprep.subr.mxu0 0.0
    %2181 = vmatpush1.msra.mxu0 %v1989
    %2182 = vmatprep.subr.mxu0 0.0
    %2183 = vmatpush2.msra.mxu0 0.0
    %2184 = vmatprep.subr.mxu0 0.0
    %2185 = vmatpush2.msra.mxu0 0.0
    %2186 = vmatprep.subr.mxu0 0.0
    %2187 = vmatpush2.msra.mxu0 0.0
    %2188 = vmatprep.subr.mxu0 0.0
    %2189 = vmatpush2.msra.mxu0 0.0
    %2190 = vmatprep.subr.mxu0 0.0
    %2191 = vmatpush2.msra.mxu0 0.0
    %2192 = vmatprep.subr.mxu0 0.0
    %2193 = vmatpush2.msra.mxu0 0.0
    %2194 = vmatprep.subr.mxu0 0.0
    %2195 = vmatpush2.msra.mxu0 0.0
    %2196 = vmatprep.subr.mxu0 0.0
    %2197 = vmatpush2.msra.mxu0 0.0
    %2198 = vmatprep.subr.mxu0 0.0
    %2199 = vmatpush2.msra.mxu0 0.0
    %2200 = vmatprep.subr.mxu0 0.0
    %2201 = vmatpush2.msra.mxu0 0.0
    %2202 = vmatprep.subr.mxu0 0.0
    %2203 = vmatpush2.msra.mxu0 0.0
    %2204 = vmatprep.subr.mxu0 0.0
    %2205 = vmatpush2.msra.mxu0 0.0
    %2206 = vmatprep.subr.mxu0 0.0
    %2207 = vmatpush2.msra.mxu0 0.0
    %2208 = vmatprep.subr.mxu0 0.0
    %2209 = vmatpush2.msra.mxu0 0.0
    %2210 = vmatprep.subr.mxu0 0.0
    %2211 = vmatpush2.msra.mxu0 0.0
    %2212 = vmatprep.subr.mxu0 0.0
    %2213 = vmatpush2.msra.mxu0 0.0
    %2214 = vmatprep.mubr.f32.mxu0 0.0
    %2215 = vmatmul.mubr.f32.gmra.mxu0 %v2148
    %v2216 = vpop.f32.mrf.mxu0
    %v2217 = vadd.f32 0.0, %v2216
    %v2218 = vpop.f32.mrf.mxu0
    %2219 = vdwg.mxu0
    %s2220 = scalar_lea.vmem %s17, 32
    %v2221 = vld [vmem:[%s2220] sm:$0xff]
    %v2222 = vld [vmem:[%s2220 + $0x8] sm:$0xff]
    %v2223 = vld [vmem:[%s2220 + $0x10] sm:$0xff]
    %v2224 = vld [vmem:[%s2220 + $0x18] sm:$0xff]
    %v2226 = vsel %vm97, %v2217, 0
    %2228 = vmatprep.subr.mxu0 0.0
    %2229 = vmatpush1.msra.mxu0 0.0
    %2230 = vmatprep.subr.mxu0 0.0
    %2231 = vmatpush1.msra.mxu0 0.0
    %2232 = vmatprep.subr.mxu0 0.0
    %2233 = vmatpush1.msra.mxu0 0.0
    %2234 = vmatprep.subr.mxu0 0.0
    %2235 = vmatpush1.msra.mxu0 0.0
    %2236 = vmatprep.subr.mxu0 0.0
    %2237 = vmatpush1.msra.mxu0 0.0
    %2238 = vmatprep.subr.mxu0 0.0
    %2239 = vmatpush1.msra.mxu0 0.0
    %2240 = vmatprep.subr.mxu0 0.0
    %2241 = vmatpush1.msra.mxu0 0.0
    %2242 = vmatprep.subr.mxu0 0.0
    %2243 = vmatpush1.msra.mxu0 0.0
    %2244 = vmatprep.subr.mxu0 0.0
    %2245 = vmatpush1.msra.mxu0 0.0
    %2246 = vmatprep.subr.mxu0 0.0
    %2247 = vmatpush1.msra.mxu0 0.0
    %2248 = vmatprep.subr.mxu0 0.0
    %2249 = vmatpush1.msra.mxu0 0.0
    %2250 = vmatprep.subr.mxu0 0.0
    %2251 = vmatpush1.msra.mxu0 0.0
    %2252 = vmatprep.subr.mxu0 0.0
    %2253 = vmatpush1.msra.mxu0 %v2224
    %2254 = vmatprep.subr.mxu0 0.0
    %2255 = vmatpush1.msra.mxu0 %v2223
    %2256 = vmatprep.subr.mxu0 0.0
    %2257 = vmatpush1.msra.mxu0 %v2222
    %2258 = vmatprep.subr.mxu0 0.0
    %2259 = vmatpush1.msra.mxu0 %v2221
    %2260 = vmatprep.subr.mxu0 0.0
    %2261 = vmatpush2.msra.mxu0 0.0
    %2262 = vmatprep.subr.mxu0 0.0
    %2263 = vmatpush2.msra.mxu0 0.0
    %2264 = vmatprep.subr.mxu0 0.0
    %2265 = vmatpush2.msra.mxu0 0.0
    %2266 = vmatprep.subr.mxu0 0.0
    %2267 = vmatpush2.msra.mxu0 0.0
    %2268 = vmatprep.subr.mxu0 0.0
    %2269 = vmatpush2.msra.mxu0 0.0
    %2270 = vmatprep.subr.mxu0 0.0
    %2271 = vmatpush2.msra.mxu0 0.0
    %2272 = vmatprep.subr.mxu0 0.0
    %2273 = vmatpush2.msra.mxu0 0.0
    %2274 = vmatprep.subr.mxu0 0.0
    %2275 = vmatpush2.msra.mxu0 0.0
    %2276 = vmatprep.subr.mxu0 0.0
    %2277 = vmatpush2.msra.mxu0 0.0
    %2278 = vmatprep.subr.mxu0 0.0
    %2279 = vmatpush2.msra.mxu0 0.0
    %2280 = vmatprep.subr.mxu0 0.0
    %2281 = vmatpush2.msra.mxu0 0.0
    %2282 = vmatprep.subr.mxu0 0.0
    %2283 = vmatpush2.msra.mxu0 0.0
    %2284 = vmatprep.subr.mxu0 0.0
    %2285 = vmatpush2.msra.mxu0 0.0
    %2286 = vmatprep.subr.mxu0 0.0
    %2287 = vmatpush2.msra.mxu0 0.0
    %2288 = vmatprep.subr.mxu0 0.0
    %2289 = vmatpush2.msra.mxu0 0.0
    %2290 = vmatprep.subr.mxu0 0.0
    %2291 = vmatpush2.msra.mxu0 0.0
    %2292 = vmatprep.mubr.f32.mxu0 0.0
    %2293 = vmatmul.mubr.f32.gmra.mxu0 %v2226
    %v2294 = vpop.f32.mrf.mxu0
    %v2295 = vadd.f32 0.0, %v2294
    %v2296 = vpop.f32.mrf.mxu0
    %2297 = vdwg.mxu0
    %v2298 = vadd.f32 %v2144, %v2295
    %vm2299 = vcmask 58368
    %v2300 = vsel %vm2299, %v2298, -inf
    %2301 = vmax.xlane.f32.xlu0 %v2300
    %v2302 = vpop.xlane.xlu0 %2301
    %v2303 = vsub.f32 %v2298, %v2302
    %v2304 = vmul.f32 %v2303, 1.442695
    %v2305 = vpow.pop %v2304
    %v2306 = vsel %vm2299, %v2305, 0.0
    %2307 = vadd.xlane.f32.xlu0 %v2306
    %v2308 = vpop.xlane.xlu0 %2307
    %v2309 = vrcp.pop %v2308
    %v2310 = vmul.f32 %v2305, %v2309
    %2311 = vst.msk [vmem:[#allocation2] sm:$0x3] %vm2299, %v2310
    // Predicated region
    $region78: #{ec_encoder_forward.5} parent=1 // pred_check
      _
    $region79: #{ec_encoder_forward.5} parent=1 // pred_check_branch
      %2313 = sbr.rel (0) target = $region81
    $region80: #{ec_encoder_forward.5} parent=1 // pred_region
      %s2315 = ssub.s32 32, 32
      %2316 = vsyncadd [#allocation3], %s2315
      %s2318 = sshll.u32 [#allocation2], 4
      %s2319 = int_to_ptr.vmem [resolvable:$true] %s2318
      %2321 = dma.vmem_to_hbm [thread:$0]  %s2319, 32, %s19, [#allocation3]
    $region81: #{ec_encoder_forward.5} parent=1 // pred_fallthru
      _
    // Predicated region
    $region82: #{ec_encoder_forward.5} parent=1 // pred_check
      _
    $region83: #{ec_encoder_forward.5} parent=1 // pred_check_branch
      %2323 = sbr.rel (0) target = $region85
    $region84: #{ec_encoder_forward.5} parent=1 // pred_region
      _
    $region85: #{ec_encoder_forward.5} parent=1 // pred_fallthru
      _
    // Predicated region
    $region86: #{ec_encoder_forward.5} parent=1 // pred_check
      _
    $region87: #{ec_encoder_forward.5} parent=1 // pred_check_branch
      %2325 = sbr.rel (0) target = $region89
    $region88: #{ec_encoder_forward.5} parent=1 // pred_region
      %2326 = dma.done [#allocation3], 32
    $region89: #{ec_encoder_forward.5} parent=1 // pred_fallthru
      _
    // Predicated region
    $region90: #{ec_encoder_forward.5} parent=1 // pred_check
      _
    $region91: #{ec_encoder_forward.5} parent=1 // pred_check_branch
      %2328 = sbr.rel (0) target = $region93
    $region92: #{ec_encoder_forward.5} parent=1 // pred_region
      _
    $region93: #{ec_encoder_forward.5} parent=1 // pred_fallthru
      _
    %2329 = vsyncpa [#allocation3], 1

// kernel: ec_encoder_forward.4
$region0: #{ec_encoder_forward.4}
  #allocation0 [shape = 'u32[]', space=smem, size = 0x4, offset = 0x4, fixed_abs, tag = 'smem constant byte address 0x4 - core index']
  #allocation1 [shape = 'u32[144,128]{1,0:T(1,128)}', space=vmem, size = 0x12000, scoped, tag = 'internal scratch']
  %s0 = inlined_call_operand.vmem [shape: f32[8,32], index: 0, kind: input, shape index: {}]
  %s1 = inlined_call_operand.vmem [shape: f32[8,8], index: 1, kind: input, shape index: {}]
  %s2 = inlined_call_operand.vmem [shape: f32[8,8], index: 2, kind: input, shape index: {}]
  %s3 = inlined_call_operand.vmem [shape: f32[8,8], index: 3, kind: input, shape index: {}]
  %s4 = inlined_call_operand.vmem [shape: f32[32,96], index: 4, kind: input, shape index: {}]
  %s5 = inlined_call_operand.vmem [shape: f32[1,96], index: 5, kind: input, shape index: {}]
  %s6 = inlined_call_operand.vmem [shape: f32[32,32], index: 6, kind: input, shape index: {}]
  %s7 = inlined_call_operand.vmem [shape: f32[1,32], index: 7, kind: input, shape index: {}]
  %s8 = inlined_call_operand.vmem [shape: f32[32,32], index: 8, kind: input, shape index: {}]
  %s9 = inlined_call_operand.vmem [shape: f32[1,32], index: 9, kind: input, shape index: {}]
  %s10 = inlined_call_operand.vmem [shape: f32[32,32], index: 10, kind: input, shape index: {}]
  %s11 = inlined_call_operand.vmem [shape: f32[1,32], index: 11, kind: input, shape index: {}]
  %s12 = inlined_call_operand.vmem [shape: f32[1,32], index: 12, kind: input, shape index: {}]
  %s13 = inlined_call_operand.vmem [shape: f32[1,32], index: 13, kind: input, shape index: {}]
  %s14 = inlined_call_operand.vmem [shape: f32[1,32], index: 14, kind: input, shape index: {}]
  %s15 = inlined_call_operand.hbm [shape: f32[1,32], index: 15, kind: input, shape index: {}]
  %s16 = inlined_call_operand.vmem [shape: f32[3,32,32], index: 16, kind: input, shape index: {}]
  %s17 = inlined_call_operand.hbm [shape: f32[1,32], index: 17, kind: input, shape index: {}]
  %s18 = inlined_call_operand.hbm [shape: f32[1,32], index: 18, kind: input, shape index: {}]
  %s19 = inlined_call_operand.hbm [shape: f32[1,32], index: 19, kind: input, shape index: {}]
  %s20 = inlined_call_operand.vmem [shape: f32[3,4,8], index: 20, kind: input, shape index: {}]
  %s21 = inlined_call_operand.vmem [shape: f32[4,32], index: 21, kind: output, shape index: {0}]
  %s22 = inlined_call_operand.vmem [shape: f32[8,32], index: 22, kind: output, shape index: {1}]
  %23 = xla_tuple %s21, %s22
  %s24 = sld [smem:[#allocation0]]
  $region118: #{ec_encoder_forward.4} parent=0
    _
  %s26 = ssub.s32 1, %s24
  %s27 = scalar_select 0, %s26, %s24
  $region1: #{ec_encoder_forward.4} parent=0
    #allocation2 [shape = 'u8[512]{0}', space=vmem, size = 0x400, scoped, tag = 'input window, operand 15, single buffered']
    #allocation3 [shape = 's32[1]{0}', space=sflag, size = 0x4, scoped, tag = 'scoped memory for ec_encoder_forward.4']
    #allocation4 [shape = 'u8[512]{0}', space=vmem, size = 0x400, scoped, tag = 'input window, operand 17, single buffered']
    #allocation5 [shape = 's32[1]{0}', space=sflag, size = 0x4, scoped, tag = 'scoped memory for ec_encoder_forward.4']
    #allocation6 [shape = 'u8[512]{0}', space=vmem, size = 0x400, scoped, tag = 'input window, operand 18, single buffered']
    #allocation7 [shape = 'u8[512]{0}', space=vmem, size = 0x400, scoped, tag = 'input window, operand 19, single buffered']
    #allocation8 [shape = 's32[1]{0}', space=sflag, size = 0x4, scoped, tag = 'scoped memory for ec_encoder_forward.4']
    %28 = vsyncpa [#allocation3], 0
    %29 = vsyncpa [#allocation5], 0
    %30 = vsyncpa [#allocation8], 0
    // Predicated region
    $region2: #{ec_encoder_forward.4} parent=1 // pred_check
      _
    $region3: #{ec_encoder_forward.4} parent=1 // pred_check_branch
      %32 = sbr.rel (0) target = $region5
    $region4: #{ec_encoder_forward.4} parent=1 // pred_region
      _
    $region5: #{ec_encoder_forward.4} parent=1 // pred_fallthru
      _
    // Predicated region
    $region6: #{ec_encoder_forward.4} parent=1 // pred_check
      _
    $region7: #{ec_encoder_forward.4} parent=1 // pred_check_branch
      %34 = sbr.rel (0) target = $region9
    $region8: #{ec_encoder_forward.4} parent=1 // pred_region
      _
    $region9: #{ec_encoder_forward.4} parent=1 // pred_fallthru
      _
    // Predicated region
    $region10: #{ec_encoder_forward.4} parent=1 // pred_check
      _
    $region11: #{ec_encoder_forward.4} parent=1 // pred_check_branch
      %36 = sbr.rel (0) target = $region13
    $region12: #{ec_encoder_forward.4} parent=1 // pred_region
      _
    $region13: #{ec_encoder_forward.4} parent=1 // pred_fallthru
      _
    // Predicated region
    $region14: #{ec_encoder_forward.4} parent=1 // pred_check
      _
    $region15: #{ec_encoder_forward.4} parent=1 // pred_check_branch
      %38 = sbr.rel (0) target = $region17
    $region16: #{ec_encoder_forward.4} parent=1 // pred_region
      _
    $region17: #{ec_encoder_forward.4} parent=1 // pred_fallthru
      _
    // Predicated region
    $region18: #{ec_encoder_forward.4} parent=1 // pred_check
      _
    $region19: #{ec_encoder_forward.4} parent=1 // pred_check_branch
      %40 = sbr.rel (0) target = $region21
    $region20: #{ec_encoder_forward.4} parent=1 // pred_region
      _
    $region21: #{ec_encoder_forward.4} parent=1 // pred_fallthru
      _
    // Predicated region
    $region22: #{ec_encoder_forward.4} parent=1 // pred_check
      _
    $region23: #{ec_encoder_forward.4} parent=1 // pred_check_branch
      %42 = sbr.rel (0) target = $region25
    $region24: #{ec_encoder_forward.4} parent=1 // pred_region
      _
    $region25: #{ec_encoder_forward.4} parent=1 // pred_fallthru
      _
    // Predicated region
    $region26: #{ec_encoder_forward.4} parent=1 // pred_check
      _
    $region27: #{ec_encoder_forward.4} parent=1 // pred_check_branch
      %44 = sbr.rel (0) target = $region29
    $region28: #{ec_encoder_forward.4} parent=1 // pred_region
      _
    $region29: #{ec_encoder_forward.4} parent=1 // pred_fallthru
      _
    // Predicated region
    $region30: #{ec_encoder_forward.4} parent=1 // pred_check
      _
    $region31: #{ec_encoder_forward.4} parent=1 // pred_check_branch
      %46 = sbr.rel (0) target = $region33
    $region32: #{ec_encoder_forward.4} parent=1 // pred_region
      _
    $region33: #{ec_encoder_forward.4} parent=1 // pred_fallthru
      _
    // Predicated region
    $region34: #{ec_encoder_forward.4} parent=1 // pred_check
      _
    $region35: #{ec_encoder_forward.4} parent=1 // pred_check_branch
      %48 = sbr.rel (0) target = $region37
    $region36: #{ec_encoder_forward.4} parent=1 // pred_region
      _
    $region37: #{ec_encoder_forward.4} parent=1 // pred_fallthru
      _
    // Predicated region
    $region38: #{ec_encoder_forward.4} parent=1 // pred_check
      _
    $region39: #{ec_encoder_forward.4} parent=1 // pred_check_branch
      %50 = sbr.rel (0) target = $region41
    $region40: #{ec_encoder_forward.4} parent=1 // pred_region
      _
    $region41: #{ec_encoder_forward.4} parent=1 // pred_fallthru
      _
    // Predicated region
    $region42: #{ec_encoder_forward.4} parent=1 // pred_check
      _
    $region43: #{ec_encoder_forward.4} parent=1 // pred_check_branch
      %52 = sbr.rel (0) target = $region45
    $region44: #{ec_encoder_forward.4} parent=1 // pred_region
      _
    $region45: #{ec_encoder_forward.4} parent=1 // pred_fallthru
      _
    // Predicated region
    $region46: #{ec_encoder_forward.4} parent=1 // pred_check
      _
    $region47: #{ec_encoder_forward.4} parent=1 // pred_check_branch
      %54 = sbr.rel (0) target = $region49
    $region48: #{ec_encoder_forward.4} parent=1 // pred_region
      _
    $region49: #{ec_encoder_forward.4} parent=1 // pred_fallthru
      _
    // Predicated region
    $region50: #{ec_encoder_forward.4} parent=1 // pred_check
      _
    $region51: #{ec_encoder_forward.4} parent=1 // pred_check_branch
      %56 = sbr.rel (0) target = $region53
    $region52: #{ec_encoder_forward.4} parent=1 // pred_region
      _
    $region53: #{ec_encoder_forward.4} parent=1 // pred_fallthru
      _
    // Predicated region
    $region54: #{ec_encoder_forward.4} parent=1 // pred_check
      _
    $region55: #{ec_encoder_forward.4} parent=1 // pred_check_branch
      %58 = sbr.rel (0) target = $region57
    $region56: #{ec_encoder_forward.4} parent=1 // pred_region
      _
    $region57: #{ec_encoder_forward.4} parent=1 // pred_fallthru
      _
    // Predicated region
    $region58: #{ec_encoder_forward.4} parent=1 // pred_check
      _
    $region59: #{ec_encoder_forward.4} parent=1 // pred_check_branch
      %60 = sbr.rel (0) target = $region61
    $region60: #{ec_encoder_forward.4} parent=1 // pred_region
      _
    $region61: #{ec_encoder_forward.4} parent=1 // pred_fallthru
      _
    // Predicated region
    $region62: #{ec_encoder_forward.4} parent=1 // pred_check
      _
    $region63: #{ec_encoder_forward.4} parent=1 // pred_check_branch
      %62 = sbr.rel (0) target = $region65
    $region64: #{ec_encoder_forward.4} parent=1 // pred_region
      %s64 = ssub.s32 16, 16
      %65 = vsyncadd [#allocation3], %s64
      %s67 = sshll.u32 [#allocation2], 4
      %s68 = int_to_ptr.vmem [resolvable:$true] %s67
      %70 = dma.hbm_to_vmem [thread:$0]  %s15, 16, %s68, [#allocation3]
    $region65: #{ec_encoder_forward.4} parent=1 // pred_fallthru
      _
    // Predicated region
    $region66: #{ec_encoder_forward.4} parent=1 // pred_check
      _
    $region67: #{ec_encoder_forward.4} parent=1 // pred_check_branch
      %72 = sbr.rel (0) target = $region69
    $region68: #{ec_encoder_forward.4} parent=1 // pred_region
      _
    $region69: #{ec_encoder_forward.4} parent=1 // pred_fallthru
      _
    // Predicated region
    $region70: #{ec_encoder_forward.4} parent=1 // pred_check
      _
    $region71: #{ec_encoder_forward.4} parent=1 // pred_check_branch
      %74 = sbr.rel (0) target = $region73
    $region72: #{ec_encoder_forward.4} parent=1 // pred_region
      %s76 = ssub.s32 16, 16
      %77 = vsyncadd [#allocation5], %s76
      %s79 = sshll.u32 [#allocation4], 4
      %s80 = int_to_ptr.vmem [resolvable:$true] %s79
      %82 = dma.hbm_to_vmem [thread:$0]  %s17, 16, %s80, [#allocation5]
    $region73: #{ec_encoder_forward.4} parent=1 // pred_fallthru
      _
    // Predicated region
    $region74: #{ec_encoder_forward.4} parent=1 // pred_check
      _
    $region75: #{ec_encoder_forward.4} parent=1 // pred_check_branch
      %84 = sbr.rel (0) target = $region77
    $region76: #{ec_encoder_forward.4} parent=1 // pred_region
      %s86 = ssub.s32 16, 16
      %87 = vsyncadd [#allocation5], %s86
      %s89 = sshll.u32 [#allocation6], 4
      %s90 = int_to_ptr.vmem [resolvable:$true] %s89
      %92 = dma.hbm_to_vmem [thread:$0]  %s18, 16, %s90, [#allocation5]
    $region77: #{ec_encoder_forward.4} parent=1 // pred_fallthru
      _
    // Predicated region
    $region78: #{ec_encoder_forward.4} parent=1 // pred_check
      _
    $region79: #{ec_encoder_forward.4} parent=1 // pred_check_branch
      %94 = sbr.rel (0) target = $region81
    $region80: #{ec_encoder_forward.4} parent=1 // pred_region
      %s96 = ssub.s32 16, 16
      %97 = vsyncadd [#allocation8], %s96
      %s99 = sshll.u32 [#allocation7], 4
      %s100 = int_to_ptr.vmem [resolvable:$true] %s99
      %102 = dma.hbm_to_vmem [thread:$0]  %s19, 16, %s100, [#allocation8]
    $region81: #{ec_encoder_forward.4} parent=1 // pred_fallthru
      _
    // Predicated region
    $region82: #{ec_encoder_forward.4} parent=1 // pred_check
      _
    $region83: #{ec_encoder_forward.4} parent=1 // pred_check_branch
      %104 = sbr.rel (0) target = $region85
    $region84: #{ec_encoder_forward.4} parent=1 // pred_region
      _
    $region85: #{ec_encoder_forward.4} parent=1 // pred_fallthru
      _
    // Predicated region
    $region86: #{ec_encoder_forward.4} parent=1 // pred_check
      _
    $region87: #{ec_encoder_forward.4} parent=1 // pred_check_branch
      %106 = sbr.rel (0) target = $region89
    $region88: #{ec_encoder_forward.4} parent=1 // pred_region
      %107 = dma.done [#allocation3], 16
    $region89: #{ec_encoder_forward.4} parent=1 // pred_fallthru
      _
    // Predicated region
    $region90: #{ec_encoder_forward.4} parent=1 // pred_check
      _
    $region91: #{ec_encoder_forward.4} parent=1 // pred_check_branch
      %109 = sbr.rel (0) target = $region93
    $region92: #{ec_encoder_forward.4} parent=1 // pred_region
      %110 = dma.done [#allocation5], 16
    $region93: #{ec_encoder_forward.4} parent=1 // pred_fallthru
      _
    // Predicated region
    $region94: #{ec_encoder_forward.4} parent=1 // pred_check
      _
    $region95: #{ec_encoder_forward.4} parent=1 // pred_check_branch
      %112 = sbr.rel (0) target = $region97
    $region96: #{ec_encoder_forward.4} parent=1 // pred_region
      %113 = dma.done [#allocation5], 16
    $region97: #{ec_encoder_forward.4} parent=1 // pred_fallthru
      _
    // Predicated region
    $region98: #{ec_encoder_forward.4} parent=1 // pred_check
      _
    $region99: #{ec_encoder_forward.4} parent=1 // pred_check_branch
      %115 = sbr.rel (0) target = $region101
    $region100: #{ec_encoder_forward.4} parent=1 // pred_region
      %116 = dma.done [#allocation8], 16
    $region101: #{ec_encoder_forward.4} parent=1 // pred_fallthru
      _
    %v117 = vld [vmem:[%s0] sm:$0xff]
    %v118 = vld [vmem:[%s3] sm:$0xff]
    %v119 = vld [vmem:[%s4] sm:$0xff]
    %v120 = vld [vmem:[%s4 + $0x8] sm:$0xff]
    %v121 = vld [vmem:[%s4 + $0x10] sm:$0xff]
    %v122 = vld [vmem:[%s4 + $0x18] sm:$0xff]
    %v123 = vld [vmem:[%s5] sm:$0x1]
    %v124 = vld [vmem:[%s6] sm:$0xff]
    %v125 = vld [vmem:[%s6 + $0x8] sm:$0xff]
    %v126 = vld [vmem:[%s6 + $0x10] sm:$0xff]
    %v127 = vld [vmem:[%s6 + $0x18] sm:$0xff]
    %v128 = vld [vmem:[%s7] sm:$0x1]
    %v129 = vld [vmem:[%s8] sm:$0xff]
    %v130 = vld [vmem:[%s8 + $0x8] sm:$0xff]
    %v131 = vld [vmem:[%s8 + $0x10] sm:$0xff]
    %v132 = vld [vmem:[%s8 + $0x18] sm:$0xff]
    %v133 = vld [vmem:[%s9] sm:$0x1]
    %v134 = vld [vmem:[%s10] sm:$0xff]
    %v135 = vld [vmem:[%s10 + $0x8] sm:$0xff]
    %v136 = vld [vmem:[%s10 + $0x10] sm:$0xff]
    %v137 = vld [vmem:[%s10 + $0x18] sm:$0xff]
    %v138 = vld [vmem:[%s11] sm:$0x1]
    %v139 = vld [vmem:[%s12] sm:$0x1]
    %v140 = vld [vmem:[%s13] sm:$0x1]
    %v141 = vld [vmem:[%s14] sm:$0x1]
    %v142 = vld [vmem:[#allocation2] sm:$0x1]
    %v144 = vlaneseq
    %v145 = vshrl.u32 %v144, 7
    %v146 = vsub.s32 0, %v145
    %v147 = vrot.slane %v123, %v146
    %vm149 = vcmask 261120
    %v151 = vsel %vm149, %v117, 0
    %153 = vmatprep.subr.mxu0 0.0
    %154 = vmatpush1.msra.mxu0 0.0
    %155 = vmatprep.subr.mxu0 0.0
    %156 = vmatpush1.msra.mxu0 0.0
    %157 = vmatprep.subr.mxu0 0.0
    %158 = vmatpush1.msra.mxu0 0.0
    %159 = vmatprep.subr.mxu0 0.0
    %160 = vmatpush1.msra.mxu0 0.0
    %161 = vmatprep.subr.mxu0 0.0
    %162 = vmatpush1.msra.mxu0 0.0
    %163 = vmatprep.subr.mxu0 0.0
    %164 = vmatpush1.msra.mxu0 0.0
    %165 = vmatprep.subr.mxu0 0.0
    %166 = vmatpush1.msra.mxu0 0.0
    %167 = vmatprep.subr.mxu0 0.0
    %168 = vmatpush1.msra.mxu0 0.0
    %169 = vmatprep.subr.mxu0 0.0
    %170 = vmatpush1.msra.mxu0 0.0
    %171 = vmatprep.subr.mxu0 0.0
    %172 = vmatpush1.msra.mxu0 0.0
    %173 = vmatprep.subr.mxu0 0.0
    %174 = vmatpush1.msra.mxu0 0.0
    %175 = vmatprep.subr.mxu0 0.0
    %176 = vmatpush1.msra.mxu0 0.0
    %177 = vmatprep.subr.mxu0 0.0
    %178 = vmatpush1.msra.mxu0 %v122
    %179 = vmatprep.subr.mxu0 0.0
    %180 = vmatpush1.msra.mxu0 %v121
    %181 = vmatprep.subr.mxu0 0.0
    %182 = vmatpush1.msra.mxu0 %v120
    %183 = vmatprep.subr.mxu0 0.0
    %184 = vmatpush1.msra.mxu0 %v119
    %185 = vmatprep.subr.mxu0 0.0
    %186 = vmatpush2.msra.mxu0 0.0
    %187 = vmatprep.subr.mxu0 0.0
    %188 = vmatpush2.msra.mxu0 0.0
    %189 = vmatprep.subr.mxu0 0.0
    %190 = vmatpush2.msra.mxu0 0.0
    %191 = vmatprep.subr.mxu0 0.0
    %192 = vmatpush2.msra.mxu0 0.0
    %193 = vmatprep.subr.mxu0 0.0
    %194 = vmatpush2.msra.mxu0 0.0
    %195 = vmatprep.subr.mxu0 0.0
    %196 = vmatpush2.msra.mxu0 0.0
    %197 = vmatprep.subr.mxu0 0.0
    %198 = vmatpush2.msra.mxu0 0.0
    %199 = vmatprep.subr.mxu0 0.0
    %200 = vmatpush2.msra.mxu0 0.0
    %201 = vmatprep.subr.mxu0 0.0
    %202 = vmatpush2.msra.mxu0 0.0
    %203 = vmatprep.subr.mxu0 0.0
    %204 = vmatpush2.msra.mxu0 0.0
    %205 = vmatprep.subr.mxu0 0.0
    %206 = vmatpush2.msra.mxu0 0.0
    %207 = vmatprep.subr.mxu0 0.0
    %208 = vmatpush2.msra.mxu0 0.0
    %209 = vmatprep.subr.mxu0 0.0
    %210 = vmatpush2.msra.mxu0 0.0
    %211 = vmatprep.subr.mxu0 0.0
    %212 = vmatpush2.msra.mxu0 0.0
    %213 = vmatprep.subr.mxu0 0.0
    %214 = vmatpush2.msra.mxu0 0.0
    %215 = vmatprep.subr.mxu0 0.0
    %216 = vmatpush2.msra.mxu0 0.0
    %217 = vmatprep.mubr.f32.mxu0 0.0
    %218 = vmatmul.mubr.f32.gmra.mxu0 %v151
    %v219 = vpop.f32.mrf.mxu0
    %v220 = vadd.f32 %v147, %v219
    %v221 = vpop.f32.mrf.mxu0
    %222 = vdwg.mxu0
    %224 = vrot.lane.b32.xlu0 %v220, 96
    %v225 = vpop.permute.xlu0 %224
    %vm226 = vcmask 31744
    %v227 = vsel %vm226, %v220, 0
    %v229 = vsel %vm226, %v225, 0
    %231 = vmatprep.subr.mxu0 0.0
    %232 = vmatpush1.xpose.msra.mxu0 0.0
    %233 = vmatprep.subr.mxu0 0.0
    %234 = vmatpush1.xpose.msra.mxu0 0.0
    %235 = vmatprep.subr.mxu0 0.0
    %236 = vmatpush1.xpose.msra.mxu0 0.0
    %237 = vmatprep.subr.mxu0 0.0
    %238 = vmatpush1.xpose.msra.mxu0 0.0
    %239 = vmatprep.subr.mxu0 0.0
    %240 = vmatpush1.xpose.msra.mxu0 0.0
    %241 = vmatprep.subr.mxu0 0.0
    %242 = vmatpush1.xpose.msra.mxu0 0.0
    %243 = vmatprep.subr.mxu0 0.0
    %244 = vmatpush1.xpose.msra.mxu0 0.0
    %245 = vmatprep.subr.mxu0 0.0
    %246 = vmatpush1.xpose.msra.mxu0 0.0
    %247 = vmatprep.subr.mxu0 0.0
    %248 = vmatpush1.xpose.msra.mxu0 0.0
    %249 = vmatprep.subr.mxu0 0.0
    %250 = vmatpush1.xpose.msra.mxu0 0.0
    %251 = vmatprep.subr.mxu0 0.0
    %252 = vmatpush1.xpose.msra.mxu0 0.0
    %253 = vmatprep.subr.mxu0 0.0
    %254 = vmatpush1.xpose.msra.mxu0 0.0
    %255 = vmatprep.subr.mxu0 0.0
    %256 = vmatpush1.xpose.msra.mxu0 0.0
    %257 = vmatprep.subr.mxu0 0.0
    %258 = vmatpush1.xpose.msra.mxu0 0.0
    %259 = vmatprep.subr.mxu0 0.0
    %260 = vmatpush1.xpose.msra.mxu0 0.0
    %261 = vmatprep.subr.mxu0 0.0
    %262 = vmatpush1.xpose.msra.mxu0 %v229
    %263 = vmatprep.subr.mxu0 0.0
    %264 = vmatpush2.xpose.msra.mxu0 0.0
    %265 = vmatprep.subr.mxu0 0.0
    %266 = vmatpush2.xpose.msra.mxu0 0.0
    %267 = vmatprep.subr.mxu0 0.0
    %268 = vmatpush2.xpose.msra.mxu0 0.0
    %269 = vmatprep.subr.mxu0 0.0
    %270 = vmatpush2.xpose.msra.mxu0 0.0
    %271 = vmatprep.subr.mxu0 0.0
    %272 = vmatpush2.xpose.msra.mxu0 0.0
    %273 = vmatprep.subr.mxu0 0.0
    %274 = vmatpush2.xpose.msra.mxu0 0.0
    %275 = vmatprep.subr.mxu0 0.0
    %276 = vmatpush2.xpose.msra.mxu0 0.0
    %277 = vmatprep.subr.mxu0 0.0
    %278 = vmatpush2.xpose.msra.mxu0 0.0
    %279 = vmatprep.subr.mxu0 0.0
    %280 = vmatpush2.xpose.msra.mxu0 0.0
    %281 = vmatprep.subr.mxu0 0.0
    %282 = vmatpush2.xpose.msra.mxu0 0.0
    %283 = vmatprep.subr.mxu0 0.0
    %284 = vmatpush2.xpose.msra.mxu0 0.0
    %285 = vmatprep.subr.mxu0 0.0
    %286 = vmatpush2.xpose.msra.mxu0 0.0
    %287 = vmatprep.subr.mxu0 0.0
    %288 = vmatpush2.xpose.msra.mxu0 0.0
    %289 = vmatprep.subr.mxu0 0.0
    %290 = vmatpush2.xpose.msra.mxu0 0.0
    %291 = vmatprep.subr.mxu0 0.0
    %292 = vmatpush2.xpose.msra.mxu0 0.0
    %293 = vmatprep.subr.mxu0 0.0
    %294 = vmatpush2.xpose.msra.mxu0 0.0
    %295 = vmatprep.mubr.f32.mxu0 0.0
    %296 = vmatmul.mubr.f32.gmra.mxu0 %v227
    %v297 = vpop.f32.mrf.mxu0
    %v298 = vadd.f32 0.0, %v297
    %v299 = vpop.f32.mrf.mxu0
    %300 = vdwg.mxu0
    %v301 = vmul.f32 %v298, 0.5
    %v302 = vadd.f32 %v301, %v118
    %vm303 = vcmask 64512
    %v304 = vsel %vm303, %v302, -inf
    %305 = vmax.xlane.f32.xlu0 %v304
    %v306 = vpop.xlane.xlu0 %305
    %v307 = vsub.f32 %v302, %v306
    %v308 = vmul.f32 %v307, 1.442695
    %v309 = vpow.pop %v308
    %v310 = vsel %vm303, %v309, 0.0
    %311 = vadd.xlane.f32.xlu0 %v310
    %v312 = vpop.xlane.xlu0 %311
    %v313 = vrcp.pop %v312
    %v314 = vmul.f32 %v309, %v313
    %315 = vrot.lane.b32.xlu0 %v220, 64
    %v316 = vpop.permute.xlu0 %315
    %v319 = vsel %vm303, %v314, 0
    %321 = vmatprep.subr.mxu0 0.0
    %322 = vmatpush1.msra.mxu0 0.0
    %323 = vmatprep.subr.mxu0 0.0
    %324 = vmatpush1.msra.mxu0 0.0
    %325 = vmatprep.subr.mxu0 0.0
    %326 = vmatpush1.msra.mxu0 0.0
    %327 = vmatprep.subr.mxu0 0.0
    %328 = vmatpush1.msra.mxu0 0.0
    %329 = vmatprep.subr.mxu0 0.0
    %330 = vmatpush1.msra.mxu0 0.0
    %331 = vmatprep.subr.mxu0 0.0
    %332 = vmatpush1.msra.mxu0 0.0
    %333 = vmatprep.subr.mxu0 0.0
    %334 = vmatpush1.msra.mxu0 0.0
    %335 = vmatprep.subr.mxu0 0.0
    %336 = vmatpush1.msra.mxu0 0.0
    %337 = vmatprep.subr.mxu0 0.0
    %338 = vmatpush1.msra.mxu0 0.0
    %339 = vmatprep.subr.mxu0 0.0
    %340 = vmatpush1.msra.mxu0 0.0
    %341 = vmatprep.subr.mxu0 0.0
    %342 = vmatpush1.msra.mxu0 0.0
    %343 = vmatprep.subr.mxu0 0.0
    %344 = vmatpush1.msra.mxu0 0.0
    %345 = vmatprep.subr.mxu0 0.0
    %346 = vmatpush1.msra.mxu0 0.0
    %347 = vmatprep.subr.mxu0 0.0
    %348 = vmatpush1.msra.mxu0 0.0
    %349 = vmatprep.subr.mxu0 0.0
    %350 = vmatpush1.msra.mxu0 0.0
    %351 = vmatprep.subr.mxu0 0.0
    %352 = vmatpush1.msra.mxu0 %v316
    %353 = vmatprep.subr.mxu0 0.0
    %354 = vmatpush2.msra.mxu0 0.0
    %355 = vmatprep.subr.mxu0 0.0
    %356 = vmatpush2.msra.mxu0 0.0
    %357 = vmatprep.subr.mxu0 0.0
    %358 = vmatpush2.msra.mxu0 0.0
    %359 = vmatprep.subr.mxu0 0.0
    %360 = vmatpush2.msra.mxu0 0.0
    %361 = vmatprep.subr.mxu0 0.0
    %362 = vmatpush2.msra.mxu0 0.0
    %363 = vmatprep.subr.mxu0 0.0
    %364 = vmatpush2.msra.mxu0 0.0
    %365 = vmatprep.subr.mxu0 0.0
    %366 = vmatpush2.msra.mxu0 0.0
    %367 = vmatprep.subr.mxu0 0.0
    %368 = vmatpush2.msra.mxu0 0.0
    %369 = vmatprep.subr.mxu0 0.0
    %370 = vmatpush2.msra.mxu0 0.0
    %371 = vmatprep.subr.mxu0 0.0
    %372 = vmatpush2.msra.mxu0 0.0
    %373 = vmatprep.subr.mxu0 0.0
    %374 = vmatpush2.msra.mxu0 0.0
    %375 = vmatprep.subr.mxu0 0.0
    %376 = vmatpush2.msra.mxu0 0.0
    %377 = vmatprep.subr.mxu0 0.0
    %378 = vmatpush2.msra.mxu0 0.0
    %379 = vmatprep.subr.mxu0 0.0
    %380 = vmatpush2.msra.mxu0 0.0
    %381 = vmatprep.subr.mxu0 0.0
    %382 = vmatpush2.msra.mxu0 0.0
    %383 = vmatprep.subr.mxu0 0.0
    %384 = vmatpush2.msra.mxu0 0.0
    %385 = vmatprep.mubr.f32.mxu0 0.0
    %386 = vmatmul.mubr.f32.gmra.mxu0 %v319
    %v387 = vpop.f32.mrf.mxu0
    %v388 = vadd.f32 0.0, %v387
    %v389 = vpop.f32.mrf.mxu0
    %390 = vdwg.mxu0
    %391 = vrot.lane.b32.xlu0 %v314, 124
    %v392 = vpop.permute.xlu0 %391
    %v394 = vadd.f32 %v314, %v392
    %395 = vrot.lane.b32.xlu0 %v220, 124
    %v396 = vpop.permute.xlu0 %395
    %397 = vrot.lane.b32.xlu0 %v220, 92
    %v398 = vpop.permute.xlu0 %397
    %v399 = vsel %vm226, %v396, 0
    %v401 = vsel %vm226, %v398, 0
    %403 = vmatprep.subr.mxu0 0.0
    %404 = vmatpush1.xpose.msra.mxu0 0.0
    %405 = vmatprep.subr.mxu0 0.0
    %406 = vmatpush1.xpose.msra.mxu0 0.0
    %407 = vmatprep.subr.mxu0 0.0
    %408 = vmatpush1.xpose.msra.mxu0 0.0
    %409 = vmatprep.subr.mxu0 0.0
    %410 = vmatpush1.xpose.msra.mxu0 0.0
    %411 = vmatprep.subr.mxu0 0.0
    %412 = vmatpush1.xpose.msra.mxu0 0.0
    %413 = vmatprep.subr.mxu0 0.0
    %414 = vmatpush1.xpose.msra.mxu0 0.0
    %415 = vmatprep.subr.mxu0 0.0
    %416 = vmatpush1.xpose.msra.mxu0 0.0
    %417 = vmatprep.subr.mxu0 0.0
    %418 = vmatpush1.xpose.msra.mxu0 0.0
    %419 = vmatprep.subr.mxu0 0.0
    %420 = vmatpush1.xpose.msra.mxu0 0.0
    %421 = vmatprep.subr.mxu0 0.0
    %422 = vmatpush1.xpose.msra.mxu0 0.0
    %423 = vmatprep.subr.mxu0 0.0
    %424 = vmatpush1.xpose.msra.mxu0 0.0
    %425 = vmatprep.subr.mxu0 0.0
    %426 = vmatpush1.xpose.msra.mxu0 0.0
    %427 = vmatprep.subr.mxu0 0.0
    %428 = vmatpush1.xpose.msra.mxu0 0.0
    %429 = vmatprep.subr.mxu0 0.0
    %430 = vmatpush1.xpose.msra.mxu0 0.0
    %431 = vmatprep.subr.mxu0 0.0
    %432 = vmatpush1.xpose.msra.mxu0 0.0
    %433 = vmatprep.subr.mxu0 0.0
    %434 = vmatpush1.xpose.msra.mxu0 %v401
    %435 = vmatprep.subr.mxu0 0.0
    %436 = vmatpush2.xpose.msra.mxu0 0.0
    %437 = vmatprep.subr.mxu0 0.0
    %438 = vmatpush2.xpose.msra.mxu0 0.0
    %439 = vmatprep.subr.mxu0 0.0
    %440 = vmatpush2.xpose.msra.mxu0 0.0
    %441 = vmatprep.subr.mxu0 0.0
    %442 = vmatpush2.xpose.msra.mxu0 0.0
    %443 = vmatprep.subr.mxu0 0.0
    %444 = vmatpush2.xpose.msra.mxu0 0.0
    %445 = vmatprep.subr.mxu0 0.0
    %446 = vmatpush2.xpose.msra.mxu0 0.0
    %447 = vmatprep.subr.mxu0 0.0
    %448 = vmatpush2.xpose.msra.mxu0 0.0
    %449 = vmatprep.subr.mxu0 0.0
    %450 = vmatpush2.xpose.msra.mxu0 0.0
    %451 = vmatprep.subr.mxu0 0.0
    %452 = vmatpush2.xpose.msra.mxu0 0.0
    %453 = vmatprep.subr.mxu0 0.0
    %454 = vmatpush2.xpose.msra.mxu0 0.0
    %455 = vmatprep.subr.mxu0 0.0
    %456 = vmatpush2.xpose.msra.mxu0 0.0
    %457 = vmatprep.subr.mxu0 0.0
    %458 = vmatpush2.xpose.msra.mxu0 0.0
    %459 = vmatprep.subr.mxu0 0.0
    %460 = vmatpush2.xpose.msra.mxu0 0.0
    %461 = vmatprep.subr.mxu0 0.0
    %462 = vmatpush2.xpose.msra.mxu0 0.0
    %463 = vmatprep.subr.mxu0 0.0
    %464 = vmatpush2.xpose.msra.mxu0 0.0
    %465 = vmatprep.subr.mxu0 0.0
    %466 = vmatpush2.xpose.msra.mxu0 0.0
    %467 = vmatprep.mubr.f32.mxu0 0.0
    %468 = vmatmul.mubr.f32.gmra.mxu0 %v399
    %v469 = vpop.f32.mrf.mxu0
    %v470 = vadd.f32 0.0, %v469
    %v471 = vpop.f32.mrf.mxu0
    %472 = vdwg.mxu0
    %v473 = vmul.f32 %v470, 0.5
    %v474 = vadd.f32 %v473, %v118
    %v475 = vsel %vm303, %v474, -inf
    %476 = vmax.xlane.f32.xlu0 %v475
    %v477 = vpop.xlane.xlu0 %476
    %v478 = vsub.f32 %v474, %v477
    %v479 = vmul.f32 %v478, 1.442695
    %v480 = vpow.pop %v479
    %v481 = vsel %vm303, %v480, 0.0
    %482 = vadd.xlane.f32.xlu0 %v481
    %v483 = vpop.xlane.xlu0 %482
    %v484 = vrcp.pop %v483
    %v485 = vmul.f32 %v480, %v484
    %486 = vrot.lane.b32.xlu0 %v220, 60
    %v487 = vpop.permute.xlu0 %486
    %v490 = vsel %vm303, %v485, 0
    %492 = vmatprep.subr.mxu0 0.0
    %493 = vmatpush1.msra.mxu0 0.0
    %494 = vmatprep.subr.mxu0 0.0
    %495 = vmatpush1.msra.mxu0 0.0
    %496 = vmatprep.subr.mxu0 0.0
    %497 = vmatpush1.msra.mxu0 0.0
    %498 = vmatprep.subr.mxu0 0.0
    %499 = vmatpush1.msra.mxu0 0.0
    %500 = vmatprep.subr.mxu0 0.0
    %501 = vmatpush1.msra.mxu0 0.0
    %502 = vmatprep.subr.mxu0 0.0
    %503 = vmatpush1.msra.mxu0 0.0
    %504 = vmatprep.subr.mxu0 0.0
    %505 = vmatpush1.msra.mxu0 0.0
    %506 = vmatprep.subr.mxu0 0.0
    %507 = vmatpush1.msra.mxu0 0.0
    %508 = vmatprep.subr.mxu0 0.0
    %509 = vmatpush1.msra.mxu0 0.0
    %510 = vmatprep.subr.mxu0 0.0
    %511 = vmatpush1.msra.mxu0 0.0
    %512 = vmatprep.subr.mxu0 0.0
    %513 = vmatpush1.msra.mxu0 0.0
    %514 = vmatprep.subr.mxu0 0.0
    %515 = vmatpush1.msra.mxu0 0.0
    %516 = vmatprep.subr.mxu0 0.0
    %517 = vmatpush1.msra.mxu0 0.0
    %518 = vmatprep.subr.mxu0 0.0
    %519 = vmatpush1.msra.mxu0 0.0
    %520 = vmatprep.subr.mxu0 0.0
    %521 = vmatpush1.msra.mxu0 0.0
    %522 = vmatprep.subr.mxu0 0.0
    %523 = vmatpush1.msra.mxu0 %v487
    %524 = vmatprep.subr.mxu0 0.0
    %525 = vmatpush2.msra.mxu0 0.0
    %526 = vmatprep.subr.mxu0 0.0
    %527 = vmatpush2.msra.mxu0 0.0
    %528 = vmatprep.subr.mxu0 0.0
    %529 = vmatpush2.msra.mxu0 0.0
    %530 = vmatprep.subr.mxu0 0.0
    %531 = vmatpush2.msra.mxu0 0.0
    %532 = vmatprep.subr.mxu0 0.0
    %533 = vmatpush2.msra.mxu0 0.0
    %534 = vmatprep.subr.mxu0 0.0
    %535 = vmatpush2.msra.mxu0 0.0
    %536 = vmatprep.subr.mxu0 0.0
    %537 = vmatpush2.msra.mxu0 0.0
    %538 = vmatprep.subr.mxu0 0.0
    %539 = vmatpush2.msra.mxu0 0.0
    %540 = vmatprep.subr.mxu0 0.0
    %541 = vmatpush2.msra.mxu0 0.0
    %542 = vmatprep.subr.mxu0 0.0
    %543 = vmatpush2.msra.mxu0 0.0
    %544 = vmatprep.subr.mxu0 0.0
    %545 = vmatpush2.msra.mxu0 0.0
    %546 = vmatprep.subr.mxu0 0.0
    %547 = vmatpush2.msra.mxu0 0.0
    %548 = vmatprep.subr.mxu0 0.0
    %549 = vmatpush2.msra.mxu0 0.0
    %550 = vmatprep.subr.mxu0 0.0
    %551 = vmatpush2.msra.mxu0 0.0
    %552 = vmatprep.subr.mxu0 0.0
    %553 = vmatpush2.msra.mxu0 0.0
    %554 = vmatprep.subr.mxu0 0.0
    %555 = vmatpush2.msra.mxu0 0.0
    %556 = vmatprep.mubr.f32.mxu0 0.0
    %557 = vmatmul.mubr.f32.gmra.mxu0 %v490
    %v558 = vpop.f32.mrf.mxu0
    %v559 = vadd.f32 0.0, %v558
    %v560 = vpop.f32.mrf.mxu0
    %561 = vdwg.mxu0
    %562 = vrot.lane.b32.xlu0 %v485, 124
    %v563 = vpop.permute.xlu0 %562
    %v565 = vadd.f32 %v485, %v563
    %566 = vrot.lane.b32.xlu0 %v220, 120
    %v567 = vpop.permute.xlu0 %566
    %568 = vrot.lane.b32.xlu0 %v220, 88
    %v569 = vpop.permute.xlu0 %568
    %v570 = vsel %vm226, %v567, 0
    %v572 = vsel %vm226, %v569, 0
    %574 = vmatprep.subr.mxu0 0.0
    %575 = vmatpush1.xpose.msra.mxu0 0.0
    %576 = vmatprep.subr.mxu0 0.0
    %577 = vmatpush1.xpose.msra.mxu0 0.0
    %578 = vmatprep.subr.mxu0 0.0
    %579 = vmatpush1.xpose.msra.mxu0 0.0
    %580 = vmatprep.subr.mxu0 0.0
    %581 = vmatpush1.xpose.msra.mxu0 0.0
    %582 = vmatprep.subr.mxu0 0.0
    %583 = vmatpush1.xpose.msra.mxu0 0.0
    %584 = vmatprep.subr.mxu0 0.0
    %585 = vmatpush1.xpose.msra.mxu0 0.0
    %586 = vmatprep.subr.mxu0 0.0
    %587 = vmatpush1.xpose.msra.mxu0 0.0
    %588 = vmatprep.subr.mxu0 0.0
    %589 = vmatpush1.xpose.msra.mxu0 0.0
    %590 = vmatprep.subr.mxu0 0.0
    %591 = vmatpush1.xpose.msra.mxu0 0.0
    %592 = vmatprep.subr.mxu0 0.0
    %593 = vmatpush1.xpose.msra.mxu0 0.0
    %594 = vmatprep.subr.mxu0 0.0
    %595 = vmatpush1.xpose.msra.mxu0 0.0
    %596 = vmatprep.subr.mxu0 0.0
    %597 = vmatpush1.xpose.msra.mxu0 0.0
    %598 = vmatprep.subr.mxu0 0.0
    %599 = vmatpush1.xpose.msra.mxu0 0.0
    %600 = vmatprep.subr.mxu0 0.0
    %601 = vmatpush1.xpose.msra.mxu0 0.0
    %602 = vmatprep.subr.mxu0 0.0
    %603 = vmatpush1.xpose.msra.mxu0 0.0
    %604 = vmatprep.subr.mxu0 0.0
    %605 = vmatpush1.xpose.msra.mxu0 %v572
    %606 = vmatprep.subr.mxu0 0.0
    %607 = vmatpush2.xpose.msra.mxu0 0.0
    %608 = vmatprep.subr.mxu0 0.0
    %609 = vmatpush2.xpose.msra.mxu0 0.0
    %610 = vmatprep.subr.mxu0 0.0
    %611 = vmatpush2.xpose.msra.mxu0 0.0
    %612 = vmatprep.subr.mxu0 0.0
    %613 = vmatpush2.xpose.msra.mxu0 0.0
    %614 = vmatprep.subr.mxu0 0.0
    %615 = vmatpush2.xpose.msra.mxu0 0.0
    %616 = vmatprep.subr.mxu0 0.0
    %617 = vmatpush2.xpose.msra.mxu0 0.0
    %618 = vmatprep.subr.mxu0 0.0
    %619 = vmatpush2.xpose.msra.mxu0 0.0
    %620 = vmatprep.subr.mxu0 0.0
    %621 = vmatpush2.xpose.msra.mxu0 0.0
    %622 = vmatprep.subr.mxu0 0.0
    %623 = vmatpush2.xpose.msra.mxu0 0.0
    %624 = vmatprep.subr.mxu0 0.0
    %625 = vmatpush2.xpose.msra.mxu0 0.0
    %626 = vmatprep.subr.mxu0 0.0
    %627 = vmatpush2.xpose.msra.mxu0 0.0
    %628 = vmatprep.subr.mxu0 0.0
    %629 = vmatpush2.xpose.msra.mxu0 0.0
    %630 = vmatprep.subr.mxu0 0.0
    %631 = vmatpush2.xpose.msra.mxu0 0.0
    %632 = vmatprep.subr.mxu0 0.0
    %633 = vmatpush2.xpose.msra.mxu0 0.0
    %634 = vmatprep.subr.mxu0 0.0
    %635 = vmatpush2.xpose.msra.mxu0 0.0
    %636 = vmatprep.subr.mxu0 0.0
    %637 = vmatpush2.xpose.msra.mxu0 0.0
    %638 = vmatprep.mubr.f32.mxu0 0.0
    %639 = vmatmul.mubr.f32.gmra.mxu0 %v570
    %v640 = vpop.f32.mrf.mxu0
    %v641 = vadd.f32 0.0, %v640
    %v642 = vpop.f32.mrf.mxu0
    %643 = vdwg.mxu0
    %v644 = vmul.f32 %v641, 0.5
    %v645 = vadd.f32 %v644, %v118
    %v646 = vsel %vm303, %v645, -inf
    %647 = vmax.xlane.f32.xlu0 %v646
    %v648 = vpop.xlane.xlu0 %647
    %v649 = vsub.f32 %v645, %v648
    %v650 = vmul.f32 %v649, 1.442695
    %v651 = vpow.pop %v650
    %v652 = vsel %vm303, %v651, 0.0
    %653 = vadd.xlane.f32.xlu0 %v652
    %v654 = vpop.xlane.xlu0 %653
    %v655 = vrcp.pop %v654
    %v656 = vmul.f32 %v651, %v655
    %657 = vrot.lane.b32.xlu0 %v220, 56
    %v658 = vpop.permute.xlu0 %657
    %v661 = vsel %vm303, %v656, 0
    %663 = vmatprep.subr.mxu0 0.0
    %664 = vmatpush1.msra.mxu0 0.0
    %665 = vmatprep.subr.mxu0 0.0
    %666 = vmatpush1.msra.mxu0 0.0
    %667 = vmatprep.subr.mxu0 0.0
    %668 = vmatpush1.msra.mxu0 0.0
    %669 = vmatprep.subr.mxu0 0.0
    %670 = vmatpush1.msra.mxu0 0.0
    %671 = vmatprep.subr.mxu0 0.0
    %672 = vmatpush1.msra.mxu0 0.0
    %673 = vmatprep.subr.mxu0 0.0
    %674 = vmatpush1.msra.mxu0 0.0
    %675 = vmatprep.subr.mxu0 0.0
    %676 = vmatpush1.msra.mxu0 0.0
    %677 = vmatprep.subr.mxu0 0.0
    %678 = vmatpush1.msra.mxu0 0.0
    %679 = vmatprep.subr.mxu0 0.0
    %680 = vmatpush1.msra.mxu0 0.0
    %681 = vmatprep.subr.mxu0 0.0
    %682 = vmatpush1.msra.mxu0 0.0
    %683 = vmatprep.subr.mxu0 0.0
    %684 = vmatpush1.msra.mxu0 0.0
    %685 = vmatprep.subr.mxu0 0.0
    %686 = vmatpush1.msra.mxu0 0.0
    %687 = vmatprep.subr.mxu0 0.0
    %688 = vmatpush1.msra.mxu0 0.0
    %689 = vmatprep.subr.mxu0 0.0
    %690 = vmatpush1.msra.mxu0 0.0
    %691 = vmatprep.subr.mxu0 0.0
    %692 = vmatpush1.msra.mxu0 0.0
    %693 = vmatprep.subr.mxu0 0.0
    %694 = vmatpush1.msra.mxu0 %v658
    %695 = vmatprep.subr.mxu0 0.0
    %696 = vmatpush2.msra.mxu0 0.0
    %697 = vmatprep.subr.mxu0 0.0
    %698 = vmatpush2.msra.mxu0 0.0
    %699 = vmatprep.subr.mxu0 0.0
    %700 = vmatpush2.msra.mxu0 0.0
    %701 = vmatprep.subr.mxu0 0.0
    %702 = vmatpush2.msra.mxu0 0.0
    %703 = vmatprep.subr.mxu0 0.0
    %704 = vmatpush2.msra.mxu0 0.0
    %705 = vmatprep.subr.mxu0 0.0
    %706 = vmatpush2.msra.mxu0 0.0
    %707 = vmatprep.subr.mxu0 0.0
    %708 = vmatpush2.msra.mxu0 0.0
    %709 = vmatprep.subr.mxu0 0.0
    %710 = vmatpush2.msra.mxu0 0.0
    %711 = vmatprep.subr.mxu0 0.0
    %712 = vmatpush2.msra.mxu0 0.0
    %713 = vmatprep.subr.mxu0 0.0
    %714 = vmatpush2.msra.mxu0 0.0
    %715 = vmatprep.subr.mxu0 0.0
    %716 = vmatpush2.msra.mxu0 0.0
    %717 = vmatprep.subr.mxu0 0.0
    %718 = vmatpush2.msra.mxu0 0.0
    %719 = vmatprep.subr.mxu0 0.0
    %720 = vmatpush2.msra.mxu0 0.0
    %721 = vmatprep.subr.mxu0 0.0
    %722 = vmatpush2.msra.mxu0 0.0
    %723 = vmatprep.subr.mxu0 0.0
    %724 = vmatpush2.msra.mxu0 0.0
    %725 = vmatprep.subr.mxu0 0.0
    %726 = vmatpush2.msra.mxu0 0.0
    %727 = vmatprep.mubr.f32.mxu0 0.0
    %728 = vmatmul.mubr.f32.gmra.mxu0 %v661
    %v729 = vpop.f32.mrf.mxu0
    %v730 = vadd.f32 0.0, %v729
    %v731 = vpop.f32.mrf.mxu0
    %732 = vdwg.mxu0
    %733 = vrot.lane.b32.xlu0 %v656, 124
    %v734 = vpop.permute.xlu0 %733
    %v736 = vadd.f32 %v656, %v734
    %737 = vrot.lane.b32.xlu0 %v220, 116
    %v738 = vpop.permute.xlu0 %737
    %739 = vrot.lane.b32.xlu0 %v220, 84
    %v740 = vpop.permute.xlu0 %739
    %v741 = vsel %vm226, %v738, 0
    %v743 = vsel %vm226, %v740, 0
    %745 = vmatprep.subr.mxu0 0.0
    %746 = vmatpush1.xpose.msra.mxu0 0.0
    %747 = vmatprep.subr.mxu0 0.0
    %748 = vmatpush1.xpose.msra.mxu0 0.0
    %749 = vmatprep.subr.mxu0 0.0
    %750 = vmatpush1.xpose.msra.mxu0 0.0
    %751 = vmatprep.subr.mxu0 0.0
    %752 = vmatpush1.xpose.msra.mxu0 0.0
    %753 = vmatprep.subr.mxu0 0.0
    %754 = vmatpush1.xpose.msra.mxu0 0.0
    %755 = vmatprep.subr.mxu0 0.0
    %756 = vmatpush1.xpose.msra.mxu0 0.0
    %757 = vmatprep.subr.mxu0 0.0
    %758 = vmatpush1.xpose.msra.mxu0 0.0
    %759 = vmatprep.subr.mxu0 0.0
    %760 = vmatpush1.xpose.msra.mxu0 0.0
    %761 = vmatprep.subr.mxu0 0.0
    %762 = vmatpush1.xpose.msra.mxu0 0.0
    %763 = vmatprep.subr.mxu0 0.0
    %764 = vmatpush1.xpose.msra.mxu0 0.0
    %765 = vmatprep.subr.mxu0 0.0
    %766 = vmatpush1.xpose.msra.mxu0 0.0
    %767 = vmatprep.subr.mxu0 0.0
    %768 = vmatpush1.xpose.msra.mxu0 0.0
    %769 = vmatprep.subr.mxu0 0.0
    %770 = vmatpush1.xpose.msra.mxu0 0.0
    %771 = vmatprep.subr.mxu0 0.0
    %772 = vmatpush1.xpose.msra.mxu0 0.0
    %773 = vmatprep.subr.mxu0 0.0
    %774 = vmatpush1.xpose.msra.mxu0 0.0
    %775 = vmatprep.subr.mxu0 0.0
    %776 = vmatpush1.xpose.msra.mxu0 %v743
    %777 = vmatprep.subr.mxu0 0.0
    %778 = vmatpush2.xpose.msra.mxu0 0.0
    %779 = vmatprep.subr.mxu0 0.0
    %780 = vmatpush2.xpose.msra.mxu0 0.0
    %781 = vmatprep.subr.mxu0 0.0
    %782 = vmatpush2.xpose.msra.mxu0 0.0
    %783 = vmatprep.subr.mxu0 0.0
    %784 = vmatpush2.xpose.msra.mxu0 0.0
    %785 = vmatprep.subr.mxu0 0.0
    %786 = vmatpush2.xpose.msra.mxu0 0.0
    %787 = vmatprep.subr.mxu0 0.0
    %788 = vmatpush2.xpose.msra.mxu0 0.0
    %789 = vmatprep.subr.mxu0 0.0
    %790 = vmatpush2.xpose.msra.mxu0 0.0
    %791 = vmatprep.subr.mxu0 0.0
    %792 = vmatpush2.xpose.msra.mxu0 0.0
    %793 = vmatprep.subr.mxu0 0.0
    %794 = vmatpush2.xpose.msra.mxu0 0.0
    %795 = vmatprep.subr.mxu0 0.0
    %796 = vmatpush2.xpose.msra.mxu0 0.0
    %797 = vmatprep.subr.mxu0 0.0
    %798 = vmatpush2.xpose.msra.mxu0 0.0
    %799 = vmatprep.subr.mxu0 0.0
    %800 = vmatpush2.xpose.msra.mxu0 0.0
    %801 = vmatprep.subr.mxu0 0.0
    %802 = vmatpush2.xpose.msra.mxu0 0.0
    %803 = vmatprep.subr.mxu0 0.0
    %804 = vmatpush2.xpose.msra.mxu0 0.0
    %805 = vmatprep.subr.mxu0 0.0
    %806 = vmatpush2.xpose.msra.mxu0 0.0
    %807 = vmatprep.subr.mxu0 0.0
    %808 = vmatpush2.xpose.msra.mxu0 0.0
    %809 = vmatprep.mubr.f32.mxu0 0.0
    %810 = vmatmul.mubr.f32.gmra.mxu0 %v741
    %v811 = vpop.f32.mrf.mxu0
    %v812 = vadd.f32 0.0, %v811
    %v813 = vpop.f32.mrf.mxu0
    %814 = vdwg.mxu0
    %v815 = vmul.f32 %v812, 0.5
    %v816 = vadd.f32 %v815, %v118
    %v817 = vsel %vm303, %v816, -inf
    %818 = vmax.xlane.f32.xlu0 %v817
    %v819 = vpop.xlane.xlu0 %818
    %v820 = vsub.f32 %v816, %v819
    %v821 = vmul.f32 %v820, 1.442695
    %v822 = vpow.pop %v821
    %v823 = vsel %vm303, %v822, 0.0
    %824 = vadd.xlane.f32.xlu0 %v823
    %v825 = vpop.xlane.xlu0 %824
    %v826 = vrcp.pop %v825
    %v827 = vmul.f32 %v822, %v826
    %828 = vrot.lane.b32.xlu0 %v220, 52
    %v829 = vpop.permute.xlu0 %828
    %v832 = vsel %vm303, %v827, 0
    %834 = vmatprep.subr.mxu0 0.0
    %835 = vmatpush1.msra.mxu0 0.0
    %836 = vmatprep.subr.mxu0 0.0
    %837 = vmatpush1.msra.mxu0 0.0
    %838 = vmatprep.subr.mxu0 0.0
    %839 = vmatpush1.msra.mxu0 0.0
    %840 = vmatprep.subr.mxu0 0.0
    %841 = vmatpush1.msra.mxu0 0.0
    %842 = vmatprep.subr.mxu0 0.0
    %843 = vmatpush1.msra.mxu0 0.0
    %844 = vmatprep.subr.mxu0 0.0
    %845 = vmatpush1.msra.mxu0 0.0
    %846 = vmatprep.subr.mxu0 0.0
    %847 = vmatpush1.msra.mxu0 0.0
    %848 = vmatprep.subr.mxu0 0.0
    %849 = vmatpush1.msra.mxu0 0.0
    %850 = vmatprep.subr.mxu0 0.0
    %851 = vmatpush1.msra.mxu0 0.0
    %852 = vmatprep.subr.mxu0 0.0
    %853 = vmatpush1.msra.mxu0 0.0
    %854 = vmatprep.subr.mxu0 0.0
    %855 = vmatpush1.msra.mxu0 0.0
    %856 = vmatprep.subr.mxu0 0.0
    %857 = vmatpush1.msra.mxu0 0.0
    %858 = vmatprep.subr.mxu0 0.0
    %859 = vmatpush1.msra.mxu0 0.0
    %860 = vmatprep.subr.mxu0 0.0
    %861 = vmatpush1.msra.mxu0 0.0
    %862 = vmatprep.subr.mxu0 0.0
    %863 = vmatpush1.msra.mxu0 0.0
    %864 = vmatprep.subr.mxu0 0.0
    %865 = vmatpush1.msra.mxu0 %v829
    %866 = vmatprep.subr.mxu0 0.0
    %867 = vmatpush2.msra.mxu0 0.0
    %868 = vmatprep.subr.mxu0 0.0
    %869 = vmatpush2.msra.mxu0 0.0
    %870 = vmatprep.subr.mxu0 0.0
    %871 = vmatpush2.msra.mxu0 0.0
    %872 = vmatprep.subr.mxu0 0.0
    %873 = vmatpush2.msra.mxu0 0.0
    %874 = vmatprep.subr.mxu0 0.0
    %875 = vmatpush2.msra.mxu0 0.0
    %876 = vmatprep.subr.mxu0 0.0
    %877 = vmatpush2.msra.mxu0 0.0
    %878 = vmatprep.subr.mxu0 0.0
    %879 = vmatpush2.msra.mxu0 0.0
    %880 = vmatprep.subr.mxu0 0.0
    %881 = vmatpush2.msra.mxu0 0.0
    %882 = vmatprep.subr.mxu0 0.0
    %883 = vmatpush2.msra.mxu0 0.0
    %884 = vmatprep.subr.mxu0 0.0
    %885 = vmatpush2.msra.mxu0 0.0
    %886 = vmatprep.subr.mxu0 0.0
    %887 = vmatpush2.msra.mxu0 0.0
    %888 = vmatprep.subr.mxu0 0.0
    %889 = vmatpush2.msra.mxu0 0.0
    %890 = vmatprep.subr.mxu0 0.0
    %891 = vmatpush2.msra.mxu0 0.0
    %892 = vmatprep.subr.mxu0 0.0
    %893 = vmatpush2.msra.mxu0 0.0
    %894 = vmatprep.subr.mxu0 0.0
    %895 = vmatpush2.msra.mxu0 0.0
    %896 = vmatprep.subr.mxu0 0.0
    %897 = vmatpush2.msra.mxu0 0.0
    %898 = vmatprep.mubr.f32.mxu0 0.0
    %899 = vmatmul.mubr.f32.gmra.mxu0 %v832
    %v900 = vpop.f32.mrf.mxu0
    %v901 = vadd.f32 0.0, %v900
    %v902 = vpop.f32.mrf.mxu0
    %903 = vdwg.mxu0
    %904 = vrot.lane.b32.xlu0 %v827, 124
    %v905 = vpop.permute.xlu0 %904
    %v907 = vadd.f32 %v827, %v905
    %908 = vrot.lane.b32.xlu0 %v220, 112
    %v909 = vpop.permute.xlu0 %908
    %910 = vrot.lane.b32.xlu0 %v220, 80
    %v911 = vpop.permute.xlu0 %910
    %v912 = vsel %vm226, %v909, 0
    %v914 = vsel %vm226, %v911, 0
    %916 = vmatprep.subr.mxu0 0.0
    %917 = vmatpush1.xpose.msra.mxu0 0.0
    %918 = vmatprep.subr.mxu0 0.0
    %919 = vmatpush1.xpose.msra.mxu0 0.0
    %920 = vmatprep.subr.mxu0 0.0
    %921 = vmatpush1.xpose.msra.mxu0 0.0
    %922 = vmatprep.subr.mxu0 0.0
    %923 = vmatpush1.xpose.msra.mxu0 0.0
    %924 = vmatprep.subr.mxu0 0.0
    %925 = vmatpush1.xpose.msra.mxu0 0.0
    %926 = vmatprep.subr.mxu0 0.0
    %927 = vmatpush1.xpose.msra.mxu0 0.0
    %928 = vmatprep.subr.mxu0 0.0
    %929 = vmatpush1.xpose.msra.mxu0 0.0
    %930 = vmatprep.subr.mxu0 0.0
    %931 = vmatpush1.xpose.msra.mxu0 0.0
    %932 = vmatprep.subr.mxu0 0.0
    %933 = vmatpush1.xpose.msra.mxu0 0.0
    %934 = vmatprep.subr.mxu0 0.0
    %935 = vmatpush1.xpose.msra.mxu0 0.0
    %936 = vmatprep.subr.mxu0 0.0
    %937 = vmatpush1.xpose.msra.mxu0 0.0
    %938 = vmatprep.subr.mxu0 0.0
    %939 = vmatpush1.xpose.msra.mxu0 0.0
    %940 = vmatprep.subr.mxu0 0.0
    %941 = vmatpush1.xpose.msra.mxu0 0.0
    %942 = vmatprep.subr.mxu0 0.0
    %943 = vmatpush1.xpose.msra.mxu0 0.0
    %944 = vmatprep.subr.mxu0 0.0
    %945 = vmatpush1.xpose.msra.mxu0 0.0
    %946 = vmatprep.subr.mxu0 0.0
    %947 = vmatpush1.xpose.msra.mxu0 %v914
    %948 = vmatprep.subr.mxu0 0.0
    %949 = vmatpush2.xpose.msra.mxu0 0.0
    %950 = vmatprep.subr.mxu0 0.0
    %951 = vmatpush2.xpose.msra.mxu0 0.0
    %952 = vmatprep.subr.mxu0 0.0
    %953 = vmatpush2.xpose.msra.mxu0 0.0
    %954 = vmatprep.subr.mxu0 0.0
    %955 = vmatpush2.xpose.msra.mxu0 0.0
    %956 = vmatprep.subr.mxu0 0.0
    %957 = vmatpush2.xpose.msra.mxu0 0.0
    %958 = vmatprep.subr.mxu0 0.0
    %959 = vmatpush2.xpose.msra.mxu0 0.0
    %960 = vmatprep.subr.mxu0 0.0
    %961 = vmatpush2.xpose.msra.mxu0 0.0
    %962 = vmatprep.subr.mxu0 0.0
    %963 = vmatpush2.xpose.msra.mxu0 0.0
    %964 = vmatprep.subr.mxu0 0.0
    %965 = vmatpush2.xpose.msra.mxu0 0.0
    %966 = vmatprep.subr.mxu0 0.0
    %967 = vmatpush2.xpose.msra.mxu0 0.0
    %968 = vmatprep.subr.mxu0 0.0
    %969 = vmatpush2.xpose.msra.mxu0 0.0
    %970 = vmatprep.subr.mxu0 0.0
    %971 = vmatpush2.xpose.msra.mxu0 0.0
    %972 = vmatprep.subr.mxu0 0.0
    %973 = vmatpush2.xpose.msra.mxu0 0.0
    %974 = vmatprep.subr.mxu0 0.0
    %975 = vmatpush2.xpose.msra.mxu0 0.0
    %976 = vmatprep.subr.mxu0 0.0
    %977 = vmatpush2.xpose.msra.mxu0 0.0
    %978 = vmatprep.subr.mxu0 0.0
    %979 = vmatpush2.xpose.msra.mxu0 0.0
    %980 = vmatprep.mubr.f32.mxu0 0.0
    %981 = vmatmul.mubr.f32.gmra.mxu0 %v912
    %v982 = vpop.f32.mrf.mxu0
    %v983 = vadd.f32 0.0, %v982
    %v984 = vpop.f32.mrf.mxu0
    %985 = vdwg.mxu0
    %v986 = vmul.f32 %v983, 0.5
    %v987 = vadd.f32 %v986, %v118
    %v988 = vsel %vm303, %v987, -inf
    %989 = vmax.xlane.f32.xlu0 %v988
    %v990 = vpop.xlane.xlu0 %989
    %v991 = vsub.f32 %v987, %v990
    %v992 = vmul.f32 %v991, 1.442695
    %v993 = vpow.pop %v992
    %v994 = vsel %vm303, %v993, 0.0
    %995 = vadd.xlane.f32.xlu0 %v994
    %v996 = vpop.xlane.xlu0 %995
    %v997 = vrcp.pop %v996
    %v998 = vmul.f32 %v993, %v997
    %999 = vrot.lane.b32.xlu0 %v220, 48
    %v1000 = vpop.permute.xlu0 %999
    %v1003 = vsel %vm303, %v998, 0
    %1005 = vmatprep.subr.mxu0 0.0
    %1006 = vmatpush1.msra.mxu0 0.0
    %1007 = vmatprep.subr.mxu0 0.0
    %1008 = vmatpush1.msra.mxu0 0.0
    %1009 = vmatprep.subr.mxu0 0.0
    %1010 = vmatpush1.msra.mxu0 0.0
    %1011 = vmatprep.subr.mxu0 0.0
    %1012 = vmatpush1.msra.mxu0 0.0
    %1013 = vmatprep.subr.mxu0 0.0
    %1014 = vmatpush1.msra.mxu0 0.0
    %1015 = vmatprep.subr.mxu0 0.0
    %1016 = vmatpush1.msra.mxu0 0.0
    %1017 = vmatprep.subr.mxu0 0.0
    %1018 = vmatpush1.msra.mxu0 0.0
    %1019 = vmatprep.subr.mxu0 0.0
    %1020 = vmatpush1.msra.mxu0 0.0
    %1021 = vmatprep.subr.mxu0 0.0
    %1022 = vmatpush1.msra.mxu0 0.0
    %1023 = vmatprep.subr.mxu0 0.0
    %1024 = vmatpush1.msra.mxu0 0.0
    %1025 = vmatprep.subr.mxu0 0.0
    %1026 = vmatpush1.msra.mxu0 0.0
    %1027 = vmatprep.subr.mxu0 0.0
    %1028 = vmatpush1.msra.mxu0 0.0
    %1029 = vmatprep.subr.mxu0 0.0
    %1030 = vmatpush1.msra.mxu0 0.0
    %1031 = vmatprep.subr.mxu0 0.0
    %1032 = vmatpush1.msra.mxu0 0.0
    %1033 = vmatprep.subr.mxu0 0.0
    %1034 = vmatpush1.msra.mxu0 0.0
    %1035 = vmatprep.subr.mxu0 0.0
    %1036 = vmatpush1.msra.mxu0 %v1000
    %1037 = vmatprep.subr.mxu0 0.0
    %1038 = vmatpush2.msra.mxu0 0.0
    %1039 = vmatprep.subr.mxu0 0.0
    %1040 = vmatpush2.msra.mxu0 0.0
    %1041 = vmatprep.subr.mxu0 0.0
    %1042 = vmatpush2.msra.mxu0 0.0
    %1043 = vmatprep.subr.mxu0 0.0
    %1044 = vmatpush2.msra.mxu0 0.0
    %1045 = vmatprep.subr.mxu0 0.0
    %1046 = vmatpush2.msra.mxu0 0.0
    %1047 = vmatprep.subr.mxu0 0.0
    %1048 = vmatpush2.msra.mxu0 0.0
    %1049 = vmatprep.subr.mxu0 0.0
    %1050 = vmatpush2.msra.mxu0 0.0
    %1051 = vmatprep.subr.mxu0 0.0
    %1052 = vmatpush2.msra.mxu0 0.0
    %1053 = vmatprep.subr.mxu0 0.0
    %1054 = vmatpush2.msra.mxu0 0.0
    %1055 = vmatprep.subr.mxu0 0.0
    %1056 = vmatpush2.msra.mxu0 0.0
    %1057 = vmatprep.subr.mxu0 0.0
    %1058 = vmatpush2.msra.mxu0 0.0
    %1059 = vmatprep.subr.mxu0 0.0
    %1060 = vmatpush2.msra.mxu0 0.0
    %1061 = vmatprep.subr.mxu0 0.0
    %1062 = vmatpush2.msra.mxu0 0.0
    %1063 = vmatprep.subr.mxu0 0.0
    %1064 = vmatpush2.msra.mxu0 0.0
    %1065 = vmatprep.subr.mxu0 0.0
    %1066 = vmatpush2.msra.mxu0 0.0
    %1067 = vmatprep.subr.mxu0 0.0
    %1068 = vmatpush2.msra.mxu0 0.0
    %1069 = vmatprep.mubr.f32.mxu0 0.0
    %1070 = vmatmul.mubr.f32.gmra.mxu0 %v1003
    %v1071 = vpop.f32.mrf.mxu0
    %v1072 = vadd.f32 0.0, %v1071
    %v1073 = vpop.f32.mrf.mxu0
    %1074 = vdwg.mxu0
    %1075 = vrot.lane.b32.xlu0 %v998, 124
    %v1076 = vpop.permute.xlu0 %1075
    %v1078 = vadd.f32 %v998, %v1076
    %1079 = vrot.lane.b32.xlu0 %v220, 108
    %v1080 = vpop.permute.xlu0 %1079
    %1081 = vrot.lane.b32.xlu0 %v220, 76
    %v1082 = vpop.permute.xlu0 %1081
    %v1083 = vsel %vm226, %v1080, 0
    %v1085 = vsel %vm226, %v1082, 0
    %1087 = vmatprep.subr.mxu0 0.0
    %1088 = vmatpush1.xpose.msra.mxu0 0.0
    %1089 = vmatprep.subr.mxu0 0.0
    %1090 = vmatpush1.xpose.msra.mxu0 0.0
    %1091 = vmatprep.subr.mxu0 0.0
    %1092 = vmatpush1.xpose.msra.mxu0 0.0
    %1093 = vmatprep.subr.mxu0 0.0
    %1094 = vmatpush1.xpose.msra.mxu0 0.0
    %1095 = vmatprep.subr.mxu0 0.0
    %1096 = vmatpush1.xpose.msra.mxu0 0.0
    %1097 = vmatprep.subr.mxu0 0.0
    %1098 = vmatpush1.xpose.msra.mxu0 0.0
    %1099 = vmatprep.subr.mxu0 0.0
    %1100 = vmatpush1.xpose.msra.mxu0 0.0
    %1101 = vmatprep.subr.mxu0 0.0
    %1102 = vmatpush1.xpose.msra.mxu0 0.0
    %1103 = vmatprep.subr.mxu0 0.0
    %1104 = vmatpush1.xpose.msra.mxu0 0.0
    %1105 = vmatprep.subr.mxu0 0.0
    %1106 = vmatpush1.xpose.msra.mxu0 0.0
    %1107 = vmatprep.subr.mxu0 0.0
    %1108 = vmatpush1.xpose.msra.mxu0 0.0
    %1109 = vmatprep.subr.mxu0 0.0
    %1110 = vmatpush1.xpose.msra.mxu0 0.0
    %1111 = vmatprep.subr.mxu0 0.0
    %1112 = vmatpush1.xpose.msra.mxu0 0.0
    %1113 = vmatprep.subr.mxu0 0.0
    %1114 = vmatpush1.xpose.msra.mxu0 0.0
    %1115 = vmatprep.subr.mxu0 0.0
    %1116 = vmatpush1.xpose.msra.mxu0 0.0
    %1117 = vmatprep.subr.mxu0 0.0
    %1118 = vmatpush1.xpose.msra.mxu0 %v1085
    %1119 = vmatprep.subr.mxu0 0.0
    %1120 = vmatpush2.xpose.msra.mxu0 0.0
    %1121 = vmatprep.subr.mxu0 0.0
    %1122 = vmatpush2.xpose.msra.mxu0 0.0
    %1123 = vmatprep.subr.mxu0 0.0
    %1124 = vmatpush2.xpose.msra.mxu0 0.0
    %1125 = vmatprep.subr.mxu0 0.0
    %1126 = vmatpush2.xpose.msra.mxu0 0.0
    %1127 = vmatprep.subr.mxu0 0.0
    %1128 = vmatpush2.xpose.msra.mxu0 0.0
    %1129 = vmatprep.subr.mxu0 0.0
    %1130 = vmatpush2.xpose.msra.mxu0 0.0
    %1131 = vmatprep.subr.mxu0 0.0
    %1132 = vmatpush2.xpose.msra.mxu0 0.0
    %1133 = vmatprep.subr.mxu0 0.0
    %1134 = vmatpush2.xpose.msra.mxu0 0.0
    %1135 = vmatprep.subr.mxu0 0.0
    %1136 = vmatpush2.xpose.msra.mxu0 0.0
    %1137 = vmatprep.subr.mxu0 0.0
    %1138 = vmatpush2.xpose.msra.mxu0 0.0
    %1139 = vmatprep.subr.mxu0 0.0
    %1140 = vmatpush2.xpose.msra.mxu0 0.0
    %1141 = vmatprep.subr.mxu0 0.0
    %1142 = vmatpush2.xpose.msra.mxu0 0.0
    %1143 = vmatprep.subr.mxu0 0.0
    %1144 = vmatpush2.xpose.msra.mxu0 0.0
    %1145 = vmatprep.subr.mxu0 0.0
    %1146 = vmatpush2.xpose.msra.mxu0 0.0
    %1147 = vmatprep.subr.mxu0 0.0
    %1148 = vmatpush2.xpose.msra.mxu0 0.0
    %1149 = vmatprep.subr.mxu0 0.0
    %1150 = vmatpush2.xpose.msra.mxu0 0.0
    %1151 = vmatprep.mubr.f32.mxu0 0.0
    %1152 = vmatmul.mubr.f32.gmra.mxu0 %v1083
    %v1153 = vpop.f32.mrf.mxu0
    %v1154 = vadd.f32 0.0, %v1153
    %v1155 = vpop.f32.mrf.mxu0
    %1156 = vdwg.mxu0
    %v1157 = vmul.f32 %v1154, 0.5
    %v1158 = vadd.f32 %v1157, %v118
    %v1159 = vsel %vm303, %v1158, -inf
    %1160 = vmax.xlane.f32.xlu0 %v1159
    %v1161 = vpop.xlane.xlu0 %1160
    %v1162 = vsub.f32 %v1158, %v1161
    %v1163 = vmul.f32 %v1162, 1.442695
    %v1164 = vpow.pop %v1163
    %v1165 = vsel %vm303, %v1164, 0.0
    %1166 = vadd.xlane.f32.xlu0 %v1165
    %v1167 = vpop.xlane.xlu0 %1166
    %v1168 = vrcp.pop %v1167
    %v1169 = vmul.f32 %v1164, %v1168
    %1170 = vrot.lane.b32.xlu0 %v220, 44
    %v1171 = vpop.permute.xlu0 %1170
    %v1174 = vsel %vm303, %v1169, 0
    %1176 = vmatprep.subr.mxu0 0.0
    %1177 = vmatpush1.msra.mxu0 0.0
    %1178 = vmatprep.subr.mxu0 0.0
    %1179 = vmatpush1.msra.mxu0 0.0
    %1180 = vmatprep.subr.mxu0 0.0
    %1181 = vmatpush1.msra.mxu0 0.0
    %1182 = vmatprep.subr.mxu0 0.0
    %1183 = vmatpush1.msra.mxu0 0.0
    %1184 = vmatprep.subr.mxu0 0.0
    %1185 = vmatpush1.msra.mxu0 0.0
    %1186 = vmatprep.subr.mxu0 0.0
    %1187 = vmatpush1.msra.mxu0 0.0
    %1188 = vmatprep.subr.mxu0 0.0
    %1189 = vmatpush1.msra.mxu0 0.0
    %1190 = vmatprep.subr.mxu0 0.0
    %1191 = vmatpush1.msra.mxu0 0.0
    %1192 = vmatprep.subr.mxu0 0.0
    %1193 = vmatpush1.msra.mxu0 0.0
    %1194 = vmatprep.subr.mxu0 0.0
    %1195 = vmatpush1.msra.mxu0 0.0
    %1196 = vmatprep.subr.mxu0 0.0
    %1197 = vmatpush1.msra.mxu0 0.0
    %1198 = vmatprep.subr.mxu0 0.0
    %1199 = vmatpush1.msra.mxu0 0.0
    %1200 = vmatprep.subr.mxu0 0.0
    %1201 = vmatpush1.msra.mxu0 0.0
    %1202 = vmatprep.subr.mxu0 0.0
    %1203 = vmatpush1.msra.mxu0 0.0
    %1204 = vmatprep.subr.mxu0 0.0
    %1205 = vmatpush1.msra.mxu0 0.0
    %1206 = vmatprep.subr.mxu0 0.0
    %1207 = vmatpush1.msra.mxu0 %v1171
    %1208 = vmatprep.subr.mxu0 0.0
    %1209 = vmatpush2.msra.mxu0 0.0
    %1210 = vmatprep.subr.mxu0 0.0
    %1211 = vmatpush2.msra.mxu0 0.0
    %1212 = vmatprep.subr.mxu0 0.0
    %1213 = vmatpush2.msra.mxu0 0.0
    %1214 = vmatprep.subr.mxu0 0.0
    %1215 = vmatpush2.msra.mxu0 0.0
    %1216 = vmatprep.subr.mxu0 0.0
    %1217 = vmatpush2.msra.mxu0 0.0
    %1218 = vmatprep.subr.mxu0 0.0
    %1219 = vmatpush2.msra.mxu0 0.0
    %1220 = vmatprep.subr.mxu0 0.0
    %1221 = vmatpush2.msra.mxu0 0.0
    %1222 = vmatprep.subr.mxu0 0.0
    %1223 = vmatpush2.msra.mxu0 0.0
    %1224 = vmatprep.subr.mxu0 0.0
    %1225 = vmatpush2.msra.mxu0 0.0
    %1226 = vmatprep.subr.mxu0 0.0
    %1227 = vmatpush2.msra.mxu0 0.0
    %1228 = vmatprep.subr.mxu0 0.0
    %1229 = vmatpush2.msra.mxu0 0.0
    %1230 = vmatprep.subr.mxu0 0.0
    %1231 = vmatpush2.msra.mxu0 0.0
    %1232 = vmatprep.subr.mxu0 0.0
    %1233 = vmatpush2.msra.mxu0 0.0
    %1234 = vmatprep.subr.mxu0 0.0
    %1235 = vmatpush2.msra.mxu0 0.0
    %1236 = vmatprep.subr.mxu0 0.0
    %1237 = vmatpush2.msra.mxu0 0.0
    %1238 = vmatprep.subr.mxu0 0.0
    %1239 = vmatpush2.msra.mxu0 0.0
    %1240 = vmatprep.mubr.f32.mxu0 0.0
    %1241 = vmatmul.mubr.f32.gmra.mxu0 %v1174
    %v1242 = vpop.f32.mrf.mxu0
    %v1243 = vadd.f32 0.0, %v1242
    %v1244 = vpop.f32.mrf.mxu0
    %1245 = vdwg.mxu0
    %1246 = vrot.lane.b32.xlu0 %v1169, 124
    %v1247 = vpop.permute.xlu0 %1246
    %v1249 = vadd.f32 %v1169, %v1247
    %1250 = vrot.lane.b32.xlu0 %v220, 104
    %v1251 = vpop.permute.xlu0 %1250
    %1252 = vrot.lane.b32.xlu0 %v220, 72
    %v1253 = vpop.permute.xlu0 %1252
    %v1254 = vsel %vm226, %v1251, 0
    %v1256 = vsel %vm226, %v1253, 0
    %1258 = vmatprep.subr.mxu0 0.0
    %1259 = vmatpush1.xpose.msra.mxu0 0.0
    %1260 = vmatprep.subr.mxu0 0.0
    %1261 = vmatpush1.xpose.msra.mxu0 0.0
    %1262 = vmatprep.subr.mxu0 0.0
    %1263 = vmatpush1.xpose.msra.mxu0 0.0
    %1264 = vmatprep.subr.mxu0 0.0
    %1265 = vmatpush1.xpose.msra.mxu0 0.0
    %1266 = vmatprep.subr.mxu0 0.0
    %1267 = vmatpush1.xpose.msra.mxu0 0.0
    %1268 = vmatprep.subr.mxu0 0.0
    %1269 = vmatpush1.xpose.msra.mxu0 0.0
    %1270 = vmatprep.subr.mxu0 0.0
    %1271 = vmatpush1.xpose.msra.mxu0 0.0
    %1272 = vmatprep.subr.mxu0 0.0
    %1273 = vmatpush1.xpose.msra.mxu0 0.0
    %1274 = vmatprep.subr.mxu0 0.0
    %1275 = vmatpush1.xpose.msra.mxu0 0.0
    %1276 = vmatprep.subr.mxu0 0.0
    %1277 = vmatpush1.xpose.msra.mxu0 0.0
    %1278 = vmatprep.subr.mxu0 0.0
    %1279 = vmatpush1.xpose.msra.mxu0 0.0
    %1280 = vmatprep.subr.mxu0 0.0
    %1281 = vmatpush1.xpose.msra.mxu0 0.0
    %1282 = vmatprep.subr.mxu0 0.0
    %1283 = vmatpush1.xpose.msra.mxu0 0.0
    %1284 = vmatprep.subr.mxu0 0.0
    %1285 = vmatpush1.xpose.msra.mxu0 0.0
    %1286 = vmatprep.subr.mxu0 0.0
    %1287 = vmatpush1.xpose.msra.mxu0 0.0
    %1288 = vmatprep.subr.mxu0 0.0
    %1289 = vmatpush1.xpose.msra.mxu0 %v1256
    %1290 = vmatprep.subr.mxu0 0.0
    %1291 = vmatpush2.xpose.msra.mxu0 0.0
    %1292 = vmatprep.subr.mxu0 0.0
    %1293 = vmatpush2.xpose.msra.mxu0 0.0
    %1294 = vmatprep.subr.mxu0 0.0
    %1295 = vmatpush2.xpose.msra.mxu0 0.0
    %1296 = vmatprep.subr.mxu0 0.0
    %1297 = vmatpush2.xpose.msra.mxu0 0.0
    %1298 = vmatprep.subr.mxu0 0.0
    %1299 = vmatpush2.xpose.msra.mxu0 0.0
    %1300 = vmatprep.subr.mxu0 0.0
    %1301 = vmatpush2.xpose.msra.mxu0 0.0
    %1302 = vmatprep.subr.mxu0 0.0
    %1303 = vmatpush2.xpose.msra.mxu0 0.0
    %1304 = vmatprep.subr.mxu0 0.0
    %1305 = vmatpush2.xpose.msra.mxu0 0.0
    %1306 = vmatprep.subr.mxu0 0.0
    %1307 = vmatpush2.xpose.msra.mxu0 0.0
    %1308 = vmatprep.subr.mxu0 0.0
    %1309 = vmatpush2.xpose.msra.mxu0 0.0
    %1310 = vmatprep.subr.mxu0 0.0
    %1311 = vmatpush2.xpose.msra.mxu0 0.0
    %1312 = vmatprep.subr.mxu0 0.0
    %1313 = vmatpush2.xpose.msra.mxu0 0.0
    %1314 = vmatprep.subr.mxu0 0.0
    %1315 = vmatpush2.xpose.msra.mxu0 0.0
    %1316 = vmatprep.subr.mxu0 0.0
    %1317 = vmatpush2.xpose.msra.mxu0 0.0
    %1318 = vmatprep.subr.mxu0 0.0
    %1319 = vmatpush2.xpose.msra.mxu0 0.0
    %1320 = vmatprep.subr.mxu0 0.0
    %1321 = vmatpush2.xpose.msra.mxu0 0.0
    %1322 = vmatprep.mubr.f32.mxu0 0.0
    %1323 = vmatmul.mubr.f32.gmra.mxu0 %v1254
    %v1324 = vpop.f32.mrf.mxu0
    %v1325 = vadd.f32 0.0, %v1324
    %v1326 = vpop.f32.mrf.mxu0
    %1327 = vdwg.mxu0
    %v1328 = vmul.f32 %v1325, 0.5
    %v1329 = vadd.f32 %v1328, %v118
    %v1330 = vsel %vm303, %v1329, -inf
    %1331 = vmax.xlane.f32.xlu0 %v1330
    %v1332 = vpop.xlane.xlu0 %1331
    %v1333 = vsub.f32 %v1329, %v1332
    %v1334 = vmul.f32 %v1333, 1.442695
    %v1335 = vpow.pop %v1334
    %v1336 = vsel %vm303, %v1335, 0.0
    %1337 = vadd.xlane.f32.xlu0 %v1336
    %v1338 = vpop.xlane.xlu0 %1337
    %v1339 = vrcp.pop %v1338
    %v1340 = vmul.f32 %v1335, %v1339
    %1341 = vrot.lane.b32.xlu0 %v220, 40
    %v1342 = vpop.permute.xlu0 %1341
    %v1345 = vsel %vm303, %v1340, 0
    %1347 = vmatprep.subr.mxu0 0.0
    %1348 = vmatpush1.msra.mxu0 0.0
    %1349 = vmatprep.subr.mxu0 0.0
    %1350 = vmatpush1.msra.mxu0 0.0
    %1351 = vmatprep.subr.mxu0 0.0
    %1352 = vmatpush1.msra.mxu0 0.0
    %1353 = vmatprep.subr.mxu0 0.0
    %1354 = vmatpush1.msra.mxu0 0.0
    %1355 = vmatprep.subr.mxu0 0.0
    %1356 = vmatpush1.msra.mxu0 0.0
    %1357 = vmatprep.subr.mxu0 0.0
    %1358 = vmatpush1.msra.mxu0 0.0
    %1359 = vmatprep.subr.mxu0 0.0
    %1360 = vmatpush1.msra.mxu0 0.0
    %1361 = vmatprep.subr.mxu0 0.0
    %1362 = vmatpush1.msra.mxu0 0.0
    %1363 = vmatprep.subr.mxu0 0.0
    %1364 = vmatpush1.msra.mxu0 0.0
    %1365 = vmatprep.subr.mxu0 0.0
    %1366 = vmatpush1.msra.mxu0 0.0
    %1367 = vmatprep.subr.mxu0 0.0
    %1368 = vmatpush1.msra.mxu0 0.0
    %1369 = vmatprep.subr.mxu0 0.0
    %1370 = vmatpush1.msra.mxu0 0.0
    %1371 = vmatprep.subr.mxu0 0.0
    %1372 = vmatpush1.msra.mxu0 0.0
    %1373 = vmatprep.subr.mxu0 0.0
    %1374 = vmatpush1.msra.mxu0 0.0
    %1375 = vmatprep.subr.mxu0 0.0
    %1376 = vmatpush1.msra.mxu0 0.0
    %1377 = vmatprep.subr.mxu0 0.0
    %1378 = vmatpush1.msra.mxu0 %v1342
    %1379 = vmatprep.subr.mxu0 0.0
    %1380 = vmatpush2.msra.mxu0 0.0
    %1381 = vmatprep.subr.mxu0 0.0
    %1382 = vmatpush2.msra.mxu0 0.0
    %1383 = vmatprep.subr.mxu0 0.0
    %1384 = vmatpush2.msra.mxu0 0.0
    %1385 = vmatprep.subr.mxu0 0.0
    %1386 = vmatpush2.msra.mxu0 0.0
    %1387 = vmatprep.subr.mxu0 0.0
    %1388 = vmatpush2.msra.mxu0 0.0
    %1389 = vmatprep.subr.mxu0 0.0
    %1390 = vmatpush2.msra.mxu0 0.0
    %1391 = vmatprep.subr.mxu0 0.0
    %1392 = vmatpush2.msra.mxu0 0.0
    %1393 = vmatprep.subr.mxu0 0.0
    %1394 = vmatpush2.msra.mxu0 0.0
    %1395 = vmatprep.subr.mxu0 0.0
    %1396 = vmatpush2.msra.mxu0 0.0
    %1397 = vmatprep.subr.mxu0 0.0
    %1398 = vmatpush2.msra.mxu0 0.0
    %1399 = vmatprep.subr.mxu0 0.0
    %1400 = vmatpush2.msra.mxu0 0.0
    %1401 = vmatprep.subr.mxu0 0.0
    %1402 = vmatpush2.msra.mxu0 0.0
    %1403 = vmatprep.subr.mxu0 0.0
    %1404 = vmatpush2.msra.mxu0 0.0
    %1405 = vmatprep.subr.mxu0 0.0
    %1406 = vmatpush2.msra.mxu0 0.0
    %1407 = vmatprep.subr.mxu0 0.0
    %1408 = vmatpush2.msra.mxu0 0.0
    %1409 = vmatprep.subr.mxu0 0.0
    %1410 = vmatpush2.msra.mxu0 0.0
    %1411 = vmatprep.mubr.f32.mxu0 0.0
    %1412 = vmatmul.mubr.f32.gmra.mxu0 %v1345
    %v1413 = vpop.f32.mrf.mxu0
    %v1414 = vadd.f32 0.0, %v1413
    %v1415 = vpop.f32.mrf.mxu0
    %1416 = vdwg.mxu0
    %1417 = vrot.lane.b32.xlu0 %v1340, 124
    %v1418 = vpop.permute.xlu0 %1417
    %v1420 = vadd.f32 %v1340, %v1418
    %1421 = vrot.lane.b32.xlu0 %v220, 100
    %v1422 = vpop.permute.xlu0 %1421
    %1423 = vrot.lane.b32.xlu0 %v220, 68
    %v1424 = vpop.permute.xlu0 %1423
    %v1425 = vsel %vm226, %v1422, 0
    %v1427 = vsel %vm226, %v1424, 0
    %1429 = vmatprep.subr.mxu0 0.0
    %1430 = vmatpush1.xpose.msra.mxu0 0.0
    %1431 = vmatprep.subr.mxu0 0.0
    %1432 = vmatpush1.xpose.msra.mxu0 0.0
    %1433 = vmatprep.subr.mxu0 0.0
    %1434 = vmatpush1.xpose.msra.mxu0 0.0
    %1435 = vmatprep.subr.mxu0 0.0
    %1436 = vmatpush1.xpose.msra.mxu0 0.0
    %1437 = vmatprep.subr.mxu0 0.0
    %1438 = vmatpush1.xpose.msra.mxu0 0.0
    %1439 = vmatprep.subr.mxu0 0.0
    %1440 = vmatpush1.xpose.msra.mxu0 0.0
    %1441 = vmatprep.subr.mxu0 0.0
    %1442 = vmatpush1.xpose.msra.mxu0 0.0
    %1443 = vmatprep.subr.mxu0 0.0
    %1444 = vmatpush1.xpose.msra.mxu0 0.0
    %1445 = vmatprep.subr.mxu0 0.0
    %1446 = vmatpush1.xpose.msra.mxu0 0.0
    %1447 = vmatprep.subr.mxu0 0.0
    %1448 = vmatpush1.xpose.msra.mxu0 0.0
    %1449 = vmatprep.subr.mxu0 0.0
    %1450 = vmatpush1.xpose.msra.mxu0 0.0
    %1451 = vmatprep.subr.mxu0 0.0
    %1452 = vmatpush1.xpose.msra.mxu0 0.0
    %1453 = vmatprep.subr.mxu0 0.0
    %1454 = vmatpush1.xpose.msra.mxu0 0.0
    %1455 = vmatprep.subr.mxu0 0.0
    %1456 = vmatpush1.xpose.msra.mxu0 0.0
    %1457 = vmatprep.subr.mxu0 0.0
    %1458 = vmatpush1.xpose.msra.mxu0 0.0
    %1459 = vmatprep.subr.mxu0 0.0
    %1460 = vmatpush1.xpose.msra.mxu0 %v1427
    %1461 = vmatprep.subr.mxu0 0.0
    %1462 = vmatpush2.xpose.msra.mxu0 0.0
    %1463 = vmatprep.subr.mxu0 0.0
    %1464 = vmatpush2.xpose.msra.mxu0 0.0
    %1465 = vmatprep.subr.mxu0 0.0
    %1466 = vmatpush2.xpose.msra.mxu0 0.0
    %1467 = vmatprep.subr.mxu0 0.0
    %1468 = vmatpush2.xpose.msra.mxu0 0.0
    %1469 = vmatprep.subr.mxu0 0.0
    %1470 = vmatpush2.xpose.msra.mxu0 0.0
    %1471 = vmatprep.subr.mxu0 0.0
    %1472 = vmatpush2.xpose.msra.mxu0 0.0
    %1473 = vmatprep.subr.mxu0 0.0
    %1474 = vmatpush2.xpose.msra.mxu0 0.0
    %1475 = vmatprep.subr.mxu0 0.0
    %1476 = vmatpush2.xpose.msra.mxu0 0.0
    %1477 = vmatprep.subr.mxu0 0.0
    %1478 = vmatpush2.xpose.msra.mxu0 0.0
    %1479 = vmatprep.subr.mxu0 0.0
    %1480 = vmatpush2.xpose.msra.mxu0 0.0
    %1481 = vmatprep.subr.mxu0 0.0
    %1482 = vmatpush2.xpose.msra.mxu0 0.0
    %1483 = vmatprep.subr.mxu0 0.0
    %1484 = vmatpush2.xpose.msra.mxu0 0.0
    %1485 = vmatprep.subr.mxu0 0.0
    %1486 = vmatpush2.xpose.msra.mxu0 0.0
    %1487 = vmatprep.subr.mxu0 0.0
    %1488 = vmatpush2.xpose.msra.mxu0 0.0
    %1489 = vmatprep.subr.mxu0 0.0
    %1490 = vmatpush2.xpose.msra.mxu0 0.0
    %1491 = vmatprep.subr.mxu0 0.0
    %1492 = vmatpush2.xpose.msra.mxu0 0.0
    %1493 = vmatprep.mubr.f32.mxu0 0.0
    %1494 = vmatmul.mubr.f32.gmra.mxu0 %v1425
    %v1495 = vpop.f32.mrf.mxu0
    %v1496 = vadd.f32 0.0, %v1495
    %v1497 = vpop.f32.mrf.mxu0
    %1498 = vdwg.mxu0
    %v1499 = vmul.f32 %v1496, 0.5
    %v1500 = vadd.f32 %v1499, %v118
    %v1501 = vsel %vm303, %v1500, -inf
    %1502 = vmax.xlane.f32.xlu0 %v1501
    %v1503 = vpop.xlane.xlu0 %1502
    %v1504 = vsub.f32 %v1500, %v1503
    %v1505 = vmul.f32 %v1504, 1.442695
    %v1506 = vpow.pop %v1505
    %v1507 = vsel %vm303, %v1506, 0.0
    %1508 = vadd.xlane.f32.xlu0 %v1507
    %v1509 = vpop.xlane.xlu0 %1508
    %v1510 = vrcp.pop %v1509
    %v1511 = vmul.f32 %v1506, %v1510
    %1512 = vrot.lane.b32.xlu0 %v220, 36
    %v1513 = vpop.permute.xlu0 %1512
    %v1516 = vsel %vm303, %v1511, 0
    %1518 = vmatprep.subr.mxu0 0.0
    %1519 = vmatpush1.msra.mxu0 0.0
    %1520 = vmatprep.subr.mxu0 0.0
    %1521 = vmatpush1.msra.mxu0 0.0
    %1522 = vmatprep.subr.mxu0 0.0
    %1523 = vmatpush1.msra.mxu0 0.0
    %1524 = vmatprep.subr.mxu0 0.0
    %1525 = vmatpush1.msra.mxu0 0.0
    %1526 = vmatprep.subr.mxu0 0.0
    %1527 = vmatpush1.msra.mxu0 0.0
    %1528 = vmatprep.subr.mxu0 0.0
    %1529 = vmatpush1.msra.mxu0 0.0
    %1530 = vmatprep.subr.mxu0 0.0
    %1531 = vmatpush1.msra.mxu0 0.0
    %1532 = vmatprep.subr.mxu0 0.0
    %1533 = vmatpush1.msra.mxu0 0.0
    %1534 = vmatprep.subr.mxu0 0.0
    %1535 = vmatpush1.msra.mxu0 0.0
    %1536 = vmatprep.subr.mxu0 0.0
    %1537 = vmatpush1.msra.mxu0 0.0
    %1538 = vmatprep.subr.mxu0 0.0
    %1539 = vmatpush1.msra.mxu0 0.0
    %1540 = vmatprep.subr.mxu0 0.0
    %1541 = vmatpush1.msra.mxu0 0.0
    %1542 = vmatprep.subr.mxu0 0.0
    %1543 = vmatpush1.msra.mxu0 0.0
    %1544 = vmatprep.subr.mxu0 0.0
    %1545 = vmatpush1.msra.mxu0 0.0
    %1546 = vmatprep.subr.mxu0 0.0
    %1547 = vmatpush1.msra.mxu0 0.0
    %1548 = vmatprep.subr.mxu0 0.0
    %1549 = vmatpush1.msra.mxu0 %v1513
    %1550 = vmatprep.subr.mxu0 0.0
    %1551 = vmatpush2.msra.mxu0 0.0
    %1552 = vmatprep.subr.mxu0 0.0
    %1553 = vmatpush2.msra.mxu0 0.0
    %1554 = vmatprep.subr.mxu0 0.0
    %1555 = vmatpush2.msra.mxu0 0.0
    %1556 = vmatprep.subr.mxu0 0.0
    %1557 = vmatpush2.msra.mxu0 0.0
    %1558 = vmatprep.subr.mxu0 0.0
    %1559 = vmatpush2.msra.mxu0 0.0
    %1560 = vmatprep.subr.mxu0 0.0
    %1561 = vmatpush2.msra.mxu0 0.0
    %1562 = vmatprep.subr.mxu0 0.0
    %1563 = vmatpush2.msra.mxu0 0.0
    %1564 = vmatprep.subr.mxu0 0.0
    %1565 = vmatpush2.msra.mxu0 0.0
    %1566 = vmatprep.subr.mxu0 0.0
    %1567 = vmatpush2.msra.mxu0 0.0
    %1568 = vmatprep.subr.mxu0 0.0
    %1569 = vmatpush2.msra.mxu0 0.0
    %1570 = vmatprep.subr.mxu0 0.0
    %1571 = vmatpush2.msra.mxu0 0.0
    %1572 = vmatprep.subr.mxu0 0.0
    %1573 = vmatpush2.msra.mxu0 0.0
    %1574 = vmatprep.subr.mxu0 0.0
    %1575 = vmatpush2.msra.mxu0 0.0
    %1576 = vmatprep.subr.mxu0 0.0
    %1577 = vmatpush2.msra.mxu0 0.0
    %1578 = vmatprep.subr.mxu0 0.0
    %1579 = vmatpush2.msra.mxu0 0.0
    %1580 = vmatprep.subr.mxu0 0.0
    %1581 = vmatpush2.msra.mxu0 0.0
    %1582 = vmatprep.mubr.f32.mxu0 0.0
    %1583 = vmatmul.mubr.f32.gmra.mxu0 %v1516
    %v1584 = vpop.f32.mrf.mxu0
    %v1585 = vadd.f32 0.0, %v1584
    %v1586 = vpop.f32.mrf.mxu0
    %1587 = vdwg.mxu0
    %1588 = vrot.lane.b32.xlu0 %v1511, 124
    %v1589 = vpop.permute.xlu0 %1588
    %v1591 = vadd.f32 %v1511, %v1589
    %1593 = vrot.lane.b32.xlu0 %v559, 4
    %v1594 = vpop.permute.xlu0 %1593
    %1597 = vrot.lane.b32.xlu0 %v730, 8
    %v1598 = vpop.permute.xlu0 %1597
    %1601 = vrot.lane.b32.xlu0 %v901, 12
    %v1602 = vpop.permute.xlu0 %1601
    %1605 = vrot.lane.b32.xlu0 %v1072, 16
    %v1606 = vpop.permute.xlu0 %1605
    %1609 = vrot.lane.b32.xlu0 %v1243, 20
    %v1610 = vpop.permute.xlu0 %1609
    %1613 = vrot.lane.b32.xlu0 %v1414, 24
    %v1614 = vpop.permute.xlu0 %1613
    %1617 = vrot.lane.b32.xlu0 %v1585, 28
    %v1618 = vpop.permute.xlu0 %1617
    %v1620 = vsel %vm226, %v388, %v1594
    %v1621 = vsel %vm303, %v1620, %v1598
    %vm1622 = vcmask 97280
    %v1623 = vsel %vm1622, %v1621, %v1602
    %vm1624 = vcmask 130048
    %v1625 = vsel %vm1624, %v1623, %v1606
    %vm1626 = vcmask 162816
    %v1627 = vsel %vm1626, %v1625, %v1610
    %vm1628 = vcmask 195584
    %v1629 = vsel %vm1628, %v1627, %v1614
    %vm1630 = vcmask 228352
    %v1631 = vsel %vm1630, %v1629, %v1618
    %1633 = vrot.lane.b32.xlu0 %v565, 4
    %v1634 = vpop.permute.xlu0 %1633
    %1637 = vrot.lane.b32.xlu0 %v736, 8
    %v1638 = vpop.permute.xlu0 %1637
    %1641 = vrot.lane.b32.xlu0 %v907, 12
    %v1642 = vpop.permute.xlu0 %1641
    %1645 = vrot.lane.b32.xlu0 %v1078, 16
    %v1646 = vpop.permute.xlu0 %1645
    %1649 = vrot.lane.b32.xlu0 %v1249, 20
    %v1650 = vpop.permute.xlu0 %1649
    %1653 = vrot.lane.b32.xlu0 %v1420, 24
    %v1654 = vpop.permute.xlu0 %1653
    %1657 = vrot.lane.b32.xlu0 %v1591, 28
    %v1658 = vpop.permute.xlu0 %1657
    %v1660 = vsel %vm226, %v394, %v1634
    %v1661 = vsel %vm303, %v1660, %v1638
    %v1662 = vsel %vm1622, %v1661, %v1642
    %v1663 = vsel %vm1624, %v1662, %v1646
    %v1664 = vsel %vm1626, %v1663, %v1650
    %v1665 = vsel %vm1628, %v1664, %v1654
    %v1666 = vsel %vm1630, %v1665, %v1658
    %v1668 = vsel %vm149, %v1631, 0
    %1670 = vmatprep.subr.mxu0 0.0
    %1671 = vmatpush1.msra.mxu0 0.0
    %1672 = vmatprep.subr.mxu0 0.0
    %1673 = vmatpush1.msra.mxu0 0.0
    %1674 = vmatprep.subr.mxu0 0.0
    %1675 = vmatpush1.msra.mxu0 0.0
    %1676 = vmatprep.subr.mxu0 0.0
    %1677 = vmatpush1.msra.mxu0 0.0
    %1678 = vmatprep.subr.mxu0 0.0
    %1679 = vmatpush1.msra.mxu0 0.0
    %1680 = vmatprep.subr.mxu0 0.0
    %1681 = vmatpush1.msra.mxu0 0.0
    %1682 = vmatprep.subr.mxu0 0.0
    %1683 = vmatpush1.msra.mxu0 0.0
    %1684 = vmatprep.subr.mxu0 0.0
    %1685 = vmatpush1.msra.mxu0 0.0
    %1686 = vmatprep.subr.mxu0 0.0
    %1687 = vmatpush1.msra.mxu0 0.0
    %1688 = vmatprep.subr.mxu0 0.0
    %1689 = vmatpush1.msra.mxu0 0.0
    %1690 = vmatprep.subr.mxu0 0.0
    %1691 = vmatpush1.msra.mxu0 0.0
    %1692 = vmatprep.subr.mxu0 0.0
    %1693 = vmatpush1.msra.mxu0 0.0
    %1694 = vmatprep.subr.mxu0 0.0
    %1695 = vmatpush1.msra.mxu0 %v127
    %1696 = vmatprep.subr.mxu0 0.0
    %1697 = vmatpush1.msra.mxu0 %v126
    %1698 = vmatprep.subr.mxu0 0.0
    %1699 = vmatpush1.msra.mxu0 %v125
    %1700 = vmatprep.subr.mxu0 0.0
    %1701 = vmatpush1.msra.mxu0 %v124
    %1702 = vmatprep.subr.mxu0 0.0
    %1703 = vmatpush2.msra.mxu0 0.0
    %1704 = vmatprep.subr.mxu0 0.0
    %1705 = vmatpush2.msra.mxu0 0.0
    %1706 = vmatprep.subr.mxu0 0.0
    %1707 = vmatpush2.msra.mxu0 0.0
    %1708 = vmatprep.subr.mxu0 0.0
    %1709 = vmatpush2.msra.mxu0 0.0
    %1710 = vmatprep.subr.mxu0 0.0
    %1711 = vmatpush2.msra.mxu0 0.0
    %1712 = vmatprep.subr.mxu0 0.0
    %1713 = vmatpush2.msra.mxu0 0.0
    %1714 = vmatprep.subr.mxu0 0.0
    %1715 = vmatpush2.msra.mxu0 0.0
    %1716 = vmatprep.subr.mxu0 0.0
    %1717 = vmatpush2.msra.mxu0 0.0
    %1718 = vmatprep.subr.mxu0 0.0
    %1719 = vmatpush2.msra.mxu0 0.0
    %1720 = vmatprep.subr.mxu0 0.0
    %1721 = vmatpush2.msra.mxu0 0.0
    %1722 = vmatprep.subr.mxu0 0.0
    %1723 = vmatpush2.msra.mxu0 0.0
    %1724 = vmatprep.subr.mxu0 0.0
    %1725 = vmatpush2.msra.mxu0 0.0
    %1726 = vmatprep.subr.mxu0 0.0
    %1727 = vmatpush2.msra.mxu0 0.0
    %1728 = vmatprep.subr.mxu0 0.0
    %1729 = vmatpush2.msra.mxu0 0.0
    %1730 = vmatprep.subr.mxu0 0.0
    %1731 = vmatpush2.msra.mxu0 0.0
    %1732 = vmatprep.subr.mxu0 0.0
    %1733 = vmatpush2.msra.mxu0 0.0
    %1734 = vmatprep.mubr.f32.mxu0 0.0
    %1735 = vmatmul.mubr.f32.gmra.mxu0 %v1668
    %v1736 = vpop.f32.mrf.mxu0
    %v1737 = vadd.f32 0.0, %v1736
    %v1738 = vpop.f32.mrf.mxu0
    %1739 = vdwg.mxu0
    %v1740 = vadd.f32 %v117, %v1737
    %v1742 = vlaneseq
    %v1743 = vshrl.u32 %v1742, 7
    %v1744 = vsub.s32 0, %v1743
    %v1745 = vrot.slane %v128, %v1744
    %v1747 = vadd.f32 %v1740, %v1745
    %v1748 = vsel %vm149, %v1747, 0.0
    %1749 = vadd.xlane.f32.xlu0 %v1748
    %v1750 = vpop.xlane.xlu0 %1749
    %v1751 = vrcp.pop 32.0
    %v1752 = vmul.f32 %v1750, %v1751
    %v1753 = vsub.f32 %v1747, %v1752
    %v1754 = vmul.f32 %v1753, %v1753
    %v1755 = vsel %vm149, %v1754, 0.0
    %1756 = vadd.xlane.f32.xlu0 %v1755
    %v1757 = vpop.xlane.xlu0 %1756
    %v1758 = vmul.f32 %v1757, %v1751
    %v1759 = vadd.f32 %v1758, 1e-05
    %v1760 = vrsqrt.pop %v1759
    %v1761 = vmul.f32 %v1753, %v1760
    %v1763 = vlaneseq
    %v1764 = vshrl.u32 %v1763, 7
    %v1765 = vsub.s32 0, %v1764
    %v1766 = vrot.slane %v139, %v1765
    %v1768 = vmul.f32 %v1761, %v1766
    %v1770 = vlaneseq
    %v1771 = vshrl.u32 %v1770, 7
    %v1772 = vsub.s32 0, %v1771
    %v1773 = vrot.slane %v140, %v1772
    %v1775 = vadd.f32 %v1768, %v1773
    %v1777 = vlaneseq
    %v1778 = vshrl.u32 %v1777, 7
    %v1779 = vsub.s32 0, %v1778
    %v1780 = vrot.slane %v133, %v1779
    %v1783 = vsel %vm149, %v1775, 0
    %1785 = vmatprep.subr.mxu0 0.0
    %1786 = vmatpush1.msra.mxu0 0.0
    %1787 = vmatprep.subr.mxu0 0.0
    %1788 = vmatpush1.msra.mxu0 0.0
    %1789 = vmatprep.subr.mxu0 0.0
    %1790 = vmatpush1.msra.mxu0 0.0
    %1791 = vmatprep.subr.mxu0 0.0
    %1792 = vmatpush1.msra.mxu0 0.0
    %1793 = vmatprep.subr.mxu0 0.0
    %1794 = vmatpush1.msra.mxu0 0.0
    %1795 = vmatprep.subr.mxu0 0.0
    %1796 = vmatpush1.msra.mxu0 0.0
    %1797 = vmatprep.subr.mxu0 0.0
    %1798 = vmatpush1.msra.mxu0 0.0
    %1799 = vmatprep.subr.mxu0 0.0
    %1800 = vmatpush1.msra.mxu0 0.0
    %1801 = vmatprep.subr.mxu0 0.0
    %1802 = vmatpush1.msra.mxu0 0.0
    %1803 = vmatprep.subr.mxu0 0.0
    %1804 = vmatpush1.msra.mxu0 0.0
    %1805 = vmatprep.subr.mxu0 0.0
    %1806 = vmatpush1.msra.mxu0 0.0
    %1807 = vmatprep.subr.mxu0 0.0
    %1808 = vmatpush1.msra.mxu0 0.0
    %1809 = vmatprep.subr.mxu0 0.0
    %1810 = vmatpush1.msra.mxu0 %v132
    %1811 = vmatprep.subr.mxu0 0.0
    %1812 = vmatpush1.msra.mxu0 %v131
    %1813 = vmatprep.subr.mxu0 0.0
    %1814 = vmatpush1.msra.mxu0 %v130
    %1815 = vmatprep.subr.mxu0 0.0
    %1816 = vmatpush1.msra.mxu0 %v129
    %1817 = vmatprep.subr.mxu0 0.0
    %1818 = vmatpush2.msra.mxu0 0.0
    %1819 = vmatprep.subr.mxu0 0.0
    %1820 = vmatpush2.msra.mxu0 0.0
    %1821 = vmatprep.subr.mxu0 0.0
    %1822 = vmatpush2.msra.mxu0 0.0
    %1823 = vmatprep.subr.mxu0 0.0
    %1824 = vmatpush2.msra.mxu0 0.0
    %1825 = vmatprep.subr.mxu0 0.0
    %1826 = vmatpush2.msra.mxu0 0.0
    %1827 = vmatprep.subr.mxu0 0.0
    %1828 = vmatpush2.msra.mxu0 0.0
    %1829 = vmatprep.subr.mxu0 0.0
    %1830 = vmatpush2.msra.mxu0 0.0
    %1831 = vmatprep.subr.mxu0 0.0
    %1832 = vmatpush2.msra.mxu0 0.0
    %1833 = vmatprep.subr.mxu0 0.0
    %1834 = vmatpush2.msra.mxu0 0.0
    %1835 = vmatprep.subr.mxu0 0.0
    %1836 = vmatpush2.msra.mxu0 0.0
    %1837 = vmatprep.subr.mxu0 0.0
    %1838 = vmatpush2.msra.mxu0 0.0
    %1839 = vmatprep.subr.mxu0 0.0
    %1840 = vmatpush2.msra.mxu0 0.0
    %1841 = vmatprep.subr.mxu0 0.0
    %1842 = vmatpush2.msra.mxu0 0.0
    %1843 = vmatprep.subr.mxu0 0.0
    %1844 = vmatpush2.msra.mxu0 0.0
    %1845 = vmatprep.subr.mxu0 0.0
    %1846 = vmatpush2.msra.mxu0 0.0
    %1847 = vmatprep.subr.mxu0 0.0
    %1848 = vmatpush2.msra.mxu0 0.0
    %1849 = vmatprep.mubr.f32.mxu0 0.0
    %1850 = vmatmul.mubr.f32.gmra.mxu0 %v1783
    %v1851 = vpop.f32.mrf.mxu0
    %v1852 = vadd.f32 %v1780, %v1851
    %v1853 = vpop.f32.mrf.mxu0
    %1854 = vdwg.mxu0
    %v1855 = vmul.f32 %v1852, 0.5
    %v1856 = vmul.f32 %v1852, 0.70710677
    %v1857 = vand.u32 2147483647, %v1856
    %v1858 = vmul.f32 %v1857, 0.3275911
    %v1859 = vadd.f32 %v1858, 1.0
    %v1860 = vrcp.pop %v1859
    %v1861 = vmul.f32 1.0, %v1860
    %v1862 = vmul.f32 %v1861, 1.0614054
    %v1863 = vsub.f32 %v1862, 1.4531521
    %v1864 = vmul.f32 %v1863, %v1861
    %v1865 = vadd.f32 %v1864, 1.4214138
    %v1866 = vmul.f32 %v1865, %v1861
    %v1867 = vsub.f32 %v1866, 0.28449672
    %v1868 = vmul.f32 %v1867, %v1861
    %v1869 = vadd.f32 %v1868, 0.2548296
    %v1870 = vmul.f32 %v1869, %v1861
    %v1871 = vsub.f32 0.0, %v1856
    %v1872 = vmul.f32 %v1871, %v1856
    %v1873 = vmul.f32 %v1872, 1.442695
    %v1874 = vpow.pop %v1873
    %v1875 = vmul.f32 %v1870, %v1874
    %v1876 = vsub.f32 1.0, %v1875
    %vm1877 = vcmp.ge.f32.partialorder %v1856, 0.0
    %v1878 = vsub.f32 0.0, %v1876
    %v1879 = vsel %vm1877, %v1876, %v1878
    %v1880 = vadd.f32 %v1879, 1.0
    %v1881 = vmul.f32 %v1855, %v1880
    %v1883 = vlaneseq
    %v1884 = vshrl.u32 %v1883, 7
    %v1885 = vsub.s32 0, %v1884
    %v1886 = vrot.slane %v138, %v1885
    %v1889 = vsel %vm149, %v1881, 0
    %1891 = vmatprep.subr.mxu0 0.0
    %1892 = vmatpush1.msra.mxu0 0.0
    %1893 = vmatprep.subr.mxu0 0.0
    %1894 = vmatpush1.msra.mxu0 0.0
    %1895 = vmatprep.subr.mxu0 0.0
    %1896 = vmatpush1.msra.mxu0 0.0
    %1897 = vmatprep.subr.mxu0 0.0
    %1898 = vmatpush1.msra.mxu0 0.0
    %1899 = vmatprep.subr.mxu0 0.0
    %1900 = vmatpush1.msra.mxu0 0.0
    %1901 = vmatprep.subr.mxu0 0.0
    %1902 = vmatpush1.msra.mxu0 0.0
    %1903 = vmatprep.subr.mxu0 0.0
    %1904 = vmatpush1.msra.mxu0 0.0
    %1905 = vmatprep.subr.mxu0 0.0
    %1906 = vmatpush1.msra.mxu0 0.0
    %1907 = vmatprep.subr.mxu0 0.0
    %1908 = vmatpush1.msra.mxu0 0.0
    %1909 = vmatprep.subr.mxu0 0.0
    %1910 = vmatpush1.msra.mxu0 0.0
    %1911 = vmatprep.subr.mxu0 0.0
    %1912 = vmatpush1.msra.mxu0 0.0
    %1913 = vmatprep.subr.mxu0 0.0
    %1914 = vmatpush1.msra.mxu0 0.0
    %1915 = vmatprep.subr.mxu0 0.0
    %1916 = vmatpush1.msra.mxu0 %v137
    %1917 = vmatprep.subr.mxu0 0.0
    %1918 = vmatpush1.msra.mxu0 %v136
    %1919 = vmatprep.subr.mxu0 0.0
    %1920 = vmatpush1.msra.mxu0 %v135
    %1921 = vmatprep.subr.mxu0 0.0
    %1922 = vmatpush1.msra.mxu0 %v134
    %1923 = vmatprep.subr.mxu0 0.0
    %1924 = vmatpush2.msra.mxu0 0.0
    %1925 = vmatprep.subr.mxu0 0.0
    %1926 = vmatpush2.msra.mxu0 0.0
    %1927 = vmatprep.subr.mxu0 0.0
    %1928 = vmatpush2.msra.mxu0 0.0
    %1929 = vmatprep.subr.mxu0 0.0
    %1930 = vmatpush2.msra.mxu0 0.0
    %1931 = vmatprep.subr.mxu0 0.0
    %1932 = vmatpush2.msra.mxu0 0.0
    %1933 = vmatprep.subr.mxu0 0.0
    %1934 = vmatpush2.msra.mxu0 0.0
    %1935 = vmatprep.subr.mxu0 0.0
    %1936 = vmatpush2.msra.mxu0 0.0
    %1937 = vmatprep.subr.mxu0 0.0
    %1938 = vmatpush2.msra.mxu0 0.0
    %1939 = vmatprep.subr.mxu0 0.0
    %1940 = vmatpush2.msra.mxu0 0.0
    %1941 = vmatprep.subr.mxu0 0.0
    %1942 = vmatpush2.msra.mxu0 0.0
    %1943 = vmatprep.subr.mxu0 0.0
    %1944 = vmatpush2.msra.mxu0 0.0
    %1945 = vmatprep.subr.mxu0 0.0
    %1946 = vmatpush2.msra.mxu0 0.0
    %1947 = vmatprep.subr.mxu0 0.0
    %1948 = vmatpush2.msra.mxu0 0.0
    %1949 = vmatprep.subr.mxu0 0.0
    %1950 = vmatpush2.msra.mxu0 0.0
    %1951 = vmatprep.subr.mxu0 0.0
    %1952 = vmatpush2.msra.mxu0 0.0
    %1953 = vmatprep.subr.mxu0 0.0
    %1954 = vmatpush2.msra.mxu0 0.0
    %1955 = vmatprep.mubr.f32.mxu0 0.0
    %1956 = vmatmul.mubr.f32.gmra.mxu0 %v1889
    %v1957 = vpop.f32.mrf.mxu0
    %v1958 = vadd.f32 %v1886, %v1957
    %v1959 = vpop.f32.mrf.mxu0
    %1960 = vdwg.mxu0
    %v1961 = vadd.f32 %v1775, %v1958
    %v1962 = vsel %vm149, %v1961, 0.0
    %1963 = vadd.xlane.f32.xlu0 %v1962
    %v1964 = vpop.xlane.xlu0 %1963
    %v1965 = vmul.f32 %v1964, %v1751
    %v1966 = vsub.f32 %v1961, %v1965
    %v1967 = vmul.f32 %v1966, %v1966
    %v1968 = vsel %vm149, %v1967, 0.0
    %1969 = vadd.xlane.f32.xlu0 %v1968
    %v1970 = vpop.xlane.xlu0 %1969
    %v1971 = vmul.f32 %v1970, %v1751
    %v1972 = vadd.f32 %v1971, 1e-05
    %v1973 = vrsqrt.pop %v1972
    %v1974 = vmul.f32 %v1966, %v1973
    %v1976 = vlaneseq
    %v1977 = vshrl.u32 %v1976, 7
    %v1978 = vsub.s32 0, %v1977
    %v1979 = vrot.slane %v141, %v1978
    %v1981 = vmul.f32 %v1974, %v1979
    %v1983 = vlaneseq
    %v1984 = vshrl.u32 %v1983, 7
    %v1985 = vsub.s32 0, %v1984
    %v1986 = vrot.slane %v142, %v1985
    %v1988 = vadd.f32 %v1981, %v1986
    %1989 = vst.msk [vmem:[%s22] sm:$0xff] %vm149, %v1666
    %v1990 = vld [vmem:[%s1] sm:$0xff]
    %v1991 = vld [vmem:[%s2] sm:$0xff]
    %v1992 = vld [vmem:[%s16] sm:$0xff]
    %v1993 = vld [vmem:[%s16 + $0x8] sm:$0xff]
    %v1994 = vld [vmem:[%s16 + $0x10] sm:$0xff]
    %v1995 = vld [vmem:[%s16 + $0x18] sm:$0xff]
    %s1996 = scalar_lea.vmem %s16, 32
    %v1997 = vld [vmem:[%s1996] sm:$0xff]
    %v1998 = vld [vmem:[%s1996 + $0x8] sm:$0xff]
    %v1999 = vld [vmem:[%s1996 + $0x10] sm:$0xff]
    %v2000 = vld [vmem:[%s1996 + $0x18] sm:$0xff]
    %s2001 = scalar_lea.vmem %s16, 64
    %v2002 = vld [vmem:[%s2001] sm:$0xff]
    %v2003 = vld [vmem:[%s2001 + $0x8] sm:$0xff]
    %v2004 = vld [vmem:[%s2001 + $0x10] sm:$0xff]
    %v2005 = vld [vmem:[%s2001 + $0x18] sm:$0xff]
    %v2006 = vld [vmem:[#allocation4] sm:$0x1]
    %v2007 = vld [vmem:[#allocation6] sm:$0x1]
    %v2008 = vld [vmem:[#allocation7] sm:$0x1]
    %v2009 = vld [vmem:[%s20] sm:$0xf]
    %s2010 = scalar_lea.vmem %s20, 4
    %v2011 = vld [vmem:[%s2010] sm:$0xf]
    %s2012 = scalar_lea.vmem %s20, 8
    %v2013 = vld [vmem:[%s2012] sm:$0xf]
    %v2015 = vsel %vm303, %v1990, 0
    %2017 = vmatprep.subr.mxu0 0.0
    %2018 = vmatpush1.msra.mxu0 0.0
    %2019 = vmatprep.subr.mxu0 0.0
    %2020 = vmatpush1.msra.mxu0 0.0
    %2021 = vmatprep.subr.mxu0 0.0
    %2022 = vmatpush1.msra.mxu0 0.0
    %2023 = vmatprep.subr.mxu0 0.0
    %2024 = vmatpush1.msra.mxu0 0.0
    %2025 = vmatprep.subr.mxu0 0.0
    %2026 = vmatpush1.msra.mxu0 0.0
    %2027 = vmatprep.subr.mxu0 0.0
    %2028 = vmatpush1.msra.mxu0 0.0
    %2029 = vmatprep.subr.mxu0 0.0
    %2030 = vmatpush1.msra.mxu0 0.0
    %2031 = vmatprep.subr.mxu0 0.0
    %2032 = vmatpush1.msra.mxu0 0.0
    %2033 = vmatprep.subr.mxu0 0.0
    %2034 = vmatpush1.msra.mxu0 0.0
    %2035 = vmatprep.subr.mxu0 0.0
    %2036 = vmatpush1.msra.mxu0 0.0
    %2037 = vmatprep.subr.mxu0 0.0
    %2038 = vmatpush1.msra.mxu0 0.0
    %2039 = vmatprep.subr.mxu0 0.0
    %2040 = vmatpush1.msra.mxu0 0.0
    %2041 = vmatprep.subr.mxu0 0.0
    %2042 = vmatpush1.msra.mxu0 0.0
    %2043 = vmatprep.subr.mxu0 0.0
    %2044 = vmatpush1.msra.mxu0 0.0
    %2045 = vmatprep.subr.mxu0 0.0
    %2046 = vmatpush1.msra.mxu0 0.0
    %2047 = vmatprep.subr.mxu0 0.0
    %2048 = vmatpush1.msra.mxu0 %v1988
    %2049 = vmatprep.subr.mxu0 0.0
    %2050 = vmatpush2.msra.mxu0 0.0
    %2051 = vmatprep.subr.mxu0 0.0
    %2052 = vmatpush2.msra.mxu0 0.0
    %2053 = vmatprep.subr.mxu0 0.0
    %2054 = vmatpush2.msra.mxu0 0.0
    %2055 = vmatprep.subr.mxu0 0.0
    %2056 = vmatpush2.msra.mxu0 0.0
    %2057 = vmatprep.subr.mxu0 0.0
    %2058 = vmatpush2.msra.mxu0 0.0
    %2059 = vmatprep.subr.mxu0 0.0
    %2060 = vmatpush2.msra.mxu0 0.0
    %2061 = vmatprep.subr.mxu0 0.0
    %2062 = vmatpush2.msra.mxu0 0.0
    %2063 = vmatprep.subr.mxu0 0.0
    %2064 = vmatpush2.msra.mxu0 0.0
    %2065 = vmatprep.subr.mxu0 0.0
    %2066 = vmatpush2.msra.mxu0 0.0
    %2067 = vmatprep.subr.mxu0 0.0
    %2068 = vmatpush2.msra.mxu0 0.0
    %2069 = vmatprep.subr.mxu0 0.0
    %2070 = vmatpush2.msra.mxu0 0.0
    %2071 = vmatprep.subr.mxu0 0.0
    %2072 = vmatpush2.msra.mxu0 0.0
    %2073 = vmatprep.subr.mxu0 0.0
    %2074 = vmatpush2.msra.mxu0 0.0
    %2075 = vmatprep.subr.mxu0 0.0
    %2076 = vmatpush2.msra.mxu0 0.0
    %2077 = vmatprep.subr.mxu0 0.0
    %2078 = vmatpush2.msra.mxu0 0.0
    %2079 = vmatprep.subr.mxu0 0.0
    %2080 = vmatpush2.msra.mxu0 0.0
    %2081 = vmatprep.mubr.f32.mxu0 0.0
    %2082 = vmatmul.mubr.f32.gmra.mxu0 %v2015
    %v2083 = vpop.f32.mrf.mxu0
    %v2084 = vadd.f32 0.0, %v2083
    %v2085 = vpop.f32.mrf.mxu0
    %2086 = vdwg.mxu0
    %v2088 = vsel %vm149, %v1988, 0
    %2090 = vmatprep.subr.mxu0 0.0
    %2091 = vmatpush1.msra.mxu0 0.0
    %2092 = vmatprep.subr.mxu0 0.0
    %2093 = vmatpush1.msra.mxu0 0.0
    %2094 = vmatprep.subr.mxu0 0.0
    %2095 = vmatpush1.msra.mxu0 0.0
    %2096 = vmatprep.subr.mxu0 0.0
    %2097 = vmatpush1.msra.mxu0 0.0
    %2098 = vmatprep.subr.mxu0 0.0
    %2099 = vmatpush1.msra.mxu0 0.0
    %2100 = vmatprep.subr.mxu0 0.0
    %2101 = vmatpush1.msra.mxu0 0.0
    %2102 = vmatprep.subr.mxu0 0.0
    %2103 = vmatpush1.msra.mxu0 0.0
    %2104 = vmatprep.subr.mxu0 0.0
    %2105 = vmatpush1.msra.mxu0 0.0
    %2106 = vmatprep.subr.mxu0 0.0
    %2107 = vmatpush1.msra.mxu0 0.0
    %2108 = vmatprep.subr.mxu0 0.0
    %2109 = vmatpush1.msra.mxu0 0.0
    %2110 = vmatprep.subr.mxu0 0.0
    %2111 = vmatpush1.msra.mxu0 0.0
    %2112 = vmatprep.subr.mxu0 0.0
    %2113 = vmatpush1.msra.mxu0 0.0
    %2114 = vmatprep.subr.mxu0 0.0
    %2115 = vmatpush1.msra.mxu0 %v2000
    %2116 = vmatprep.subr.mxu0 0.0
    %2117 = vmatpush1.msra.mxu0 %v1999
    %2118 = vmatprep.subr.mxu0 0.0
    %2119 = vmatpush1.msra.mxu0 %v1998
    %2120 = vmatprep.subr.mxu0 0.0
    %2121 = vmatpush1.msra.mxu0 %v1997
    %2122 = vmatprep.subr.mxu0 0.0
    %2123 = vmatpush2.msra.mxu0 0.0
    %2124 = vmatprep.subr.mxu0 0.0
    %2125 = vmatpush2.msra.mxu0 0.0
    %2126 = vmatprep.subr.mxu0 0.0
    %2127 = vmatpush2.msra.mxu0 0.0
    %2128 = vmatprep.subr.mxu0 0.0
    %2129 = vmatpush2.msra.mxu0 0.0
    %2130 = vmatprep.subr.mxu0 0.0
    %2131 = vmatpush2.msra.mxu0 0.0
    %2132 = vmatprep.subr.mxu0 0.0
    %2133 = vmatpush2.msra.mxu0 0.0
    %2134 = vmatprep.subr.mxu0 0.0
    %2135 = vmatpush2.msra.mxu0 0.0
    %2136 = vmatprep.subr.mxu0 0.0
    %2137 = vmatpush2.msra.mxu0 0.0
    %2138 = vmatprep.subr.mxu0 0.0
    %2139 = vmatpush2.msra.mxu0 0.0
    %2140 = vmatprep.subr.mxu0 0.0
    %2141 = vmatpush2.msra.mxu0 0.0
    %2142 = vmatprep.subr.mxu0 0.0
    %2143 = vmatpush2.msra.mxu0 0.0
    %2144 = vmatprep.subr.mxu0 0.0
    %2145 = vmatpush2.msra.mxu0 0.0
    %2146 = vmatprep.subr.mxu0 0.0
    %2147 = vmatpush2.msra.mxu0 0.0
    %2148 = vmatprep.subr.mxu0 0.0
    %2149 = vmatpush2.msra.mxu0 0.0
    %2150 = vmatprep.subr.mxu0 0.0
    %2151 = vmatpush2.msra.mxu0 0.0
    %2152 = vmatprep.subr.mxu0 0.0
    %2153 = vmatpush2.msra.mxu0 0.0
    %2154 = vmatprep.mubr.f32.mxu0 0.0
    %2155 = vmatmul.mubr.f32.gmra.mxu0 %v2088
    %v2156 = vpop.f32.mrf.mxu0
    %v2157 = vadd.f32 0.0, %v2156
    %v2158 = vpop.f32.mrf.mxu0
    %2159 = vdwg.mxu0
    %v2161 = vsel %vm149, %v2084, 0
    %2163 = vmatprep.subr.mxu0 0.0
    %2164 = vmatpush1.msra.mxu0 0.0
    %2165 = vmatprep.subr.mxu0 0.0
    %2166 = vmatpush1.msra.mxu0 0.0
    %2167 = vmatprep.subr.mxu0 0.0
    %2168 = vmatpush1.msra.mxu0 0.0
    %2169 = vmatprep.subr.mxu0 0.0
    %2170 = vmatpush1.msra.mxu0 0.0
    %2171 = vmatprep.subr.mxu0 0.0
    %2172 = vmatpush1.msra.mxu0 0.0
    %2173 = vmatprep.subr.mxu0 0.0
    %2174 = vmatpush1.msra.mxu0 0.0
    %2175 = vmatprep.subr.mxu0 0.0
    %2176 = vmatpush1.msra.mxu0 0.0
    %2177 = vmatprep.subr.mxu0 0.0
    %2178 = vmatpush1.msra.mxu0 0.0
    %2179 = vmatprep.subr.mxu0 0.0
    %2180 = vmatpush1.msra.mxu0 0.0
    %2181 = vmatprep.subr.mxu0 0.0
    %2182 = vmatpush1.msra.mxu0 0.0
    %2183 = vmatprep.subr.mxu0 0.0
    %2184 = vmatpush1.msra.mxu0 0.0
    %2185 = vmatprep.subr.mxu0 0.0
    %2186 = vmatpush1.msra.mxu0 0.0
    %2187 = vmatprep.subr.mxu0 0.0
    %2188 = vmatpush1.msra.mxu0 %v1995
    %2189 = vmatprep.subr.mxu0 0.0
    %2190 = vmatpush1.msra.mxu0 %v1994
    %2191 = vmatprep.subr.mxu0 0.0
    %2192 = vmatpush1.msra.mxu0 %v1993
    %2193 = vmatprep.subr.mxu0 0.0
    %2194 = vmatpush1.msra.mxu0 %v1992
    %2195 = vmatprep.subr.mxu0 0.0
    %2196 = vmatpush2.msra.mxu0 0.0
    %2197 = vmatprep.subr.mxu0 0.0
    %2198 = vmatpush2.msra.mxu0 0.0
    %2199 = vmatprep.subr.mxu0 0.0
    %2200 = vmatpush2.msra.mxu0 0.0
    %2201 = vmatprep.subr.mxu0 0.0
    %2202 = vmatpush2.msra.mxu0 0.0
    %2203 = vmatprep.subr.mxu0 0.0
    %2204 = vmatpush2.msra.mxu0 0.0
    %2205 = vmatprep.subr.mxu0 0.0
    %2206 = vmatpush2.msra.mxu0 0.0
    %2207 = vmatprep.subr.mxu0 0.0
    %2208 = vmatpush2.msra.mxu0 0.0
    %2209 = vmatprep.subr.mxu0 0.0
    %2210 = vmatpush2.msra.mxu0 0.0
    %2211 = vmatprep.subr.mxu0 0.0
    %2212 = vmatpush2.msra.mxu0 0.0
    %2213 = vmatprep.subr.mxu0 0.0
    %2214 = vmatpush2.msra.mxu0 0.0
    %2215 = vmatprep.subr.mxu0 0.0
    %2216 = vmatpush2.msra.mxu0 0.0
    %2217 = vmatprep.subr.mxu0 0.0
    %2218 = vmatpush2.msra.mxu0 0.0
    %2219 = vmatprep.subr.mxu0 0.0
    %2220 = vmatpush2.msra.mxu0 0.0
    %2221 = vmatprep.subr.mxu0 0.0
    %2222 = vmatpush2.msra.mxu0 0.0
    %2223 = vmatprep.subr.mxu0 0.0
    %2224 = vmatpush2.msra.mxu0 0.0
    %2225 = vmatprep.subr.mxu0 0.0
    %2226 = vmatpush2.msra.mxu0 0.0
    %2227 = vmatprep.mubr.f32.mxu0 0.0
    %2228 = vmatmul.mubr.f32.gmra.mxu0 %v2161
    %v2229 = vpop.f32.mrf.mxu0
    %v2230 = vadd.f32 %v2157, %v2229
    %v2231 = vpop.f32.mrf.mxu0
    %2232 = vdwg.mxu0
    %v2234 = vsel %vm303, %v1991, 0
    %2236 = vmatprep.subr.mxu0 0.0
    %2237 = vmatpush1.msra.mxu0 0.0
    %2238 = vmatprep.subr.mxu0 0.0
    %2239 = vmatpush1.msra.mxu0 0.0
    %2240 = vmatprep.subr.mxu0 0.0
    %2241 = vmatpush1.msra.mxu0 0.0
    %2242 = vmatprep.subr.mxu0 0.0
    %2243 = vmatpush1.msra.mxu0 0.0
    %2244 = vmatprep.subr.mxu0 0.0
    %2245 = vmatpush1.msra.mxu0 0.0
    %2246 = vmatprep.subr.mxu0 0.0
    %2247 = vmatpush1.msra.mxu0 0.0
    %2248 = vmatprep.subr.mxu0 0.0
    %2249 = vmatpush1.msra.mxu0 0.0
    %2250 = vmatprep.subr.mxu0 0.0
    %2251 = vmatpush1.msra.mxu0 0.0
    %2252 = vmatprep.subr.mxu0 0.0
    %2253 = vmatpush1.msra.mxu0 0.0
    %2254 = vmatprep.subr.mxu0 0.0
    %2255 = vmatpush1.msra.mxu0 0.0
    %2256 = vmatprep.subr.mxu0 0.0
    %2257 = vmatpush1.msra.mxu0 0.0
    %2258 = vmatprep.subr.mxu0 0.0
    %2259 = vmatpush1.msra.mxu0 0.0
    %2260 = vmatprep.subr.mxu0 0.0
    %2261 = vmatpush1.msra.mxu0 0.0
    %2262 = vmatprep.subr.mxu0 0.0
    %2263 = vmatpush1.msra.mxu0 0.0
    %2264 = vmatprep.subr.mxu0 0.0
    %2265 = vmatpush1.msra.mxu0 0.0
    %2266 = vmatprep.subr.mxu0 0.0
    %2267 = vmatpush1.msra.mxu0 %v1988
    %2268 = vmatprep.subr.mxu0 0.0
    %2269 = vmatpush2.msra.mxu0 0.0
    %2270 = vmatprep.subr.mxu0 0.0
    %2271 = vmatpush2.msra.mxu0 0.0
    %2272 = vmatprep.subr.mxu0 0.0
    %2273 = vmatpush2.msra.mxu0 0.0
    %2274 = vmatprep.subr.mxu0 0.0
    %2275 = vmatpush2.msra.mxu0 0.0
    %2276 = vmatprep.subr.mxu0 0.0
    %2277 = vmatpush2.msra.mxu0 0.0
    %2278 = vmatprep.subr.mxu0 0.0
    %2279 = vmatpush2.msra.mxu0 0.0
    %2280 = vmatprep.subr.mxu0 0.0
    %2281 = vmatpush2.msra.mxu0 0.0
    %2282 = vmatprep.subr.mxu0 0.0
    %2283 = vmatpush2.msra.mxu0 0.0
    %2284 = vmatprep.subr.mxu0 0.0
    %2285 = vmatpush2.msra.mxu0 0.0
    %2286 = vmatprep.subr.mxu0 0.0
    %2287 = vmatpush2.msra.mxu0 0.0
    %2288 = vmatprep.subr.mxu0 0.0
    %2289 = vmatpush2.msra.mxu0 0.0
    %2290 = vmatprep.subr.mxu0 0.0
    %2291 = vmatpush2.msra.mxu0 0.0
    %2292 = vmatprep.subr.mxu0 0.0
    %2293 = vmatpush2.msra.mxu0 0.0
    %2294 = vmatprep.subr.mxu0 0.0
    %2295 = vmatpush2.msra.mxu0 0.0
    %2296 = vmatprep.subr.mxu0 0.0
    %2297 = vmatpush2.msra.mxu0 0.0
    %2298 = vmatprep.subr.mxu0 0.0
    %2299 = vmatpush2.msra.mxu0 0.0
    %2300 = vmatprep.mubr.f32.mxu0 0.0
    %2301 = vmatmul.mubr.f32.gmra.mxu0 %v2234
    %v2302 = vpop.f32.mrf.mxu0
    %v2303 = vadd.f32 0.0, %v2302
    %v2304 = vpop.f32.mrf.mxu0
    %2305 = vdwg.mxu0
    %v2307 = vsel %vm149, %v2303, 0
    %2309 = vmatprep.subr.mxu0 0.0
    %2310 = vmatpush1.msra.mxu0 0.0
    %2311 = vmatprep.subr.mxu0 0.0
    %2312 = vmatpush1.msra.mxu0 0.0
    %2313 = vmatprep.subr.mxu0 0.0
    %2314 = vmatpush1.msra.mxu0 0.0
    %2315 = vmatprep.subr.mxu0 0.0
    %2316 = vmatpush1.msra.mxu0 0.0
    %2317 = vmatprep.subr.mxu0 0.0
    %2318 = vmatpush1.msra.mxu0 0.0
    %2319 = vmatprep.subr.mxu0 0.0
    %2320 = vmatpush1.msra.mxu0 0.0
    %2321 = vmatprep.subr.mxu0 0.0
    %2322 = vmatpush1.msra.mxu0 0.0
    %2323 = vmatprep.subr.mxu0 0.0
    %2324 = vmatpush1.msra.mxu0 0.0
    %2325 = vmatprep.subr.mxu0 0.0
    %2326 = vmatpush1.msra.mxu0 0.0
    %2327 = vmatprep.subr.mxu0 0.0
    %2328 = vmatpush1.msra.mxu0 0.0
    %2329 = vmatprep.subr.mxu0 0.0
    %2330 = vmatpush1.msra.mxu0 0.0
    %2331 = vmatprep.subr.mxu0 0.0
    %2332 = vmatpush1.msra.mxu0 0.0
    %2333 = vmatprep.subr.mxu0 0.0
    %2334 = vmatpush1.msra.mxu0 %v2005
    %2335 = vmatprep.subr.mxu0 0.0
    %2336 = vmatpush1.msra.mxu0 %v2004
    %2337 = vmatprep.subr.mxu0 0.0
    %2338 = vmatpush1.msra.mxu0 %v2003
    %2339 = vmatprep.subr.mxu0 0.0
    %2340 = vmatpush1.msra.mxu0 %v2002
    %2341 = vmatprep.subr.mxu0 0.0
    %2342 = vmatpush2.msra.mxu0 0.0
    %2343 = vmatprep.subr.mxu0 0.0
    %2344 = vmatpush2.msra.mxu0 0.0
    %2345 = vmatprep.subr.mxu0 0.0
    %2346 = vmatpush2.msra.mxu0 0.0
    %2347 = vmatprep.subr.mxu0 0.0
    %2348 = vmatpush2.msra.mxu0 0.0
    %2349 = vmatprep.subr.mxu0 0.0
    %2350 = vmatpush2.msra.mxu0 0.0
    %2351 = vmatprep.subr.mxu0 0.0
    %2352 = vmatpush2.msra.mxu0 0.0
    %2353 = vmatprep.subr.mxu0 0.0
    %2354 = vmatpush2.msra.mxu0 0.0
    %2355 = vmatprep.subr.mxu0 0.0
    %2356 = vmatpush2.msra.mxu0 0.0
    %2357 = vmatprep.subr.mxu0 0.0
    %2358 = vmatpush2.msra.mxu0 0.0
    %2359 = vmatprep.subr.mxu0 0.0
    %2360 = vmatpush2.msra.mxu0 0.0
    %2361 = vmatprep.subr.mxu0 0.0
    %2362 = vmatpush2.msra.mxu0 0.0
    %2363 = vmatprep.subr.mxu0 0.0
    %2364 = vmatpush2.msra.mxu0 0.0
    %2365 = vmatprep.subr.mxu0 0.0
    %2366 = vmatpush2.msra.mxu0 0.0
    %2367 = vmatprep.subr.mxu0 0.0
    %2368 = vmatpush2.msra.mxu0 0.0
    %2369 = vmatprep.subr.mxu0 0.0
    %2370 = vmatpush2.msra.mxu0 0.0
    %2371 = vmatprep.subr.mxu0 0.0
    %2372 = vmatpush2.msra.mxu0 0.0
    %2373 = vmatprep.mubr.f32.mxu0 0.0
    %2374 = vmatmul.mubr.f32.gmra.mxu0 %v2307
    %v2375 = vpop.f32.mrf.mxu0
    %v2376 = vadd.f32 0.0, %v2375
    %v2377 = vpop.f32.mrf.mxu0
    %2378 = vdwg.mxu0
    %v2379 = vadd.f32 %v2230, %v2376
    %v2381 = vlaneseq
    %v2382 = vshrl.u32 %v2381, 7
    %v2383 = vsub.s32 0, %v2382
    %v2384 = vrot.slane %v2006, %v2383
    %v2386 = vadd.f32 %v2379, %v2384
    %v2387 = vsel %vm149, %v2386, 0.0
    %v2388 = vrot.slane %v2387, 4
    %v2389 = vadd.f32 %v2387, %v2388
    %v2390 = vrot.slane %v2389, 2
    %v2391 = vadd.f32 %v2389, %v2390
    %v2392 = vrot.slane %v2391, 1
    %v2393 = vadd.f32 %v2391, %v2392
    %v2394 = vrcp.pop 8.0
    %v2395 = vmul.f32 %v2393, %v2394
    %v2396 = vsub.f32 %v2386, %v2395
    %v2397 = vmul.f32 %v2396, %v2396
    %v2398 = vsel %vm149, %v2397, 0.0
    %v2399 = vrot.slane %v2398, 4
    %v2400 = vadd.f32 %v2398, %v2399
    %v2401 = vrot.slane %v2400, 2
    %v2402 = vadd.f32 %v2400, %v2401
    %v2403 = vrot.slane %v2402, 1
    %v2404 = vadd.f32 %v2402, %v2403
    %v2405 = vmul.f32 %v2404, %v2394
    %v2406 = vadd.f32 %v2405, 1e-05
    %v2407 = vrsqrt.pop %v2406
    %v2408 = vmul.f32 %v2396, %v2407
    %v2410 = vlaneseq
    %v2411 = vshrl.u32 %v2410, 7
    %v2412 = vsub.s32 0, %v2411
    %v2413 = vrot.slane %v2007, %v2412
    %v2415 = vmul.f32 %v2408, %v2413
    %v2417 = vlaneseq
    %v2418 = vshrl.u32 %v2417, 7
    %v2419 = vsub.s32 0, %v2418
    %v2420 = vrot.slane %v2008, %v2419
    %v2422 = vadd.f32 %v2415, %v2420
    %vm2423 = vcmp.gt.f32.partialorder %v2422, 0.0
    %v2424 = vmul.f32 %v2422, 1.442695
    %v2425 = vpow.pop %v2424
    %v2426 = vsub.f32 %v2425, 1.0
    %v2427 = vsel %vm2423, %v2422, %v2426
    %v2429 = vsel %vm303, %v2009, 0
    %2431 = vmatprep.subr.mxu0 0.0
    %2432 = vmatpush1.msra.mxu0 0.0
    %2433 = vmatprep.subr.mxu0 0.0
    %2434 = vmatpush1.msra.mxu0 0.0
    %2435 = vmatprep.subr.mxu0 0.0
    %2436 = vmatpush1.msra.mxu0 0.0
    %2437 = vmatprep.subr.mxu0 0.0
    %2438 = vmatpush1.msra.mxu0 0.0
    %2439 = vmatprep.subr.mxu0 0.0
    %2440 = vmatpush1.msra.mxu0 0.0
    %2441 = vmatprep.subr.mxu0 0.0
    %2442 = vmatpush1.msra.mxu0 0.0
    %2443 = vmatprep.subr.mxu0 0.0
    %2444 = vmatpush1.msra.mxu0 0.0
    %2445 = vmatprep.subr.mxu0 0.0
    %2446 = vmatpush1.msra.mxu0 0.0
    %2447 = vmatprep.subr.mxu0 0.0
    %2448 = vmatpush1.msra.mxu0 0.0
    %2449 = vmatprep.subr.mxu0 0.0
    %2450 = vmatpush1.msra.mxu0 0.0
    %2451 = vmatprep.subr.mxu0 0.0
    %2452 = vmatpush1.msra.mxu0 0.0
    %2453 = vmatprep.subr.mxu0 0.0
    %2454 = vmatpush1.msra.mxu0 0.0
    %2455 = vmatprep.subr.mxu0 0.0
    %2456 = vmatpush1.msra.mxu0 0.0
    %2457 = vmatprep.subr.mxu0 0.0
    %2458 = vmatpush1.msra.mxu0 0.0
    %2459 = vmatprep.subr.mxu0 0.0
    %2460 = vmatpush1.msra.mxu0 0.0
    %2461 = vmatprep.subr.mxu0 0.0
    %2462 = vmatpush1.msra.mxu0 %v2427
    %2463 = vmatprep.subr.mxu0 0.0
    %2464 = vmatpush2.msra.mxu0 0.0
    %2465 = vmatprep.subr.mxu0 0.0
    %2466 = vmatpush2.msra.mxu0 0.0
    %2467 = vmatprep.subr.mxu0 0.0
    %2468 = vmatpush2.msra.mxu0 0.0
    %2469 = vmatprep.subr.mxu0 0.0
    %2470 = vmatpush2.msra.mxu0 0.0
    %2471 = vmatprep.subr.mxu0 0.0
    %2472 = vmatpush2.msra.mxu0 0.0
    %2473 = vmatprep.subr.mxu0 0.0
    %2474 = vmatpush2.msra.mxu0 0.0
    %2475 = vmatprep.subr.mxu0 0.0
    %2476 = vmatpush2.msra.mxu0 0.0
    %2477 = vmatprep.subr.mxu0 0.0
    %2478 = vmatpush2.msra.mxu0 0.0
    %2479 = vmatprep.subr.mxu0 0.0
    %2480 = vmatpush2.msra.mxu0 0.0
    %2481 = vmatprep.subr.mxu0 0.0
    %2482 = vmatpush2.msra.mxu0 0.0
    %2483 = vmatprep.subr.mxu0 0.0
    %2484 = vmatpush2.msra.mxu0 0.0
    %2485 = vmatprep.subr.mxu0 0.0
    %2486 = vmatpush2.msra.mxu0 0.0
    %2487 = vmatprep.subr.mxu0 0.0
    %2488 = vmatpush2.msra.mxu0 0.0
    %2489 = vmatprep.subr.mxu0 0.0
    %2490 = vmatpush2.msra.mxu0 0.0
    %2491 = vmatprep.subr.mxu0 0.0
    %2492 = vmatpush2.msra.mxu0 0.0
    %2493 = vmatprep.subr.mxu0 0.0
    %2494 = vmatpush2.msra.mxu0 0.0
    %2495 = vmatprep.mubr.f32.mxu0 0.0
    %2496 = vmatmul.mubr.f32.gmra.mxu0 %v2429
    %v2497 = vpop.f32.mrf.mxu0
    %v2498 = vadd.f32 0.0, %v2497
    %v2499 = vpop.f32.mrf.mxu0
    %2500 = vdwg.mxu0
    %v2502 = vsel %vm303, %v2011, 0
    %2504 = vmatprep.subr.mxu0 0.0
    %2505 = vmatpush1.msra.mxu0 0.0
    %2506 = vmatprep.subr.mxu0 0.0
    %2507 = vmatpush1.msra.mxu0 0.0
    %2508 = vmatprep.subr.mxu0 0.0
    %2509 = vmatpush1.msra.mxu0 0.0
    %2510 = vmatprep.subr.mxu0 0.0
    %2511 = vmatpush1.msra.mxu0 0.0
    %2512 = vmatprep.subr.mxu0 0.0
    %2513 = vmatpush1.msra.mxu0 0.0
    %2514 = vmatprep.subr.mxu0 0.0
    %2515 = vmatpush1.msra.mxu0 0.0
    %2516 = vmatprep.subr.mxu0 0.0
    %2517 = vmatpush1.msra.mxu0 0.0
    %2518 = vmatprep.subr.mxu0 0.0
    %2519 = vmatpush1.msra.mxu0 0.0
    %2520 = vmatprep.subr.mxu0 0.0
    %2521 = vmatpush1.msra.mxu0 0.0
    %2522 = vmatprep.subr.mxu0 0.0
    %2523 = vmatpush1.msra.mxu0 0.0
    %2524 = vmatprep.subr.mxu0 0.0
    %2525 = vmatpush1.msra.mxu0 0.0
    %2526 = vmatprep.subr.mxu0 0.0
    %2527 = vmatpush1.msra.mxu0 0.0
    %2528 = vmatprep.subr.mxu0 0.0
    %2529 = vmatpush1.msra.mxu0 0.0
    %2530 = vmatprep.subr.mxu0 0.0
    %2531 = vmatpush1.msra.mxu0 0.0
    %2532 = vmatprep.subr.mxu0 0.0
    %2533 = vmatpush1.msra.mxu0 0.0
    %2534 = vmatprep.subr.mxu0 0.0
    %2535 = vmatpush1.msra.mxu0 %v2427
    %2536 = vmatprep.subr.mxu0 0.0
    %2537 = vmatpush2.msra.mxu0 0.0
    %2538 = vmatprep.subr.mxu0 0.0
    %2539 = vmatpush2.msra.mxu0 0.0
    %2540 = vmatprep.subr.mxu0 0.0
    %2541 = vmatpush2.msra.mxu0 0.0
    %2542 = vmatprep.subr.mxu0 0.0
    %2543 = vmatpush2.msra.mxu0 0.0
    %2544 = vmatprep.subr.mxu0 0.0
    %2545 = vmatpush2.msra.mxu0 0.0
    %2546 = vmatprep.subr.mxu0 0.0
    %2547 = vmatpush2.msra.mxu0 0.0
    %2548 = vmatprep.subr.mxu0 0.0
    %2549 = vmatpush2.msra.mxu0 0.0
    %2550 = vmatprep.subr.mxu0 0.0
    %2551 = vmatpush2.msra.mxu0 0.0
    %2552 = vmatprep.subr.mxu0 0.0
    %2553 = vmatpush2.msra.mxu0 0.0
    %2554 = vmatprep.subr.mxu0 0.0
    %2555 = vmatpush2.msra.mxu0 0.0
    %2556 = vmatprep.subr.mxu0 0.0
    %2557 = vmatpush2.msra.mxu0 0.0
    %2558 = vmatprep.subr.mxu0 0.0
    %2559 = vmatpush2.msra.mxu0 0.0
    %2560 = vmatprep.subr.mxu0 0.0
    %2561 = vmatpush2.msra.mxu0 0.0
    %2562 = vmatprep.subr.mxu0 0.0
    %2563 = vmatpush2.msra.mxu0 0.0
    %2564 = vmatprep.subr.mxu0 0.0
    %2565 = vmatpush2.msra.mxu0 0.0
    %2566 = vmatprep.subr.mxu0 0.0
    %2567 = vmatpush2.msra.mxu0 0.0
    %2568 = vmatprep.mubr.f32.mxu0 0.0
    %2569 = vmatmul.mubr.f32.gmra.mxu0 %v2502
    %v2570 = vpop.f32.mrf.mxu0
    %v2571 = vadd.f32 0.0, %v2570
    %v2572 = vpop.f32.mrf.mxu0
    %2573 = vdwg.mxu0
    %v2574 = vmax.f32 %v2498, %v2571
    %v2576 = vsel %vm303, %v2013, 0
    %2578 = vmatprep.subr.mxu0 0.0
    %2579 = vmatpush1.msra.mxu0 0.0
    %2580 = vmatprep.subr.mxu0 0.0
    %2581 = vmatpush1.msra.mxu0 0.0
    %2582 = vmatprep.subr.mxu0 0.0
    %2583 = vmatpush1.msra.mxu0 0.0
    %2584 = vmatprep.subr.mxu0 0.0
    %2585 = vmatpush1.msra.mxu0 0.0
    %2586 = vmatprep.subr.mxu0 0.0
    %2587 = vmatpush1.msra.mxu0 0.0
    %2588 = vmatprep.subr.mxu0 0.0
    %2589 = vmatpush1.msra.mxu0 0.0
    %2590 = vmatprep.subr.mxu0 0.0
    %2591 = vmatpush1.msra.mxu0 0.0
    %2592 = vmatprep.subr.mxu0 0.0
    %2593 = vmatpush1.msra.mxu0 0.0
    %2594 = vmatprep.subr.mxu0 0.0
    %2595 = vmatpush1.msra.mxu0 0.0
    %2596 = vmatprep.subr.mxu0 0.0
    %2597 = vmatpush1.msra.mxu0 0.0
    %2598 = vmatprep.subr.mxu0 0.0
    %2599 = vmatpush1.msra.mxu0 0.0
    %2600 = vmatprep.subr.mxu0 0.0
    %2601 = vmatpush1.msra.mxu0 0.0
    %2602 = vmatprep.subr.mxu0 0.0
    %2603 = vmatpush1.msra.mxu0 0.0
    %2604 = vmatprep.subr.mxu0 0.0
    %2605 = vmatpush1.msra.mxu0 0.0
    %2606 = vmatprep.subr.mxu0 0.0
    %2607 = vmatpush1.msra.mxu0 0.0
    %2608 = vmatprep.subr.mxu0 0.0
    %2609 = vmatpush1.msra.mxu0 %v2427
    %2610 = vmatprep.subr.mxu0 0.0
    %2611 = vmatpush2.msra.mxu0 0.0
    %2612 = vmatprep.subr.mxu0 0.0
    %2613 = vmatpush2.msra.mxu0 0.0
    %2614 = vmatprep.subr.mxu0 0.0
    %2615 = vmatpush2.msra.mxu0 0.0
    %2616 = vmatprep.subr.mxu0 0.0
    %2617 = vmatpush2.msra.mxu0 0.0
    %2618 = vmatprep.subr.mxu0 0.0
    %2619 = vmatpush2.msra.mxu0 0.0
    %2620 = vmatprep.subr.mxu0 0.0
    %2621 = vmatpush2.msra.mxu0 0.0
    %2622 = vmatprep.subr.mxu0 0.0
    %2623 = vmatpush2.msra.mxu0 0.0
    %2624 = vmatprep.subr.mxu0 0.0
    %2625 = vmatpush2.msra.mxu0 0.0
    %2626 = vmatprep.subr.mxu0 0.0
    %2627 = vmatpush2.msra.mxu0 0.0
    %2628 = vmatprep.subr.mxu0 0.0
    %2629 = vmatpush2.msra.mxu0 0.0
    %2630 = vmatprep.subr.mxu0 0.0
    %2631 = vmatpush2.msra.mxu0 0.0
    %2632 = vmatprep.subr.mxu0 0.0
    %2633 = vmatpush2.msra.mxu0 0.0
    %2634 = vmatprep.subr.mxu0 0.0
    %2635 = vmatpush2.msra.mxu0 0.0
    %2636 = vmatprep.subr.mxu0 0.0
    %2637 = vmatpush2.msra.mxu0 0.0
    %2638 = vmatprep.subr.mxu0 0.0
    %2639 = vmatpush2.msra.mxu0 0.0
    %2640 = vmatprep.subr.mxu0 0.0
    %2641 = vmatpush2.msra.mxu0 0.0
    %2642 = vmatprep.mubr.f32.mxu0 0.0
    %2643 = vmatmul.mubr.f32.gmra.mxu0 %v2576
    %v2644 = vpop.f32.mrf.mxu0
    %v2645 = vadd.f32 0.0, %v2644
    %v2646 = vpop.f32.mrf.mxu0
    %2647 = vdwg.mxu0
    %v2648 = vmax.f32 %v2574, %v2645
    %vm2649 = vcmask 257024
    %2650 = vst.msk [vmem:[%s21] sm:$0xf] %vm2649, %v2648
    // Predicated region
    $region102: #{ec_encoder_forward.4} parent=1 // pred_check
      _
    $region103: #{ec_encoder_forward.4} parent=1 // pred_check_branch
      %2652 = sbr.rel (0) target = $region105
    $region104: #{ec_encoder_forward.4} parent=1 // pred_region
      _
    $region105: #{ec_encoder_forward.4} parent=1 // pred_fallthru
      _
    // Predicated region
    $region106: #{ec_encoder_forward.4} parent=1 // pred_check
      _
    $region107: #{ec_encoder_forward.4} parent=1 // pred_check_branch
      %2654 = sbr.rel (0) target = $region109
    $region108: #{ec_encoder_forward.4} parent=1 // pred_region
      _
    $region109: #{ec_encoder_forward.4} parent=1 // pred_fallthru
      _
    // Predicated region
    $region110: #{ec_encoder_forward.4} parent=1 // pred_check
      _
    $region111: #{ec_encoder_forward.4} parent=1 // pred_check_branch
      %2656 = sbr.rel (0) target = $region113
    $region112: #{ec_encoder_forward.4} parent=1 // pred_region
      _
    $region113: #{ec_encoder_forward.4} parent=1 // pred_fallthru
      _
    // Predicated region
    $region114: #{ec_encoder_forward.4} parent=1 // pred_check
      _
    $region115: #{ec_encoder_forward.4} parent=1 // pred_check_branch
      %2658 = sbr.rel (0) target = $region117
    $region116: #{ec_encoder_forward.4} parent=1 // pred_region
      _
    $region117: #{ec_encoder_forward.4} parent=1 // pred_fallthru
      _
    %2659 = vsyncpa [#allocation3], 1
    %2660 = vsyncpa [#allocation5], 1
    %2661 = vsyncpa [#allocation8], 1

// kernel: ec_encoder_forward.3
$region0: #{ec_encoder_forward.3}
  #allocation0 [shape = 'u32[]', space=smem, size = 0x4, offset = 0x4, fixed_abs, tag = 'smem constant byte address 0x4 - core index']
  #allocation1 [shape = 'u32[144,128]{1,0:T(1,128)}', space=vmem, size = 0x12000, scoped, tag = 'internal scratch']
  %s0 = inlined_call_operand.vmem [shape: f32[16,4], index: 0, kind: input, shape index: {}]
  %s1 = inlined_call_operand.vmem [shape: f32[16,32], index: 1, kind: input, shape index: {}]
  %s2 = inlined_call_operand.vmem [shape: f32[3,4,32], index: 2, kind: input, shape index: {}]
  %s3 = inlined_call_operand.vmem [shape: f32[16,16], index: 3, kind: input, shape index: {}]
  %s4 = inlined_call_operand.vmem [shape: f32[16,16], index: 4, kind: input, shape index: {}]
  %s5 = inlined_call_operand.vmem [shape: f32[16,16], index: 5, kind: input, shape index: {}]
  %s6 = inlined_call_operand.vmem [shape: f32[32,96], index: 6, kind: input, shape index: {}]
  %s7 = inlined_call_operand.vmem [shape: f32[1,96], index: 7, kind: input, shape index: {}]
  %s8 = inlined_call_operand.vmem [shape: f32[32,32], index: 8, kind: input, shape index: {}]
  %s9 = inlined_call_operand.vmem [shape: f32[1,32], index: 9, kind: input, shape index: {}]
  %s10 = inlined_call_operand.vmem [shape: f32[32,32], index: 10, kind: input, shape index: {}]
  %s11 = inlined_call_operand.vmem [shape: f32[1,32], index: 11, kind: input, shape index: {}]
  %s12 = inlined_call_operand.vmem [shape: f32[32,32], index: 12, kind: input, shape index: {}]
  %s13 = inlined_call_operand.vmem [shape: f32[1,32], index: 13, kind: input, shape index: {}]
  %s14 = inlined_call_operand.vmem [shape: f32[1,32], index: 14, kind: input, shape index: {}]
  %s15 = inlined_call_operand.vmem [shape: f32[1,32], index: 15, kind: input, shape index: {}]
  %s16 = inlined_call_operand.vmem [shape: f32[1,32], index: 16, kind: input, shape index: {}]
  %s17 = inlined_call_operand.vmem [shape: f32[1,32], index: 17, kind: input, shape index: {}]
  %s18 = inlined_call_operand.vmem [shape: f32[3,32,32], index: 18, kind: input, shape index: {}]
  %s19 = inlined_call_operand.vmem [shape: f32[1,32], index: 19, kind: input, shape index: {}]
  %s20 = inlined_call_operand.vmem [shape: f32[1,32], index: 20, kind: input, shape index: {}]
  %s21 = inlined_call_operand.vmem [shape: f32[1,32], index: 21, kind: input, shape index: {}]
  %s22 = inlined_call_operand.vmem [shape: f32[3,8,16], index: 22, kind: input, shape index: {}]
  %s23 = inlined_call_operand.vmem [shape: f32[8,32], index: 23, kind: output, shape index: {0}]
  %s24 = inlined_call_operand.vmem [shape: f32[16,64], index: 24, kind: output, shape index: {1}]
  %25 = xla_tuple %s23, %s24
  %s26 = sld [smem:[#allocation0]]
  $region110: #{ec_encoder_forward.3} parent=0
    _
  %s28 = ssub.s32 1, %s26
  %s29 = scalar_select 0, %s28, %s26
  // Predicated region
  $region2: #{ec_encoder_forward.3} parent=0 // pred_check
    _
  $region3: #{ec_encoder_forward.3} parent=0 // pred_check_branch
    %31 = sbr.rel (0) target = $region5
  $region4: #{ec_encoder_forward.3} parent=0 // pred_region
    _
  $region5: #{ec_encoder_forward.3} parent=0 // pred_fallthru
    _
  // Predicated region
  $region6: #{ec_encoder_forward.3} parent=0 // pred_check
    _
  $region7: #{ec_encoder_forward.3} parent=0 // pred_check_branch
    %33 = sbr.rel (0) target = $region9
  $region8: #{ec_encoder_forward.3} parent=0 // pred_region
    _
  $region9: #{ec_encoder_forward.3} parent=0 // pred_fallthru
    _
  // Predicated region
  $region10: #{ec_encoder_forward.3} parent=0 // pred_check
    _
  $region11: #{ec_encoder_forward.3} parent=0 // pred_check_branch
    %35 = sbr.rel (0) target = $region13
  $region12: #{ec_encoder_forward.3} parent=0 // pred_region
    _
  $region13: #{ec_encoder_forward.3} parent=0 // pred_fallthru
    _
  // Predicated region
  $region14: #{ec_encoder_forward.3} parent=0 // pred_check
    _
  $region15: #{ec_encoder_forward.3} parent=0 // pred_check_branch
    %37 = sbr.rel (0) target = $region17
  $region16: #{ec_encoder_forward.3} parent=0 // pred_region
    _
  $region17: #{ec_encoder_forward.3} parent=0 // pred_fallthru
    _
  // Predicated region
  $region18: #{ec_encoder_forward.3} parent=0 // pred_check
    _
  $region19: #{ec_encoder_forward.3} parent=0 // pred_check_branch
    %39 = sbr.rel (0) target = $region21
  $region20: #{ec_encoder_forward.3} parent=0 // pred_region
    _
  $region21: #{ec_encoder_forward.3} parent=0 // pred_fallthru
    _
  // Predicated region
  $region22: #{ec_encoder_forward.3} parent=0 // pred_check
    _
  $region23: #{ec_encoder_forward.3} parent=0 // pred_check_branch
    %41 = sbr.rel (0) target = $region25
  $region24: #{ec_encoder_forward.3} parent=0 // pred_region
    _
  $region25: #{ec_encoder_forward.3} parent=0 // pred_fallthru
    _
  // Predicated region
  $region26: #{ec_encoder_forward.3} parent=0 // pred_check
    _
  $region27: #{ec_encoder_forward.3} parent=0 // pred_check_branch
    %43 = sbr.rel (0) target = $region29
  $region28: #{ec_encoder_forward.3} parent=0 // pred_region
    _
  $region29: #{ec_encoder_forward.3} parent=0 // pred_fallthru
    _
  // Predicated region
  $region30: #{ec_encoder_forward.3} parent=0 // pred_check
    _
  $region31: #{ec_encoder_forward.3} parent=0 // pred_check_branch
    %45 = sbr.rel (0) target = $region33
  $region32: #{ec_encoder_forward.3} parent=0 // pred_region
    _
  $region33: #{ec_encoder_forward.3} parent=0 // pred_fallthru
    _
  // Predicated region
  $region34: #{ec_encoder_forward.3} parent=0 // pred_check
    _
  $region35: #{ec_encoder_forward.3} parent=0 // pred_check_branch
    %47 = sbr.rel (0) target = $region37
  $region36: #{ec_encoder_forward.3} parent=0 // pred_region
    _
  $region37: #{ec_encoder_forward.3} parent=0 // pred_fallthru
    _
  // Predicated region
  $region38: #{ec_encoder_forward.3} parent=0 // pred_check
    _
  $region39: #{ec_encoder_forward.3} parent=0 // pred_check_branch
    %49 = sbr.rel (0) target = $region41
  $region40: #{ec_encoder_forward.3} parent=0 // pred_region
    _
  $region41: #{ec_encoder_forward.3} parent=0 // pred_fallthru
    _
  // Predicated region
  $region42: #{ec_encoder_forward.3} parent=0 // pred_check
    _
  $region43: #{ec_encoder_forward.3} parent=0 // pred_check_branch
    %51 = sbr.rel (0) target = $region45
  $region44: #{ec_encoder_forward.3} parent=0 // pred_region
    _
  $region45: #{ec_encoder_forward.3} parent=0 // pred_fallthru
    _
  // Predicated region
  $region46: #{ec_encoder_forward.3} parent=0 // pred_check
    _
  $region47: #{ec_encoder_forward.3} parent=0 // pred_check_branch
    %53 = sbr.rel (0) target = $region49
  $region48: #{ec_encoder_forward.3} parent=0 // pred_region
    _
  $region49: #{ec_encoder_forward.3} parent=0 // pred_fallthru
    _
  // Predicated region
  $region50: #{ec_encoder_forward.3} parent=0 // pred_check
    _
  $region51: #{ec_encoder_forward.3} parent=0 // pred_check_branch
    %55 = sbr.rel (0) target = $region53
  $region52: #{ec_encoder_forward.3} parent=0 // pred_region
    _
  $region53: #{ec_encoder_forward.3} parent=0 // pred_fallthru
    _
  // Predicated region
  $region54: #{ec_encoder_forward.3} parent=0 // pred_check
    _
  $region55: #{ec_encoder_forward.3} parent=0 // pred_check_branch
    %57 = sbr.rel (0) target = $region57
  $region56: #{ec_encoder_forward.3} parent=0 // pred_region
    _
  $region57: #{ec_encoder_forward.3} parent=0 // pred_fallthru
    _
  // Predicated region
  $region58: #{ec_encoder_forward.3} parent=0 // pred_check
    _
  $region59: #{ec_encoder_forward.3} parent=0 // pred_check_branch
    %59 = sbr.rel (0) target = $region61
  $region60: #{ec_encoder_forward.3} parent=0 // pred_region
    _
  $region61: #{ec_encoder_forward.3} parent=0 // pred_fallthru
    _
  // Predicated region
  $region62: #{ec_encoder_forward.3} parent=0 // pred_check
    _
  $region63: #{ec_encoder_forward.3} parent=0 // pred_check_branch
    %61 = sbr.rel (0) target = $region65
  $region64: #{ec_encoder_forward.3} parent=0 // pred_region
    _
  $region65: #{ec_encoder_forward.3} parent=0 // pred_fallthru
    _
  // Predicated region
  $region66: #{ec_encoder_forward.3} parent=0 // pred_check
    _
  $region67: #{ec_encoder_forward.3} parent=0 // pred_check_branch
    %63 = sbr.rel (0) target = $region69
  $region68: #{ec_encoder_forward.3} parent=0 // pred_region
    _
  $region69: #{ec_encoder_forward.3} parent=0 // pred_fallthru
    _
  // Predicated region
  $region70: #{ec_encoder_forward.3} parent=0 // pred_check
    _
  $region71: #{ec_encoder_forward.3} parent=0 // pred_check_branch
    %65 = sbr.rel (0) target = $region73
  $region72: #{ec_encoder_forward.3} parent=0 // pred_region
    _
  $region73: #{ec_encoder_forward.3} parent=0 // pred_fallthru
    _
  // Predicated region
  $region74: #{ec_encoder_forward.3} parent=0 // pred_check
    _
  $region75: #{ec_encoder_forward.3} parent=0 // pred_check_branch
    %67 = sbr.rel (0) target = $region77
  $region76: #{ec_encoder_forward.3} parent=0 // pred_region
    _
  $region77: #{ec_encoder_forward.3} parent=0 // pred_fallthru
    _
  // Predicated region
  $region78: #{ec_encoder_forward.3} parent=0 // pred_check
    _
  $region79: #{ec_encoder_forward.3} parent=0 // pred_check_branch
    %69 = sbr.rel (0) target = $region81
  $region80: #{ec_encoder_forward.3} parent=0 // pred_region
    _
  $region81: #{ec_encoder_forward.3} parent=0 // pred_fallthru
    _
  // Predicated region
  $region82: #{ec_encoder_forward.3} parent=0 // pred_check
    _
  $region83: #{ec_encoder_forward.3} parent=0 // pred_check_branch
    %71 = sbr.rel (0) target = $region85
  $region84: #{ec_encoder_forward.3} parent=0 // pred_region
    _
  $region85: #{ec_encoder_forward.3} parent=0 // pred_fallthru
    _
  // Predicated region
  $region86: #{ec_encoder_forward.3} parent=0 // pred_check
    _
  $region87: #{ec_encoder_forward.3} parent=0 // pred_check_branch
    %73 = sbr.rel (0) target = $region89
  $region88: #{ec_encoder_forward.3} parent=0 // pred_region
    _
  $region89: #{ec_encoder_forward.3} parent=0 // pred_fallthru
    _
  // Predicated region
  $region90: #{ec_encoder_forward.3} parent=0 // pred_check
    _
  $region91: #{ec_encoder_forward.3} parent=0 // pred_check_branch
    %75 = sbr.rel (0) target = $region93
  $region92: #{ec_encoder_forward.3} parent=0 // pred_region
    _
  $region93: #{ec_encoder_forward.3} parent=0 // pred_fallthru
    _
  %v76 = vld [vmem:[%s3] sm:$0xff]
  %v77 = vld [vmem:[%s3 + $0x8] sm:$0xff]
  %v78 = vld [vmem:[%s4] sm:$0xff]
  %v79 = vld [vmem:[%s4 + $0x8] sm:$0xff]
  %v80 = vld [vmem:[%s0] sm:$0xff]
  %v81 = vld [vmem:[%s0 + $0x8] sm:$0xff]
  %v82 = vld [vmem:[%s2] sm:$0xf]
  %s83 = scalar_lea.vmem %s2, 4
  %v84 = vld [vmem:[%s83] sm:$0xf]
  %s85 = scalar_lea.vmem %s2, 8
  %v86 = vld [vmem:[%s85] sm:$0xf]
  %vm87 = vcmask 130048
  %v89 = vsel %vm87, %v76, 0
  %v92 = vsel %vm87, %v77, 0
  %94 = vmatprep.subr.mxu0 0.0
  %95 = vmatpush1.msra.mxu0 0.0
  %96 = vmatprep.subr.mxu0 0.0
  %97 = vmatpush1.msra.mxu0 0.0
  %98 = vmatprep.subr.mxu0 0.0
  %99 = vmatpush1.msra.mxu0 0.0
  %100 = vmatprep.subr.mxu0 0.0
  %101 = vmatpush1.msra.mxu0 0.0
  %102 = vmatprep.subr.mxu0 0.0
  %103 = vmatpush1.msra.mxu0 0.0
  %104 = vmatprep.subr.mxu0 0.0
  %105 = vmatpush1.msra.mxu0 0.0
  %106 = vmatprep.subr.mxu0 0.0
  %107 = vmatpush1.msra.mxu0 0.0
  %108 = vmatprep.subr.mxu0 0.0
  %109 = vmatpush1.msra.mxu0 0.0
  %110 = vmatprep.subr.mxu0 0.0
  %111 = vmatpush1.msra.mxu0 0.0
  %112 = vmatprep.subr.mxu0 0.0
  %113 = vmatpush1.msra.mxu0 0.0
  %114 = vmatprep.subr.mxu0 0.0
  %115 = vmatpush1.msra.mxu0 0.0
  %116 = vmatprep.subr.mxu0 0.0
  %117 = vmatpush1.msra.mxu0 0.0
  %118 = vmatprep.subr.mxu0 0.0
  %119 = vmatpush1.msra.mxu0 0.0
  %120 = vmatprep.subr.mxu0 0.0
  %121 = vmatpush1.msra.mxu0 0.0
  %122 = vmatprep.subr.mxu0 0.0
  %123 = vmatpush1.msra.mxu0 %v81
  %124 = vmatprep.subr.mxu0 0.0
  %125 = vmatpush1.msra.mxu0 %v80
  %126 = vmatprep.subr.mxu0 0.0
  %127 = vmatpush2.msra.mxu0 0.0
  %128 = vmatprep.subr.mxu0 0.0
  %129 = vmatpush2.msra.mxu0 0.0
  %130 = vmatprep.subr.mxu0 0.0
  %131 = vmatpush2.msra.mxu0 0.0
  %132 = vmatprep.subr.mxu0 0.0
  %133 = vmatpush2.msra.mxu0 0.0
  %134 = vmatprep.subr.mxu0 0.0
  %135 = vmatpush2.msra.mxu0 0.0
  %136 = vmatprep.subr.mxu0 0.0
  %137 = vmatpush2.msra.mxu0 0.0
  %138 = vmatprep.subr.mxu0 0.0
  %139 = vmatpush2.msra.mxu0 0.0
  %140 = vmatprep.subr.mxu0 0.0
  %141 = vmatpush2.msra.mxu0 0.0
  %142 = vmatprep.subr.mxu0 0.0
  %143 = vmatpush2.msra.mxu0 0.0
  %144 = vmatprep.subr.mxu0 0.0
  %145 = vmatpush2.msra.mxu0 0.0
  %146 = vmatprep.subr.mxu0 0.0
  %147 = vmatpush2.msra.mxu0 0.0
  %148 = vmatprep.subr.mxu0 0.0
  %149 = vmatpush2.msra.mxu0 0.0
  %150 = vmatprep.subr.mxu0 0.0
  %151 = vmatpush2.msra.mxu0 0.0
  %152 = vmatprep.subr.mxu0 0.0
  %153 = vmatpush2.msra.mxu0 0.0
  %154 = vmatprep.subr.mxu0 0.0
  %155 = vmatpush2.msra.mxu0 0.0
  %156 = vmatprep.subr.mxu0 0.0
  %157 = vmatpush2.msra.mxu0 0.0
  %158 = vmatprep.mubr.f32.mxu0 0.0
  %159 = vmatmul.mubr.f32.gmra.mxu0 %v89
  %v160 = vpop.f32.mrf.mxu0
  %v161 = vadd.f32 0.0, %v160
  %v162 = vpop.f32.mrf.mxu0
  %163 = vmatprep.mubr.f32.mxu0 0.0
  %164 = vmatmul.mubr.f32.gmra.mxu0 %v92
  %v165 = vpop.f32.mrf.mxu0
  %v166 = vadd.f32 0.0, %v165
  %v167 = vpop.f32.mrf.mxu0
  %168 = vdwg.mxu0
  %vm169 = vcmask 31744
  %v171 = vsel %vm169, %v80, 0
  %v174 = vsel %vm169, %v81, 0
  %vm176 = vcmask 1043456
  %v178 = vsel %vm176, %v84, 0
  %180 = vmatprep.subr.mxu0 0.0
  %181 = vmatpush1.msra.mxu0 0.0
  %182 = vmatprep.subr.mxu0 0.0
  %183 = vmatpush1.msra.mxu0 0.0
  %184 = vmatprep.subr.mxu0 0.0
  %185 = vmatpush1.msra.mxu0 0.0
  %186 = vmatprep.subr.mxu0 0.0
  %187 = vmatpush1.msra.mxu0 0.0
  %188 = vmatprep.subr.mxu0 0.0
  %189 = vmatpush1.msra.mxu0 0.0
  %190 = vmatprep.subr.mxu0 0.0
  %191 = vmatpush1.msra.mxu0 0.0
  %192 = vmatprep.subr.mxu0 0.0
  %193 = vmatpush1.msra.mxu0 0.0
  %194 = vmatprep.subr.mxu0 0.0
  %195 = vmatpush1.msra.mxu0 0.0
  %196 = vmatprep.subr.mxu0 0.0
  %197 = vmatpush1.msra.mxu0 0.0
  %198 = vmatprep.subr.mxu0 0.0
  %199 = vmatpush1.msra.mxu0 0.0
  %200 = vmatprep.subr.mxu0 0.0
  %201 = vmatpush1.msra.mxu0 0.0
  %202 = vmatprep.subr.mxu0 0.0
  %203 = vmatpush1.msra.mxu0 0.0
  %204 = vmatprep.subr.mxu0 0.0
  %205 = vmatpush1.msra.mxu0 0.0
  %206 = vmatprep.subr.mxu0 0.0
  %207 = vmatpush1.msra.mxu0 0.0
  %208 = vmatprep.subr.mxu0 0.0
  %209 = vmatpush1.msra.mxu0 0.0
  %210 = vmatprep.subr.mxu0 0.0
  %211 = vmatpush1.msra.mxu0 %v178
  %212 = vmatprep.subr.mxu0 0.0
  %213 = vmatpush2.msra.mxu0 0.0
  %214 = vmatprep.subr.mxu0 0.0
  %215 = vmatpush2.msra.mxu0 0.0
  %216 = vmatprep.subr.mxu0 0.0
  %217 = vmatpush2.msra.mxu0 0.0
  %218 = vmatprep.subr.mxu0 0.0
  %219 = vmatpush2.msra.mxu0 0.0
  %220 = vmatprep.subr.mxu0 0.0
  %221 = vmatpush2.msra.mxu0 0.0
  %222 = vmatprep.subr.mxu0 0.0
  %223 = vmatpush2.msra.mxu0 0.0
  %224 = vmatprep.subr.mxu0 0.0
  %225 = vmatpush2.msra.mxu0 0.0
  %226 = vmatprep.subr.mxu0 0.0
  %227 = vmatpush2.msra.mxu0 0.0
  %228 = vmatprep.subr.mxu0 0.0
  %229 = vmatpush2.msra.mxu0 0.0
  %230 = vmatprep.subr.mxu0 0.0
  %231 = vmatpush2.msra.mxu0 0.0
  %232 = vmatprep.subr.mxu0 0.0
  %233 = vmatpush2.msra.mxu0 0.0
  %234 = vmatprep.subr.mxu0 0.0
  %235 = vmatpush2.msra.mxu0 0.0
  %236 = vmatprep.subr.mxu0 0.0
  %237 = vmatpush2.msra.mxu0 0.0
  %238 = vmatprep.subr.mxu0 0.0
  %239 = vmatpush2.msra.mxu0 0.0
  %240 = vmatprep.subr.mxu0 0.0
  %241 = vmatpush2.msra.mxu0 0.0
  %242 = vmatprep.subr.mxu0 0.0
  %243 = vmatpush2.msra.mxu0 0.0
  %244 = vmatprep.mubr.f32.mxu0 0.0
  %245 = vmatmul.mubr.f32.gmra.mxu0 %v171
  %v246 = vpop.f32.mrf.mxu0
  %v247 = vadd.f32 0.0, %v246
  %v248 = vpop.f32.mrf.mxu0
  %249 = vmatprep.mubr.f32.mxu0 0.0
  %250 = vmatmul.mubr.f32.gmra.mxu0 %v174
  %v251 = vpop.f32.mrf.mxu0
  %v252 = vadd.f32 0.0, %v251
  %v253 = vpop.f32.mrf.mxu0
  %254 = vdwg.mxu0
  %v256 = vsel %vm169, %v161, 0
  %v259 = vsel %vm169, %v166, 0
  %v262 = vsel %vm176, %v82, 0
  %264 = vmatprep.subr.mxu0 0.0
  %265 = vmatpush1.msra.mxu0 0.0
  %266 = vmatprep.subr.mxu0 0.0
  %267 = vmatpush1.msra.mxu0 0.0
  %268 = vmatprep.subr.mxu0 0.0
  %269 = vmatpush1.msra.mxu0 0.0
  %270 = vmatprep.subr.mxu0 0.0
  %271 = vmatpush1.msra.mxu0 0.0
  %272 = vmatprep.subr.mxu0 0.0
  %273 = vmatpush1.msra.mxu0 0.0
  %274 = vmatprep.subr.mxu0 0.0
  %275 = vmatpush1.msra.mxu0 0.0
  %276 = vmatprep.subr.mxu0 0.0
  %277 = vmatpush1.msra.mxu0 0.0
  %278 = vmatprep.subr.mxu0 0.0
  %279 = vmatpush1.msra.mxu0 0.0
  %280 = vmatprep.subr.mxu0 0.0
  %281 = vmatpush1.msra.mxu0 0.0
  %282 = vmatprep.subr.mxu0 0.0
  %283 = vmatpush1.msra.mxu0 0.0
  %284 = vmatprep.subr.mxu0 0.0
  %285 = vmatpush1.msra.mxu0 0.0
  %286 = vmatprep.subr.mxu0 0.0
  %287 = vmatpush1.msra.mxu0 0.0
  %288 = vmatprep.subr.mxu0 0.0
  %289 = vmatpush1.msra.mxu0 0.0
  %290 = vmatprep.subr.mxu0 0.0
  %291 = vmatpush1.msra.mxu0 0.0
  %292 = vmatprep.subr.mxu0 0.0
  %293 = vmatpush1.msra.mxu0 0.0
  %294 = vmatprep.subr.mxu0 0.0
  %295 = vmatpush1.msra.mxu0 %v262
  %296 = vmatprep.subr.mxu0 0.0
  %297 = vmatpush2.msra.mxu0 0.0
  %298 = vmatprep.subr.mxu0 0.0
  %299 = vmatpush2.msra.mxu0 0.0
  %300 = vmatprep.subr.mxu0 0.0
  %301 = vmatpush2.msra.mxu0 0.0
  %302 = vmatprep.subr.mxu0 0.0
  %303 = vmatpush2.msra.mxu0 0.0
  %304 = vmatprep.subr.mxu0 0.0
  %305 = vmatpush2.msra.mxu0 0.0
  %306 = vmatprep.subr.mxu0 0.0
  %307 = vmatpush2.msra.mxu0 0.0
  %308 = vmatprep.subr.mxu0 0.0
  %309 = vmatpush2.msra.mxu0 0.0
  %310 = vmatprep.subr.mxu0 0.0
  %311 = vmatpush2.msra.mxu0 0.0
  %312 = vmatprep.subr.mxu0 0.0
  %313 = vmatpush2.msra.mxu0 0.0
  %314 = vmatprep.subr.mxu0 0.0
  %315 = vmatpush2.msra.mxu0 0.0
  %316 = vmatprep.subr.mxu0 0.0
  %317 = vmatpush2.msra.mxu0 0.0
  %318 = vmatprep.subr.mxu0 0.0
  %319 = vmatpush2.msra.mxu0 0.0
  %320 = vmatprep.subr.mxu0 0.0
  %321 = vmatpush2.msra.mxu0 0.0
  %322 = vmatprep.subr.mxu0 0.0
  %323 = vmatpush2.msra.mxu0 0.0
  %324 = vmatprep.subr.mxu0 0.0
  %325 = vmatpush2.msra.mxu0 0.0
  %326 = vmatprep.subr.mxu0 0.0
  %327 = vmatpush2.msra.mxu0 0.0
  %328 = vmatprep.mubr.f32.mxu0 0.0
  %329 = vmatmul.mubr.f32.gmra.mxu0 %v256
  %v330 = vpop.f32.mrf.mxu0
  %v331 = vadd.f32 %v247, %v330
  %v332 = vpop.f32.mrf.mxu0
  %333 = vmatprep.mubr.f32.mxu0 0.0
  %334 = vmatmul.mubr.f32.gmra.mxu0 %v259
  %v335 = vpop.f32.mrf.mxu0
  %v336 = vadd.f32 %v252, %v335
  %v337 = vpop.f32.mrf.mxu0
  %338 = vdwg.mxu0
  %v340 = vsel %vm87, %v78, 0
  %v343 = vsel %vm87, %v79, 0
  %345 = vmatprep.subr.mxu0 0.0
  %346 = vmatpush1.msra.mxu0 0.0
  %347 = vmatprep.subr.mxu0 0.0
  %348 = vmatpush1.msra.mxu0 0.0
  %349 = vmatprep.subr.mxu0 0.0
  %350 = vmatpush1.msra.mxu0 0.0
  %351 = vmatprep.subr.mxu0 0.0
  %352 = vmatpush1.msra.mxu0 0.0
  %353 = vmatprep.subr.mxu0 0.0
  %354 = vmatpush1.msra.mxu0 0.0
  %355 = vmatprep.subr.mxu0 0.0
  %356 = vmatpush1.msra.mxu0 0.0
  %357 = vmatprep.subr.mxu0 0.0
  %358 = vmatpush1.msra.mxu0 0.0
  %359 = vmatprep.subr.mxu0 0.0
  %360 = vmatpush1.msra.mxu0 0.0
  %361 = vmatprep.subr.mxu0 0.0
  %362 = vmatpush1.msra.mxu0 0.0
  %363 = vmatprep.subr.mxu0 0.0
  %364 = vmatpush1.msra.mxu0 0.0
  %365 = vmatprep.subr.mxu0 0.0
  %366 = vmatpush1.msra.mxu0 0.0
  %367 = vmatprep.subr.mxu0 0.0
  %368 = vmatpush1.msra.mxu0 0.0
  %369 = vmatprep.subr.mxu0 0.0
  %370 = vmatpush1.msra.mxu0 0.0
  %371 = vmatprep.subr.mxu0 0.0
  %372 = vmatpush1.msra.mxu0 0.0
  %373 = vmatprep.subr.mxu0 0.0
  %374 = vmatpush1.msra.mxu0 %v81
  %375 = vmatprep.subr.mxu0 0.0
  %376 = vmatpush1.msra.mxu0 %v80
  %377 = vmatprep.subr.mxu0 0.0
  %378 = vmatpush2.msra.mxu0 0.0
  %379 = vmatprep.subr.mxu0 0.0
  %380 = vmatpush2.msra.mxu0 0.0
  %381 = vmatprep.subr.mxu0 0.0
  %382 = vmatpush2.msra.mxu0 0.0
  %383 = vmatprep.subr.mxu0 0.0
  %384 = vmatpush2.msra.mxu0 0.0
  %385 = vmatprep.subr.mxu0 0.0
  %386 = vmatpush2.msra.mxu0 0.0
  %387 = vmatprep.subr.mxu0 0.0
  %388 = vmatpush2.msra.mxu0 0.0
  %389 = vmatprep.subr.mxu0 0.0
  %390 = vmatpush2.msra.mxu0 0.0
  %391 = vmatprep.subr.mxu0 0.0
  %392 = vmatpush2.msra.mxu0 0.0
  %393 = vmatprep.subr.mxu0 0.0
  %394 = vmatpush2.msra.mxu0 0.0
  %395 = vmatprep.subr.mxu0 0.0
  %396 = vmatpush2.msra.mxu0 0.0
  %397 = vmatprep.subr.mxu0 0.0
  %398 = vmatpush2.msra.mxu0 0.0
  %399 = vmatprep.subr.mxu0 0.0
  %400 = vmatpush2.msra.mxu0 0.0
  %401 = vmatprep.subr.mxu0 0.0
  %402 = vmatpush2.msra.mxu0 0.0
  %403 = vmatprep.subr.mxu0 0.0
  %404 = vmatpush2.msra.mxu0 0.0
  %405 = vmatprep.subr.mxu0 0.0
  %406 = vmatpush2.msra.mxu0 0.0
  %407 = vmatprep.subr.mxu0 0.0
  %408 = vmatpush2.msra.mxu0 0.0
  %409 = vmatprep.mubr.f32.mxu0 0.0
  %410 = vmatmul.mubr.f32.gmra.mxu0 %v340
  %v411 = vpop.f32.mrf.mxu0
  %v412 = vadd.f32 0.0, %v411
  %v413 = vpop.f32.mrf.mxu0
  %414 = vmatprep.mubr.f32.mxu0 0.0
  %415 = vmatmul.mubr.f32.gmra.mxu0 %v343
  %v416 = vpop.f32.mrf.mxu0
  %v417 = vadd.f32 0.0, %v416
  %v418 = vpop.f32.mrf.mxu0
  %419 = vdwg.mxu0
  %v421 = vsel %vm169, %v412, 0
  %v424 = vsel %vm169, %v417, 0
  %v427 = vsel %vm176, %v86, 0
  %429 = vmatprep.subr.mxu0 0.0
  %430 = vmatpush1.msra.mxu0 0.0
  %431 = vmatprep.subr.mxu0 0.0
  %432 = vmatpush1.msra.mxu0 0.0
  %433 = vmatprep.subr.mxu0 0.0
  %434 = vmatpush1.msra.mxu0 0.0
  %435 = vmatprep.subr.mxu0 0.0
  %436 = vmatpush1.msra.mxu0 0.0
  %437 = vmatprep.subr.mxu0 0.0
  %438 = vmatpush1.msra.mxu0 0.0
  %439 = vmatprep.subr.mxu0 0.0
  %440 = vmatpush1.msra.mxu0 0.0
  %441 = vmatprep.subr.mxu0 0.0
  %442 = vmatpush1.msra.mxu0 0.0
  %443 = vmatprep.subr.mxu0 0.0
  %444 = vmatpush1.msra.mxu0 0.0
  %445 = vmatprep.subr.mxu0 0.0
  %446 = vmatpush1.msra.mxu0 0.0
  %447 = vmatprep.subr.mxu0 0.0
  %448 = vmatpush1.msra.mxu0 0.0
  %449 = vmatprep.subr.mxu0 0.0
  %450 = vmatpush1.msra.mxu0 0.0
  %451 = vmatprep.subr.mxu0 0.0
  %452 = vmatpush1.msra.mxu0 0.0
  %453 = vmatprep.subr.mxu0 0.0
  %454 = vmatpush1.msra.mxu0 0.0
  %455 = vmatprep.subr.mxu0 0.0
  %456 = vmatpush1.msra.mxu0 0.0
  %457 = vmatprep.subr.mxu0 0.0
  %458 = vmatpush1.msra.mxu0 0.0
  %459 = vmatprep.subr.mxu0 0.0
  %460 = vmatpush1.msra.mxu0 %v427
  %461 = vmatprep.subr.mxu0 0.0
  %462 = vmatpush2.msra.mxu0 0.0
  %463 = vmatprep.subr.mxu0 0.0
  %464 = vmatpush2.msra.mxu0 0.0
  %465 = vmatprep.subr.mxu0 0.0
  %466 = vmatpush2.msra.mxu0 0.0
  %467 = vmatprep.subr.mxu0 0.0
  %468 = vmatpush2.msra.mxu0 0.0
  %469 = vmatprep.subr.mxu0 0.0
  %470 = vmatpush2.msra.mxu0 0.0
  %471 = vmatprep.subr.mxu0 0.0
  %472 = vmatpush2.msra.mxu0 0.0
  %473 = vmatprep.subr.mxu0 0.0
  %474 = vmatpush2.msra.mxu0 0.0
  %475 = vmatprep.subr.mxu0 0.0
  %476 = vmatpush2.msra.mxu0 0.0
  %477 = vmatprep.subr.mxu0 0.0
  %478 = vmatpush2.msra.mxu0 0.0
  %479 = vmatprep.subr.mxu0 0.0
  %480 = vmatpush2.msra.mxu0 0.0
  %481 = vmatprep.subr.mxu0 0.0
  %482 = vmatpush2.msra.mxu0 0.0
  %483 = vmatprep.subr.mxu0 0.0
  %484 = vmatpush2.msra.mxu0 0.0
  %485 = vmatprep.subr.mxu0 0.0
  %486 = vmatpush2.msra.mxu0 0.0
  %487 = vmatprep.subr.mxu0 0.0
  %488 = vmatpush2.msra.mxu0 0.0
  %489 = vmatprep.subr.mxu0 0.0
  %490 = vmatpush2.msra.mxu0 0.0
  %491 = vmatprep.subr.mxu0 0.0
  %492 = vmatpush2.msra.mxu0 0.0
  %493 = vmatprep.mubr.f32.mxu0 0.0
  %494 = vmatmul.mubr.f32.gmra.mxu0 %v421
  %v495 = vpop.f32.mrf.mxu0
  %v496 = vadd.f32 0.0, %v495
  %v497 = vpop.f32.mrf.mxu0
  %498 = vmatprep.mubr.f32.mxu0 0.0
  %499 = vmatmul.mubr.f32.gmra.mxu0 %v424
  %v500 = vpop.f32.mrf.mxu0
  %v501 = vadd.f32 0.0, %v500
  %v502 = vpop.f32.mrf.mxu0
  %503 = vdwg.mxu0
  %v504 = vadd.f32 %v331, %v496
  %v505 = vadd.f32 %v336, %v501
  %v506 = vld [vmem:[%s1] sm:$0xff]
  %v507 = vld [vmem:[%s1 + $0x8] sm:$0xff]
  %v508 = vadd.f32 %v504, %v506
  %v509 = vadd.f32 %v505, %v507
  %v510 = vld [vmem:[%s5] sm:$0xff]
  %v511 = vld [vmem:[%s5 + $0x8] sm:$0xff]
  %v512 = vld [vmem:[%s6] sm:$0xff]
  %v513 = vld [vmem:[%s6 + $0x8] sm:$0xff]
  %v514 = vld [vmem:[%s6 + $0x10] sm:$0xff]
  %v515 = vld [vmem:[%s6 + $0x18] sm:$0xff]
  %v516 = vld [vmem:[%s7] sm:$0x1]
  %v517 = vld [vmem:[%s8] sm:$0xff]
  %v518 = vld [vmem:[%s8 + $0x8] sm:$0xff]
  %v519 = vld [vmem:[%s8 + $0x10] sm:$0xff]
  %v520 = vld [vmem:[%s8 + $0x18] sm:$0xff]
  %v521 = vld [vmem:[%s9] sm:$0x1]
  %v522 = vld [vmem:[%s10] sm:$0xff]
  %v523 = vld [vmem:[%s10 + $0x8] sm:$0xff]
  %v524 = vld [vmem:[%s10 + $0x10] sm:$0xff]
  %v525 = vld [vmem:[%s10 + $0x18] sm:$0xff]
  %v526 = vld [vmem:[%s11] sm:$0x1]
  %v527 = vld [vmem:[%s12] sm:$0xff]
  %v528 = vld [vmem:[%s12 + $0x8] sm:$0xff]
  %v529 = vld [vmem:[%s12 + $0x10] sm:$0xff]
  %v530 = vld [vmem:[%s12 + $0x18] sm:$0xff]
  %v531 = vld [vmem:[%s13] sm:$0x1]
  %v532 = vld [vmem:[%s14] sm:$0x1]
  %v533 = vld [vmem:[%s15] sm:$0x1]
  %v534 = vld [vmem:[%s16] sm:$0x1]
  %v535 = vld [vmem:[%s17] sm:$0x1]
  %v537 = vlaneseq
  %v538 = vshrl.u32 %v537, 7
  %v539 = vsub.s32 0, %v538
  %v540 = vrot.slane %v516, %v539
  %vm542 = vcmask 261120
  %v544 = vsel %vm542, %v508, 0
  %v547 = vsel %vm542, %v509, 0
  %549 = vmatprep.subr.mxu0 0.0
  %550 = vmatpush1.msra.mxu0 0.0
  %551 = vmatprep.subr.mxu0 0.0
  %552 = vmatpush1.msra.mxu0 0.0
  %553 = vmatprep.subr.mxu0 0.0
  %554 = vmatpush1.msra.mxu0 0.0
  %555 = vmatprep.subr.mxu0 0.0
  %556 = vmatpush1.msra.mxu0 0.0
  %557 = vmatprep.subr.mxu0 0.0
  %558 = vmatpush1.msra.mxu0 0.0
  %559 = vmatprep.subr.mxu0 0.0
  %560 = vmatpush1.msra.mxu0 0.0
  %561 = vmatprep.subr.mxu0 0.0
  %562 = vmatpush1.msra.mxu0 0.0
  %563 = vmatprep.subr.mxu0 0.0
  %564 = vmatpush1.msra.mxu0 0.0
  %565 = vmatprep.subr.mxu0 0.0
  %566 = vmatpush1.msra.mxu0 0.0
  %567 = vmatprep.subr.mxu0 0.0
  %568 = vmatpush1.msra.mxu0 0.0
  %569 = vmatprep.subr.mxu0 0.0
  %570 = vmatpush1.msra.mxu0 0.0
  %571 = vmatprep.subr.mxu0 0.0
  %572 = vmatpush1.msra.mxu0 0.0
  %573 = vmatprep.subr.mxu0 0.0
  %574 = vmatpush1.msra.mxu0 %v515
  %575 = vmatprep.subr.mxu0 0.0
  %576 = vmatpush1.msra.mxu0 %v514
  %577 = vmatprep.subr.mxu0 0.0
  %578 = vmatpush1.msra.mxu0 %v513
  %579 = vmatprep.subr.mxu0 0.0
  %580 = vmatpush1.msra.mxu0 %v512
  %581 = vmatprep.subr.mxu0 0.0
  %582 = vmatpush2.msra.mxu0 0.0
  %583 = vmatprep.subr.mxu0 0.0
  %584 = vmatpush2.msra.mxu0 0.0
  %585 = vmatprep.subr.mxu0 0.0
  %586 = vmatpush2.msra.mxu0 0.0
  %587 = vmatprep.subr.mxu0 0.0
  %588 = vmatpush2.msra.mxu0 0.0
  %589 = vmatprep.subr.mxu0 0.0
  %590 = vmatpush2.msra.mxu0 0.0
  %591 = vmatprep.subr.mxu0 0.0
  %592 = vmatpush2.msra.mxu0 0.0
  %593 = vmatprep.subr.mxu0 0.0
  %594 = vmatpush2.msra.mxu0 0.0
  %595 = vmatprep.subr.mxu0 0.0
  %596 = vmatpush2.msra.mxu0 0.0
  %597 = vmatprep.subr.mxu0 0.0
  %598 = vmatpush2.msra.mxu0 0.0
  %599 = vmatprep.subr.mxu0 0.0
  %600 = vmatpush2.msra.mxu0 0.0
  %601 = vmatprep.subr.mxu0 0.0
  %602 = vmatpush2.msra.mxu0 0.0
  %603 = vmatprep.subr.mxu0 0.0
  %604 = vmatpush2.msra.mxu0 0.0
  %605 = vmatprep.subr.mxu0 0.0
  %606 = vmatpush2.msra.mxu0 0.0
  %607 = vmatprep.subr.mxu0 0.0
  %608 = vmatpush2.msra.mxu0 0.0
  %609 = vmatprep.subr.mxu0 0.0
  %610 = vmatpush2.msra.mxu0 0.0
  %611 = vmatprep.subr.mxu0 0.0
  %612 = vmatpush2.msra.mxu0 0.0
  %613 = vmatprep.mubr.f32.mxu0 0.0
  %614 = vmatmul.mubr.f32.gmra.mxu0 %v544
  %v615 = vpop.f32.mrf.mxu0
  %v616 = vadd.f32 %v540, %v615
  %v617 = vpop.f32.mrf.mxu0
  %618 = vmatprep.mubr.f32.mxu0 0.0
  %619 = vmatmul.mubr.f32.gmra.mxu0 %v547
  %v620 = vpop.f32.mrf.mxu0
  %v621 = vadd.f32 %v540, %v620
  %v622 = vpop.f32.mrf.mxu0
  %623 = vdwg.mxu0
  %626 = vrot.lane.b32.xlu0 %v616, 96
  %v627 = vpop.permute.xlu0 %626
  %628 = vrot.lane.b32.xlu0 %v621, 96
  %v629 = vpop.permute.xlu0 %628
  %v630 = vsel %vm169, %v616, 0
  %v632 = vsel %vm169, %v621, 0
  %v634 = vsel %vm169, %v627, 0
  %v636 = vsel %vm169, %v629, 0
  %638 = vmatprep.subr.mxu0 0.0
  %639 = vmatpush1.xpose.msra.mxu0 0.0
  %640 = vmatprep.subr.mxu0 0.0
  %641 = vmatpush1.xpose.msra.mxu0 0.0
  %642 = vmatprep.subr.mxu0 0.0
  %643 = vmatpush1.xpose.msra.mxu0 0.0
  %644 = vmatprep.subr.mxu0 0.0
  %645 = vmatpush1.xpose.msra.mxu0 0.0
  %646 = vmatprep.subr.mxu0 0.0
  %647 = vmatpush1.xpose.msra.mxu0 0.0
  %648 = vmatprep.subr.mxu0 0.0
  %649 = vmatpush1.xpose.msra.mxu0 0.0
  %650 = vmatprep.subr.mxu0 0.0
  %651 = vmatpush1.xpose.msra.mxu0 0.0
  %652 = vmatprep.subr.mxu0 0.0
  %653 = vmatpush1.xpose.msra.mxu0 0.0
  %654 = vmatprep.subr.mxu0 0.0
  %655 = vmatpush1.xpose.msra.mxu0 0.0
  %656 = vmatprep.subr.mxu0 0.0
  %657 = vmatpush1.xpose.msra.mxu0 0.0
  %658 = vmatprep.subr.mxu0 0.0
  %659 = vmatpush1.xpose.msra.mxu0 0.0
  %660 = vmatprep.subr.mxu0 0.0
  %661 = vmatpush1.xpose.msra.mxu0 0.0
  %662 = vmatprep.subr.mxu0 0.0
  %663 = vmatpush1.xpose.msra.mxu0 0.0
  %664 = vmatprep.subr.mxu0 0.0
  %665 = vmatpush1.xpose.msra.mxu0 0.0
  %666 = vmatprep.subr.mxu0 0.0
  %667 = vmatpush1.xpose.msra.mxu0 %v636
  %668 = vmatprep.subr.mxu0 0.0
  %669 = vmatpush1.xpose.msra.mxu0 %v634
  %670 = vmatprep.subr.mxu0 0.0
  %671 = vmatpush2.xpose.msra.mxu0 0.0
  %672 = vmatprep.subr.mxu0 0.0
  %673 = vmatpush2.xpose.msra.mxu0 0.0
  %674 = vmatprep.subr.mxu0 0.0
  %675 = vmatpush2.xpose.msra.mxu0 0.0
  %676 = vmatprep.subr.mxu0 0.0
  %677 = vmatpush2.xpose.msra.mxu0 0.0
  %678 = vmatprep.subr.mxu0 0.0
  %679 = vmatpush2.xpose.msra.mxu0 0.0
  %680 = vmatprep.subr.mxu0 0.0
  %681 = vmatpush2.xpose.msra.mxu0 0.0
  %682 = vmatprep.subr.mxu0 0.0
  %683 = vmatpush2.xpose.msra.mxu0 0.0
  %684 = vmatprep.subr.mxu0 0.0
  %685 = vmatpush2.xpose.msra.mxu0 0.0
  %686 = vmatprep.subr.mxu0 0.0
  %687 = vmatpush2.xpose.msra.mxu0 0.0
  %688 = vmatprep.subr.mxu0 0.0
  %689 = vmatpush2.xpose.msra.mxu0 0.0
  %690 = vmatprep.subr.mxu0 0.0
  %691 = vmatpush2.xpose.msra.mxu0 0.0
  %692 = vmatprep.subr.mxu0 0.0
  %693 = vmatpush2.xpose.msra.mxu0 0.0
  %694 = vmatprep.subr.mxu0 0.0
  %695 = vmatpush2.xpose.msra.mxu0 0.0
  %696 = vmatprep.subr.mxu0 0.0
  %697 = vmatpush2.xpose.msra.mxu0 0.0
  %698 = vmatprep.subr.mxu0 0.0
  %699 = vmatpush2.xpose.msra.mxu0 0.0
  %700 = vmatprep.subr.mxu0 0.0
  %701 = vmatpush2.xpose.msra.mxu0 0.0
  %702 = vmatprep.mubr.f32.mxu0 0.0
  %703 = vmatmul.mubr.f32.gmra.mxu0 %v630
  %v704 = vpop.f32.mrf.mxu0
  %v705 = vadd.f32 0.0, %v704
  %v706 = vpop.f32.mrf.mxu0
  %707 = vmatprep.mubr.f32.mxu0 0.0
  %708 = vmatmul.mubr.f32.gmra.mxu0 %v632
  %v709 = vpop.f32.mrf.mxu0
  %v710 = vadd.f32 0.0, %v709
  %v711 = vpop.f32.mrf.mxu0
  %712 = vdwg.mxu0
  %v713 = vmul.f32 %v705, 0.5
  %v714 = vmul.f32 %v710, 0.5
  %v715 = vadd.f32 %v713, %v510
  %v716 = vadd.f32 %v714, %v511
  %v717 = vsel %vm87, %v715, -inf
  %718 = vmax.xlane.f32.xlu0 %v717
  %v719 = vpop.xlane.xlu0 %718
  %v720 = vsel %vm87, %v716, -inf
  %721 = vmax.xlane.f32.xlu0 %v720
  %v722 = vpop.xlane.xlu0 %721
  %v723 = vsub.f32 %v715, %v719
  %v724 = vsub.f32 %v716, %v722
  %v725 = vmul.f32 %v723, 1.442695
  %v726 = vpow.pop %v725
  %v727 = vmul.f32 %v724, 1.442695
  %v728 = vpow.pop %v727
  %v729 = vsel %vm87, %v726, 0.0
  %730 = vadd.xlane.f32.xlu0 %v729
  %v731 = vpop.xlane.xlu0 %730
  %v732 = vsel %vm87, %v728, 0.0
  %733 = vadd.xlane.f32.xlu0 %v732
  %v734 = vpop.xlane.xlu0 %733
  %v735 = vrcp.pop %v731
  %v736 = vrcp.pop %v734
  %v737 = vmul.f32 %v726, %v735
  %v738 = vmul.f32 %v728, %v736
  %739 = vrot.lane.b32.xlu0 %v616, 64
  %v740 = vpop.permute.xlu0 %739
  %741 = vrot.lane.b32.xlu0 %v621, 64
  %v742 = vpop.permute.xlu0 %741
  %v746 = vsel %vm87, %v737, 0
  %v749 = vsel %vm87, %v738, 0
  %751 = vmatprep.subr.mxu0 0.0
  %752 = vmatpush1.msra.mxu0 0.0
  %753 = vmatprep.subr.mxu0 0.0
  %754 = vmatpush1.msra.mxu0 0.0
  %755 = vmatprep.subr.mxu0 0.0
  %756 = vmatpush1.msra.mxu0 0.0
  %757 = vmatprep.subr.mxu0 0.0
  %758 = vmatpush1.msra.mxu0 0.0
  %759 = vmatprep.subr.mxu0 0.0
  %760 = vmatpush1.msra.mxu0 0.0
  %761 = vmatprep.subr.mxu0 0.0
  %762 = vmatpush1.msra.mxu0 0.0
  %763 = vmatprep.subr.mxu0 0.0
  %764 = vmatpush1.msra.mxu0 0.0
  %765 = vmatprep.subr.mxu0 0.0
  %766 = vmatpush1.msra.mxu0 0.0
  %767 = vmatprep.subr.mxu0 0.0
  %768 = vmatpush1.msra.mxu0 0.0
  %769 = vmatprep.subr.mxu0 0.0
  %770 = vmatpush1.msra.mxu0 0.0
  %771 = vmatprep.subr.mxu0 0.0
  %772 = vmatpush1.msra.mxu0 0.0
  %773 = vmatprep.subr.mxu0 0.0
  %774 = vmatpush1.msra.mxu0 0.0
  %775 = vmatprep.subr.mxu0 0.0
  %776 = vmatpush1.msra.mxu0 0.0
  %777 = vmatprep.subr.mxu0 0.0
  %778 = vmatpush1.msra.mxu0 0.0
  %779 = vmatprep.subr.mxu0 0.0
  %780 = vmatpush1.msra.mxu0 %v742
  %781 = vmatprep.subr.mxu0 0.0
  %782 = vmatpush1.msra.mxu0 %v740
  %783 = vmatprep.subr.mxu0 0.0
  %784 = vmatpush2.msra.mxu0 0.0
  %785 = vmatprep.subr.mxu0 0.0
  %786 = vmatpush2.msra.mxu0 0.0
  %787 = vmatprep.subr.mxu0 0.0
  %788 = vmatpush2.msra.mxu0 0.0
  %789 = vmatprep.subr.mxu0 0.0
  %790 = vmatpush2.msra.mxu0 0.0
  %791 = vmatprep.subr.mxu0 0.0
  %792 = vmatpush2.msra.mxu0 0.0
  %793 = vmatprep.subr.mxu0 0.0
  %794 = vmatpush2.msra.mxu0 0.0
  %795 = vmatprep.subr.mxu0 0.0
  %796 = vmatpush2.msra.mxu0 0.0
  %797 = vmatprep.subr.mxu0 0.0
  %798 = vmatpush2.msra.mxu0 0.0
  %799 = vmatprep.subr.mxu0 0.0
  %800 = vmatpush2.msra.mxu0 0.0
  %801 = vmatprep.subr.mxu0 0.0
  %802 = vmatpush2.msra.mxu0 0.0
  %803 = vmatprep.subr.mxu0 0.0
  %804 = vmatpush2.msra.mxu0 0.0
  %805 = vmatprep.subr.mxu0 0.0
  %806 = vmatpush2.msra.mxu0 0.0
  %807 = vmatprep.subr.mxu0 0.0
  %808 = vmatpush2.msra.mxu0 0.0
  %809 = vmatprep.subr.mxu0 0.0
  %810 = vmatpush2.msra.mxu0 0.0
  %811 = vmatprep.subr.mxu0 0.0
  %812 = vmatpush2.msra.mxu0 0.0
  %813 = vmatprep.subr.mxu0 0.0
  %814 = vmatpush2.msra.mxu0 0.0
  %815 = vmatprep.mubr.f32.mxu0 0.0
  %816 = vmatmul.mubr.f32.gmra.mxu0 %v746
  %v817 = vpop.f32.mrf.mxu0
  %v818 = vadd.f32 0.0, %v817
  %v819 = vpop.f32.mrf.mxu0
  %820 = vmatprep.mubr.f32.mxu0 0.0
  %821 = vmatmul.mubr.f32.gmra.mxu0 %v749
  %v822 = vpop.f32.mrf.mxu0
  %v823 = vadd.f32 0.0, %v822
  %v824 = vpop.f32.mrf.mxu0
  %825 = vdwg.mxu0
  %826 = vrot.lane.b32.xlu0 %v737, 120
  %v827 = vpop.permute.xlu0 %826
  %828 = vrot.lane.b32.xlu0 %v738, 120
  %v829 = vpop.permute.xlu0 %828
  %v832 = vadd.f32 %v737, %v827
  %v833 = vadd.f32 %v738, %v829
  %834 = vrot.lane.b32.xlu0 %v616, 124
  %v835 = vpop.permute.xlu0 %834
  %836 = vrot.lane.b32.xlu0 %v621, 124
  %v837 = vpop.permute.xlu0 %836
  %838 = vrot.lane.b32.xlu0 %v616, 92
  %v839 = vpop.permute.xlu0 %838
  %840 = vrot.lane.b32.xlu0 %v621, 92
  %v841 = vpop.permute.xlu0 %840
  %v842 = vsel %vm169, %v835, 0
  %v844 = vsel %vm169, %v837, 0
  %v846 = vsel %vm169, %v839, 0
  %v848 = vsel %vm169, %v841, 0
  %850 = vmatprep.subr.mxu0 0.0
  %851 = vmatpush1.xpose.msra.mxu0 0.0
  %852 = vmatprep.subr.mxu0 0.0
  %853 = vmatpush1.xpose.msra.mxu0 0.0
  %854 = vmatprep.subr.mxu0 0.0
  %855 = vmatpush1.xpose.msra.mxu0 0.0
  %856 = vmatprep.subr.mxu0 0.0
  %857 = vmatpush1.xpose.msra.mxu0 0.0
  %858 = vmatprep.subr.mxu0 0.0
  %859 = vmatpush1.xpose.msra.mxu0 0.0
  %860 = vmatprep.subr.mxu0 0.0
  %861 = vmatpush1.xpose.msra.mxu0 0.0
  %862 = vmatprep.subr.mxu0 0.0
  %863 = vmatpush1.xpose.msra.mxu0 0.0
  %864 = vmatprep.subr.mxu0 0.0
  %865 = vmatpush1.xpose.msra.mxu0 0.0
  %866 = vmatprep.subr.mxu0 0.0
  %867 = vmatpush1.xpose.msra.mxu0 0.0
  %868 = vmatprep.subr.mxu0 0.0
  %869 = vmatpush1.xpose.msra.mxu0 0.0
  %870 = vmatprep.subr.mxu0 0.0
  %871 = vmatpush1.xpose.msra.mxu0 0.0
  %872 = vmatprep.subr.mxu0 0.0
  %873 = vmatpush1.xpose.msra.mxu0 0.0
  %874 = vmatprep.subr.mxu0 0.0
  %875 = vmatpush1.xpose.msra.mxu0 0.0
  %876 = vmatprep.subr.mxu0 0.0
  %877 = vmatpush1.xpose.msra.mxu0 0.0
  %878 = vmatprep.subr.mxu0 0.0
  %879 = vmatpush1.xpose.msra.mxu0 %v848
  %880 = vmatprep.subr.mxu0 0.0
  %881 = vmatpush1.xpose.msra.mxu0 %v846
  %882 = vmatprep.subr.mxu0 0.0
  %883 = vmatpush2.xpose.msra.mxu0 0.0
  %884 = vmatprep.subr.mxu0 0.0
  %885 = vmatpush2.xpose.msra.mxu0 0.0
  %886 = vmatprep.subr.mxu0 0.0
  %887 = vmatpush2.xpose.msra.mxu0 0.0
  %888 = vmatprep.subr.mxu0 0.0
  %889 = vmatpush2.xpose.msra.mxu0 0.0
  %890 = vmatprep.subr.mxu0 0.0
  %891 = vmatpush2.xpose.msra.mxu0 0.0
  %892 = vmatprep.subr.mxu0 0.0
  %893 = vmatpush2.xpose.msra.mxu0 0.0
  %894 = vmatprep.subr.mxu0 0.0
  %895 = vmatpush2.xpose.msra.mxu0 0.0
  %896 = vmatprep.subr.mxu0 0.0
  %897 = vmatpush2.xpose.msra.mxu0 0.0
  %898 = vmatprep.subr.mxu0 0.0
  %899 = vmatpush2.xpose.msra.mxu0 0.0
  %900 = vmatprep.subr.mxu0 0.0
  %901 = vmatpush2.xpose.msra.mxu0 0.0
  %902 = vmatprep.subr.mxu0 0.0
  %903 = vmatpush2.xpose.msra.mxu0 0.0
  %904 = vmatprep.subr.mxu0 0.0
  %905 = vmatpush2.xpose.msra.mxu0 0.0
  %906 = vmatprep.subr.mxu0 0.0
  %907 = vmatpush2.xpose.msra.mxu0 0.0
  %908 = vmatprep.subr.mxu0 0.0
  %909 = vmatpush2.xpose.msra.mxu0 0.0
  %910 = vmatprep.subr.mxu0 0.0
  %911 = vmatpush2.xpose.msra.mxu0 0.0
  %912 = vmatprep.subr.mxu0 0.0
  %913 = vmatpush2.xpose.msra.mxu0 0.0
  %914 = vmatprep.mubr.f32.mxu0 0.0
  %915 = vmatmul.mubr.f32.gmra.mxu0 %v842
  %v916 = vpop.f32.mrf.mxu0
  %v917 = vadd.f32 0.0, %v916
  %v918 = vpop.f32.mrf.mxu0
  %919 = vmatprep.mubr.f32.mxu0 0.0
  %920 = vmatmul.mubr.f32.gmra.mxu0 %v844
  %v921 = vpop.f32.mrf.mxu0
  %v922 = vadd.f32 0.0, %v921
  %v923 = vpop.f32.mrf.mxu0
  %924 = vdwg.mxu0
  %v925 = vmul.f32 %v917, 0.5
  %v926 = vmul.f32 %v922, 0.5
  %v927 = vadd.f32 %v925, %v510
  %v928 = vadd.f32 %v926, %v511
  %v929 = vsel %vm87, %v927, -inf
  %930 = vmax.xlane.f32.xlu0 %v929
  %v931 = vpop.xlane.xlu0 %930
  %v932 = vsel %vm87, %v928, -inf
  %933 = vmax.xlane.f32.xlu0 %v932
  %v934 = vpop.xlane.xlu0 %933
  %v935 = vsub.f32 %v927, %v931
  %v936 = vsub.f32 %v928, %v934
  %v937 = vmul.f32 %v935, 1.442695
  %v938 = vpow.pop %v937
  %v939 = vmul.f32 %v936, 1.442695
  %v940 = vpow.pop %v939
  %v941 = vsel %vm87, %v938, 0.0
  %942 = vadd.xlane.f32.xlu0 %v941
  %v943 = vpop.xlane.xlu0 %942
  %v944 = vsel %vm87, %v940, 0.0
  %945 = vadd.xlane.f32.xlu0 %v944
  %v946 = vpop.xlane.xlu0 %945
  %v947 = vrcp.pop %v943
  %v948 = vrcp.pop %v946
  %v949 = vmul.f32 %v938, %v947
  %v950 = vmul.f32 %v940, %v948
  %951 = vrot.lane.b32.xlu0 %v616, 60
  %v952 = vpop.permute.xlu0 %951
  %953 = vrot.lane.b32.xlu0 %v621, 60
  %v954 = vpop.permute.xlu0 %953
  %v958 = vsel %vm87, %v949, 0
  %v961 = vsel %vm87, %v950, 0
  %963 = vmatprep.subr.mxu0 0.0
  %964 = vmatpush1.msra.mxu0 0.0
  %965 = vmatprep.subr.mxu0 0.0
  %966 = vmatpush1.msra.mxu0 0.0
  %967 = vmatprep.subr.mxu0 0.0
  %968 = vmatpush1.msra.mxu0 0.0
  %969 = vmatprep.subr.mxu0 0.0
  %970 = vmatpush1.msra.mxu0 0.0
  %971 = vmatprep.subr.mxu0 0.0
  %972 = vmatpush1.msra.mxu0 0.0
  %973 = vmatprep.subr.mxu0 0.0
  %974 = vmatpush1.msra.mxu0 0.0
  %975 = vmatprep.subr.mxu0 0.0
  %976 = vmatpush1.msra.mxu0 0.0
  %977 = vmatprep.subr.mxu0 0.0
  %978 = vmatpush1.msra.mxu0 0.0
  %979 = vmatprep.subr.mxu0 0.0
  %980 = vmatpush1.msra.mxu0 0.0
  %981 = vmatprep.subr.mxu0 0.0
  %982 = vmatpush1.msra.mxu0 0.0
  %983 = vmatprep.subr.mxu0 0.0
  %984 = vmatpush1.msra.mxu0 0.0
  %985 = vmatprep.subr.mxu0 0.0
  %986 = vmatpush1.msra.mxu0 0.0
  %987 = vmatprep.subr.mxu0 0.0
  %988 = vmatpush1.msra.mxu0 0.0
  %989 = vmatprep.subr.mxu0 0.0
  %990 = vmatpush1.msra.mxu0 0.0
  %991 = vmatprep.subr.mxu0 0.0
  %992 = vmatpush1.msra.mxu0 %v954
  %993 = vmatprep.subr.mxu0 0.0
  %994 = vmatpush1.msra.mxu0 %v952
  %995 = vmatprep.subr.mxu0 0.0
  %996 = vmatpush2.msra.mxu0 0.0
  %997 = vmatprep.subr.mxu0 0.0
  %998 = vmatpush2.msra.mxu0 0.0
  %999 = vmatprep.subr.mxu0 0.0
  %1000 = vmatpush2.msra.mxu0 0.0
  %1001 = vmatprep.subr.mxu0 0.0
  %1002 = vmatpush2.msra.mxu0 0.0
  %1003 = vmatprep.subr.mxu0 0.0
  %1004 = vmatpush2.msra.mxu0 0.0
  %1005 = vmatprep.subr.mxu0 0.0
  %1006 = vmatpush2.msra.mxu0 0.0
  %1007 = vmatprep.subr.mxu0 0.0
  %1008 = vmatpush2.msra.mxu0 0.0
  %1009 = vmatprep.subr.mxu0 0.0
  %1010 = vmatpush2.msra.mxu0 0.0
  %1011 = vmatprep.subr.mxu0 0.0
  %1012 = vmatpush2.msra.mxu0 0.0
  %1013 = vmatprep.subr.mxu0 0.0
  %1014 = vmatpush2.msra.mxu0 0.0
  %1015 = vmatprep.subr.mxu0 0.0
  %1016 = vmatpush2.msra.mxu0 0.0
  %1017 = vmatprep.subr.mxu0 0.0
  %1018 = vmatpush2.msra.mxu0 0.0
  %1019 = vmatprep.subr.mxu0 0.0
  %1020 = vmatpush2.msra.mxu0 0.0
  %1021 = vmatprep.subr.mxu0 0.0
  %1022 = vmatpush2.msra.mxu0 0.0
  %1023 = vmatprep.subr.mxu0 0.0
  %1024 = vmatpush2.msra.mxu0 0.0
  %1025 = vmatprep.subr.mxu0 0.0
  %1026 = vmatpush2.msra.mxu0 0.0
  %1027 = vmatprep.mubr.f32.mxu0 0.0
  %1028 = vmatmul.mubr.f32.gmra.mxu0 %v958
  %v1029 = vpop.f32.mrf.mxu0
  %v1030 = vadd.f32 0.0, %v1029
  %v1031 = vpop.f32.mrf.mxu0
  %1032 = vmatprep.mubr.f32.mxu0 0.0
  %1033 = vmatmul.mubr.f32.gmra.mxu0 %v961
  %v1034 = vpop.f32.mrf.mxu0
  %v1035 = vadd.f32 0.0, %v1034
  %v1036 = vpop.f32.mrf.mxu0
  %1037 = vdwg.mxu0
  %1038 = vrot.lane.b32.xlu0 %v949, 120
  %v1039 = vpop.permute.xlu0 %1038
  %1040 = vrot.lane.b32.xlu0 %v950, 120
  %v1041 = vpop.permute.xlu0 %1040
  %v1044 = vadd.f32 %v949, %v1039
  %v1045 = vadd.f32 %v950, %v1041
  %1046 = vrot.lane.b32.xlu0 %v616, 120
  %v1047 = vpop.permute.xlu0 %1046
  %1048 = vrot.lane.b32.xlu0 %v621, 120
  %v1049 = vpop.permute.xlu0 %1048
  %1050 = vrot.lane.b32.xlu0 %v616, 88
  %v1051 = vpop.permute.xlu0 %1050
  %1052 = vrot.lane.b32.xlu0 %v621, 88
  %v1053 = vpop.permute.xlu0 %1052
  %v1054 = vsel %vm169, %v1047, 0
  %v1056 = vsel %vm169, %v1049, 0
  %v1058 = vsel %vm169, %v1051, 0
  %v1060 = vsel %vm169, %v1053, 0
  %1062 = vmatprep.subr.mxu0 0.0
  %1063 = vmatpush1.xpose.msra.mxu0 0.0
  %1064 = vmatprep.subr.mxu0 0.0
  %1065 = vmatpush1.xpose.msra.mxu0 0.0
  %1066 = vmatprep.subr.mxu0 0.0
  %1067 = vmatpush1.xpose.msra.mxu0 0.0
  %1068 = vmatprep.subr.mxu0 0.0
  %1069 = vmatpush1.xpose.msra.mxu0 0.0
  %1070 = vmatprep.subr.mxu0 0.0
  %1071 = vmatpush1.xpose.msra.mxu0 0.0
  %1072 = vmatprep.subr.mxu0 0.0
  %1073 = vmatpush1.xpose.msra.mxu0 0.0
  %1074 = vmatprep.subr.mxu0 0.0
  %1075 = vmatpush1.xpose.msra.mxu0 0.0
  %1076 = vmatprep.subr.mxu0 0.0
  %1077 = vmatpush1.xpose.msra.mxu0 0.0
  %1078 = vmatprep.subr.mxu0 0.0
  %1079 = vmatpush1.xpose.msra.mxu0 0.0
  %1080 = vmatprep.subr.mxu0 0.0
  %1081 = vmatpush1.xpose.msra.mxu0 0.0
  %1082 = vmatprep.subr.mxu0 0.0
  %1083 = vmatpush1.xpose.msra.mxu0 0.0
  %1084 = vmatprep.subr.mxu0 0.0
  %1085 = vmatpush1.xpose.msra.mxu0 0.0
  %1086 = vmatprep.subr.mxu0 0.0
  %1087 = vmatpush1.xpose.msra.mxu0 0.0
  %1088 = vmatprep.subr.mxu0 0.0
  %1089 = vmatpush1.xpose.msra.mxu0 0.0
  %1090 = vmatprep.subr.mxu0 0.0
  %1091 = vmatpush1.xpose.msra.mxu0 %v1060
  %1092 = vmatprep.subr.mxu0 0.0
  %1093 = vmatpush1.xpose.msra.mxu0 %v1058
  %1094 = vmatprep.subr.mxu0 0.0
  %1095 = vmatpush2.xpose.msra.mxu0 0.0
  %1096 = vmatprep.subr.mxu0 0.0
  %1097 = vmatpush2.xpose.msra.mxu0 0.0
  %1098 = vmatprep.subr.mxu0 0.0
  %1099 = vmatpush2.xpose.msra.mxu0 0.0
  %1100 = vmatprep.subr.mxu0 0.0
  %1101 = vmatpush2.xpose.msra.mxu0 0.0
  %1102 = vmatprep.subr.mxu0 0.0
  %1103 = vmatpush2.xpose.msra.mxu0 0.0
  %1104 = vmatprep.subr.mxu0 0.0
  %1105 = vmatpush2.xpose.msra.mxu0 0.0
  %1106 = vmatprep.subr.mxu0 0.0
  %1107 = vmatpush2.xpose.msra.mxu0 0.0
  %1108 = vmatprep.subr.mxu0 0.0
  %1109 = vmatpush2.xpose.msra.mxu0 0.0
  %1110 = vmatprep.subr.mxu0 0.0
  %1111 = vmatpush2.xpose.msra.mxu0 0.0
  %1112 = vmatprep.subr.mxu0 0.0
  %1113 = vmatpush2.xpose.msra.mxu0 0.0
  %1114 = vmatprep.subr.mxu0 0.0
  %1115 = vmatpush2.xpose.msra.mxu0 0.0
  %1116 = vmatprep.subr.mxu0 0.0
  %1117 = vmatpush2.xpose.msra.mxu0 0.0
  %1118 = vmatprep.subr.mxu0 0.0
  %1119 = vmatpush2.xpose.msra.mxu0 0.0
  %1120 = vmatprep.subr.mxu0 0.0
  %1121 = vmatpush2.xpose.msra.mxu0 0.0
  %1122 = vmatprep.subr.mxu0 0.0
  %1123 = vmatpush2.xpose.msra.mxu0 0.0
  %1124 = vmatprep.subr.mxu0 0.0
  %1125 = vmatpush2.xpose.msra.mxu0 0.0
  %1126 = vmatprep.mubr.f32.mxu0 0.0
  %1127 = vmatmul.mubr.f32.gmra.mxu0 %v1054
  %v1128 = vpop.f32.mrf.mxu0
  %v1129 = vadd.f32 0.0, %v1128
  %v1130 = vpop.f32.mrf.mxu0
  %1131 = vmatprep.mubr.f32.mxu0 0.0
  %1132 = vmatmul.mubr.f32.gmra.mxu0 %v1056
  %v1133 = vpop.f32.mrf.mxu0
  %v1134 = vadd.f32 0.0, %v1133
  %v1135 = vpop.f32.mrf.mxu0
  %1136 = vdwg.mxu0
  %v1137 = vmul.f32 %v1129, 0.5
  %v1138 = vmul.f32 %v1134, 0.5
  %v1139 = vadd.f32 %v1137, %v510
  %v1140 = vadd.f32 %v1138, %v511
  %v1141 = vsel %vm87, %v1139, -inf
  %1142 = vmax.xlane.f32.xlu0 %v1141
  %v1143 = vpop.xlane.xlu0 %1142
  %v1144 = vsel %vm87, %v1140, -inf
  %1145 = vmax.xlane.f32.xlu0 %v1144
  %v1146 = vpop.xlane.xlu0 %1145
  %v1147 = vsub.f32 %v1139, %v1143
  %v1148 = vsub.f32 %v1140, %v1146
  %v1149 = vmul.f32 %v1147, 1.442695
  %v1150 = vpow.pop %v1149
  %v1151 = vmul.f32 %v1148, 1.442695
  %v1152 = vpow.pop %v1151
  %v1153 = vsel %vm87, %v1150, 0.0
  %1154 = vadd.xlane.f32.xlu0 %v1153
  %v1155 = vpop.xlane.xlu0 %1154
  %v1156 = vsel %vm87, %v1152, 0.0
  %1157 = vadd.xlane.f32.xlu0 %v1156
  %v1158 = vpop.xlane.xlu0 %1157
  %v1159 = vrcp.pop %v1155
  %v1160 = vrcp.pop %v1158
  %v1161 = vmul.f32 %v1150, %v1159
  %v1162 = vmul.f32 %v1152, %v1160
  %1163 = vrot.lane.b32.xlu0 %v616, 56
  %v1164 = vpop.permute.xlu0 %1163
  %1165 = vrot.lane.b32.xlu0 %v621, 56
  %v1166 = vpop.permute.xlu0 %1165
  %v1170 = vsel %vm87, %v1161, 0
  %v1173 = vsel %vm87, %v1162, 0
  %1175 = vmatprep.subr.mxu0 0.0
  %1176 = vmatpush1.msra.mxu0 0.0
  %1177 = vmatprep.subr.mxu0 0.0
  %1178 = vmatpush1.msra.mxu0 0.0
  %1179 = vmatprep.subr.mxu0 0.0
  %1180 = vmatpush1.msra.mxu0 0.0
  %1181 = vmatprep.subr.mxu0 0.0
  %1182 = vmatpush1.msra.mxu0 0.0
  %1183 = vmatprep.subr.mxu0 0.0
  %1184 = vmatpush1.msra.mxu0 0.0
  %1185 = vmatprep.subr.mxu0 0.0
  %1186 = vmatpush1.msra.mxu0 0.0
  %1187 = vmatprep.subr.mxu0 0.0
  %1188 = vmatpush1.msra.mxu0 0.0
  %1189 = vmatprep.subr.mxu0 0.0
  %1190 = vmatpush1.msra.mxu0 0.0
  %1191 = vmatprep.subr.mxu0 0.0
  %1192 = vmatpush1.msra.mxu0 0.0
  %1193 = vmatprep.subr.mxu0 0.0
  %1194 = vmatpush1.msra.mxu0 0.0
  %1195 = vmatprep.subr.mxu0 0.0
  %1196 = vmatpush1.msra.mxu0 0.0
  %1197 = vmatprep.subr.mxu0 0.0
  %1198 = vmatpush1.msra.mxu0 0.0
  %1199 = vmatprep.subr.mxu0 0.0
  %1200 = vmatpush1.msra.mxu0 0.0
  %1201 = vmatprep.subr.mxu0 0.0
  %1202 = vmatpush1.msra.mxu0 0.0
  %1203 = vmatprep.subr.mxu0 0.0
  %1204 = vmatpush1.msra.mxu0 %v1166
  %1205 = vmatprep.subr.mxu0 0.0
  %1206 = vmatpush1.msra.mxu0 %v1164
  %1207 = vmatprep.subr.mxu0 0.0
  %1208 = vmatpush2.msra.mxu0 0.0
  %1209 = vmatprep.subr.mxu0 0.0
  %1210 = vmatpush2.msra.mxu0 0.0
  %1211 = vmatprep.subr.mxu0 0.0
  %1212 = vmatpush2.msra.mxu0 0.0
  %1213 = vmatprep.subr.mxu0 0.0
  %1214 = vmatpush2.msra.mxu0 0.0
  %1215 = vmatprep.subr.mxu0 0.0
  %1216 = vmatpush2.msra.mxu0 0.0
  %1217 = vmatprep.subr.mxu0 0.0
  %1218 = vmatpush2.msra.mxu0 0.0
  %1219 = vmatprep.subr.mxu0 0.0
  %1220 = vmatpush2.msra.mxu0 0.0
  %1221 = vmatprep.subr.mxu0 0.0
  %1222 = vmatpush2.msra.mxu0 0.0
  %1223 = vmatprep.subr.mxu0 0.0
  %1224 = vmatpush2.msra.mxu0 0.0
  %1225 = vmatprep.subr.mxu0 0.0
  %1226 = vmatpush2.msra.mxu0 0.0
  %1227 = vmatprep.subr.mxu0 0.0
  %1228 = vmatpush2.msra.mxu0 0.0
  %1229 = vmatprep.subr.mxu0 0.0
  %1230 = vmatpush2.msra.mxu0 0.0
  %1231 = vmatprep.subr.mxu0 0.0
  %1232 = vmatpush2.msra.mxu0 0.0
  %1233 = vmatprep.subr.mxu0 0.0
  %1234 = vmatpush2.msra.mxu0 0.0
  %1235 = vmatprep.subr.mxu0 0.0
  %1236 = vmatpush2.msra.mxu0 0.0
  %1237 = vmatprep.subr.mxu0 0.0
  %1238 = vmatpush2.msra.mxu0 0.0
  %1239 = vmatprep.mubr.f32.mxu0 0.0
  %1240 = vmatmul.mubr.f32.gmra.mxu0 %v1170
  %v1241 = vpop.f32.mrf.mxu0
  %v1242 = vadd.f32 0.0, %v1241
  %v1243 = vpop.f32.mrf.mxu0
  %1244 = vmatprep.mubr.f32.mxu0 0.0
  %1245 = vmatmul.mubr.f32.gmra.mxu0 %v1173
  %v1246 = vpop.f32.mrf.mxu0
  %v1247 = vadd.f32 0.0, %v1246
  %v1248 = vpop.f32.mrf.mxu0
  %1249 = vdwg.mxu0
  %1250 = vrot.lane.b32.xlu0 %v1161, 120
  %v1251 = vpop.permute.xlu0 %1250
  %1252 = vrot.lane.b32.xlu0 %v1162, 120
  %v1253 = vpop.permute.xlu0 %1252
  %v1256 = vadd.f32 %v1161, %v1251
  %v1257 = vadd.f32 %v1162, %v1253
  %1258 = vrot.lane.b32.xlu0 %v616, 116
  %v1259 = vpop.permute.xlu0 %1258
  %1260 = vrot.lane.b32.xlu0 %v621, 116
  %v1261 = vpop.permute.xlu0 %1260
  %1262 = vrot.lane.b32.xlu0 %v616, 84
  %v1263 = vpop.permute.xlu0 %1262
  %1264 = vrot.lane.b32.xlu0 %v621, 84
  %v1265 = vpop.permute.xlu0 %1264
  %v1266 = vsel %vm169, %v1259, 0
  %v1268 = vsel %vm169, %v1261, 0
  %v1270 = vsel %vm169, %v1263, 0
  %v1272 = vsel %vm169, %v1265, 0
  %1274 = vmatprep.subr.mxu0 0.0
  %1275 = vmatpush1.xpose.msra.mxu0 0.0
  %1276 = vmatprep.subr.mxu0 0.0
  %1277 = vmatpush1.xpose.msra.mxu0 0.0
  %1278 = vmatprep.subr.mxu0 0.0
  %1279 = vmatpush1.xpose.msra.mxu0 0.0
  %1280 = vmatprep.subr.mxu0 0.0
  %1281 = vmatpush1.xpose.msra.mxu0 0.0
  %1282 = vmatprep.subr.mxu0 0.0
  %1283 = vmatpush1.xpose.msra.mxu0 0.0
  %1284 = vmatprep.subr.mxu0 0.0
  %1285 = vmatpush1.xpose.msra.mxu0 0.0
  %1286 = vmatprep.subr.mxu0 0.0
  %1287 = vmatpush1.xpose.msra.mxu0 0.0
  %1288 = vmatprep.subr.mxu0 0.0
  %1289 = vmatpush1.xpose.msra.mxu0 0.0
  %1290 = vmatprep.subr.mxu0 0.0
  %1291 = vmatpush1.xpose.msra.mxu0 0.0
  %1292 = vmatprep.subr.mxu0 0.0
  %1293 = vmatpush1.xpose.msra.mxu0 0.0
  %1294 = vmatprep.subr.mxu0 0.0
  %1295 = vmatpush1.xpose.msra.mxu0 0.0
  %1296 = vmatprep.subr.mxu0 0.0
  %1297 = vmatpush1.xpose.msra.mxu0 0.0
  %1298 = vmatprep.subr.mxu0 0.0
  %1299 = vmatpush1.xpose.msra.mxu0 0.0
  %1300 = vmatprep.subr.mxu0 0.0
  %1301 = vmatpush1.xpose.msra.mxu0 0.0
  %1302 = vmatprep.subr.mxu0 0.0
  %1303 = vmatpush1.xpose.msra.mxu0 %v1272
  %1304 = vmatprep.subr.mxu0 0.0
  %1305 = vmatpush1.xpose.msra.mxu0 %v1270
  %1306 = vmatprep.subr.mxu0 0.0
  %1307 = vmatpush2.xpose.msra.mxu0 0.0
  %1308 = vmatprep.subr.mxu0 0.0
  %1309 = vmatpush2.xpose.msra.mxu0 0.0
  %1310 = vmatprep.subr.mxu0 0.0
  %1311 = vmatpush2.xpose.msra.mxu0 0.0
  %1312 = vmatprep.subr.mxu0 0.0
  %1313 = vmatpush2.xpose.msra.mxu0 0.0
  %1314 = vmatprep.subr.mxu0 0.0
  %1315 = vmatpush2.xpose.msra.mxu0 0.0
  %1316 = vmatprep.subr.mxu0 0.0
  %1317 = vmatpush2.xpose.msra.mxu0 0.0
  %1318 = vmatprep.subr.mxu0 0.0
  %1319 = vmatpush2.xpose.msra.mxu0 0.0
  %1320 = vmatprep.subr.mxu0 0.0
  %1321 = vmatpush2.xpose.msra.mxu0 0.0
  %1322 = vmatprep.subr.mxu0 0.0
  %1323 = vmatpush2.xpose.msra.mxu0 0.0
  %1324 = vmatprep.subr.mxu0 0.0
  %1325 = vmatpush2.xpose.msra.mxu0 0.0
  %1326 = vmatprep.subr.mxu0 0.0
  %1327 = vmatpush2.xpose.msra.mxu0 0.0
  %1328 = vmatprep.subr.mxu0 0.0
  %1329 = vmatpush2.xpose.msra.mxu0 0.0
  %1330 = vmatprep.subr.mxu0 0.0
  %1331 = vmatpush2.xpose.msra.mxu0 0.0
  %1332 = vmatprep.subr.mxu0 0.0
  %1333 = vmatpush2.xpose.msra.mxu0 0.0
  %1334 = vmatprep.subr.mxu0 0.0
  %1335 = vmatpush2.xpose.msra.mxu0 0.0
  %1336 = vmatprep.subr.mxu0 0.0
  %1337 = vmatpush2.xpose.msra.mxu0 0.0
  %1338 = vmatprep.mubr.f32.mxu0 0.0
  %1339 = vmatmul.mubr.f32.gmra.mxu0 %v1266
  %v1340 = vpop.f32.mrf.mxu0
  %v1341 = vadd.f32 0.0, %v1340
  %v1342 = vpop.f32.mrf.mxu0
  %1343 = vmatprep.mubr.f32.mxu0 0.0
  %1344 = vmatmul.mubr.f32.gmra.mxu0 %v1268
  %v1345 = vpop.f32.mrf.mxu0
  %v1346 = vadd.f32 0.0, %v1345
  %v1347 = vpop.f32.mrf.mxu0
  %1348 = vdwg.mxu0
  %v1349 = vmul.f32 %v1341, 0.5
  %v1350 = vmul.f32 %v1346, 0.5
  %v1351 = vadd.f32 %v1349, %v510
  %v1352 = vadd.f32 %v1350, %v511
  %v1353 = vsel %vm87, %v1351, -inf
  %1354 = vmax.xlane.f32.xlu0 %v1353
  %v1355 = vpop.xlane.xlu0 %1354
  %v1356 = vsel %vm87, %v1352, -inf
  %1357 = vmax.xlane.f32.xlu0 %v1356
  %v1358 = vpop.xlane.xlu0 %1357
  %v1359 = vsub.f32 %v1351, %v1355
  %v1360 = vsub.f32 %v1352, %v1358
  %v1361 = vmul.f32 %v1359, 1.442695
  %v1362 = vpow.pop %v1361
  %v1363 = vmul.f32 %v1360, 1.442695
  %v1364 = vpow.pop %v1363
  %v1365 = vsel %vm87, %v1362, 0.0
  %1366 = vadd.xlane.f32.xlu0 %v1365
  %v1367 = vpop.xlane.xlu0 %1366
  %v1368 = vsel %vm87, %v1364, 0.0
  %1369 = vadd.xlane.f32.xlu0 %v1368
  %v1370 = vpop.xlane.xlu0 %1369
  %v1371 = vrcp.pop %v1367
  %v1372 = vrcp.pop %v1370
  %v1373 = vmul.f32 %v1362, %v1371
  %v1374 = vmul.f32 %v1364, %v1372
  %1375 = vrot.lane.b32.xlu0 %v616, 52
  %v1376 = vpop.permute.xlu0 %1375
  %1377 = vrot.lane.b32.xlu0 %v621, 52
  %v1378 = vpop.permute.xlu0 %1377
  %v1382 = vsel %vm87, %v1373, 0
  %v1385 = vsel %vm87, %v1374, 0
  %1387 = vmatprep.subr.mxu0 0.0
  %1388 = vmatpush1.msra.mxu0 0.0
  %1389 = vmatprep.subr.mxu0 0.0
  %1390 = vmatpush1.msra.mxu0 0.0
  %1391 = vmatprep.subr.mxu0 0.0
  %1392 = vmatpush1.msra.mxu0 0.0
  %1393 = vmatprep.subr.mxu0 0.0
  %1394 = vmatpush1.msra.mxu0 0.0
  %1395 = vmatprep.subr.mxu0 0.0
  %1396 = vmatpush1.msra.mxu0 0.0
  %1397 = vmatprep.subr.mxu0 0.0
  %1398 = vmatpush1.msra.mxu0 0.0
  %1399 = vmatprep.subr.mxu0 0.0
  %1400 = vmatpush1.msra.mxu0 0.0
  %1401 = vmatprep.subr.mxu0 0.0
  %1402 = vmatpush1.msra.mxu0 0.0
  %1403 = vmatprep.subr.mxu0 0.0
  %1404 = vmatpush1.msra.mxu0 0.0
  %1405 = vmatprep.subr.mxu0 0.0
  %1406 = vmatpush1.msra.mxu0 0.0
  %1407 = vmatprep.subr.mxu0 0.0
  %1408 = vmatpush1.msra.mxu0 0.0
  %1409 = vmatprep.subr.mxu0 0.0
  %1410 = vmatpush1.msra.mxu0 0.0
  %1411 = vmatprep.subr.mxu0 0.0
  %1412 = vmatpush1.msra.mxu0 0.0
  %1413 = vmatprep.subr.mxu0 0.0
  %1414 = vmatpush1.msra.mxu0 0.0
  %1415 = vmatprep.subr.mxu0 0.0
  %1416 = vmatpush1.msra.mxu0 %v1378
  %1417 = vmatprep.subr.mxu0 0.0
  %1418 = vmatpush1.msra.mxu0 %v1376
  %1419 = vmatprep.subr.mxu0 0.0
  %1420 = vmatpush2.msra.mxu0 0.0
  %1421 = vmatprep.subr.mxu0 0.0
  %1422 = vmatpush2.msra.mxu0 0.0
  %1423 = vmatprep.subr.mxu0 0.0
  %1424 = vmatpush2.msra.mxu0 0.0
  %1425 = vmatprep.subr.mxu0 0.0
  %1426 = vmatpush2.msra.mxu0 0.0
  %1427 = vmatprep.subr.mxu0 0.0
  %1428 = vmatpush2.msra.mxu0 0.0
  %1429 = vmatprep.subr.mxu0 0.0
  %1430 = vmatpush2.msra.mxu0 0.0
  %1431 = vmatprep.subr.mxu0 0.0
  %1432 = vmatpush2.msra.mxu0 0.0
  %1433 = vmatprep.subr.mxu0 0.0
  %1434 = vmatpush2.msra.mxu0 0.0
  %1435 = vmatprep.subr.mxu0 0.0
  %1436 = vmatpush2.msra.mxu0 0.0
  %1437 = vmatprep.subr.mxu0 0.0
  %1438 = vmatpush2.msra.mxu0 0.0
  %1439 = vmatprep.subr.mxu0 0.0
  %1440 = vmatpush2.msra.mxu0 0.0
  %1441 = vmatprep.subr.mxu0 0.0
  %1442 = vmatpush2.msra.mxu0 0.0
  %1443 = vmatprep.subr.mxu0 0.0
  %1444 = vmatpush2.msra.mxu0 0.0
  %1445 = vmatprep.subr.mxu0 0.0
  %1446 = vmatpush2.msra.mxu0 0.0
  %1447 = vmatprep.subr.mxu0 0.0
  %1448 = vmatpush2.msra.mxu0 0.0
  %1449 = vmatprep.subr.mxu0 0.0
  %1450 = vmatpush2.msra.mxu0 0.0
  %1451 = vmatprep.mubr.f32.mxu0 0.0
  %1452 = vmatmul.mubr.f32.gmra.mxu0 %v1382
  %v1453 = vpop.f32.mrf.mxu0
  %v1454 = vadd.f32 0.0, %v1453
  %v1455 = vpop.f32.mrf.mxu0
  %1456 = vmatprep.mubr.f32.mxu0 0.0
  %1457 = vmatmul.mubr.f32.gmra.mxu0 %v1385
  %v1458 = vpop.f32.mrf.mxu0
  %v1459 = vadd.f32 0.0, %v1458
  %v1460 = vpop.f32.mrf.mxu0
  %1461 = vdwg.mxu0
  %1462 = vrot.lane.b32.xlu0 %v1373, 120
  %v1463 = vpop.permute.xlu0 %1462
  %1464 = vrot.lane.b32.xlu0 %v1374, 120
  %v1465 = vpop.permute.xlu0 %1464
  %v1468 = vadd.f32 %v1373, %v1463
  %v1469 = vadd.f32 %v1374, %v1465
  %1470 = vrot.lane.b32.xlu0 %v616, 112
  %v1471 = vpop.permute.xlu0 %1470
  %1472 = vrot.lane.b32.xlu0 %v621, 112
  %v1473 = vpop.permute.xlu0 %1472
  %1474 = vrot.lane.b32.xlu0 %v616, 80
  %v1475 = vpop.permute.xlu0 %1474
  %1476 = vrot.lane.b32.xlu0 %v621, 80
  %v1477 = vpop.permute.xlu0 %1476
  %v1478 = vsel %vm169, %v1471, 0
  %v1480 = vsel %vm169, %v1473, 0
  %v1482 = vsel %vm169, %v1475, 0
  %v1484 = vsel %vm169, %v1477, 0
  %1486 = vmatprep.subr.mxu0 0.0
  %1487 = vmatpush1.xpose.msra.mxu0 0.0
  %1488 = vmatprep.subr.mxu0 0.0
  %1489 = vmatpush1.xpose.msra.mxu0 0.0
  %1490 = vmatprep.subr.mxu0 0.0
  %1491 = vmatpush1.xpose.msra.mxu0 0.0
  %1492 = vmatprep.subr.mxu0 0.0
  %1493 = vmatpush1.xpose.msra.mxu0 0.0
  %1494 = vmatprep.subr.mxu0 0.0
  %1495 = vmatpush1.xpose.msra.mxu0 0.0
  %1496 = vmatprep.subr.mxu0 0.0
  %1497 = vmatpush1.xpose.msra.mxu0 0.0
  %1498 = vmatprep.subr.mxu0 0.0
  %1499 = vmatpush1.xpose.msra.mxu0 0.0
  %1500 = vmatprep.subr.mxu0 0.0
  %1501 = vmatpush1.xpose.msra.mxu0 0.0
  %1502 = vmatprep.subr.mxu0 0.0
  %1503 = vmatpush1.xpose.msra.mxu0 0.0
  %1504 = vmatprep.subr.mxu0 0.0
  %1505 = vmatpush1.xpose.msra.mxu0 0.0
  %1506 = vmatprep.subr.mxu0 0.0
  %1507 = vmatpush1.xpose.msra.mxu0 0.0
  %1508 = vmatprep.subr.mxu0 0.0
  %1509 = vmatpush1.xpose.msra.mxu0 0.0
  %1510 = vmatprep.subr.mxu0 0.0
  %1511 = vmatpush1.xpose.msra.mxu0 0.0
  %1512 = vmatprep.subr.mxu0 0.0
  %1513 = vmatpush1.xpose.msra.mxu0 0.0
  %1514 = vmatprep.subr.mxu0 0.0
  %1515 = vmatpush1.xpose.msra.mxu0 %v1484
  %1516 = vmatprep.subr.mxu0 0.0
  %1517 = vmatpush1.xpose.msra.mxu0 %v1482
  %1518 = vmatprep.subr.mxu0 0.0
  %1519 = vmatpush2.xpose.msra.mxu0 0.0
  %1520 = vmatprep.subr.mxu0 0.0
  %1521 = vmatpush2.xpose.msra.mxu0 0.0
  %1522 = vmatprep.subr.mxu0 0.0
  %1523 = vmatpush2.xpose.msra.mxu0 0.0
  %1524 = vmatprep.subr.mxu0 0.0
  %1525 = vmatpush2.xpose.msra.mxu0 0.0
  %1526 = vmatprep.subr.mxu0 0.0
  %1527 = vmatpush2.xpose.msra.mxu0 0.0
  %1528 = vmatprep.subr.mxu0 0.0
  %1529 = vmatpush2.xpose.msra.mxu0 0.0
  %1530 = vmatprep.subr.mxu0 0.0
  %1531 = vmatpush2.xpose.msra.mxu0 0.0
  %1532 = vmatprep.subr.mxu0 0.0
  %1533 = vmatpush2.xpose.msra.mxu0 0.0
  %1534 = vmatprep.subr.mxu0 0.0
  %1535 = vmatpush2.xpose.msra.mxu0 0.0
  %1536 = vmatprep.subr.mxu0 0.0
  %1537 = vmatpush2.xpose.msra.mxu0 0.0
  %1538 = vmatprep.subr.mxu0 0.0
  %1539 = vmatpush2.xpose.msra.mxu0 0.0
  %1540 = vmatprep.subr.mxu0 0.0
  %1541 = vmatpush2.xpose.msra.mxu0 0.0
  %1542 = vmatprep.subr.mxu0 0.0
  %1543 = vmatpush2.xpose.msra.mxu0 0.0
  %1544 = vmatprep.subr.mxu0 0.0
  %1545 = vmatpush2.xpose.msra.mxu0 0.0
  %1546 = vmatprep.subr.mxu0 0.0
  %1547 = vmatpush2.xpose.msra.mxu0 0.0
  %1548 = vmatprep.subr.mxu0 0.0
  %1549 = vmatpush2.xpose.msra.mxu0 0.0
  %1550 = vmatprep.mubr.f32.mxu0 0.0
  %1551 = vmatmul.mubr.f32.gmra.mxu0 %v1478
  %v1552 = vpop.f32.mrf.mxu0
  %v1553 = vadd.f32 0.0, %v1552
  %v1554 = vpop.f32.mrf.mxu0
  %1555 = vmatprep.mubr.f32.mxu0 0.0
  %1556 = vmatmul.mubr.f32.gmra.mxu0 %v1480
  %v1557 = vpop.f32.mrf.mxu0
  %v1558 = vadd.f32 0.0, %v1557
  %v1559 = vpop.f32.mrf.mxu0
  %1560 = vdwg.mxu0
  %v1561 = vmul.f32 %v1553, 0.5
  %v1562 = vmul.f32 %v1558, 0.5
  %v1563 = vadd.f32 %v1561, %v510
  %v1564 = vadd.f32 %v1562, %v511
  %v1565 = vsel %vm87, %v1563, -inf
  %1566 = vmax.xlane.f32.xlu0 %v1565
  %v1567 = vpop.xlane.xlu0 %1566
  %v1568 = vsel %vm87, %v1564, -inf
  %1569 = vmax.xlane.f32.xlu0 %v1568
  %v1570 = vpop.xlane.xlu0 %1569
  %v1571 = vsub.f32 %v1563, %v1567
  %v1572 = vsub.f32 %v1564, %v1570
  %v1573 = vmul.f32 %v1571, 1.442695
  %v1574 = vpow.pop %v1573
  %v1575 = vmul.f32 %v1572, 1.442695
  %v1576 = vpow.pop %v1575
  %v1577 = vsel %vm87, %v1574, 0.0
  %1578 = vadd.xlane.f32.xlu0 %v1577
  %v1579 = vpop.xlane.xlu0 %1578
  %v1580 = vsel %vm87, %v1576, 0.0
  %1581 = vadd.xlane.f32.xlu0 %v1580
  %v1582 = vpop.xlane.xlu0 %1581
  %v1583 = vrcp.pop %v1579
  %v1584 = vrcp.pop %v1582
  %v1585 = vmul.f32 %v1574, %v1583
  %v1586 = vmul.f32 %v1576, %v1584
  %1587 = vrot.lane.b32.xlu0 %v616, 48
  %v1588 = vpop.permute.xlu0 %1587
  %1589 = vrot.lane.b32.xlu0 %v621, 48
  %v1590 = vpop.permute.xlu0 %1589
  %v1594 = vsel %vm87, %v1585, 0
  %v1597 = vsel %vm87, %v1586, 0
  %1599 = vmatprep.subr.mxu0 0.0
  %1600 = vmatpush1.msra.mxu0 0.0
  %1601 = vmatprep.subr.mxu0 0.0
  %1602 = vmatpush1.msra.mxu0 0.0
  %1603 = vmatprep.subr.mxu0 0.0
  %1604 = vmatpush1.msra.mxu0 0.0
  %1605 = vmatprep.subr.mxu0 0.0
  %1606 = vmatpush1.msra.mxu0 0.0
  %1607 = vmatprep.subr.mxu0 0.0
  %1608 = vmatpush1.msra.mxu0 0.0
  %1609 = vmatprep.subr.mxu0 0.0
  %1610 = vmatpush1.msra.mxu0 0.0
  %1611 = vmatprep.subr.mxu0 0.0
  %1612 = vmatpush1.msra.mxu0 0.0
  %1613 = vmatprep.subr.mxu0 0.0
  %1614 = vmatpush1.msra.mxu0 0.0
  %1615 = vmatprep.subr.mxu0 0.0
  %1616 = vmatpush1.msra.mxu0 0.0
  %1617 = vmatprep.subr.mxu0 0.0
  %1618 = vmatpush1.msra.mxu0 0.0
  %1619 = vmatprep.subr.mxu0 0.0
  %1620 = vmatpush1.msra.mxu0 0.0
  %1621 = vmatprep.subr.mxu0 0.0
  %1622 = vmatpush1.msra.mxu0 0.0
  %1623 = vmatprep.subr.mxu0 0.0
  %1624 = vmatpush1.msra.mxu0 0.0
  %1625 = vmatprep.subr.mxu0 0.0
  %1626 = vmatpush1.msra.mxu0 0.0
  %1627 = vmatprep.subr.mxu0 0.0
  %1628 = vmatpush1.msra.mxu0 %v1590
  %1629 = vmatprep.subr.mxu0 0.0
  %1630 = vmatpush1.msra.mxu0 %v1588
  %1631 = vmatprep.subr.mxu0 0.0
  %1632 = vmatpush2.msra.mxu0 0.0
  %1633 = vmatprep.subr.mxu0 0.0
  %1634 = vmatpush2.msra.mxu0 0.0
  %1635 = vmatprep.subr.mxu0 0.0
  %1636 = vmatpush2.msra.mxu0 0.0
  %1637 = vmatprep.subr.mxu0 0.0
  %1638 = vmatpush2.msra.mxu0 0.0
  %1639 = vmatprep.subr.mxu0 0.0
  %1640 = vmatpush2.msra.mxu0 0.0
  %1641 = vmatprep.subr.mxu0 0.0
  %1642 = vmatpush2.msra.mxu0 0.0
  %1643 = vmatprep.subr.mxu0 0.0
  %1644 = vmatpush2.msra.mxu0 0.0
  %1645 = vmatprep.subr.mxu0 0.0
  %1646 = vmatpush2.msra.mxu0 0.0
  %1647 = vmatprep.subr.mxu0 0.0
  %1648 = vmatpush2.msra.mxu0 0.0
  %1649 = vmatprep.subr.mxu0 0.0
  %1650 = vmatpush2.msra.mxu0 0.0
  %1651 = vmatprep.subr.mxu0 0.0
  %1652 = vmatpush2.msra.mxu0 0.0
  %1653 = vmatprep.subr.mxu0 0.0
  %1654 = vmatpush2.msra.mxu0 0.0
  %1655 = vmatprep.subr.mxu0 0.0
  %1656 = vmatpush2.msra.mxu0 0.0
  %1657 = vmatprep.subr.mxu0 0.0
  %1658 = vmatpush2.msra.mxu0 0.0
  %1659 = vmatprep.subr.mxu0 0.0
  %1660 = vmatpush2.msra.mxu0 0.0
  %1661 = vmatprep.subr.mxu0 0.0
  %1662 = vmatpush2.msra.mxu0 0.0
  %1663 = vmatprep.mubr.f32.mxu0 0.0
  %1664 = vmatmul.mubr.f32.gmra.mxu0 %v1594
  %v1665 = vpop.f32.mrf.mxu0
  %v1666 = vadd.f32 0.0, %v1665
  %v1667 = vpop.f32.mrf.mxu0
  %1668 = vmatprep.mubr.f32.mxu0 0.0
  %1669 = vmatmul.mubr.f32.gmra.mxu0 %v1597
  %v1670 = vpop.f32.mrf.mxu0
  %v1671 = vadd.f32 0.0, %v1670
  %v1672 = vpop.f32.mrf.mxu0
  %1673 = vdwg.mxu0
  %1674 = vrot.lane.b32.xlu0 %v1585, 120
  %v1675 = vpop.permute.xlu0 %1674
  %1676 = vrot.lane.b32.xlu0 %v1586, 120
  %v1677 = vpop.permute.xlu0 %1676
  %v1680 = vadd.f32 %v1585, %v1675
  %v1681 = vadd.f32 %v1586, %v1677
  %1682 = vrot.lane.b32.xlu0 %v616, 108
  %v1683 = vpop.permute.xlu0 %1682
  %1684 = vrot.lane.b32.xlu0 %v621, 108
  %v1685 = vpop.permute.xlu0 %1684
  %1686 = vrot.lane.b32.xlu0 %v616, 76
  %v1687 = vpop.permute.xlu0 %1686
  %1688 = vrot.lane.b32.xlu0 %v621, 76
  %v1689 = vpop.permute.xlu0 %1688
  %v1690 = vsel %vm169, %v1683, 0
  %v1692 = vsel %vm169, %v1685, 0
  %v1694 = vsel %vm169, %v1687, 0
  %v1696 = vsel %vm169, %v1689, 0
  %1698 = vmatprep.subr.mxu0 0.0
  %1699 = vmatpush1.xpose.msra.mxu0 0.0
  %1700 = vmatprep.subr.mxu0 0.0
  %1701 = vmatpush1.xpose.msra.mxu0 0.0
  %1702 = vmatprep.subr.mxu0 0.0
  %1703 = vmatpush1.xpose.msra.mxu0 0.0
  %1704 = vmatprep.subr.mxu0 0.0
  %1705 = vmatpush1.xpose.msra.mxu0 0.0
  %1706 = vmatprep.subr.mxu0 0.0
  %1707 = vmatpush1.xpose.msra.mxu0 0.0
  %1708 = vmatprep.subr.mxu0 0.0
  %1709 = vmatpush1.xpose.msra.mxu0 0.0
  %1710 = vmatprep.subr.mxu0 0.0
  %1711 = vmatpush1.xpose.msra.mxu0 0.0
  %1712 = vmatprep.subr.mxu0 0.0
  %1713 = vmatpush1.xpose.msra.mxu0 0.0
  %1714 = vmatprep.subr.mxu0 0.0
  %1715 = vmatpush1.xpose.msra.mxu0 0.0
  %1716 = vmatprep.subr.mxu0 0.0
  %1717 = vmatpush1.xpose.msra.mxu0 0.0
  %1718 = vmatprep.subr.mxu0 0.0
  %1719 = vmatpush1.xpose.msra.mxu0 0.0
  %1720 = vmatprep.subr.mxu0 0.0
  %1721 = vmatpush1.xpose.msra.mxu0 0.0
  %1722 = vmatprep.subr.mxu0 0.0
  %1723 = vmatpush1.xpose.msra.mxu0 0.0
  %1724 = vmatprep.subr.mxu0 0.0
  %1725 = vmatpush1.xpose.msra.mxu0 0.0
  %1726 = vmatprep.subr.mxu0 0.0
  %1727 = vmatpush1.xpose.msra.mxu0 %v1696
  %1728 = vmatprep.subr.mxu0 0.0
  %1729 = vmatpush1.xpose.msra.mxu0 %v1694
  %1730 = vmatprep.subr.mxu0 0.0
  %1731 = vmatpush2.xpose.msra.mxu0 0.0
  %1732 = vmatprep.subr.mxu0 0.0
  %1733 = vmatpush2.xpose.msra.mxu0 0.0
  %1734 = vmatprep.subr.mxu0 0.0
  %1735 = vmatpush2.xpose.msra.mxu0 0.0
  %1736 = vmatprep.subr.mxu0 0.0
  %1737 = vmatpush2.xpose.msra.mxu0 0.0
  %1738 = vmatprep.subr.mxu0 0.0
  %1739 = vmatpush2.xpose.msra.mxu0 0.0
  %1740 = vmatprep.subr.mxu0 0.0
  %1741 = vmatpush2.xpose.msra.mxu0 0.0
  %1742 = vmatprep.subr.mxu0 0.0
  %1743 = vmatpush2.xpose.msra.mxu0 0.0
  %1744 = vmatprep.subr.mxu0 0.0
  %1745 = vmatpush2.xpose.msra.mxu0 0.0
  %1746 = vmatprep.subr.mxu0 0.0
  %1747 = vmatpush2.xpose.msra.mxu0 0.0
  %1748 = vmatprep.subr.mxu0 0.0
  %1749 = vmatpush2.xpose.msra.mxu0 0.0
  %1750 = vmatprep.subr.mxu0 0.0
  %1751 = vmatpush2.xpose.msra.mxu0 0.0
  %1752 = vmatprep.subr.mxu0 0.0
  %1753 = vmatpush2.xpose.msra.mxu0 0.0
  %1754 = vmatprep.subr.mxu0 0.0
  %1755 = vmatpush2.xpose.msra.mxu0 0.0
  %1756 = vmatprep.subr.mxu0 0.0
  %1757 = vmatpush2.xpose.msra.mxu0 0.0
  %1758 = vmatprep.subr.mxu0 0.0
  %1759 = vmatpush2.xpose.msra.mxu0 0.0
  %1760 = vmatprep.subr.mxu0 0.0
  %1761 = vmatpush2.xpose.msra.mxu0 0.0
  %1762 = vmatprep.mubr.f32.mxu0 0.0
  %1763 = vmatmul.mubr.f32.gmra.mxu0 %v1690
  %v1764 = vpop.f32.mrf.mxu0
  %v1765 = vadd.f32 0.0, %v1764
  %v1766 = vpop.f32.mrf.mxu0
  %1767 = vmatprep.mubr.f32.mxu0 0.0
  %1768 = vmatmul.mubr.f32.gmra.mxu0 %v1692
  %v1769 = vpop.f32.mrf.mxu0
  %v1770 = vadd.f32 0.0, %v1769
  %v1771 = vpop.f32.mrf.mxu0
  %1772 = vdwg.mxu0
  %v1773 = vmul.f32 %v1765, 0.5
  %v1774 = vmul.f32 %v1770, 0.5
  %v1775 = vadd.f32 %v1773, %v510
  %v1776 = vadd.f32 %v1774, %v511
  %v1777 = vsel %vm87, %v1775, -inf
  %1778 = vmax.xlane.f32.xlu0 %v1777
  %v1779 = vpop.xlane.xlu0 %1778
  %v1780 = vsel %vm87, %v1776, -inf
  %1781 = vmax.xlane.f32.xlu0 %v1780
  %v1782 = vpop.xlane.xlu0 %1781
  %v1783 = vsub.f32 %v1775, %v1779
  %v1784 = vsub.f32 %v1776, %v1782
  %v1785 = vmul.f32 %v1783, 1.442695
  %v1786 = vpow.pop %v1785
  %v1787 = vmul.f32 %v1784, 1.442695
  %v1788 = vpow.pop %v1787
  %v1789 = vsel %vm87, %v1786, 0.0
  %1790 = vadd.xlane.f32.xlu0 %v1789
  %v1791 = vpop.xlane.xlu0 %1790
  %v1792 = vsel %vm87, %v1788, 0.0
  %1793 = vadd.xlane.f32.xlu0 %v1792
  %v1794 = vpop.xlane.xlu0 %1793
  %v1795 = vrcp.pop %v1791
  %v1796 = vrcp.pop %v1794
  %v1797 = vmul.f32 %v1786, %v1795
  %v1798 = vmul.f32 %v1788, %v1796
  %1799 = vrot.lane.b32.xlu0 %v616, 44
  %v1800 = vpop.permute.xlu0 %1799
  %1801 = vrot.lane.b32.xlu0 %v621, 44
  %v1802 = vpop.permute.xlu0 %1801
  %v1806 = vsel %vm87, %v1797, 0
  %v1809 = vsel %vm87, %v1798, 0
  %1811 = vmatprep.subr.mxu0 0.0
  %1812 = vmatpush1.msra.mxu0 0.0
  %1813 = vmatprep.subr.mxu0 0.0
  %1814 = vmatpush1.msra.mxu0 0.0
  %1815 = vmatprep.subr.mxu0 0.0
  %1816 = vmatpush1.msra.mxu0 0.0
  %1817 = vmatprep.subr.mxu0 0.0
  %1818 = vmatpush1.msra.mxu0 0.0
  %1819 = vmatprep.subr.mxu0 0.0
  %1820 = vmatpush1.msra.mxu0 0.0
  %1821 = vmatprep.subr.mxu0 0.0
  %1822 = vmatpush1.msra.mxu0 0.0
  %1823 = vmatprep.subr.mxu0 0.0
  %1824 = vmatpush1.msra.mxu0 0.0
  %1825 = vmatprep.subr.mxu0 0.0
  %1826 = vmatpush1.msra.mxu0 0.0
  %1827 = vmatprep.subr.mxu0 0.0
  %1828 = vmatpush1.msra.mxu0 0.0
  %1829 = vmatprep.subr.mxu0 0.0
  %1830 = vmatpush1.msra.mxu0 0.0
  %1831 = vmatprep.subr.mxu0 0.0
  %1832 = vmatpush1.msra.mxu0 0.0
  %1833 = vmatprep.subr.mxu0 0.0
  %1834 = vmatpush1.msra.mxu0 0.0
  %1835 = vmatprep.subr.mxu0 0.0
  %1836 = vmatpush1.msra.mxu0 0.0
  %1837 = vmatprep.subr.mxu0 0.0
  %1838 = vmatpush1.msra.mxu0 0.0
  %1839 = vmatprep.subr.mxu0 0.0
  %1840 = vmatpush1.msra.mxu0 %v1802
  %1841 = vmatprep.subr.mxu0 0.0
  %1842 = vmatpush1.msra.mxu0 %v1800
  %1843 = vmatprep.subr.mxu0 0.0
  %1844 = vmatpush2.msra.mxu0 0.0
  %1845 = vmatprep.subr.mxu0 0.0
  %1846 = vmatpush2.msra.mxu0 0.0
  %1847 = vmatprep.subr.mxu0 0.0
  %1848 = vmatpush2.msra.mxu0 0.0
  %1849 = vmatprep.subr.mxu0 0.0
  %1850 = vmatpush2.msra.mxu0 0.0
  %1851 = vmatprep.subr.mxu0 0.0
  %1852 = vmatpush2.msra.mxu0 0.0
  %1853 = vmatprep.subr.mxu0 0.0
  %1854 = vmatpush2.msra.mxu0 0.0
  %1855 = vmatprep.subr.mxu0 0.0
  %1856 = vmatpush2.msra.mxu0 0.0
  %1857 = vmatprep.subr.mxu0 0.0
  %1858 = vmatpush2.msra.mxu0 0.0
  %1859 = vmatprep.subr.mxu0 0.0
  %1860 = vmatpush2.msra.mxu0 0.0
  %1861 = vmatprep.subr.mxu0 0.0
  %1862 = vmatpush2.msra.mxu0 0.0
  %1863 = vmatprep.subr.mxu0 0.0
  %1864 = vmatpush2.msra.mxu0 0.0
  %1865 = vmatprep.subr.mxu0 0.0
  %1866 = vmatpush2.msra.mxu0 0.0
  %1867 = vmatprep.subr.mxu0 0.0
  %1868 = vmatpush2.msra.mxu0 0.0
  %1869 = vmatprep.subr.mxu0 0.0
  %1870 = vmatpush2.msra.mxu0 0.0
  %1871 = vmatprep.subr.mxu0 0.0
  %1872 = vmatpush2.msra.mxu0 0.0
  %1873 = vmatprep.subr.mxu0 0.0
  %1874 = vmatpush2.msra.mxu0 0.0
  %1875 = vmatprep.mubr.f32.mxu0 0.0
  %1876 = vmatmul.mubr.f32.gmra.mxu0 %v1806
  %v1877 = vpop.f32.mrf.mxu0
  %v1878 = vadd.f32 0.0, %v1877
  %v1879 = vpop.f32.mrf.mxu0
  %1880 = vmatprep.mubr.f32.mxu0 0.0
  %1881 = vmatmul.mubr.f32.gmra.mxu0 %v1809
  %v1882 = vpop.f32.mrf.mxu0
  %v1883 = vadd.f32 0.0, %v1882
  %v1884 = vpop.f32.mrf.mxu0
  %1885 = vdwg.mxu0
  %1886 = vrot.lane.b32.xlu0 %v1797, 120
  %v1887 = vpop.permute.xlu0 %1886
  %1888 = vrot.lane.b32.xlu0 %v1798, 120
  %v1889 = vpop.permute.xlu0 %1888
  %v1892 = vadd.f32 %v1797, %v1887
  %v1893 = vadd.f32 %v1798, %v1889
  %1894 = vrot.lane.b32.xlu0 %v616, 104
  %v1895 = vpop.permute.xlu0 %1894
  %1896 = vrot.lane.b32.xlu0 %v621, 104
  %v1897 = vpop.permute.xlu0 %1896
  %1898 = vrot.lane.b32.xlu0 %v616, 72
  %v1899 = vpop.permute.xlu0 %1898
  %1900 = vrot.lane.b32.xlu0 %v621, 72
  %v1901 = vpop.permute.xlu0 %1900
  %v1902 = vsel %vm169, %v1895, 0
  %v1904 = vsel %vm169, %v1897, 0
  %v1906 = vsel %vm169, %v1899, 0
  %v1908 = vsel %vm169, %v1901, 0
  %1910 = vmatprep.subr.mxu0 0.0
  %1911 = vmatpush1.xpose.msra.mxu0 0.0
  %1912 = vmatprep.subr.mxu0 0.0
  %1913 = vmatpush1.xpose.msra.mxu0 0.0
  %1914 = vmatprep.subr.mxu0 0.0
  %1915 = vmatpush1.xpose.msra.mxu0 0.0
  %1916 = vmatprep.subr.mxu0 0.0
  %1917 = vmatpush1.xpose.msra.mxu0 0.0
  %1918 = vmatprep.subr.mxu0 0.0
  %1919 = vmatpush1.xpose.msra.mxu0 0.0
  %1920 = vmatprep.subr.mxu0 0.0
  %1921 = vmatpush1.xpose.msra.mxu0 0.0
  %1922 = vmatprep.subr.mxu0 0.0
  %1923 = vmatpush1.xpose.msra.mxu0 0.0
  %1924 = vmatprep.subr.mxu0 0.0
  %1925 = vmatpush1.xpose.msra.mxu0 0.0
  %1926 = vmatprep.subr.mxu0 0.0
  %1927 = vmatpush1.xpose.msra.mxu0 0.0
  %1928 = vmatprep.subr.mxu0 0.0
  %1929 = vmatpush1.xpose.msra.mxu0 0.0
  %1930 = vmatprep.subr.mxu0 0.0
  %1931 = vmatpush1.xpose.msra.mxu0 0.0
  %1932 = vmatprep.subr.mxu0 0.0
  %1933 = vmatpush1.xpose.msra.mxu0 0.0
  %1934 = vmatprep.subr.mxu0 0.0
  %1935 = vmatpush1.xpose.msra.mxu0 0.0
  %1936 = vmatprep.subr.mxu0 0.0
  %1937 = vmatpush1.xpose.msra.mxu0 0.0
  %1938 = vmatprep.subr.mxu0 0.0
  %1939 = vmatpush1.xpose.msra.mxu0 %v1908
  %1940 = vmatprep.subr.mxu0 0.0
  %1941 = vmatpush1.xpose.msra.mxu0 %v1906
  %1942 = vmatprep.subr.mxu0 0.0
  %1943 = vmatpush2.xpose.msra.mxu0 0.0
  %1944 = vmatprep.subr.mxu0 0.0
  %1945 = vmatpush2.xpose.msra.mxu0 0.0
  %1946 = vmatprep.subr.mxu0 0.0
  %1947 = vmatpush2.xpose.msra.mxu0 0.0
  %1948 = vmatprep.subr.mxu0 0.0
  %1949 = vmatpush2.xpose.msra.mxu0 0.0
  %1950 = vmatprep.subr.mxu0 0.0
  %1951 = vmatpush2.xpose.msra.mxu0 0.0
  %1952 = vmatprep.subr.mxu0 0.0
  %1953 = vmatpush2.xpose.msra.mxu0 0.0
  %1954 = vmatprep.subr.mxu0 0.0
  %1955 = vmatpush2.xpose.msra.mxu0 0.0
  %1956 = vmatprep.subr.mxu0 0.0
  %1957 = vmatpush2.xpose.msra.mxu0 0.0
  %1958 = vmatprep.subr.mxu0 0.0
  %1959 = vmatpush2.xpose.msra.mxu0 0.0
  %1960 = vmatprep.subr.mxu0 0.0
  %1961 = vmatpush2.xpose.msra.mxu0 0.0
  %1962 = vmatprep.subr.mxu0 0.0
  %1963 = vmatpush2.xpose.msra.mxu0 0.0
  %1964 = vmatprep.subr.mxu0 0.0
  %1965 = vmatpush2.xpose.msra.mxu0 0.0
  %1966 = vmatprep.subr.mxu0 0.0
  %1967 = vmatpush2.xpose.msra.mxu0 0.0
  %1968 = vmatprep.subr.mxu0 0.0
  %1969 = vmatpush2.xpose.msra.mxu0 0.0
  %1970 = vmatprep.subr.mxu0 0.0
  %1971 = vmatpush2.xpose.msra.mxu0 0.0
  %1972 = vmatprep.subr.mxu0 0.0
  %1973 = vmatpush2.xpose.msra.mxu0 0.0
  %1974 = vmatprep.mubr.f32.mxu0 0.0
  %1975 = vmatmul.mubr.f32.gmra.mxu0 %v1902
  %v1976 = vpop.f32.mrf.mxu0
  %v1977 = vadd.f32 0.0, %v1976
  %v1978 = vpop.f32.mrf.mxu0
  %1979 = vmatprep.mubr.f32.mxu0 0.0
  %1980 = vmatmul.mubr.f32.gmra.mxu0 %v1904
  %v1981 = vpop.f32.mrf.mxu0
  %v1982 = vadd.f32 0.0, %v1981
  %v1983 = vpop.f32.mrf.mxu0
  %1984 = vdwg.mxu0
  %v1985 = vmul.f32 %v1977, 0.5
  %v1986 = vmul.f32 %v1982, 0.5
  %v1987 = vadd.f32 %v1985, %v510
  %v1988 = vadd.f32 %v1986, %v511
  %v1989 = vsel %vm87, %v1987, -inf
  %1990 = vmax.xlane.f32.xlu0 %v1989
  %v1991 = vpop.xlane.xlu0 %1990
  %v1992 = vsel %vm87, %v1988, -inf
  %1993 = vmax.xlane.f32.xlu0 %v1992
  %v1994 = vpop.xlane.xlu0 %1993
  %v1995 = vsub.f32 %v1987, %v1991
  %v1996 = vsub.f32 %v1988, %v1994
  %v1997 = vmul.f32 %v1995, 1.442695
  %v1998 = vpow.pop %v1997
  %v1999 = vmul.f32 %v1996, 1.442695
  %v2000 = vpow.pop %v1999
  %v2001 = vsel %vm87, %v1998, 0.0
  %2002 = vadd.xlane.f32.xlu0 %v2001
  %v2003 = vpop.xlane.xlu0 %2002
  %v2004 = vsel %vm87, %v2000, 0.0
  %2005 = vadd.xlane.f32.xlu0 %v2004
  %v2006 = vpop.xlane.xlu0 %2005
  %v2007 = vrcp.pop %v2003
  %v2008 = vrcp.pop %v2006
  %v2009 = vmul.f32 %v1998, %v2007
  %v2010 = vmul.f32 %v2000, %v2008
  %2011 = vrot.lane.b32.xlu0 %v616, 40
  %v2012 = vpop.permute.xlu0 %2011
  %2013 = vrot.lane.b32.xlu0 %v621, 40
  %v2014 = vpop.permute.xlu0 %2013
  %v2018 = vsel %vm87, %v2009, 0
  %v2021 = vsel %vm87, %v2010, 0
  %2023 = vmatprep.subr.mxu0 0.0
  %2024 = vmatpush1.msra.mxu0 0.0
  %2025 = vmatprep.subr.mxu0 0.0
  %2026 = vmatpush1.msra.mxu0 0.0
  %2027 = vmatprep.subr.mxu0 0.0
  %2028 = vmatpush1.msra.mxu0 0.0
  %2029 = vmatprep.subr.mxu0 0.0
  %2030 = vmatpush1.msra.mxu0 0.0
  %2031 = vmatprep.subr.mxu0 0.0
  %2032 = vmatpush1.msra.mxu0 0.0
  %2033 = vmatprep.subr.mxu0 0.0
  %2034 = vmatpush1.msra.mxu0 0.0
  %2035 = vmatprep.subr.mxu0 0.0
  %2036 = vmatpush1.msra.mxu0 0.0
  %2037 = vmatprep.subr.mxu0 0.0
  %2038 = vmatpush1.msra.mxu0 0.0
  %2039 = vmatprep.subr.mxu0 0.0
  %2040 = vmatpush1.msra.mxu0 0.0
  %2041 = vmatprep.subr.mxu0 0.0
  %2042 = vmatpush1.msra.mxu0 0.0
  %2043 = vmatprep.subr.mxu0 0.0
  %2044 = vmatpush1.msra.mxu0 0.0
  %2045 = vmatprep.subr.mxu0 0.0
  %2046 = vmatpush1.msra.mxu0 0.0
  %2047 = vmatprep.subr.mxu0 0.0
  %2048 = vmatpush1.msra.mxu0 0.0
  %2049 = vmatprep.subr.mxu0 0.0
  %2050 = vmatpush1.msra.mxu0 0.0
  %2051 = vmatprep.subr.mxu0 0.0
  %2052 = vmatpush1.msra.mxu0 %v2014
  %2053 = vmatprep.subr.mxu0 0.0
  %2054 = vmatpush1.msra.mxu0 %v2012
  %2055 = vmatprep.subr.mxu0 0.0
  %2056 = vmatpush2.msra.mxu0 0.0
  %2057 = vmatprep.subr.mxu0 0.0
  %2058 = vmatpush2.msra.mxu0 0.0
  %2059 = vmatprep.subr.mxu0 0.0
  %2060 = vmatpush2.msra.mxu0 0.0
  %2061 = vmatprep.subr.mxu0 0.0
  %2062 = vmatpush2.msra.mxu0 0.0
  %2063 = vmatprep.subr.mxu0 0.0
  %2064 = vmatpush2.msra.mxu0 0.0
  %2065 = vmatprep.subr.mxu0 0.0
  %2066 = vmatpush2.msra.mxu0 0.0
  %2067 = vmatprep.subr.mxu0 0.0
  %2068 = vmatpush2.msra.mxu0 0.0
  %2069 = vmatprep.subr.mxu0 0.0
  %2070 = vmatpush2.msra.mxu0 0.0
  %2071 = vmatprep.subr.mxu0 0.0
  %2072 = vmatpush2.msra.mxu0 0.0
  %2073 = vmatprep.subr.mxu0 0.0
  %2074 = vmatpush2.msra.mxu0 0.0
  %2075 = vmatprep.subr.mxu0 0.0
  %2076 = vmatpush2.msra.mxu0 0.0
  %2077 = vmatprep.subr.mxu0 0.0
  %2078 = vmatpush2.msra.mxu0 0.0
  %2079 = vmatprep.subr.mxu0 0.0
  %2080 = vmatpush2.msra.mxu0 0.0
  %2081 = vmatprep.subr.mxu0 0.0
  %2082 = vmatpush2.msra.mxu0 0.0
  %2083 = vmatprep.subr.mxu0 0.0
  %2084 = vmatpush2.msra.mxu0 0.0
  %2085 = vmatprep.subr.mxu0 0.0
  %2086 = vmatpush2.msra.mxu0 0.0
  %2087 = vmatprep.mubr.f32.mxu0 0.0
  %2088 = vmatmul.mubr.f32.gmra.mxu0 %v2018
  %v2089 = vpop.f32.mrf.mxu0
  %v2090 = vadd.f32 0.0, %v2089
  %v2091 = vpop.f32.mrf.mxu0
  %2092 = vmatprep.mubr.f32.mxu0 0.0
  %2093 = vmatmul.mubr.f32.gmra.mxu0 %v2021
  %v2094 = vpop.f32.mrf.mxu0
  %v2095 = vadd.f32 0.0, %v2094
  %v2096 = vpop.f32.mrf.mxu0
  %2097 = vdwg.mxu0
  %2098 = vrot.lane.b32.xlu0 %v2009, 120
  %v2099 = vpop.permute.xlu0 %2098
  %2100 = vrot.lane.b32.xlu0 %v2010, 120
  %v2101 = vpop.permute.xlu0 %2100
  %v2104 = vadd.f32 %v2009, %v2099
  %v2105 = vadd.f32 %v2010, %v2101
  %2106 = vrot.lane.b32.xlu0 %v616, 100
  %v2107 = vpop.permute.xlu0 %2106
  %2108 = vrot.lane.b32.xlu0 %v621, 100
  %v2109 = vpop.permute.xlu0 %2108
  %2110 = vrot.lane.b32.xlu0 %v616, 68
  %v2111 = vpop.permute.xlu0 %2110
  %2112 = vrot.lane.b32.xlu0 %v621, 68
  %v2113 = vpop.permute.xlu0 %2112
  %v2114 = vsel %vm169, %v2107, 0
  %v2116 = vsel %vm169, %v2109, 0
  %v2118 = vsel %vm169, %v2111, 0
  %v2120 = vsel %vm169, %v2113, 0
  %2122 = vmatprep.subr.mxu0 0.0
  %2123 = vmatpush1.xpose.msra.mxu0 0.0
  %2124 = vmatprep.subr.mxu0 0.0
  %2125 = vmatpush1.xpose.msra.mxu0 0.0
  %2126 = vmatprep.subr.mxu0 0.0
  %2127 = vmatpush1.xpose.msra.mxu0 0.0
  %2128 = vmatprep.subr.mxu0 0.0
  %2129 = vmatpush1.xpose.msra.mxu0 0.0
  %2130 = vmatprep.subr.mxu0 0.0
  %2131 = vmatpush1.xpose.msra.mxu0 0.0
  %2132 = vmatprep.subr.mxu0 0.0
  %2133 = vmatpush1.xpose.msra.mxu0 0.0
  %2134 = vmatprep.subr.mxu0 0.0
  %2135 = vmatpush1.xpose.msra.mxu0 0.0
  %2136 = vmatprep.subr.mxu0 0.0
  %2137 = vmatpush1.xpose.msra.mxu0 0.0
  %2138 = vmatprep.subr.mxu0 0.0
  %2139 = vmatpush1.xpose.msra.mxu0 0.0
  %2140 = vmatprep.subr.mxu0 0.0
  %2141 = vmatpush1.xpose.msra.mxu0 0.0
  %2142 = vmatprep.subr.mxu0 0.0
  %2143 = vmatpush1.xpose.msra.mxu0 0.0
  %2144 = vmatprep.subr.mxu0 0.0
  %2145 = vmatpush1.xpose.msra.mxu0 0.0
  %2146 = vmatprep.subr.mxu0 0.0
  %2147 = vmatpush1.xpose.msra.mxu0 0.0
  %2148 = vmatprep.subr.mxu0 0.0
  %2149 = vmatpush1.xpose.msra.mxu0 0.0
  %2150 = vmatprep.subr.mxu0 0.0
  %2151 = vmatpush1.xpose.msra.mxu0 %v2120
  %2152 = vmatprep.subr.mxu0 0.0
  %2153 = vmatpush1.xpose.msra.mxu0 %v2118
  %2154 = vmatprep.subr.mxu0 0.0
  %2155 = vmatpush2.xpose.msra.mxu0 0.0
  %2156 = vmatprep.subr.mxu0 0.0
  %2157 = vmatpush2.xpose.msra.mxu0 0.0
  %2158 = vmatprep.subr.mxu0 0.0
  %2159 = vmatpush2.xpose.msra.mxu0 0.0
  %2160 = vmatprep.subr.mxu0 0.0
  %2161 = vmatpush2.xpose.msra.mxu0 0.0
  %2162 = vmatprep.subr.mxu0 0.0
  %2163 = vmatpush2.xpose.msra.mxu0 0.0
  %2164 = vmatprep.subr.mxu0 0.0
  %2165 = vmatpush2.xpose.msra.mxu0 0.0
  %2166 = vmatprep.subr.mxu0 0.0
  %2167 = vmatpush2.xpose.msra.mxu0 0.0
  %2168 = vmatprep.subr.mxu0 0.0
  %2169 = vmatpush2.xpose.msra.mxu0 0.0
  %2170 = vmatprep.subr.mxu0 0.0
  %2171 = vmatpush2.xpose.msra.mxu0 0.0
  %2172 = vmatprep.subr.mxu0 0.0
  %2173 = vmatpush2.xpose.msra.mxu0 0.0
  %2174 = vmatprep.subr.mxu0 0.0
  %2175 = vmatpush2.xpose.msra.mxu0 0.0
  %2176 = vmatprep.subr.mxu0 0.0
  %2177 = vmatpush2.xpose.msra.mxu0 0.0
  %2178 = vmatprep.subr.mxu0 0.0
  %2179 = vmatpush2.xpose.msra.mxu0 0.0
  %2180 = vmatprep.subr.mxu0 0.0
  %2181 = vmatpush2.xpose.msra.mxu0 0.0
  %2182 = vmatprep.subr.mxu0 0.0
  %2183 = vmatpush2.xpose.msra.mxu0 0.0
  %2184 = vmatprep.subr.mxu0 0.0
  %2185 = vmatpush2.xpose.msra.mxu0 0.0
  %2186 = vmatprep.mubr.f32.mxu0 0.0
  %2187 = vmatmul.mubr.f32.gmra.mxu0 %v2114
  %v2188 = vpop.f32.mrf.mxu0
  %v2189 = vadd.f32 0.0, %v2188
  %v2190 = vpop.f32.mrf.mxu0
  %2191 = vmatprep.mubr.f32.mxu0 0.0
  %2192 = vmatmul.mubr.f32.gmra.mxu0 %v2116
  %v2193 = vpop.f32.mrf.mxu0
  %v2194 = vadd.f32 0.0, %v2193
  %v2195 = vpop.f32.mrf.mxu0
  %2196 = vdwg.mxu0
  %v2197 = vmul.f32 %v2189, 0.5
  %v2198 = vmul.f32 %v2194, 0.5
  %v2199 = vadd.f32 %v2197, %v510
  %v2200 = vadd.f32 %v2198, %v511
  %v2201 = vsel %vm87, %v2199, -inf
  %2202 = vmax.xlane.f32.xlu0 %v2201
  %v2203 = vpop.xlane.xlu0 %2202
  %v2204 = vsel %vm87, %v2200, -inf
  %2205 = vmax.xlane.f32.xlu0 %v2204
  %v2206 = vpop.xlane.xlu0 %2205
  %v2207 = vsub.f32 %v2199, %v2203
  %v2208 = vsub.f32 %v2200, %v2206
  %v2209 = vmul.f32 %v2207, 1.442695
  %v2210 = vpow.pop %v2209
  %v2211 = vmul.f32 %v2208, 1.442695
  %v2212 = vpow.pop %v2211
  %v2213 = vsel %vm87, %v2210, 0.0
  %2214 = vadd.xlane.f32.xlu0 %v2213
  %v2215 = vpop.xlane.xlu0 %2214
  %v2216 = vsel %vm87, %v2212, 0.0
  %2217 = vadd.xlane.f32.xlu0 %v2216
  %v2218 = vpop.xlane.xlu0 %2217
  %v2219 = vrcp.pop %v2215
  %v2220 = vrcp.pop %v2218
  %v2221 = vmul.f32 %v2210, %v2219
  %v2222 = vmul.f32 %v2212, %v2220
  %2223 = vrot.lane.b32.xlu0 %v616, 36
  %v2224 = vpop.permute.xlu0 %2223
  %2225 = vrot.lane.b32.xlu0 %v621, 36
  %v2226 = vpop.permute.xlu0 %2225
  %v2230 = vsel %vm87, %v2221, 0
  %v2233 = vsel %vm87, %v2222, 0
  %2235 = vmatprep.subr.mxu0 0.0
  %2236 = vmatpush1.msra.mxu0 0.0
  %2237 = vmatprep.subr.mxu0 0.0
  %2238 = vmatpush1.msra.mxu0 0.0
  %2239 = vmatprep.subr.mxu0 0.0
  %2240 = vmatpush1.msra.mxu0 0.0
  %2241 = vmatprep.subr.mxu0 0.0
  %2242 = vmatpush1.msra.mxu0 0.0
  %2243 = vmatprep.subr.mxu0 0.0
  %2244 = vmatpush1.msra.mxu0 0.0
  %2245 = vmatprep.subr.mxu0 0.0
  %2246 = vmatpush1.msra.mxu0 0.0
  %2247 = vmatprep.subr.mxu0 0.0
  %2248 = vmatpush1.msra.mxu0 0.0
  %2249 = vmatprep.subr.mxu0 0.0
  %2250 = vmatpush1.msra.mxu0 0.0
  %2251 = vmatprep.subr.mxu0 0.0
  %2252 = vmatpush1.msra.mxu0 0.0
  %2253 = vmatprep.subr.mxu0 0.0
  %2254 = vmatpush1.msra.mxu0 0.0
  %2255 = vmatprep.subr.mxu0 0.0
  %2256 = vmatpush1.msra.mxu0 0.0
  %2257 = vmatprep.subr.mxu0 0.0
  %2258 = vmatpush1.msra.mxu0 0.0
  %2259 = vmatprep.subr.mxu0 0.0
  %2260 = vmatpush1.msra.mxu0 0.0
  %2261 = vmatprep.subr.mxu0 0.0
  %2262 = vmatpush1.msra.mxu0 0.0
  %2263 = vmatprep.subr.mxu0 0.0
  %2264 = vmatpush1.msra.mxu0 %v2226
  %2265 = vmatprep.subr.mxu0 0.0
  %2266 = vmatpush1.msra.mxu0 %v2224
  %2267 = vmatprep.subr.mxu0 0.0
  %2268 = vmatpush2.msra.mxu0 0.0
  %2269 = vmatprep.subr.mxu0 0.0
  %2270 = vmatpush2.msra.mxu0 0.0
  %2271 = vmatprep.subr.mxu0 0.0
  %2272 = vmatpush2.msra.mxu0 0.0
  %2273 = vmatprep.subr.mxu0 0.0
  %2274 = vmatpush2.msra.mxu0 0.0
  %2275 = vmatprep.subr.mxu0 0.0
  %2276 = vmatpush2.msra.mxu0 0.0
  %2277 = vmatprep.subr.mxu0 0.0
  %2278 = vmatpush2.msra.mxu0 0.0
  %2279 = vmatprep.subr.mxu0 0.0
  %2280 = vmatpush2.msra.mxu0 0.0
  %2281 = vmatprep.subr.mxu0 0.0
  %2282 = vmatpush2.msra.mxu0 0.0
  %2283 = vmatprep.subr.mxu0 0.0
  %2284 = vmatpush2.msra.mxu0 0.0
  %2285 = vmatprep.subr.mxu0 0.0
  %2286 = vmatpush2.msra.mxu0 0.0
  %2287 = vmatprep.subr.mxu0 0.0
  %2288 = vmatpush2.msra.mxu0 0.0
  %2289 = vmatprep.subr.mxu0 0.0
  %2290 = vmatpush2.msra.mxu0 0.0
  %2291 = vmatprep.subr.mxu0 0.0
  %2292 = vmatpush2.msra.mxu0 0.0
  %2293 = vmatprep.subr.mxu0 0.0
  %2294 = vmatpush2.msra.mxu0 0.0
  %2295 = vmatprep.subr.mxu0 0.0
  %2296 = vmatpush2.msra.mxu0 0.0
  %2297 = vmatprep.subr.mxu0 0.0
  %2298 = vmatpush2.msra.mxu0 0.0
  %2299 = vmatprep.mubr.f32.mxu0 0.0
  %2300 = vmatmul.mubr.f32.gmra.mxu0 %v2230
  %v2301 = vpop.f32.mrf.mxu0
  %v2302 = vadd.f32 0.0, %v2301
  %v2303 = vpop.f32.mrf.mxu0
  %2304 = vmatprep.mubr.f32.mxu0 0.0
  %2305 = vmatmul.mubr.f32.gmra.mxu0 %v2233
  %v2306 = vpop.f32.mrf.mxu0
  %v2307 = vadd.f32 0.0, %v2306
  %v2308 = vpop.f32.mrf.mxu0
  %2309 = vdwg.mxu0
  %2310 = vrot.lane.b32.xlu0 %v2221, 120
  %v2311 = vpop.permute.xlu0 %2310
  %2312 = vrot.lane.b32.xlu0 %v2222, 120
  %v2313 = vpop.permute.xlu0 %2312
  %v2316 = vadd.f32 %v2221, %v2311
  %v2317 = vadd.f32 %v2222, %v2313
  %2320 = vrot.lane.b32.xlu0 %v1030, 4
  %v2321 = vpop.permute.xlu0 %2320
  %2322 = vrot.lane.b32.xlu0 %v1035, 4
  %v2323 = vpop.permute.xlu0 %2322
  %2328 = vrot.lane.b32.xlu0 %v1242, 8
  %v2329 = vpop.permute.xlu0 %2328
  %2330 = vrot.lane.b32.xlu0 %v1247, 8
  %v2331 = vpop.permute.xlu0 %2330
  %2336 = vrot.lane.b32.xlu0 %v1454, 12
  %v2337 = vpop.permute.xlu0 %2336
  %2338 = vrot.lane.b32.xlu0 %v1459, 12
  %v2339 = vpop.permute.xlu0 %2338
  %2344 = vrot.lane.b32.xlu0 %v1666, 16
  %v2345 = vpop.permute.xlu0 %2344
  %2346 = vrot.lane.b32.xlu0 %v1671, 16
  %v2347 = vpop.permute.xlu0 %2346
  %2352 = vrot.lane.b32.xlu0 %v1878, 20
  %v2353 = vpop.permute.xlu0 %2352
  %2354 = vrot.lane.b32.xlu0 %v1883, 20
  %v2355 = vpop.permute.xlu0 %2354
  %2360 = vrot.lane.b32.xlu0 %v2090, 24
  %v2361 = vpop.permute.xlu0 %2360
  %2362 = vrot.lane.b32.xlu0 %v2095, 24
  %v2363 = vpop.permute.xlu0 %2362
  %2368 = vrot.lane.b32.xlu0 %v2302, 28
  %v2369 = vpop.permute.xlu0 %2368
  %2370 = vrot.lane.b32.xlu0 %v2307, 28
  %v2371 = vpop.permute.xlu0 %2370
  %v2374 = vsel %vm169, %v818, %v2321
  %v2375 = vsel %vm169, %v823, %v2323
  %vm2376 = vcmask 64512
  %v2377 = vsel %vm2376, %v2374, %v2329
  %v2378 = vsel %vm2376, %v2375, %v2331
  %vm2379 = vcmask 97280
  %v2380 = vsel %vm2379, %v2377, %v2337
  %v2381 = vsel %vm2379, %v2378, %v2339
  %v2382 = vsel %vm87, %v2380, %v2345
  %v2383 = vsel %vm87, %v2381, %v2347
  %vm2384 = vcmask 162816
  %v2385 = vsel %vm2384, %v2382, %v2353
  %v2386 = vsel %vm2384, %v2383, %v2355
  %vm2387 = vcmask 195584
  %v2388 = vsel %vm2387, %v2385, %v2361
  %v2389 = vsel %vm2387, %v2386, %v2363
  %vm2390 = vcmask 228352
  %v2391 = vsel %vm2390, %v2388, %v2369
  %v2392 = vsel %vm2390, %v2389, %v2371
  %2395 = vrot.lane.b32.xlu0 %v1044, 8
  %v2396 = vpop.permute.xlu0 %2395
  %2397 = vrot.lane.b32.xlu0 %v1045, 8
  %v2398 = vpop.permute.xlu0 %2397
  %2403 = vrot.lane.b32.xlu0 %v1256, 16
  %v2404 = vpop.permute.xlu0 %2403
  %2405 = vrot.lane.b32.xlu0 %v1257, 16
  %v2406 = vpop.permute.xlu0 %2405
  %2411 = vrot.lane.b32.xlu0 %v1468, 24
  %v2412 = vpop.permute.xlu0 %2411
  %2413 = vrot.lane.b32.xlu0 %v1469, 24
  %v2414 = vpop.permute.xlu0 %2413
  %2419 = vrot.lane.b32.xlu0 %v1680, 32
  %v2420 = vpop.permute.xlu0 %2419
  %2421 = vrot.lane.b32.xlu0 %v1681, 32
  %v2422 = vpop.permute.xlu0 %2421
  %2427 = vrot.lane.b32.xlu0 %v1892, 40
  %v2428 = vpop.permute.xlu0 %2427
  %2429 = vrot.lane.b32.xlu0 %v1893, 40
  %v2430 = vpop.permute.xlu0 %2429
  %2435 = vrot.lane.b32.xlu0 %v2104, 48
  %v2436 = vpop.permute.xlu0 %2435
  %2437 = vrot.lane.b32.xlu0 %v2105, 48
  %v2438 = vpop.permute.xlu0 %2437
  %2443 = vrot.lane.b32.xlu0 %v2316, 56
  %v2444 = vpop.permute.xlu0 %2443
  %2445 = vrot.lane.b32.xlu0 %v2317, 56
  %v2446 = vpop.permute.xlu0 %2445
  %v2449 = vsel %vm2376, %v832, %v2396
  %v2450 = vsel %vm2376, %v833, %v2398
  %v2451 = vsel %vm87, %v2449, %v2404
  %v2452 = vsel %vm87, %v2450, %v2406
  %v2453 = vsel %vm2387, %v2451, %v2412
  %v2454 = vsel %vm2387, %v2452, %v2414
  %v2455 = vsel %vm542, %v2453, %v2420
  %v2456 = vsel %vm542, %v2454, %v2422
  %vm2457 = vcmask 326656
  %v2458 = vsel %vm2457, %v2455, %v2428
  %v2459 = vsel %vm2457, %v2456, %v2430
  %vm2460 = vcmask 392192
  %v2461 = vsel %vm2460, %v2458, %v2436
  %v2462 = vsel %vm2460, %v2459, %v2438
  %vm2463 = vcmask 457728
  %v2464 = vsel %vm2463, %v2461, %v2444
  %v2465 = vsel %vm2463, %v2462, %v2446
  %v2467 = vsel %vm542, %v2391, 0
  %v2470 = vsel %vm542, %v2392, 0
  %2472 = vmatprep.subr.mxu0 0.0
  %2473 = vmatpush1.msra.mxu0 0.0
  %2474 = vmatprep.subr.mxu0 0.0
  %2475 = vmatpush1.msra.mxu0 0.0
  %2476 = vmatprep.subr.mxu0 0.0
  %2477 = vmatpush1.msra.mxu0 0.0
  %2478 = vmatprep.subr.mxu0 0.0
  %2479 = vmatpush1.msra.mxu0 0.0
  %2480 = vmatprep.subr.mxu0 0.0
  %2481 = vmatpush1.msra.mxu0 0.0
  %2482 = vmatprep.subr.mxu0 0.0
  %2483 = vmatpush1.msra.mxu0 0.0
  %2484 = vmatprep.subr.mxu0 0.0
  %2485 = vmatpush1.msra.mxu0 0.0
  %2486 = vmatprep.subr.mxu0 0.0
  %2487 = vmatpush1.msra.mxu0 0.0
  %2488 = vmatprep.subr.mxu0 0.0
  %2489 = vmatpush1.msra.mxu0 0.0
  %2490 = vmatprep.subr.mxu0 0.0
  %2491 = vmatpush1.msra.mxu0 0.0
  %2492 = vmatprep.subr.mxu0 0.0
  %2493 = vmatpush1.msra.mxu0 0.0
  %2494 = vmatprep.subr.mxu0 0.0
  %2495 = vmatpush1.msra.mxu0 0.0
  %2496 = vmatprep.subr.mxu0 0.0
  %2497 = vmatpush1.msra.mxu0 %v520
  %2498 = vmatprep.subr.mxu0 0.0
  %2499 = vmatpush1.msra.mxu0 %v519
  %2500 = vmatprep.subr.mxu0 0.0
  %2501 = vmatpush1.msra.mxu0 %v518
  %2502 = vmatprep.subr.mxu0 0.0
  %2503 = vmatpush1.msra.mxu0 %v517
  %2504 = vmatprep.subr.mxu0 0.0
  %2505 = vmatpush2.msra.mxu0 0.0
  %2506 = vmatprep.subr.mxu0 0.0
  %2507 = vmatpush2.msra.mxu0 0.0
  %2508 = vmatprep.subr.mxu0 0.0
  %2509 = vmatpush2.msra.mxu0 0.0
  %2510 = vmatprep.subr.mxu0 0.0
  %2511 = vmatpush2.msra.mxu0 0.0
  %2512 = vmatprep.subr.mxu0 0.0
  %2513 = vmatpush2.msra.mxu0 0.0
  %2514 = vmatprep.subr.mxu0 0.0
  %2515 = vmatpush2.msra.mxu0 0.0
  %2516 = vmatprep.subr.mxu0 0.0
  %2517 = vmatpush2.msra.mxu0 0.0
  %2518 = vmatprep.subr.mxu0 0.0
  %2519 = vmatpush2.msra.mxu0 0.0
  %2520 = vmatprep.subr.mxu0 0.0
  %2521 = vmatpush2.msra.mxu0 0.0
  %2522 = vmatprep.subr.mxu0 0.0
  %2523 = vmatpush2.msra.mxu0 0.0
  %2524 = vmatprep.subr.mxu0 0.0
  %2525 = vmatpush2.msra.mxu0 0.0
  %2526 = vmatprep.subr.mxu0 0.0
  %2527 = vmatpush2.msra.mxu0 0.0
  %2528 = vmatprep.subr.mxu0 0.0
  %2529 = vmatpush2.msra.mxu0 0.0
  %2530 = vmatprep.subr.mxu0 0.0
  %2531 = vmatpush2.msra.mxu0 0.0
  %2532 = vmatprep.subr.mxu0 0.0
  %2533 = vmatpush2.msra.mxu0 0.0
  %2534 = vmatprep.subr.mxu0 0.0
  %2535 = vmatpush2.msra.mxu0 0.0
  %2536 = vmatprep.mubr.f32.mxu0 0.0
  %2537 = vmatmul.mubr.f32.gmra.mxu0 %v2467
  %v2538 = vpop.f32.mrf.mxu0
  %v2539 = vadd.f32 0.0, %v2538
  %v2540 = vpop.f32.mrf.mxu0
  %2541 = vmatprep.mubr.f32.mxu0 0.0
  %2542 = vmatmul.mubr.f32.gmra.mxu0 %v2470
  %v2543 = vpop.f32.mrf.mxu0
  %v2544 = vadd.f32 0.0, %v2543
  %v2545 = vpop.f32.mrf.mxu0
  %2546 = vdwg.mxu0
  %v2547 = vadd.f32 %v508, %v2539
  %v2548 = vadd.f32 %v509, %v2544
  %v2550 = vlaneseq
  %v2551 = vshrl.u32 %v2550, 7
  %v2552 = vsub.s32 0, %v2551
  %v2553 = vrot.slane %v521, %v2552
  %v2555 = vadd.f32 %v2547, %v2553
  %v2556 = vadd.f32 %v2548, %v2553
  %v2557 = vsel %vm542, %v2555, 0.0
  %2558 = vadd.xlane.f32.xlu0 %v2557
  %v2559 = vpop.xlane.xlu0 %2558
  %v2560 = vsel %vm542, %v2556, 0.0
  %2561 = vadd.xlane.f32.xlu0 %v2560
  %v2562 = vpop.xlane.xlu0 %2561
  %v2563 = vrcp.pop 32.0
  %v2564 = vmul.f32 %v2559, %v2563
  %v2565 = vmul.f32 %v2562, %v2563
  %v2566 = vsub.f32 %v2555, %v2564
  %v2567 = vsub.f32 %v2556, %v2565
  %v2568 = vmul.f32 %v2566, %v2566
  %v2569 = vmul.f32 %v2567, %v2567
  %v2570 = vsel %vm542, %v2568, 0.0
  %2571 = vadd.xlane.f32.xlu0 %v2570
  %v2572 = vpop.xlane.xlu0 %2571
  %v2573 = vsel %vm542, %v2569, 0.0
  %2574 = vadd.xlane.f32.xlu0 %v2573
  %v2575 = vpop.xlane.xlu0 %2574
  %v2576 = vmul.f32 %v2572, %v2563
  %v2577 = vmul.f32 %v2575, %v2563
  %v2578 = vadd.f32 %v2576, 1e-05
  %v2579 = vadd.f32 %v2577, 1e-05
  %v2580 = vrsqrt.pop %v2578
  %v2581 = vrsqrt.pop %v2579
  %v2582 = vmul.f32 %v2566, %v2580
  %v2583 = vmul.f32 %v2567, %v2581
  %v2585 = vlaneseq
  %v2586 = vshrl.u32 %v2585, 7
  %v2587 = vsub.s32 0, %v2586
  %v2588 = vrot.slane %v532, %v2587
  %v2590 = vmul.f32 %v2582, %v2588
  %v2591 = vmul.f32 %v2583, %v2588
  %v2593 = vlaneseq
  %v2594 = vshrl.u32 %v2593, 7
  %v2595 = vsub.s32 0, %v2594
  %v2596 = vrot.slane %v533, %v2595
  %v2598 = vadd.f32 %v2590, %v2596
  %v2599 = vadd.f32 %v2591, %v2596
  %v2601 = vlaneseq
  %v2602 = vshrl.u32 %v2601, 7
  %v2603 = vsub.s32 0, %v2602
  %v2604 = vrot.slane %v526, %v2603
  %v2607 = vsel %vm542, %v2598, 0
  %v2610 = vsel %vm542, %v2599, 0
  %2612 = vmatprep.subr.mxu0 0.0
  %2613 = vmatpush1.msra.mxu0 0.0
  %2614 = vmatprep.subr.mxu0 0.0
  %2615 = vmatpush1.msra.mxu0 0.0
  %2616 = vmatprep.subr.mxu0 0.0
  %2617 = vmatpush1.msra.mxu0 0.0
  %2618 = vmatprep.subr.mxu0 0.0
  %2619 = vmatpush1.msra.mxu0 0.0
  %2620 = vmatprep.subr.mxu0 0.0
  %2621 = vmatpush1.msra.mxu0 0.0
  %2622 = vmatprep.subr.mxu0 0.0
  %2623 = vmatpush1.msra.mxu0 0.0
  %2624 = vmatprep.subr.mxu0 0.0
  %2625 = vmatpush1.msra.mxu0 0.0
  %2626 = vmatprep.subr.mxu0 0.0
  %2627 = vmatpush1.msra.mxu0 0.0
  %2628 = vmatprep.subr.mxu0 0.0
  %2629 = vmatpush1.msra.mxu0 0.0
  %2630 = vmatprep.subr.mxu0 0.0
  %2631 = vmatpush1.msra.mxu0 0.0
  %2632 = vmatprep.subr.mxu0 0.0
  %2633 = vmatpush1.msra.mxu0 0.0
  %2634 = vmatprep.subr.mxu0 0.0
  %2635 = vmatpush1.msra.mxu0 0.0
  %2636 = vmatprep.subr.mxu0 0.0
  %2637 = vmatpush1.msra.mxu0 %v525
  %2638 = vmatprep.subr.mxu0 0.0
  %2639 = vmatpush1.msra.mxu0 %v524
  %2640 = vmatprep.subr.mxu0 0.0
  %2641 = vmatpush1.msra.mxu0 %v523
  %2642 = vmatprep.subr.mxu0 0.0
  %2643 = vmatpush1.msra.mxu0 %v522
  %2644 = vmatprep.subr.mxu0 0.0
  %2645 = vmatpush2.msra.mxu0 0.0
  %2646 = vmatprep.subr.mxu0 0.0
  %2647 = vmatpush2.msra.mxu0 0.0
  %2648 = vmatprep.subr.mxu0 0.0
  %2649 = vmatpush2.msra.mxu0 0.0
  %2650 = vmatprep.subr.mxu0 0.0
  %2651 = vmatpush2.msra.mxu0 0.0
  %2652 = vmatprep.subr.mxu0 0.0
  %2653 = vmatpush2.msra.mxu0 0.0
  %2654 = vmatprep.subr.mxu0 0.0
  %2655 = vmatpush2.msra.mxu0 0.0
  %2656 = vmatprep.subr.mxu0 0.0
  %2657 = vmatpush2.msra.mxu0 0.0
  %2658 = vmatprep.subr.mxu0 0.0
  %2659 = vmatpush2.msra.mxu0 0.0
  %2660 = vmatprep.subr.mxu0 0.0
  %2661 = vmatpush2.msra.mxu0 0.0
  %2662 = vmatprep.subr.mxu0 0.0
  %2663 = vmatpush2.msra.mxu0 0.0
  %2664 = vmatprep.subr.mxu0 0.0
  %2665 = vmatpush2.msra.mxu0 0.0
  %2666 = vmatprep.subr.mxu0 0.0
  %2667 = vmatpush2.msra.mxu0 0.0
  %2668 = vmatprep.subr.mxu0 0.0
  %2669 = vmatpush2.msra.mxu0 0.0
  %2670 = vmatprep.subr.mxu0 0.0
  %2671 = vmatpush2.msra.mxu0 0.0
  %2672 = vmatprep.subr.mxu0 0.0
  %2673 = vmatpush2.msra.mxu0 0.0
  %2674 = vmatprep.subr.mxu0 0.0
  %2675 = vmatpush2.msra.mxu0 0.0
  %2676 = vmatprep.mubr.f32.mxu0 0.0
  %2677 = vmatmul.mubr.f32.gmra.mxu0 %v2607
  %v2678 = vpop.f32.mrf.mxu0
  %v2679 = vadd.f32 %v2604, %v2678
  %v2680 = vpop.f32.mrf.mxu0
  %2681 = vmatprep.mubr.f32.mxu0 0.0
  %2682 = vmatmul.mubr.f32.gmra.mxu0 %v2610
  %v2683 = vpop.f32.mrf.mxu0
  %v2684 = vadd.f32 %v2604, %v2683
  %v2685 = vpop.f32.mrf.mxu0
  %2686 = vdwg.mxu0
  %v2687 = vmul.f32 %v2679, 0.5
  %v2688 = vmul.f32 %v2684, 0.5
  %v2689 = vmul.f32 %v2679, 0.70710677
  %v2690 = vmul.f32 %v2684, 0.70710677
  %v2691 = vand.u32 2147483647, %v2689
  %v2692 = vand.u32 2147483647, %v2690
  %v2693 = vmul.f32 %v2691, 0.3275911
  %v2694 = vmul.f32 %v2692, 0.3275911
  %v2695 = vadd.f32 %v2693, 1.0
  %v2696 = vadd.f32 %v2694, 1.0
  %v2697 = vrcp.pop %v2695
  %v2698 = vmul.f32 1.0, %v2697
  %v2699 = vrcp.pop %v2696
  %v2700 = vmul.f32 1.0, %v2699
  %v2701 = vmul.f32 %v2698, 1.0614054
  %v2702 = vmul.f32 %v2700, 1.0614054
  %v2703 = vsub.f32 %v2701, 1.4531521
  %v2704 = vsub.f32 %v2702, 1.4531521
  %v2705 = vmul.f32 %v2703, %v2698
  %v2706 = vmul.f32 %v2704, %v2700
  %v2707 = vadd.f32 %v2705, 1.4214138
  %v2708 = vadd.f32 %v2706, 1.4214138
  %v2709 = vmul.f32 %v2707, %v2698
  %v2710 = vmul.f32 %v2708, %v2700
  %v2711 = vsub.f32 %v2709, 0.28449672
  %v2712 = vsub.f32 %v2710, 0.28449672
  %v2713 = vmul.f32 %v2711, %v2698
  %v2714 = vmul.f32 %v2712, %v2700
  %v2715 = vadd.f32 %v2713, 0.2548296
  %v2716 = vadd.f32 %v2714, 0.2548296
  %v2717 = vmul.f32 %v2715, %v2698
  %v2718 = vmul.f32 %v2716, %v2700
  %v2719 = vsub.f32 0.0, %v2689
  %v2720 = vsub.f32 0.0, %v2690
  %v2721 = vmul.f32 %v2719, %v2689
  %v2722 = vmul.f32 %v2720, %v2690
  %v2723 = vmul.f32 %v2721, 1.442695
  %v2724 = vpow.pop %v2723
  %v2725 = vmul.f32 %v2722, 1.442695
  %v2726 = vpow.pop %v2725
  %v2727 = vmul.f32 %v2717, %v2724
  %v2728 = vmul.f32 %v2718, %v2726
  %v2729 = vsub.f32 1.0, %v2727
  %v2730 = vsub.f32 1.0, %v2728
  %vm2731 = vcmp.ge.f32.partialorder %v2689, 0.0
  %vm2732 = vcmp.ge.f32.partialorder %v2690, 0.0
  %v2733 = vsub.f32 0.0, %v2729
  %v2734 = vsub.f32 0.0, %v2730
  %v2735 = vsel %vm2731, %v2729, %v2733
  %v2736 = vsel %vm2732, %v2730, %v2734
  %v2737 = vadd.f32 %v2735, 1.0
  %v2738 = vadd.f32 %v2736, 1.0
  %v2739 = vmul.f32 %v2687, %v2737
  %v2740 = vmul.f32 %v2688, %v2738
  %v2742 = vlaneseq
  %v2743 = vshrl.u32 %v2742, 7
  %v2744 = vsub.s32 0, %v2743
  %v2745 = vrot.slane %v531, %v2744
  %v2748 = vsel %vm542, %v2739, 0
  %v2751 = vsel %vm542, %v2740, 0
  %2753 = vmatprep.subr.mxu0 0.0
  %2754 = vmatpush1.msra.mxu0 0.0
  %2755 = vmatprep.subr.mxu0 0.0
  %2756 = vmatpush1.msra.mxu0 0.0
  %2757 = vmatprep.subr.mxu0 0.0
  %2758 = vmatpush1.msra.mxu0 0.0
  %2759 = vmatprep.subr.mxu0 0.0
  %2760 = vmatpush1.msra.mxu0 0.0
  %2761 = vmatprep.subr.mxu0 0.0
  %2762 = vmatpush1.msra.mxu0 0.0
  %2763 = vmatprep.subr.mxu0 0.0
  %2764 = vmatpush1.msra.mxu0 0.0
  %2765 = vmatprep.subr.mxu0 0.0
  %2766 = vmatpush1.msra.mxu0 0.0
  %2767 = vmatprep.subr.mxu0 0.0
  %2768 = vmatpush1.msra.mxu0 0.0
  %2769 = vmatprep.subr.mxu0 0.0
  %2770 = vmatpush1.msra.mxu0 0.0
  %2771 = vmatprep.subr.mxu0 0.0
  %2772 = vmatpush1.msra.mxu0 0.0
  %2773 = vmatprep.subr.mxu0 0.0
  %2774 = vmatpush1.msra.mxu0 0.0
  %2775 = vmatprep.subr.mxu0 0.0
  %2776 = vmatpush1.msra.mxu0 0.0
  %2777 = vmatprep.subr.mxu0 0.0
  %2778 = vmatpush1.msra.mxu0 %v530
  %2779 = vmatprep.subr.mxu0 0.0
  %2780 = vmatpush1.msra.mxu0 %v529
  %2781 = vmatprep.subr.mxu0 0.0
  %2782 = vmatpush1.msra.mxu0 %v528
  %2783 = vmatprep.subr.mxu0 0.0
  %2784 = vmatpush1.msra.mxu0 %v527
  %2785 = vmatprep.subr.mxu0 0.0
  %2786 = vmatpush2.msra.mxu0 0.0
  %2787 = vmatprep.subr.mxu0 0.0
  %2788 = vmatpush2.msra.mxu0 0.0
  %2789 = vmatprep.subr.mxu0 0.0
  %2790 = vmatpush2.msra.mxu0 0.0
  %2791 = vmatprep.subr.mxu0 0.0
  %2792 = vmatpush2.msra.mxu0 0.0
  %2793 = vmatprep.subr.mxu0 0.0
  %2794 = vmatpush2.msra.mxu0 0.0
  %2795 = vmatprep.subr.mxu0 0.0
  %2796 = vmatpush2.msra.mxu0 0.0
  %2797 = vmatprep.subr.mxu0 0.0
  %2798 = vmatpush2.msra.mxu0 0.0
  %2799 = vmatprep.subr.mxu0 0.0
  %2800 = vmatpush2.msra.mxu0 0.0
  %2801 = vmatprep.subr.mxu0 0.0
  %2802 = vmatpush2.msra.mxu0 0.0
  %2803 = vmatprep.subr.mxu0 0.0
  %2804 = vmatpush2.msra.mxu0 0.0
  %2805 = vmatprep.subr.mxu0 0.0
  %2806 = vmatpush2.msra.mxu0 0.0
  %2807 = vmatprep.subr.mxu0 0.0
  %2808 = vmatpush2.msra.mxu0 0.0
  %2809 = vmatprep.subr.mxu0 0.0
  %2810 = vmatpush2.msra.mxu0 0.0
  %2811 = vmatprep.subr.mxu0 0.0
  %2812 = vmatpush2.msra.mxu0 0.0
  %2813 = vmatprep.subr.mxu0 0.0
  %2814 = vmatpush2.msra.mxu0 0.0
  %2815 = vmatprep.subr.mxu0 0.0
  %2816 = vmatpush2.msra.mxu0 0.0
  %2817 = vmatprep.mubr.f32.mxu0 0.0
  %2818 = vmatmul.mubr.f32.gmra.mxu0 %v2748
  %v2819 = vpop.f32.mrf.mxu0
  %v2820 = vadd.f32 %v2745, %v2819
  %v2821 = vpop.f32.mrf.mxu0
  %2822 = vmatprep.mubr.f32.mxu0 0.0
  %2823 = vmatmul.mubr.f32.gmra.mxu0 %v2751
  %v2824 = vpop.f32.mrf.mxu0
  %v2825 = vadd.f32 %v2745, %v2824
  %v2826 = vpop.f32.mrf.mxu0
  %2827 = vdwg.mxu0
  %v2828 = vadd.f32 %v2598, %v2820
  %v2829 = vadd.f32 %v2599, %v2825
  %v2830 = vsel %vm542, %v2828, 0.0
  %2831 = vadd.xlane.f32.xlu0 %v2830
  %v2832 = vpop.xlane.xlu0 %2831
  %v2833 = vsel %vm542, %v2829, 0.0
  %2834 = vadd.xlane.f32.xlu0 %v2833
  %v2835 = vpop.xlane.xlu0 %2834
  %v2836 = vmul.f32 %v2832, %v2563
  %v2837 = vmul.f32 %v2835, %v2563
  %v2838 = vsub.f32 %v2828, %v2836
  %v2839 = vsub.f32 %v2829, %v2837
  %v2840 = vmul.f32 %v2838, %v2838
  %v2841 = vmul.f32 %v2839, %v2839
  %v2842 = vsel %vm542, %v2840, 0.0
  %2843 = vadd.xlane.f32.xlu0 %v2842
  %v2844 = vpop.xlane.xlu0 %2843
  %v2845 = vsel %vm542, %v2841, 0.0
  %2846 = vadd.xlane.f32.xlu0 %v2845
  %v2847 = vpop.xlane.xlu0 %2846
  %v2848 = vmul.f32 %v2844, %v2563
  %v2849 = vmul.f32 %v2847, %v2563
  %v2850 = vadd.f32 %v2848, 1e-05
  %v2851 = vadd.f32 %v2849, 1e-05
  %v2852 = vrsqrt.pop %v2850
  %v2853 = vrsqrt.pop %v2851
  %v2854 = vmul.f32 %v2838, %v2852
  %v2855 = vmul.f32 %v2839, %v2853
  %v2857 = vlaneseq
  %v2858 = vshrl.u32 %v2857, 7
  %v2859 = vsub.s32 0, %v2858
  %v2860 = vrot.slane %v534, %v2859
  %v2862 = vmul.f32 %v2854, %v2860
  %v2863 = vmul.f32 %v2855, %v2860
  %v2865 = vlaneseq
  %v2866 = vshrl.u32 %v2865, 7
  %v2867 = vsub.s32 0, %v2866
  %v2868 = vrot.slane %v535, %v2867
  %v2870 = vadd.f32 %v2862, %v2868
  %v2871 = vadd.f32 %v2863, %v2868
  %vm2872 = vcmask 523264
  %2873 = vst.msk [vmem:[%s24] sm:$0xff] %vm2872, %v2464
  %2874 = vst.msk [vmem:[%s24 + $0x8] sm:$0xff] %vm2872, %v2465
  %v2875 = vld [vmem:[%s18] sm:$0xff]
  %v2876 = vld [vmem:[%s18 + $0x8] sm:$0xff]
  %v2877 = vld [vmem:[%s18 + $0x10] sm:$0xff]
  %v2878 = vld [vmem:[%s18 + $0x18] sm:$0xff]
  %s2879 = scalar_lea.vmem %s18, 32
  %v2880 = vld [vmem:[%s2879] sm:$0xff]
  %v2881 = vld [vmem:[%s2879 + $0x8] sm:$0xff]
  %v2882 = vld [vmem:[%s2879 + $0x10] sm:$0xff]
  %v2883 = vld [vmem:[%s2879 + $0x18] sm:$0xff]
  %s2884 = scalar_lea.vmem %s18, 64
  %v2885 = vld [vmem:[%s2884] sm:$0xff]
  %v2886 = vld [vmem:[%s2884 + $0x8] sm:$0xff]
  %v2887 = vld [vmem:[%s2884 + $0x10] sm:$0xff]
  %v2888 = vld [vmem:[%s2884 + $0x18] sm:$0xff]
  %v2889 = vld [vmem:[%s19] sm:$0x1]
  %v2890 = vld [vmem:[%s20] sm:$0x1]
  %v2891 = vld [vmem:[%s21] sm:$0x1]
  %v2892 = vld [vmem:[%s22] sm:$0xff]
  %s2893 = scalar_lea.vmem %s22, 8
  %v2894 = vld [vmem:[%s2893] sm:$0xff]
  %s2895 = scalar_lea.vmem %s22, 16
  %v2896 = vld [vmem:[%s2895] sm:$0xff]
  %2897 = vmatprep.subr.mxu0 0.0
  %2898 = vmatpush1.msra.mxu0 0.0
  %2899 = vmatprep.subr.mxu0 0.0
  %2900 = vmatpush1.msra.mxu0 0.0
  %2901 = vmatprep.subr.mxu0 0.0
  %2902 = vmatpush1.msra.mxu0 0.0
  %2903 = vmatprep.subr.mxu0 0.0
  %2904 = vmatpush1.msra.mxu0 0.0
  %2905 = vmatprep.subr.mxu0 0.0
  %2906 = vmatpush1.msra.mxu0 0.0
  %2907 = vmatprep.subr.mxu0 0.0
  %2908 = vmatpush1.msra.mxu0 0.0
  %2909 = vmatprep.subr.mxu0 0.0
  %2910 = vmatpush1.msra.mxu0 0.0
  %2911 = vmatprep.subr.mxu0 0.0
  %2912 = vmatpush1.msra.mxu0 0.0
  %2913 = vmatprep.subr.mxu0 0.0
  %2914 = vmatpush1.msra.mxu0 0.0
  %2915 = vmatprep.subr.mxu0 0.0
  %2916 = vmatpush1.msra.mxu0 0.0
  %2917 = vmatprep.subr.mxu0 0.0
  %2918 = vmatpush1.msra.mxu0 0.0
  %2919 = vmatprep.subr.mxu0 0.0
  %2920 = vmatpush1.msra.mxu0 0.0
  %2921 = vmatprep.subr.mxu0 0.0
  %2922 = vmatpush1.msra.mxu0 0.0
  %2923 = vmatprep.subr.mxu0 0.0
  %2924 = vmatpush1.msra.mxu0 0.0
  %2925 = vmatprep.subr.mxu0 0.0
  %2926 = vmatpush1.msra.mxu0 %v2871
  %2927 = vmatprep.subr.mxu0 0.0
  %2928 = vmatpush1.msra.mxu0 %v2870
  %2929 = vmatprep.subr.mxu0 0.0
  %2930 = vmatpush2.msra.mxu0 0.0
  %2931 = vmatprep.subr.mxu0 0.0
  %2932 = vmatpush2.msra.mxu0 0.0
  %2933 = vmatprep.subr.mxu0 0.0
  %2934 = vmatpush2.msra.mxu0 0.0
  %2935 = vmatprep.subr.mxu0 0.0
  %2936 = vmatpush2.msra.mxu0 0.0
  %2937 = vmatprep.subr.mxu0 0.0
  %2938 = vmatpush2.msra.mxu0 0.0
  %2939 = vmatprep.subr.mxu0 0.0
  %2940 = vmatpush2.msra.mxu0 0.0
  %2941 = vmatprep.subr.mxu0 0.0
  %2942 = vmatpush2.msra.mxu0 0.0
  %2943 = vmatprep.subr.mxu0 0.0
  %2944 = vmatpush2.msra.mxu0 0.0
  %2945 = vmatprep.subr.mxu0 0.0
  %2946 = vmatpush2.msra.mxu0 0.0
  %2947 = vmatprep.subr.mxu0 0.0
  %2948 = vmatpush2.msra.mxu0 0.0
  %2949 = vmatprep.subr.mxu0 0.0
  %2950 = vmatpush2.msra.mxu0 0.0
  %2951 = vmatprep.subr.mxu0 0.0
  %2952 = vmatpush2.msra.mxu0 0.0
  %2953 = vmatprep.subr.mxu0 0.0
  %2954 = vmatpush2.msra.mxu0 0.0
  %2955 = vmatprep.subr.mxu0 0.0
  %2956 = vmatpush2.msra.mxu0 0.0
  %2957 = vmatprep.subr.mxu0 0.0
  %2958 = vmatpush2.msra.mxu0 0.0
  %2959 = vmatprep.subr.mxu0 0.0
  %2960 = vmatpush2.msra.mxu0 0.0
  %2961 = vmatprep.mubr.f32.mxu0 0.0
  %2962 = vmatmul.mubr.f32.gmra.mxu0 %v89
  %v2963 = vpop.f32.mrf.mxu0
  %v2964 = vadd.f32 0.0, %v2963
  %v2965 = vpop.f32.mrf.mxu0
  %2966 = vmatprep.mubr.f32.mxu0 0.0
  %2967 = vmatmul.mubr.f32.gmra.mxu0 %v92
  %v2968 = vpop.f32.mrf.mxu0
  %v2969 = vadd.f32 0.0, %v2968
  %v2970 = vpop.f32.mrf.mxu0
  %2971 = vdwg.mxu0
  %v2973 = vsel %vm542, %v2870, 0
  %v2976 = vsel %vm542, %v2871, 0
  %2978 = vmatprep.subr.mxu0 0.0
  %2979 = vmatpush1.msra.mxu0 0.0
  %2980 = vmatprep.subr.mxu0 0.0
  %2981 = vmatpush1.msra.mxu0 0.0
  %2982 = vmatprep.subr.mxu0 0.0
  %2983 = vmatpush1.msra.mxu0 0.0
  %2984 = vmatprep.subr.mxu0 0.0
  %2985 = vmatpush1.msra.mxu0 0.0
  %2986 = vmatprep.subr.mxu0 0.0
  %2987 = vmatpush1.msra.mxu0 0.0
  %2988 = vmatprep.subr.mxu0 0.0
  %2989 = vmatpush1.msra.mxu0 0.0
  %2990 = vmatprep.subr.mxu0 0.0
  %2991 = vmatpush1.msra.mxu0 0.0
  %2992 = vmatprep.subr.mxu0 0.0
  %2993 = vmatpush1.msra.mxu0 0.0
  %2994 = vmatprep.subr.mxu0 0.0
  %2995 = vmatpush1.msra.mxu0 0.0
  %2996 = vmatprep.subr.mxu0 0.0
  %2997 = vmatpush1.msra.mxu0 0.0
  %2998 = vmatprep.subr.mxu0 0.0
  %2999 = vmatpush1.msra.mxu0 0.0
  %3000 = vmatprep.subr.mxu0 0.0
  %3001 = vmatpush1.msra.mxu0 0.0
  %3002 = vmatprep.subr.mxu0 0.0
  %3003 = vmatpush1.msra.mxu0 %v2883
  %3004 = vmatprep.subr.mxu0 0.0
  %3005 = vmatpush1.msra.mxu0 %v2882
  %3006 = vmatprep.subr.mxu0 0.0
  %3007 = vmatpush1.msra.mxu0 %v2881
  %3008 = vmatprep.subr.mxu0 0.0
  %3009 = vmatpush1.msra.mxu0 %v2880
  %3010 = vmatprep.subr.mxu0 0.0
  %3011 = vmatpush2.msra.mxu0 0.0
  %3012 = vmatprep.subr.mxu0 0.0
  %3013 = vmatpush2.msra.mxu0 0.0
  %3014 = vmatprep.subr.mxu0 0.0
  %3015 = vmatpush2.msra.mxu0 0.0
  %3016 = vmatprep.subr.mxu0 0.0
  %3017 = vmatpush2.msra.mxu0 0.0
  %3018 = vmatprep.subr.mxu0 0.0
  %3019 = vmatpush2.msra.mxu0 0.0
  %3020 = vmatprep.subr.mxu0 0.0
  %3021 = vmatpush2.msra.mxu0 0.0
  %3022 = vmatprep.subr.mxu0 0.0
  %3023 = vmatpush2.msra.mxu0 0.0
  %3024 = vmatprep.subr.mxu0 0.0
  %3025 = vmatpush2.msra.mxu0 0.0
  %3026 = vmatprep.subr.mxu0 0.0
  %3027 = vmatpush2.msra.mxu0 0.0
  %3028 = vmatprep.subr.mxu0 0.0
  %3029 = vmatpush2.msra.mxu0 0.0
  %3030 = vmatprep.subr.mxu0 0.0
  %3031 = vmatpush2.msra.mxu0 0.0
  %3032 = vmatprep.subr.mxu0 0.0
  %3033 = vmatpush2.msra.mxu0 0.0
  %3034 = vmatprep.subr.mxu0 0.0
  %3035 = vmatpush2.msra.mxu0 0.0
  %3036 = vmatprep.subr.mxu0 0.0
  %3037 = vmatpush2.msra.mxu0 0.0
  %3038 = vmatprep.subr.mxu0 0.0
  %3039 = vmatpush2.msra.mxu0 0.0
  %3040 = vmatprep.subr.mxu0 0.0
  %3041 = vmatpush2.msra.mxu0 0.0
  %3042 = vmatprep.mubr.f32.mxu0 0.0
  %3043 = vmatmul.mubr.f32.gmra.mxu0 %v2973
  %v3044 = vpop.f32.mrf.mxu0
  %v3045 = vadd.f32 0.0, %v3044
  %v3046 = vpop.f32.mrf.mxu0
  %3047 = vmatprep.mubr.f32.mxu0 0.0
  %3048 = vmatmul.mubr.f32.gmra.mxu0 %v2976
  %v3049 = vpop.f32.mrf.mxu0
  %v3050 = vadd.f32 0.0, %v3049
  %v3051 = vpop.f32.mrf.mxu0
  %3052 = vdwg.mxu0
  %v3054 = vsel %vm542, %v2964, 0
  %v3057 = vsel %vm542, %v2969, 0
  %3059 = vmatprep.subr.mxu0 0.0
  %3060 = vmatpush1.msra.mxu0 0.0
  %3061 = vmatprep.subr.mxu0 0.0
  %3062 = vmatpush1.msra.mxu0 0.0
  %3063 = vmatprep.subr.mxu0 0.0
  %3064 = vmatpush1.msra.mxu0 0.0
  %3065 = vmatprep.subr.mxu0 0.0
  %3066 = vmatpush1.msra.mxu0 0.0
  %3067 = vmatprep.subr.mxu0 0.0
  %3068 = vmatpush1.msra.mxu0 0.0
  %3069 = vmatprep.subr.mxu0 0.0
  %3070 = vmatpush1.msra.mxu0 0.0
  %3071 = vmatprep.subr.mxu0 0.0
  %3072 = vmatpush1.msra.mxu0 0.0
  %3073 = vmatprep.subr.mxu0 0.0
  %3074 = vmatpush1.msra.mxu0 0.0
  %3075 = vmatprep.subr.mxu0 0.0
  %3076 = vmatpush1.msra.mxu0 0.0
  %3077 = vmatprep.subr.mxu0 0.0
  %3078 = vmatpush1.msra.mxu0 0.0
  %3079 = vmatprep.subr.mxu0 0.0
  %3080 = vmatpush1.msra.mxu0 0.0
  %3081 = vmatprep.subr.mxu0 0.0
  %3082 = vmatpush1.msra.mxu0 0.0
  %3083 = vmatprep.subr.mxu0 0.0
  %3084 = vmatpush1.msra.mxu0 %v2878
  %3085 = vmatprep.subr.mxu0 0.0
  %3086 = vmatpush1.msra.mxu0 %v2877
  %3087 = vmatprep.subr.mxu0 0.0
  %3088 = vmatpush1.msra.mxu0 %v2876
  %3089 = vmatprep.subr.mxu0 0.0
  %3090 = vmatpush1.msra.mxu0 %v2875
  %3091 = vmatprep.subr.mxu0 0.0
  %3092 = vmatpush2.msra.mxu0 0.0
  %3093 = vmatprep.subr.mxu0 0.0
  %3094 = vmatpush2.msra.mxu0 0.0
  %3095 = vmatprep.subr.mxu0 0.0
  %3096 = vmatpush2.msra.mxu0 0.0
  %3097 = vmatprep.subr.mxu0 0.0
  %3098 = vmatpush2.msra.mxu0 0.0
  %3099 = vmatprep.subr.mxu0 0.0
  %3100 = vmatpush2.msra.mxu0 0.0
  %3101 = vmatprep.subr.mxu0 0.0
  %3102 = vmatpush2.msra.mxu0 0.0
  %3103 = vmatprep.subr.mxu0 0.0
  %3104 = vmatpush2.msra.mxu0 0.0
  %3105 = vmatprep.subr.mxu0 0.0
  %3106 = vmatpush2.msra.mxu0 0.0
  %3107 = vmatprep.subr.mxu0 0.0
  %3108 = vmatpush2.msra.mxu0 0.0
  %3109 = vmatprep.subr.mxu0 0.0
  %3110 = vmatpush2.msra.mxu0 0.0
  %3111 = vmatprep.subr.mxu0 0.0
  %3112 = vmatpush2.msra.mxu0 0.0
  %3113 = vmatprep.subr.mxu0 0.0
  %3114 = vmatpush2.msra.mxu0 0.0
  %3115 = vmatprep.subr.mxu0 0.0
  %3116 = vmatpush2.msra.mxu0 0.0
  %3117 = vmatprep.subr.mxu0 0.0
  %3118 = vmatpush2.msra.mxu0 0.0
  %3119 = vmatprep.subr.mxu0 0.0
  %3120 = vmatpush2.msra.mxu0 0.0
  %3121 = vmatprep.subr.mxu0 0.0
  %3122 = vmatpush2.msra.mxu0 0.0
  %3123 = vmatprep.mubr.f32.mxu0 0.0
  %3124 = vmatmul.mubr.f32.gmra.mxu0 %v3054
  %v3125 = vpop.f32.mrf.mxu0
  %v3126 = vadd.f32 %v3045, %v3125
  %v3127 = vpop.f32.mrf.mxu0
  %3128 = vmatprep.mubr.f32.mxu0 0.0
  %3129 = vmatmul.mubr.f32.gmra.mxu0 %v3057
  %v3130 = vpop.f32.mrf.mxu0
  %v3131 = vadd.f32 %v3050, %v3130
  %v3132 = vpop.f32.mrf.mxu0
  %3133 = vdwg.mxu0
  %3134 = vmatprep.subr.mxu0 0.0
  %3135 = vmatpush1.msra.mxu0 0.0
  %3136 = vmatprep.subr.mxu0 0.0
  %3137 = vmatpush1.msra.mxu0 0.0
  %3138 = vmatprep.subr.mxu0 0.0
  %3139 = vmatpush1.msra.mxu0 0.0
  %3140 = vmatprep.subr.mxu0 0.0
  %3141 = vmatpush1.msra.mxu0 0.0
  %3142 = vmatprep.subr.mxu0 0.0
  %3143 = vmatpush1.msra.mxu0 0.0
  %3144 = vmatprep.subr.mxu0 0.0
  %3145 = vmatpush1.msra.mxu0 0.0
  %3146 = vmatprep.subr.mxu0 0.0
  %3147 = vmatpush1.msra.mxu0 0.0
  %3148 = vmatprep.subr.mxu0 0.0
  %3149 = vmatpush1.msra.mxu0 0.0
  %3150 = vmatprep.subr.mxu0 0.0
  %3151 = vmatpush1.msra.mxu0 0.0
  %3152 = vmatprep.subr.mxu0 0.0
  %3153 = vmatpush1.msra.mxu0 0.0
  %3154 = vmatprep.subr.mxu0 0.0
  %3155 = vmatpush1.msra.mxu0 0.0
  %3156 = vmatprep.subr.mxu0 0.0
  %3157 = vmatpush1.msra.mxu0 0.0
  %3158 = vmatprep.subr.mxu0 0.0
  %3159 = vmatpush1.msra.mxu0 0.0
  %3160 = vmatprep.subr.mxu0 0.0
  %3161 = vmatpush1.msra.mxu0 0.0
  %3162 = vmatprep.subr.mxu0 0.0
  %3163 = vmatpush1.msra.mxu0 %v2871
  %3164 = vmatprep.subr.mxu0 0.0
  %3165 = vmatpush1.msra.mxu0 %v2870
  %3166 = vmatprep.subr.mxu0 0.0
  %3167 = vmatpush2.msra.mxu0 0.0
  %3168 = vmatprep.subr.mxu0 0.0
  %3169 = vmatpush2.msra.mxu0 0.0
  %3170 = vmatprep.subr.mxu0 0.0
  %3171 = vmatpush2.msra.mxu0 0.0
  %3172 = vmatprep.subr.mxu0 0.0
  %3173 = vmatpush2.msra.mxu0 0.0
  %3174 = vmatprep.subr.mxu0 0.0
  %3175 = vmatpush2.msra.mxu0 0.0
  %3176 = vmatprep.subr.mxu0 0.0
  %3177 = vmatpush2.msra.mxu0 0.0
  %3178 = vmatprep.subr.mxu0 0.0
  %3179 = vmatpush2.msra.mxu0 0.0
  %3180 = vmatprep.subr.mxu0 0.0
  %3181 = vmatpush2.msra.mxu0 0.0
  %3182 = vmatprep.subr.mxu0 0.0
  %3183 = vmatpush2.msra.mxu0 0.0
  %3184 = vmatprep.subr.mxu0 0.0
  %3185 = vmatpush2.msra.mxu0 0.0
  %3186 = vmatprep.subr.mxu0 0.0
  %3187 = vmatpush2.msra.mxu0 0.0
  %3188 = vmatprep.subr.mxu0 0.0
  %3189 = vmatpush2.msra.mxu0 0.0
  %3190 = vmatprep.subr.mxu0 0.0
  %3191 = vmatpush2.msra.mxu0 0.0
  %3192 = vmatprep.subr.mxu0 0.0
  %3193 = vmatpush2.msra.mxu0 0.0
  %3194 = vmatprep.subr.mxu0 0.0
  %3195 = vmatpush2.msra.mxu0 0.0
  %3196 = vmatprep.subr.mxu0 0.0
  %3197 = vmatpush2.msra.mxu0 0.0
  %3198 = vmatprep.mubr.f32.mxu0 0.0
  %3199 = vmatmul.mubr.f32.gmra.mxu0 %v340
  %v3200 = vpop.f32.mrf.mxu0
  %v3201 = vadd.f32 0.0, %v3200
  %v3202 = vpop.f32.mrf.mxu0
  %3203 = vmatprep.mubr.f32.mxu0 0.0
  %3204 = vmatmul.mubr.f32.gmra.mxu0 %v343
  %v3205 = vpop.f32.mrf.mxu0
  %v3206 = vadd.f32 0.0, %v3205
  %v3207 = vpop.f32.mrf.mxu0
  %3208 = vdwg.mxu0
  %v3210 = vsel %vm542, %v3201, 0
  %v3213 = vsel %vm542, %v3206, 0
  %3215 = vmatprep.subr.mxu0 0.0
  %3216 = vmatpush1.msra.mxu0 0.0
  %3217 = vmatprep.subr.mxu0 0.0
  %3218 = vmatpush1.msra.mxu0 0.0
  %3219 = vmatprep.subr.mxu0 0.0
  %3220 = vmatpush1.msra.mxu0 0.0
  %3221 = vmatprep.subr.mxu0 0.0
  %3222 = vmatpush1.msra.mxu0 0.0
  %3223 = vmatprep.subr.mxu0 0.0
  %3224 = vmatpush1.msra.mxu0 0.0
  %3225 = vmatprep.subr.mxu0 0.0
  %3226 = vmatpush1.msra.mxu0 0.0
  %3227 = vmatprep.subr.mxu0 0.0
  %3228 = vmatpush1.msra.mxu0 0.0
  %3229 = vmatprep.subr.mxu0 0.0
  %3230 = vmatpush1.msra.mxu0 0.0
  %3231 = vmatprep.subr.mxu0 0.0
  %3232 = vmatpush1.msra.mxu0 0.0
  %3233 = vmatprep.subr.mxu0 0.0
  %3234 = vmatpush1.msra.mxu0 0.0
  %3235 = vmatprep.subr.mxu0 0.0
  %3236 = vmatpush1.msra.mxu0 0.0
  %3237 = vmatprep.subr.mxu0 0.0
  %3238 = vmatpush1.msra.mxu0 0.0
  %3239 = vmatprep.subr.mxu0 0.0
  %3240 = vmatpush1.msra.mxu0 %v2888
  %3241 = vmatprep.subr.mxu0 0.0
  %3242 = vmatpush1.msra.mxu0 %v2887
  %3243 = vmatprep.subr.mxu0 0.0
  %3244 = vmatpush1.msra.mxu0 %v2886
  %3245 = vmatprep.subr.mxu0 0.0
  %3246 = vmatpush1.msra.mxu0 %v2885
  %3247 = vmatprep.subr.mxu0 0.0
  %3248 = vmatpush2.msra.mxu0 0.0
  %3249 = vmatprep.subr.mxu0 0.0
  %3250 = vmatpush2.msra.mxu0 0.0
  %3251 = vmatprep.subr.mxu0 0.0
  %3252 = vmatpush2.msra.mxu0 0.0
  %3253 = vmatprep.subr.mxu0 0.0
  %3254 = vmatpush2.msra.mxu0 0.0
  %3255 = vmatprep.subr.mxu0 0.0
  %3256 = vmatpush2.msra.mxu0 0.0
  %3257 = vmatprep.subr.mxu0 0.0
  %3258 = vmatpush2.msra.mxu0 0.0
  %3259 = vmatprep.subr.mxu0 0.0
  %3260 = vmatpush2.msra.mxu0 0.0
  %3261 = vmatprep.subr.mxu0 0.0
  %3262 = vmatpush2.msra.mxu0 0.0
  %3263 = vmatprep.subr.mxu0 0.0
  %3264 = vmatpush2.msra.mxu0 0.0
  %3265 = vmatprep.subr.mxu0 0.0
  %3266 = vmatpush2.msra.mxu0 0.0
  %3267 = vmatprep.subr.mxu0 0.0
  %3268 = vmatpush2.msra.mxu0 0.0
  %3269 = vmatprep.subr.mxu0 0.0
  %3270 = vmatpush2.msra.mxu0 0.0
  %3271 = vmatprep.subr.mxu0 0.0
  %3272 = vmatpush2.msra.mxu0 0.0
  %3273 = vmatprep.subr.mxu0 0.0
  %3274 = vmatpush2.msra.mxu0 0.0
  %3275 = vmatprep.subr.mxu0 0.0
  %3276 = vmatpush2.msra.mxu0 0.0
  %3277 = vmatprep.subr.mxu0 0.0
  %3278 = vmatpush2.msra.mxu0 0.0
  %3279 = vmatprep.mubr.f32.mxu0 0.0
  %3280 = vmatmul.mubr.f32.gmra.mxu0 %v3210
  %v3281 = vpop.f32.mrf.mxu0
  %v3282 = vadd.f32 0.0, %v3281
  %v3283 = vpop.f32.mrf.mxu0
  %3284 = vmatprep.mubr.f32.mxu0 0.0
  %3285 = vmatmul.mubr.f32.gmra.mxu0 %v3213
  %v3286 = vpop.f32.mrf.mxu0
  %v3287 = vadd.f32 0.0, %v3286
  %v3288 = vpop.f32.mrf.mxu0
  %3289 = vdwg.mxu0
  %v3290 = vadd.f32 %v3126, %v3282
  %v3291 = vadd.f32 %v3131, %v3287
  %v3293 = vlaneseq
  %v3294 = vshrl.u32 %v3293, 7
  %v3295 = vsub.s32 0, %v3294
  %v3296 = vrot.slane %v2889, %v3295
  %v3298 = vadd.f32 %v3290, %v3296
  %v3299 = vadd.f32 %v3291, %v3296
  %v3300 = vsel %vm542, %v3298, 0.0
  %v3301 = vsel %vm542, %v3299, 0.0
  %v3302 = vadd.f32 %v3300, %v3301
  %v3303 = vrot.slane %v3302, 4
  %v3304 = vadd.f32 %v3302, %v3303
  %v3305 = vrot.slane %v3304, 2
  %v3306 = vadd.f32 %v3304, %v3305
  %v3307 = vrot.slane %v3306, 1
  %v3308 = vadd.f32 %v3306, %v3307
  %v3309 = vrcp.pop 16.0
  %v3310 = vmul.f32 %v3308, %v3309
  %v3311 = vsub.f32 %v3298, %v3310
  %v3312 = vsub.f32 %v3299, %v3310
  %v3313 = vmul.f32 %v3311, %v3311
  %v3314 = vmul.f32 %v3312, %v3312
  %v3315 = vsel %vm542, %v3313, 0.0
  %v3316 = vsel %vm542, %v3314, 0.0
  %v3317 = vadd.f32 %v3315, %v3316
  %v3318 = vrot.slane %v3317, 4
  %v3319 = vadd.f32 %v3317, %v3318
  %v3320 = vrot.slane %v3319, 2
  %v3321 = vadd.f32 %v3319, %v3320
  %v3322 = vrot.slane %v3321, 1
  %v3323 = vadd.f32 %v3321, %v3322
  %v3324 = vmul.f32 %v3323, %v3309
  %v3325 = vadd.f32 %v3324, 1e-05
  %v3326 = vrsqrt.pop %v3325
  %v3327 = vmul.f32 %v3311, %v3326
  %v3328 = vmul.f32 %v3312, %v3326
  %v3330 = vlaneseq
  %v3331 = vshrl.u32 %v3330, 7
  %v3332 = vsub.s32 0, %v3331
  %v3333 = vrot.slane %v2890, %v3332
  %v3335 = vmul.f32 %v3327, %v3333
  %v3336 = vmul.f32 %v3328, %v3333
  %v3338 = vlaneseq
  %v3339 = vshrl.u32 %v3338, 7
  %v3340 = vsub.s32 0, %v3339
  %v3341 = vrot.slane %v2891, %v3340
  %v3343 = vadd.f32 %v3335, %v3341
  %v3344 = vadd.f32 %v3336, %v3341
  %vm3345 = vcmp.gt.f32.partialorder %v3343, 0.0
  %vm3346 = vcmp.gt.f32.partialorder %v3344, 0.0
  %v3347 = vmul.f32 %v3343, 1.442695
  %v3348 = vpow.pop %v3347
  %v3349 = vmul.f32 %v3344, 1.442695
  %v3350 = vpow.pop %v3349
  %v3351 = vsub.f32 %v3348, 1.0
  %v3352 = vsub.f32 %v3350, 1.0
  %v3353 = vsel %vm3345, %v3343, %v3351
  %v3354 = vsel %vm3346, %v3344, %v3352
  %v3356 = vsel %vm87, %v2892, 0
  %3358 = vmatprep.subr.mxu0 0.0
  %3359 = vmatpush1.msra.mxu0 0.0
  %3360 = vmatprep.subr.mxu0 0.0
  %3361 = vmatpush1.msra.mxu0 0.0
  %3362 = vmatprep.subr.mxu0 0.0
  %3363 = vmatpush1.msra.mxu0 0.0
  %3364 = vmatprep.subr.mxu0 0.0
  %3365 = vmatpush1.msra.mxu0 0.0
  %3366 = vmatprep.subr.mxu0 0.0
  %3367 = vmatpush1.msra.mxu0 0.0
  %3368 = vmatprep.subr.mxu0 0.0
  %3369 = vmatpush1.msra.mxu0 0.0
  %3370 = vmatprep.subr.mxu0 0.0
  %3371 = vmatpush1.msra.mxu0 0.0
  %3372 = vmatprep.subr.mxu0 0.0
  %3373 = vmatpush1.msra.mxu0 0.0
  %3374 = vmatprep.subr.mxu0 0.0
  %3375 = vmatpush1.msra.mxu0 0.0
  %3376 = vmatprep.subr.mxu0 0.0
  %3377 = vmatpush1.msra.mxu0 0.0
  %3378 = vmatprep.subr.mxu0 0.0
  %3379 = vmatpush1.msra.mxu0 0.0
  %3380 = vmatprep.subr.mxu0 0.0
  %3381 = vmatpush1.msra.mxu0 0.0
  %3382 = vmatprep.subr.mxu0 0.0
  %3383 = vmatpush1.msra.mxu0 0.0
  %3384 = vmatprep.subr.mxu0 0.0
  %3385 = vmatpush1.msra.mxu0 0.0
  %3386 = vmatprep.subr.mxu0 0.0
  %3387 = vmatpush1.msra.mxu0 %v3354
  %3388 = vmatprep.subr.mxu0 0.0
  %3389 = vmatpush1.msra.mxu0 %v3353
  %3390 = vmatprep.subr.mxu0 0.0
  %3391 = vmatpush2.msra.mxu0 0.0
  %3392 = vmatprep.subr.mxu0 0.0
  %3393 = vmatpush2.msra.mxu0 0.0
  %3394 = vmatprep.subr.mxu0 0.0
  %3395 = vmatpush2.msra.mxu0 0.0
  %3396 = vmatprep.subr.mxu0 0.0
  %3397 = vmatpush2.msra.mxu0 0.0
  %3398 = vmatprep.subr.mxu0 0.0
  %3399 = vmatpush2.msra.mxu0 0.0
  %3400 = vmatprep.subr.mxu0 0.0
  %3401 = vmatpush2.msra.mxu0 0.0
  %3402 = vmatprep.subr.mxu0 0.0
  %3403 = vmatpush2.msra.mxu0 0.0
  %3404 = vmatprep.subr.mxu0 0.0
  %3405 = vmatpush2.msra.mxu0 0.0
  %3406 = vmatprep.subr.mxu0 0.0
  %3407 = vmatpush2.msra.mxu0 0.0
  %3408 = vmatprep.subr.mxu0 0.0
  %3409 = vmatpush2.msra.mxu0 0.0
  %3410 = vmatprep.subr.mxu0 0.0
  %3411 = vmatpush2.msra.mxu0 0.0
  %3412 = vmatprep.subr.mxu0 0.0
  %3413 = vmatpush2.msra.mxu0 0.0
  %3414 = vmatprep.subr.mxu0 0.0
  %3415 = vmatpush2.msra.mxu0 0.0
  %3416 = vmatprep.subr.mxu0 0.0
  %3417 = vmatpush2.msra.mxu0 0.0
  %3418 = vmatprep.subr.mxu0 0.0
  %3419 = vmatpush2.msra.mxu0 0.0
  %3420 = vmatprep.subr.mxu0 0.0
  %3421 = vmatpush2.msra.mxu0 0.0
  %3422 = vmatprep.mubr.f32.mxu0 0.0
  %3423 = vmatmul.mubr.f32.gmra.mxu0 %v3356
  %v3424 = vpop.f32.mrf.mxu0
  %v3425 = vadd.f32 0.0, %v3424
  %v3426 = vpop.f32.mrf.mxu0
  %3427 = vdwg.mxu0
  %v3429 = vsel %vm87, %v2894, 0
  %3431 = vmatprep.subr.mxu0 0.0
  %3432 = vmatpush1.msra.mxu0 0.0
  %3433 = vmatprep.subr.mxu0 0.0
  %3434 = vmatpush1.msra.mxu0 0.0
  %3435 = vmatprep.subr.mxu0 0.0
  %3436 = vmatpush1.msra.mxu0 0.0
  %3437 = vmatprep.subr.mxu0 0.0
  %3438 = vmatpush1.msra.mxu0 0.0
  %3439 = vmatprep.subr.mxu0 0.0
  %3440 = vmatpush1.msra.mxu0 0.0
  %3441 = vmatprep.subr.mxu0 0.0
  %3442 = vmatpush1.msra.mxu0 0.0
  %3443 = vmatprep.subr.mxu0 0.0
  %3444 = vmatpush1.msra.mxu0 0.0
  %3445 = vmatprep.subr.mxu0 0.0
  %3446 = vmatpush1.msra.mxu0 0.0
  %3447 = vmatprep.subr.mxu0 0.0
  %3448 = vmatpush1.msra.mxu0 0.0
  %3449 = vmatprep.subr.mxu0 0.0
  %3450 = vmatpush1.msra.mxu0 0.0
  %3451 = vmatprep.subr.mxu0 0.0
  %3452 = vmatpush1.msra.mxu0 0.0
  %3453 = vmatprep.subr.mxu0 0.0
  %3454 = vmatpush1.msra.mxu0 0.0
  %3455 = vmatprep.subr.mxu0 0.0
  %3456 = vmatpush1.msra.mxu0 0.0
  %3457 = vmatprep.subr.mxu0 0.0
  %3458 = vmatpush1.msra.mxu0 0.0
  %3459 = vmatprep.subr.mxu0 0.0
  %3460 = vmatpush1.msra.mxu0 %v3354
  %3461 = vmatprep.subr.mxu0 0.0
  %3462 = vmatpush1.msra.mxu0 %v3353
  %3463 = vmatprep.subr.mxu0 0.0
  %3464 = vmatpush2.msra.mxu0 0.0
  %3465 = vmatprep.subr.mxu0 0.0
  %3466 = vmatpush2.msra.mxu0 0.0
  %3467 = vmatprep.subr.mxu0 0.0
  %3468 = vmatpush2.msra.mxu0 0.0
  %3469 = vmatprep.subr.mxu0 0.0
  %3470 = vmatpush2.msra.mxu0 0.0
  %3471 = vmatprep.subr.mxu0 0.0
  %3472 = vmatpush2.msra.mxu0 0.0
  %3473 = vmatprep.subr.mxu0 0.0
  %3474 = vmatpush2.msra.mxu0 0.0
  %3475 = vmatprep.subr.mxu0 0.0
  %3476 = vmatpush2.msra.mxu0 0.0
  %3477 = vmatprep.subr.mxu0 0.0
  %3478 = vmatpush2.msra.mxu0 0.0
  %3479 = vmatprep.subr.mxu0 0.0
  %3480 = vmatpush2.msra.mxu0 0.0
  %3481 = vmatprep.subr.mxu0 0.0
  %3482 = vmatpush2.msra.mxu0 0.0
  %3483 = vmatprep.subr.mxu0 0.0
  %3484 = vmatpush2.msra.mxu0 0.0
  %3485 = vmatprep.subr.mxu0 0.0
  %3486 = vmatpush2.msra.mxu0 0.0
  %3487 = vmatprep.subr.mxu0 0.0
  %3488 = vmatpush2.msra.mxu0 0.0
  %3489 = vmatprep.subr.mxu0 0.0
  %3490 = vmatpush2.msra.mxu0 0.0
  %3491 = vmatprep.subr.mxu0 0.0
  %3492 = vmatpush2.msra.mxu0 0.0
  %3493 = vmatprep.subr.mxu0 0.0
  %3494 = vmatpush2.msra.mxu0 0.0
  %3495 = vmatprep.mubr.f32.mxu0 0.0
  %3496 = vmatmul.mubr.f32.gmra.mxu0 %v3429
  %v3497 = vpop.f32.mrf.mxu0
  %v3498 = vadd.f32 0.0, %v3497
  %v3499 = vpop.f32.mrf.mxu0
  %3500 = vdwg.mxu0
  %v3501 = vmax.f32 %v3425, %v3498
  %v3503 = vsel %vm87, %v2896, 0
  %3505 = vmatprep.subr.mxu0 0.0
  %3506 = vmatpush1.msra.mxu0 0.0
  %3507 = vmatprep.subr.mxu0 0.0
  %3508 = vmatpush1.msra.mxu0 0.0
  %3509 = vmatprep.subr.mxu0 0.0
  %3510 = vmatpush1.msra.mxu0 0.0
  %3511 = vmatprep.subr.mxu0 0.0
  %3512 = vmatpush1.msra.mxu0 0.0
  %3513 = vmatprep.subr.mxu0 0.0
  %3514 = vmatpush1.msra.mxu0 0.0
  %3515 = vmatprep.subr.mxu0 0.0
  %3516 = vmatpush1.msra.mxu0 0.0
  %3517 = vmatprep.subr.mxu0 0.0
  %3518 = vmatpush1.msra.mxu0 0.0
  %3519 = vmatprep.subr.mxu0 0.0
  %3520 = vmatpush1.msra.mxu0 0.0
  %3521 = vmatprep.subr.mxu0 0.0
  %3522 = vmatpush1.msra.mxu0 0.0
  %3523 = vmatprep.subr.mxu0 0.0
  %3524 = vmatpush1.msra.mxu0 0.0
  %3525 = vmatprep.subr.mxu0 0.0
  %3526 = vmatpush1.msra.mxu0 0.0
  %3527 = vmatprep.subr.mxu0 0.0
  %3528 = vmatpush1.msra.mxu0 0.0
  %3529 = vmatprep.subr.mxu0 0.0
  %3530 = vmatpush1.msra.mxu0 0.0
  %3531 = vmatprep.subr.mxu0 0.0
  %3532 = vmatpush1.msra.mxu0 0.0
  %3533 = vmatprep.subr.mxu0 0.0
  %3534 = vmatpush1.msra.mxu0 %v3354
  %3535 = vmatprep.subr.mxu0 0.0
  %3536 = vmatpush1.msra.mxu0 %v3353
  %3537 = vmatprep.subr.mxu0 0.0
  %3538 = vmatpush2.msra.mxu0 0.0
  %3539 = vmatprep.subr.mxu0 0.0
  %3540 = vmatpush2.msra.mxu0 0.0
  %3541 = vmatprep.subr.mxu0 0.0
  %3542 = vmatpush2.msra.mxu0 0.0
  %3543 = vmatprep.subr.mxu0 0.0
  %3544 = vmatpush2.msra.mxu0 0.0
  %3545 = vmatprep.subr.mxu0 0.0
  %3546 = vmatpush2.msra.mxu0 0.0
  %3547 = vmatprep.subr.mxu0 0.0
  %3548 = vmatpush2.msra.mxu0 0.0
  %3549 = vmatprep.subr.mxu0 0.0
  %3550 = vmatpush2.msra.mxu0 0.0
  %3551 = vmatprep.subr.mxu0 0.0
  %3552 = vmatpush2.msra.mxu0 0.0
  %3553 = vmatprep.subr.mxu0 0.0
  %3554 = vmatpush2.msra.mxu0 0.0
  %3555 = vmatprep.subr.mxu0 0.0
  %3556 = vmatpush2.msra.mxu0 0.0
  %3557 = vmatprep.subr.mxu0 0.0
  %3558 = vmatpush2.msra.mxu0 0.0
  %3559 = vmatprep.subr.mxu0 0.0
  %3560 = vmatpush2.msra.mxu0 0.0
  %3561 = vmatprep.subr.mxu0 0.0
  %3562 = vmatpush2.msra.mxu0 0.0
  %3563 = vmatprep.subr.mxu0 0.0
  %3564 = vmatpush2.msra.mxu0 0.0
  %3565 = vmatprep.subr.mxu0 0.0
  %3566 = vmatpush2.msra.mxu0 0.0
  %3567 = vmatprep.subr.mxu0 0.0
  %3568 = vmatpush2.msra.mxu0 0.0
  %3569 = vmatprep.mubr.f32.mxu0 0.0
  %3570 = vmatmul.mubr.f32.gmra.mxu0 %v3503
  %v3571 = vpop.f32.mrf.mxu0
  %v3572 = vadd.f32 0.0, %v3571
  %v3573 = vpop.f32.mrf.mxu0
  %3574 = vdwg.mxu0
  %v3575 = vmax.f32 %v3501, %v3572
  %3576 = vst.msk [vmem:[%s23] sm:$0xff] %vm542, %v3575
  // Predicated region
  $region94: #{ec_encoder_forward.3} parent=0 // pred_check
    _
  $region95: #{ec_encoder_forward.3} parent=0 // pred_check_branch
    %3578 = sbr.rel (0) target = $region97
  $region96: #{ec_encoder_forward.3} parent=0 // pred_region
    _
  $region97: #{ec_encoder_forward.3} parent=0 // pred_fallthru
    _
  // Predicated region
  $region98: #{ec_encoder_forward.3} parent=0 // pred_check
    _
  $region99: #{ec_encoder_forward.3} parent=0 // pred_check_branch
    %3580 = sbr.rel (0) target = $region101
  $region100: #{ec_encoder_forward.3} parent=0 // pred_region
    _
  $region101: #{ec_encoder_forward.3} parent=0 // pred_fallthru
    _
  // Predicated region
  $region102: #{ec_encoder_forward.3} parent=0 // pred_check
    _
  $region103: #{ec_encoder_forward.3} parent=0 // pred_check_branch
    %3582 = sbr.rel (0) target = $region105
  $region104: #{ec_encoder_forward.3} parent=0 // pred_region
    _
  $region105: #{ec_encoder_forward.3} parent=0 // pred_fallthru
    _
  // Predicated region
  $region106: #{ec_encoder_forward.3} parent=0 // pred_check
    _
  $region107: #{ec_encoder_forward.3} parent=0 // pred_check_branch
    %3584 = sbr.rel (0) target = $region109
  $region108: #{ec_encoder_forward.3} parent=0 // pred_region
    _
  $region109: #{ec_encoder_forward.3} parent=0 // pred_fallthru
    _

</llo_original>
